<compile_context>
chip_gen: v5e
topology: v5e:2x2
jax: 0.10.0
libtpu: 0.0.40
codegen_flags: <defaults>
</compile_context>

<pallas_src>
import functools

import jax
import jax.numpy as jnp
from jax.experimental import pallas as pl
from jax.experimental.pallas import tpu as pltpu

BN_EPS = 1e-5
LEAKY_SLOPE = 0.1
VMEM_LIMIT = 32 * 1024 * 1024          # safe on v5e/v6e (128 MiB) and v7x (64 MiB)
TILE_BYTE_BUDGET = 8 * 1024 * 1024     # per-step working-set target


def _round_up(x, m):
    return ((x + m - 1) // m) * m


def _rows_for_budget(rows, bytes_per_row, cap):
    """Largest multiple-of-8 row tile fitting the per-step VMEM byte budget."""
    tr = (TILE_BYTE_BUDGET // max(bytes_per_row, 1)) // 8 * 8
    tr = max(8, min(tr, cap, _round_up(rows, 8)))
    return int(tr)


# ---------------------------------------------------------------------------
# 1x1 conv as a tiled MXU matmul, fused with BN partial statistics
# ---------------------------------------------------------------------------

def _mm_stats_kernel(x_ref, w_ref, y_ref, sum_ref, sq_ref, acc_ref):
    k = pl.program_id(1)

    @pl.when(k == 0)
    def _():
        acc_ref[...] = jnp.zeros_like(acc_ref)

    # bf16 operands (pre-cast in the wrapper), f32 accumulation in VMEM scratch.
    acc_ref[...] += jnp.dot(x_ref[...], w_ref[...],
                            preferred_element_type=jnp.float32)

    @pl.when(k == pl.num_programs(1) - 1)
    def _():
        acc = acc_ref[...]
        y_ref[...] = acc.astype(y_ref.dtype)                       # bf16 to HBM
        sum_ref[...] = jnp.sum(acc, axis=0, keepdims=True).reshape(1, 1, -1)
        sq_ref[...] = jnp.sum(acc * acc, axis=0, keepdims=True).reshape(1, 1, -1)


def matmul_stats(x_bf16, w_bf16):
    """(M, K) @ (K, Coutp) -> bf16 y plus per-row-block channel sums / sq-sums."""
    M, K = x_bf16.shape
    K2, Coutp = w_bf16.shape
    assert K == K2 and Coutp % 128 == 0

    if K <= 1024:
        tk, kp = K, K
    else:
        tk = 512
        kp = _round_up(K, tk)

    # per-step VMEM: x tile (x2 buf) + w tile (x2) + bf16 y tile (x2) + f32 acc.
    per_row = 2 * (tk * 2) + 2 * (Coutp * 2) + Coutp * 4
    tm = _rows_for_budget(M, per_row, 1024)
    mp = _round_up(M, tm)
    if mp != M or kp != K:
        x_bf16 = jnp.pad(x_bf16, ((0, mp - M), (0, kp - K)))
    if kp != K:
        w_bf16 = jnp.pad(w_bf16, ((0, kp - K), (0, 0)))
    gm, gk = mp // tm, kp // tk

    cost = pl.CostEstimate(
        flops=2 * mp * kp * Coutp,
        transcendentals=0,
        bytes_accessed=(mp * kp * 2 + kp * Coutp * 2 + mp * Coutp * 2
                        + 2 * gm * Coutp * 4))

    y, psum, psq = pl.pallas_call(
        _mm_stats_kernel,
        out_shape=(jax.ShapeDtypeStruct((mp, Coutp), jnp.bfloat16),
                   jax.ShapeDtypeStruct((gm, 1, Coutp), jnp.float32),
                   jax.ShapeDtypeStruct((gm, 1, Coutp), jnp.float32)),
        grid_spec=pltpu.PrefetchScalarGridSpec(
            num_scalar_prefetch=0,
            grid=(gm, gk),
            in_specs=[
                pl.BlockSpec((tm, tk), lambda i, k: (i, k)),
                pl.BlockSpec((tk, Coutp), lambda i, k: (k, 0)),
            ],
            out_specs=(pl.BlockSpec((tm, Coutp), lambda i, k: (i, 0)),
                       pl.BlockSpec((1, 1, Coutp), lambda i, k: (i, 0, 0)),
                       pl.BlockSpec((1, 1, Coutp), lambda i, k: (i, 0, 0))),
            scratch_shapes=[pltpu.VMEM((tm, Coutp), jnp.float32)],
        ),
        compiler_params=pltpu.CompilerParams(
            dimension_semantics=("parallel", "arbitrary"),
            vmem_limit_bytes=VMEM_LIMIT),
        cost_estimate=cost,
    )(x_bf16, w_bf16)
    if mp != M:
        y = y[:M]
    return y, psum, psq


# ---------------------------------------------------------------------------
# 3x3 / pad=1 conv with fused (block-1) BN+LeakyReLU, in-VMEM halo, im2col
# patch + single K=9*Cin MXU matmul, and fused BN partial statistics.
# ---------------------------------------------------------------------------

def _make_conv3x3_kernel(H, W, Cinp):
    HW = H * W

    def kernel(y1_ref, sc_ref, sh_ref, w_ref, y2_ref, sum_ref, sq_ref,
               xpad_ref, patch_ref):
        # Block-1 BN (precomputed scale/shift) + LeakyReLU applied in VMEM to
        # the raw 1x1-conv output tile (no mid-activation HBM round-trip).
        sc = sc_ref[...].reshape(1, 1, Cinp)
        sh = sh_ref[...].reshape(1, 1, Cinp)
        a = y1_ref[0].astype(jnp.float32) * sc + sh
        a = jnp.where(a > 0, a, LEAKY_SLOPE * a)

        # Zero-halo padded image built in a VMEM scratch (replaces jnp.pad).
        xpad_ref[...] = jnp.zeros_like(xpad_ref)
        xpad_ref[1:H + 1, 1:W + 1, :] = a

        # In-VMEM im2col: fold the 9 taps into K so accumulation stays in the
        # MXU (one matmul with K = 9*Cinp, no duplicate f32 accumulator value).
        for dy in range(3):
            for dx in range(3):
                t = dy * 3 + dx
                tap = xpad_ref[dy:dy + H, dx:dx + W, :].reshape(HW, Cinp)
                patch_ref[:, t * Cinp:(t + 1) * Cinp] = tap.astype(jnp.bfloat16)

        acc = jnp.dot(patch_ref[...], w_ref[...],
                      preferred_element_type=jnp.float32)
        y2_ref[...] = acc.astype(y2_ref.dtype)                      # bf16 to HBM
        sum_ref[...] = jnp.sum(acc, axis=0, keepdims=True).reshape(1, 1, -1)
        sq_ref[...] = jnp.sum(acc * acc, axis=0, keepdims=True).reshape(1, 1, -1)

    return kernel


def conv3x3_bn_stats(y1, sc1, sh1, w_flat):
    """Fused BN1+LeakyReLU + 3x3/pad=1 conv + BN2 partial statistics.

    y1: bf16 (N, H, W, Cinp) raw 1x1-conv output; sc1/sh1: f32 (1, Cinp);
    w_flat: bf16 (9*Cinp, Coutp) tap-major weights.
    Returns bf16 y2 (N*H*W, Coutp) and per-image channel sums / sq-sums.
    """
    N, H, W, Cinp = y1.shape
    Coutp = w_flat.shape[-1]
    assert (H * W) % 8 == 0 and Cinp % 128 == 0 and Coutp % 128 == 0
    # TODO(synk): tile over H row-strips (halo via manual DMA) so large feature
    # maps do not need the whole padded image + im2col patch resident in VMEM;
    # whole-image blocking is fine for the small shapes exercised here.

    cost = pl.CostEstimate(
        flops=2 * 9 * N * H * W * Cinp * Coutp,
        transcendentals=0,
        bytes_accessed=(N * H * W * Cinp * 2 + 9 * Cinp * Coutp * 2
                        + N * H * W * Coutp * 2 + 2 * N * Coutp * 4))

    y2, psum, psq = pl.pallas_call(
        _make_conv3x3_kernel(H, W, Cinp),
        out_shape=(jax.ShapeDtypeStruct((N * H * W, Coutp), jnp.bfloat16),
                   jax.ShapeDtypeStruct((N, 1, Coutp), jnp.float32),
                   jax.ShapeDtypeStruct((N, 1, Coutp), jnp.float32)),
        grid_spec=pltpu.PrefetchScalarGridSpec(
            num_scalar_prefetch=0,
            grid=(N,),
            in_specs=[
                pl.BlockSpec((1, H, W, Cinp), lambda n: (n, 0, 0, 0)),
                pl.BlockSpec((1, Cinp), lambda n: (0, 0)),
                pl.BlockSpec((1, Cinp), lambda n: (0, 0)),
                pl.BlockSpec((9 * Cinp, Coutp), lambda n: (0, 0)),
            ],
            out_specs=(pl.BlockSpec((H * W, Coutp), lambda n: (n, 0)),
                       pl.BlockSpec((1, 1, Coutp), lambda n: (n, 0, 0)),
                       pl.BlockSpec((1, 1, Coutp), lambda n: (n, 0, 0))),
            scratch_shapes=[
                pltpu.VMEM((H + 2, W + 2, Cinp), jnp.float32),   # padded image
                pltpu.VMEM((H * W, 9 * Cinp), jnp.bfloat16),     # im2col patch
            ],
        ),
        compiler_params=pltpu.CompilerParams(
            dimension_semantics=("parallel",),
            vmem_limit_bytes=VMEM_LIMIT),
        cost_estimate=cost,
    )(y1, sc1, sh1, w_flat)
    return y2, psum, psq


# ---------------------------------------------------------------------------
# Fused BN (precomputed scale/shift) + LeakyReLU (+ residual add), emitting
# both the f32 state and a bf16 copy (next repeat's matmul LHS).
# ---------------------------------------------------------------------------

def _bn_leaky_res_kernel(y_ref, res_ref, sc_ref, sh_ref, of_ref, ob_ref):
    yn = y_ref[...].astype(jnp.float32) * sc_ref[...] + sh_ref[...]
    act = jnp.where(yn > 0, yn, LEAKY_SLOPE * yn)
    out = res_ref[...] + act
    of_ref[...] = out
    ob_ref[...] = out.astype(jnp.bfloat16)


def _bn_leaky_kernel(y_ref, sc_ref, sh_ref, of_ref, ob_ref):
    yn = y_ref[...].astype(jnp.float32) * sc_ref[...] + sh_ref[...]
    out = jnp.where(yn > 0, yn, LEAKY_SLOPE * yn)
    of_ref[...] = out
    ob_ref[...] = out.astype(jnp.bfloat16)


def bn_leaky_res(y2, sc, sh, residual=None):
    M, Cp = y2.shape
    per_row = 2 * Cp * (2 + 4 + 2)                 # y bf16 + out f32 + out bf16
    if residual is not None:
        per_row += 2 * Cp * 4                      # residual f32
    tr = _rows_for_budget(M, per_row, 2048)
    rp = _round_up(M, tr)
    if rp != M:
        y2 = jnp.pad(y2, ((0, rp - M), (0, 0)))
        if residual is not None:
            residual = jnp.pad(residual, ((0, rp - M), (0, 0)))

    row_spec = pl.BlockSpec((tr, Cp), lambda i: (i, 0))
    par_spec = pl.BlockSpec((1, Cp), lambda i: (0, 0))
    if residual is None:
        kern = _bn_leaky_kernel
        in_specs = [row_spec, par_spec, par_spec]
        args = (y2, sc, sh)
    else:
        kern = _bn_leaky_res_kernel
        in_specs = [row_spec, row_spec, par_spec, par_spec]
        args = (y2, residual, sc, sh)

    of, ob = pl.pallas_call(
        kern,
        out_shape=(jax.ShapeDtypeStruct((rp, Cp), jnp.float32),
                   jax.ShapeDtypeStruct((rp, Cp), jnp.bfloat16)),
        grid_spec=pltpu.PrefetchScalarGridSpec(
            num_scalar_prefetch=0,
            grid=(rp // tr,),
            in_specs=in_specs,
            out_specs=(row_spec, row_spec),
        ),
        compiler_params=pltpu.CompilerParams(
            dimension_semantics=("parallel",),
            vmem_limit_bytes=VMEM_LIMIT),
    )(*args)
    if rp != M:
        of, ob = of[:M], ob[:M]
    return of, ob


# ------------------------------- glue (JAX) --------------------------------

def _bn_scale_shift(psum, psq, gamma_p, beta_p, count):
    """Finish training-mode BatchNorm batch stats from per-block partials."""
    s = jnp.sum(psum, axis=0)                         # (1, Cp)
    q = jnp.sum(psq, axis=0)                          # (1, Cp)
    mean = s / count
    var = jnp.maximum(q / count - mean * mean, 0.0)   # clamp tiny negatives
    inv = jax.lax.rsqrt(var + BN_EPS)
    scale = gamma_p * inv
    shift = beta_p - mean * scale
    return scale, shift


@functools.partial(jax.jit, static_argnames=("use_residual",))
def residual_block(x_nchw, params, use_residual=True):
    """ResidualBlock.forward: for each repeat, x = x + Seq(CNN1x1, CNN3x3)(x)."""
    N, C, H, W = x_nchw.shape
    Ch = C // 2
    M = N * H * W
    Cp = _round_up(C, 128)      # lane-dense channel padding (zeros, exact)
    Chp = _round_up(Ch, 128)

    x = jnp.transpose(x_nchw, (0, 2, 3, 1)).reshape(M, C).astype(jnp.float32)
    xf = jnp.pad(x, ((0, 0), (0, Cp - C)))            # f32 residual path
    xb = xf.astype(jnp.bfloat16)                      # bf16 copy: matmul LHS

    # TODO(synk): BatchNorm running-stat (momentum) buffers are not modeled;
    # they do not affect the training-mode forward output.
    for (w1, g1, b1, w2, g2, b2) in params:
        # Channel-pad weights / affine params to 128-lane multiples.
        w1p = jnp.pad(w1, ((0, Cp - C), (0, Chp - Ch))).astype(jnp.bfloat16)
        w2p = jnp.pad(w2, ((0, 0), (0, Chp - Ch), (0, Cp - C)))
        w2p = w2p.reshape(9 * Chp, Cp).astype(jnp.bfloat16)
        g1p = jnp.pad(g1, ((0, 0), (0, Chp - Ch)))
        b1p = jnp.pad(b1, ((0, 0), (0, Chp - Ch)))
        g2p = jnp.pad(g2, ((0, 0), (0, Cp - C)))
        b2p = jnp.pad(b2, ((0, 0), (0, Cp - C)))

        # CNNBlock 1: 1x1 conv (C -> C/2) + fused BN batch-stat partials.
        y1, s1, q1 = matmul_stats(xb, w1p)                        # (M, Chp) bf16
        sc1, sh1 = _bn_scale_shift(s1, q1, g1p, b1p, float(M))

        # CNNBlock 2: BN1+LeakyReLU fused into a 3x3/pad=1 conv (C/2 -> C)
        # with in-VMEM halo, plus BN2 batch-stat partials.
        y2, s2, q2 = conv3x3_bn_stats(y1.reshape(N, H, W, Chp), sc1, sh1, w2p)
        sc2, sh2 = _bn_scale_shift(s2, q2, g2p, b2p, float(M))

        # BN2 + LeakyReLU (+ residual add); emits f32 state + bf16 matmul copy.
        xf, xb = bn_leaky_res(y2, sc2, sh2, xf if use_residual else None)

    out = xf[:, :C].reshape(N, H, W, C)
    return jnp.transpose(out, (0, 3, 1, 2))           # back to NCHW, f32


def init_params(key, channels, num_repeats):
    """Deterministic synthetic parameters matching the module __init__ shapes."""
    c_half = channels // 2
    params = []
    for _ in range(num_repeats):
        key, k1, k2, k3, k4, k5, k6 = jax.random.split(key, 7)
        # conv1: 1x1, in=channels, out=channels//2 -> matmul weight (C, C//2)
        w1 = jax.random.normal(k1, (channels, c_half), jnp.float32)
        w1 = w1 / jnp.sqrt(jnp.float32(channels))
        g1 = (1.0 + 0.1 * jax.random.normal(k2, (1, c_half))).astype(jnp.float32)
        b1 = (0.1 * jax.random.normal(k3, (1, c_half))).astype(jnp.float32)
        # conv2: 3x3, in=channels//2, out=channels -> (tap=kh*3+kw, cin, cout)
        w2 = jax.random.normal(k4, (9, c_half, channels), jnp.float32)
        w2 = w2 / jnp.sqrt(jnp.float32(9 * c_half))
        g2 = (1.0 + 0.1 * jax.random.normal(k5, (1, channels))).astype(jnp.float32)
        b2 = (0.1 * jax.random.normal(k6, (1, channels))).astype(jnp.float32)
        params.append((w1, g1, b1, w2, g2, b2))
    return tuple(params)


if __name__ == "__main__":
    key = jax.random.PRNGKey(0)
    kx, kp = jax.random.split(key)

    N, C, H, W = 2, 8, 16, 16          # channels must be even (C//2 split)
    x = jax.random.normal(kx, (N, C, H, W), jnp.float32)
    params = init_params(kp, C, num_repeats=2)

    out = residual_block(x, params, use_residual=True)
    out = jax.block_until_ready(out)
    assert out.shape == (N, C, H, W) and out.dtype == jnp.float32
    assert bool(jnp.all(jnp.isfinite(out)))
    print("KERNEL_OK")
</pallas_src>

<mosaic_0001>
module attributes {stable_mosaic.version = 11 : i64} {
  func.func @_mm_stats_kernel(%arg0: i32, %arg1: i32, %arg2: memref<512x128xbf16, #tpu.memory_space<vmem>>, %arg3: memref<128x128xbf16, #tpu.memory_space<vmem>>, %arg4: memref<512x128xbf16, #tpu.memory_space<vmem>>, %arg5: memref<1x1x128xf32, #tpu.memory_space<vmem>>, %arg6: memref<1x1x128xf32, #tpu.memory_space<vmem>>, %arg7: memref<512x128xf32, #tpu.memory_space<vmem>>) attributes {dimension_semantics = [#tpu.dimension_semantics<parallel>, #tpu.dimension_semantics<arbitrary>], iteration_bounds = array<i64: 1, 1>, scalar_prefetch = 0 : i64, scratch_operands = 1 : i64, tpu.core_type = #tpu.core_type<tc>, window_params = [{transform_indices = @transform_0, window_bounds = array<i64: 512, 128>}, {transform_indices = @transform_1, window_bounds = array<i64: 128, 128>}, {transform_indices = @transform_2, window_bounds = array<i64: 512, 128>}, {transform_indices = @transform_3, window_bounds = array<i64: 1, 1, 128>}, {transform_indices = @transform_4, window_bounds = array<i64: 1, 1, 128>}]} {
    %c0_i32 = arith.constant 0 : i32
    %0 = arith.cmpi eq, %arg1, %c0_i32 : i32
    %1 = arith.extui %0 : i1 to i32
    %c0_i32_0 = arith.constant 0 : i32
    %2 = arith.cmpi ne, %1, %c0_i32_0 : i32
    scf.if %2 {
      %cst_10 = arith.constant 0.000000e+00 : f32
      %12 = vector.broadcast %cst_10 : f32 to vector<512x128xf32>
      %c0_11 = arith.constant 0 : index
      %c0_12 = arith.constant 0 : index
      %13 = vector.load %arg7[%c0_11, %c0_12] : memref<512x128xf32, #tpu.memory_space<vmem>>, vector<512x128xf32>
      tpu.vector_store %arg7[%c0_11, %c0_12], %12 {strides = array<i32>} : memref<512x128xf32, #tpu.memory_space<vmem>>, vector<512x128xf32>,
    } else {
    }
    %c0 = arith.constant 0 : index
    %c0_1 = arith.constant 0 : index
    %3 = vector.load %arg7[%c0, %c0_1] : memref<512x128xf32, #tpu.memory_space<vmem>>, vector<512x128xf32>
    %c0_2 = arith.constant 0 : index
    %c0_3 = arith.constant 0 : index
    %4 = vector.load %arg2[%c0_2, %c0_3] : memref<512x128xbf16, #tpu.memory_space<vmem>>, vector<512x128xbf16>
    %c0_4 = arith.constant 0 : index
    %c0_5 = arith.constant 0 : index
    %5 = vector.load %arg3[%c0_4, %c0_5] : memref<128x128xbf16, #tpu.memory_space<vmem>>, vector<128x128xbf16>
    %cst = arith.constant dense<0.000000e+00> : vector<512x128xf32>
    %6 = tpu.matmul %4, %5, %cst {dimension_numbers = #tpu.dot_dimension_numbers<[1], [0], [0], [1], [0, 0, 1, 1], [], []>} : vector<512x128xbf16>, vector<128x128xbf16>, vector<512x128xf32> -> vector<512x128xf32>
    %7 = arith.addf %3, %6 : vector<512x128xf32>
    %c0_6 = arith.constant 0 : index
    %c0_7 = arith.constant 0 : index
    %8 = vector.load %arg7[%c0_6, %c0_7] : memref<512x128xf32, #tpu.memory_space<vmem>>, vector<512x128xf32>
    tpu.vector_store %arg7[%c0_6, %c0_7], %7 {strides = array<i32>} : memref<512x128xf32, #tpu.memory_space<vmem>>, vector<512x128xf32>,
    %c0_i32_8 = arith.constant 0 : i32
    %9 = arith.cmpi eq, %arg1, %c0_i32_8 : i32
    %10 = arith.extui %9 : i1 to i32
    %c0_i32_9 = arith.constant 0 : i32
    %11 = arith.cmpi ne, %10, %c0_i32_9 : i32
    scf.if %11 {
      %c0_10 = arith.constant 0 : index
      %c0_11 = arith.constant 0 : index
      %12 = vector.load %arg7[%c0_10, %c0_11] : memref<512x128xf32, #tpu.memory_space<vmem>>, vector<512x128xf32>
      %13 = arith.truncf %12 : vector<512x128xf32> to vector<512x128xbf16>
      %c0_12 = arith.constant 0 : index
      %c0_13 = arith.constant 0 : index
      %14 = vector.load %arg4[%c0_12, %c0_13] : memref<512x128xbf16, #tpu.memory_space<vmem>>, vector<512x128xbf16>
      tpu.vector_store %arg4[%c0_12, %c0_13], %13 {strides = array<i32>} : memref<512x128xbf16, #tpu.memory_space<vmem>>, vector<512x128xbf16>,
      %cst_14 = arith.constant dense<0.000000e+00> : vector<128xf32>
      %15 = vector.multi_reduction <add>, %12, %cst_14 [0] : vector<512x128xf32> to vector<128xf32>
      %16 = vector.shape_cast %15 : vector<128xf32> to vector<1x128xf32>
      %17 = vector.shape_cast %16 : vector<1x128xf32> to vector<1x1x128xf32>
      %c0_15 = arith.constant 0 : index
      %c0_16 = arith.constant 0 : index
      %c0_17 = arith.constant 0 : index
      %18 = vector.load %arg5[%c0_15, %c0_16, %c0_17] : memref<1x1x128xf32, #tpu.memory_space<vmem>>, vector<1x1x128xf32>
      tpu.vector_store %arg5[%c0_15, %c0_16, %c0_17], %17 {strides = array<i32>} : memref<1x1x128xf32, #tpu.memory_space<vmem>>, vector<1x1x128xf32>,
      %19 = arith.mulf %12, %12 : vector<512x128xf32>
      %cst_18 = arith.constant dense<0.000000e+00> : vector<128xf32>
      %20 = vector.multi_reduction <add>, %19, %cst_18 [0] : vector<512x128xf32> to vector<128xf32>
      %21 = vector.shape_cast %20 : vector<128xf32> to vector<1x128xf32>
      %22 = vector.shape_cast %21 : vector<1x128xf32> to vector<1x1x128xf32>
      %c0_19 = arith.constant 0 : index
      %c0_20 = arith.constant 0 : index
      %c0_21 = arith.constant 0 : index
      %23 = vector.load %arg6[%c0_19, %c0_20, %c0_21] : memref<1x1x128xf32, #tpu.memory_space<vmem>>, vector<1x1x128xf32>
      tpu.vector_store %arg6[%c0_19, %c0_20, %c0_21], %22 {strides = array<i32>} : memref<1x1x128xf32, #tpu.memory_space<vmem>>, vector<1x1x128xf32>,
    } else {
    }
    return
  }
  func.func @transform_0(%arg0: i32, %arg1: i32) -> (i32, i32) {
    %c0_i32 = arith.constant 0 : i32
    return %arg0, %arg1 : i32, i32
  }
  func.func @transform_1(%arg0: i32, %arg1: i32) -> (i32, i32) {
    %c0_i32 = arith.constant 0 : i32
    %c0_i32_0 = arith.constant 0 : i32
    return %arg1, %c0_i32 : i32, i32
  }
  func.func @transform_2(%arg0: i32, %arg1: i32) -> (i32, i32) {
    %c0_i32 = arith.constant 0 : i32
    %c0_i32_0 = arith.constant 0 : i32
    return %arg0, %c0_i32 : i32, i32
  }
  func.func @transform_3(%arg0: i32, %arg1: i32) -> (i32, i32, i32) {
    %c0_i32 = arith.constant 0 : i32
    %c0_i32_0 = arith.constant 0 : i32
    %c0_i32_1 = arith.constant 0 : i32
    return %arg0, %c0_i32, %c0_i32_0 : i32, i32, i32
  }
  func.func @transform_4(%arg0: i32, %arg1: i32) -> (i32, i32, i32) {
    %c0_i32 = arith.constant 0 : i32
    %c0_i32_0 = arith.constant 0 : i32
    %c0_i32_1 = arith.constant 0 : i32
    return %arg0, %c0_i32, %c0_i32_0 : i32, i32, i32
  }
}

module attributes {stable_mosaic.version = 11 : i64} {
  func.func @kernel(%arg0: i32, %arg1: memref<1x16x16x128xbf16, #tpu.memory_space<vmem>>, %arg2: memref<1x128xf32, #tpu.memory_space<vmem>>, %arg3: memref<1x128xf32, #tpu.memory_space<vmem>>, %arg4: memref<1152x128xbf16, #tpu.memory_space<vmem>>, %arg5: memref<256x128xbf16, #tpu.memory_space<vmem>>, %arg6: memref<1x1x128xf32, #tpu.memory_space<vmem>>, %arg7: memref<1x1x128xf32, #tpu.memory_space<vmem>>, %arg8: memref<18x18x128xf32, #tpu.memory_space<vmem>>, %arg9: memref<256x1152xbf16, #tpu.memory_space<vmem>>) attributes {dimension_semantics = [#tpu.dimension_semantics<parallel>], iteration_bounds = array<i64: 2>, scalar_prefetch = 0 : i64, scratch_operands = 2 : i64, tpu.core_type = #tpu.core_type<tc>, window_params = [{transform_indices = @transform_0, window_bounds = array<i64: 1, 16, 16, 128>}, {pipeline_mode = #tpu.pipeline_mode<synchronous>, transform_indices = @transform_1, window_bounds = array<i64: 1, 128>}, {pipeline_mode = #tpu.pipeline_mode<synchronous>, transform_indices = @transform_2, window_bounds = array<i64: 1, 128>}, {pipeline_mode = #tpu.pipeline_mode<synchronous>, transform_indices = @transform_3, window_bounds = array<i64: 1152, 128>}, {transform_indices = @transform_4, window_bounds = array<i64: 256, 128>}, {transform_indices = @transform_5, window_bounds = array<i64: 1, 1, 128>}, {transform_indices = @transform_6, window_bounds = array<i64: 1, 1, 128>}]} {
    %c0 = arith.constant 0 : index
    %c0_0 = arith.constant 0 : index
    %0 = vector.load %arg2[%c0, %c0_0] : memref<1x128xf32, #tpu.memory_space<vmem>>, vector<1x128xf32>
    %1 = vector.shape_cast %0 : vector<1x128xf32> to vector<1x1x128xf32>
    %c0_1 = arith.constant 0 : index
    %c0_2 = arith.constant 0 : index
    %2 = vector.load %arg3[%c0_1, %c0_2] : memref<1x128xf32, #tpu.memory_space<vmem>>, vector<1x128xf32>
    %3 = vector.shape_cast %2 : vector<1x128xf32> to vector<1x1x128xf32>
    %c0_3 = arith.constant 0 : index
    %c0_4 = arith.constant 0 : index
    %c0_5 = arith.constant 0 : index
    %c0_6 = arith.constant 0 : index
    %4 = vector.load %arg1[%c0_3, %c0_4, %c0_5, %c0_6] : memref<1x16x16x128xbf16, #tpu.memory_space<vmem>>, vector<1x16x16x128xbf16>
    %5 = vector.shape_cast %4 : vector<1x16x16x128xbf16> to vector<16x16x128xbf16>
    %6 = arith.extf %5 : vector<16x16x128xbf16> to vector<16x16x128xf32>
    %7 = vector.broadcast %1 : vector<1x1x128xf32> to vector<16x16x128xf32>
    %8 = arith.mulf %6, %7 : vector<16x16x128xf32>
    %9 = vector.broadcast %3 : vector<1x1x128xf32> to vector<16x16x128xf32>
    %10 = arith.addf %8, %9 : vector<16x16x128xf32>
    %cst = arith.constant 0.000000e+00 : f32
    %11 = vector.broadcast %cst : f32 to vector<16x16x128xf32>
    %12 = arith.cmpf ogt, %10, %11 : vector<16x16x128xf32>
    %cst_7 = arith.constant 1.000000e-01 : f32
    %13 = vector.broadcast %cst_7 : f32 to vector<16x16x128xf32>
    %14 = arith.mulf %13, %10 : vector<16x16x128xf32>
    %15 = arith.select %12, %10, %14 : vector<16x16x128xi1>, vector<16x16x128xf32>
    %cst_8 = arith.constant 0.000000e+00 : f32
    %16 = vector.broadcast %cst_8 : f32 to vector<18x18x128xf32>
    %c0_9 = arith.constant 0 : index
    %c0_10 = arith.constant 0 : index
    %c0_11 = arith.constant 0 : index
    %17 = vector.load %arg8[%c0_9, %c0_10, %c0_11] : memref<18x18x128xf32, #tpu.memory_space<vmem>>, vector<18x18x128xf32>
    tpu.vector_store %arg8[%c0_9, %c0_10, %c0_11], %16 {strides = array<i32>} : memref<18x18x128xf32, #tpu.memory_space<vmem>>, vector<18x18x128xf32>,
    %c1 = arith.constant 1 : index
    %c1_12 = arith.constant 1 : index
    %c0_13 = arith.constant 0 : index
    %18 = vector.load %arg8[%c1, %c1_12, %c0_13] : memref<18x18x128xf32, #tpu.memory_space<vmem>>, vector<16x16x128xf32>
    tpu.vector_store %arg8[%c1, %c1_12, %c0_13], %15 {strides = array<i32>} : memref<18x18x128xf32, #tpu.memory_space<vmem>>, vector<16x16x128xf32>,
    %c0_14 = arith.constant 0 : index
    %c0_15 = arith.constant 0 : index
    %c0_16 = arith.constant 0 : index
    %19 = vector.load %arg8[%c0_14, %c0_15, %c0_16] : memref<18x18x128xf32, #tpu.memory_space<vmem>>, vector<16x16x128xf32>
    %20 = vector.shape_cast %19 : vector<16x16x128xf32> to vector<256x128xf32>
    %21 = arith.truncf %20 : vector<256x128xf32> to vector<256x128xbf16>
    %c0_17 = arith.constant 0 : index
    %c0_18 = arith.constant 0 : index
    %22 = vector.load %arg9[%c0_17, %c0_18] : memref<256x1152xbf16, #tpu.memory_space<vmem>>, vector<256x128xbf16>
    tpu.vector_store %arg9[%c0_17, %c0_18], %21 {strides = array<i32>} : memref<256x1152xbf16, #tpu.memory_space<vmem>>, vector<256x128xbf16>,
    %c0_19 = arith.constant 0 : index
    %c1_20 = arith.constant 1 : index
    %c0_21 = arith.constant 0 : index
    %23 = vector.load %arg8[%c0_19, %c1_20, %c0_21] : memref<18x18x128xf32, #tpu.memory_space<vmem>>, vector<16x16x128xf32>
    %24 = vector.shape_cast %23 : vector<16x16x128xf32> to vector<256x128xf32>
    %25 = arith.truncf %24 : vector<256x128xf32> to vector<256x128xbf16>
    %c0_22 = arith.constant 0 : index
    %c128 = arith.constant 128 : index
    %26 = vector.load %arg9[%c0_22, %c128] : memref<256x1152xbf16, #tpu.memory_space<vmem>>, vector<256x128xbf16>
    tpu.vector_store %arg9[%c0_22, %c128], %25 {strides = array<i32>} : memref<256x1152xbf16, #tpu.memory_space<vmem>>, vector<256x128xbf16>,
    %c0_23 = arith.constant 0 : index
    %c2 = arith.constant 2 : index
    %c0_24 = arith.constant 0 : index
    %27 = vector.load %arg8[%c0_23, %c2, %c0_24] : memref<18x18x128xf32, #tpu.memory_space<vmem>>, vector<16x16x128xf32>
    %28 = vector.shape_cast %27 : vector<16x16x128xf32> to vector<256x128xf32>
    %29 = arith.truncf %28 : vector<256x128xf32> to vector<256x128xbf16>
    %c0_25 = arith.constant 0 : index
    %c256 = arith.constant 256 : index
    %30 = vector.load %arg9[%c0_25, %c256] : memref<256x1152xbf16, #tpu.memory_space<vmem>>, vector<256x128xbf16>
    tpu.vector_store %arg9[%c0_25, %c256], %29 {strides = array<i32>} : memref<256x1152xbf16, #tpu.memory_space<vmem>>, vector<256x128xbf16>,
    %c1_26 = arith.constant 1 : index
    %c0_27 = arith.constant 0 : index
    %c0_28 = arith.constant 0 : index
    %31 = vector.load %arg8[%c1_26, %c0_27, %c0_28] : memref<18x18x128xf32, #tpu.memory_space<vmem>>, vector<16x16x128xf32>
    %32 = vector.shape_cast %31 : vector<16x16x128xf32> to vector<256x128xf32>
    %33 = arith.truncf %32 : vector<256x128xf32> to vector<256x128xbf16>
    %c0_29 = arith.constant 0 : index
    %c384 = arith.constant 384 : index
    %34 = vector.load %arg9[%c0_29, %c384] : memref<256x1152xbf16, #tpu.memory_space<vmem>>, vector<256x128xbf16>
    tpu.vector_store %arg9[%c0_29, %c384], %33 {strides = array<i32>} : memref<256x1152xbf16, #tpu.memory_space<vmem>>, vector<256x128xbf16>,
    %c1_30 = arith.constant 1 : index
    %c1_31 = arith.constant 1 : index
    %c0_32 = arith.constant 0 : index
    %35 = vector.load %arg8[%c1_30, %c1_31, %c0_32] : memref<18x18x128xf32, #tpu.memory_space<vmem>>, vector<16x16x128xf32>
    %36 = vector.shape_cast %35 : vector<16x16x128xf32> to vector<256x128xf32>
    %37 = arith.truncf %36 : vector<256x128xf32> to vector<256x128xbf16>
    %c0_33 = arith.constant 0 : index
    %c512 = arith.constant 512 : index
    %38 = vector.load %arg9[%c0_33, %c512] : memref<256x1152xbf16, #tpu.memory_space<vmem>>, vector<256x128xbf16>
    tpu.vector_store %arg9[%c0_33, %c512], %37 {strides = array<i32>} : memref<256x1152xbf16, #tpu.memory_space<vmem>>, vector<256x128xbf16>,
    %c1_34 = arith.constant 1 : index
    %c2_35 = arith.constant 2 : index
    %c0_36 = arith.constant 0 : index
    %39 = vector.load %arg8[%c1_34, %c2_35, %c0_36] : memref<18x18x128xf32, #tpu.memory_space<vmem>>, vector<16x16x128xf32>
    %40 = vector.shape_cast %39 : vector<16x16x128xf32> to vector<256x128xf32>
    %41 = arith.truncf %40 : vector<256x128xf32> to vector<256x128xbf16>
    %c0_37 = arith.constant 0 : index
    %c640 = arith.constant 640 : index
    %42 = vector.load %arg9[%c0_37, %c640] : memref<256x1152xbf16, #tpu.memory_space<vmem>>, vector<256x128xbf16>
    tpu.vector_store %arg9[%c0_37, %c640], %41 {strides = array<i32>} : memref<256x1152xbf16, #tpu.memory_space<vmem>>, vector<256x128xbf16>,
    %c2_38 = arith.constant 2 : index
    %c0_39 = arith.constant 0 : index
    %c0_40 = arith.constant 0 : index
    %43 = vector.load %arg8[%c2_38, %c0_39, %c0_40] : memref<18x18x128xf32, #tpu.memory_space<vmem>>, vector<16x16x128xf32>
    %44 = vector.shape_cast %43 : vector<16x16x128xf32> to vector<256x128xf32>
    %45 = arith.truncf %44 : vector<256x128xf32> to vector<256x128xbf16>
    %c0_41 = arith.constant 0 : index
    %c768 = arith.constant 768 : index
    %46 = vector.load %arg9[%c0_41, %c768] : memref<256x1152xbf16, #tpu.memory_space<vmem>>, vector<256x128xbf16>
    tpu.vector_store %arg9[%c0_41, %c768], %45 {strides = array<i32>} : memref<256x1152xbf16, #tpu.memory_space<vmem>>, vector<256x128xbf16>,
    %c2_42 = arith.constant 2 : index
    %c1_43 = arith.constant 1 : index
    %c0_44 = arith.constant 0 : index
    %47 = vector.load %arg8[%c2_42, %c1_43, %c0_44] : memref<18x18x128xf32, #tpu.memory_space<vmem>>, vector<16x16x128xf32>
    %48 = vector.shape_cast %47 : vector<16x16x128xf32> to vector<256x128xf32>
    %49 = arith.truncf %48 : vector<256x128xf32> to vector<256x128xbf16>
    %c0_45 = arith.constant 0 : index
    %c896 = arith.constant 896 : index
    %50 = vector.load %arg9[%c0_45, %c896] : memref<256x1152xbf16, #tpu.memory_space<vmem>>, vector<256x128xbf16>
    tpu.vector_store %arg9[%c0_45, %c896], %49 {strides = array<i32>} : memref<256x1152xbf16, #tpu.memory_space<vmem>>, vector<256x128xbf16>,
    %c2_46 = arith.constant 2 : index
    %c2_47 = arith.constant 2 : index
    %c0_48 = arith.constant 0 : index
    %51 = vector.load %arg8[%c2_46, %c2_47, %c0_48] : memref<18x18x128xf32, #tpu.memory_space<vmem>>, vector<16x16x128xf32>
    %52 = vector.shape_cast %51 : vector<16x16x128xf32> to vector<256x128xf32>
    %53 = arith.truncf %52 : vector<256x128xf32> to vector<256x128xbf16>
    %c0_49 = arith.constant 0 : index
    %c1024 = arith.constant 1024 : index
    %54 = vector.load %arg9[%c0_49, %c1024] : memref<256x1152xbf16, #tpu.memory_space<vmem>>, vector<256x128xbf16>
    tpu.vector_store %arg9[%c0_49, %c1024], %53 {strides = array<i32>} : memref<256x1152xbf16, #tpu.memory_space<vmem>>, vector<256x128xbf16>,
    %c0_50 = arith.constant 0 : index
    %c0_51 = arith.constant 0 : index
    %55 = vector.load %arg9[%c0_50, %c0_51] : memref<256x1152xbf16, #tpu.memory_space<vmem>>, vector<256x1152xbf16>
    %c0_52 = arith.constant 0 : index
    %c0_53 = arith.constant 0 : index
    %56 = vector.load %arg4[%c0_52, %c0_53] : memref<1152x128xbf16, #tpu.memory_space<vmem>>, vector<1152x128xbf16>
    %cst_54 = arith.constant dense<0.000000e+00> : vector<256x128xf32>
    %57 = tpu.matmul %55, %56, %cst_54 {dimension_numbers = #tpu.dot_dimension_numbers<[1], [0], [0], [1], [0, 0, 1, 1], [], []>} : vector<256x1152xbf16>, vector<1152x128xbf16>, vector<256x128xf32> -> vector<256x128xf32>
    %58 = arith.truncf %57 : vector<256x128xf32> to vector<256x128xbf16>
    %c0_55 = arith.constant 0 : index
    %c0_56 = arith.constant 0 : index
    %59 = vector.load %arg5[%c0_55, %c0_56] : memref<256x128xbf16, #tpu.memory_space<vmem>>, vector<256x128xbf16>
    tpu.vector_store %arg5[%c0_55, %c0_56], %58 {strides = array<i32>} : memref<256x128xbf16, #tpu.memory_space<vmem>>, vector<256x128xbf16>,
    %cst_57 = arith.constant dense<0.000000e+00> : vector<128xf32>
    %60 = vector.multi_reduction <add>, %57, %cst_57 [0] : vector<256x128xf32> to vector<128xf32>
    %61 = vector.shape_cast %60 : vector<128xf32> to vector<1x128xf32>
    %62 = vector.shape_cast %61 : vector<1x128xf32> to vector<1x1x128xf32>
    %c0_58 = arith.constant 0 : index
    %c0_59 = arith.constant 0 : index
    %c0_60 = arith.constant 0 : index
    %63 = vector.load %arg6[%c0_58, %c0_59, %c0_60] : memref<1x1x128xf32, #tpu.memory_space<vmem>>, vector<1x1x128xf32>
    tpu.vector_store %arg6[%c0_58, %c0_59, %c0_60], %62 {strides = array<i32>} : memref<1x1x128xf32, #tpu.memory_space<vmem>>, vector<1x1x128xf32>,
    %64 = arith.mulf %57, %57 : vector<256x128xf32>
    %cst_61 = arith.constant dense<0.000000e+00> : vector<128xf32>
    %65 = vector.multi_reduction <add>, %64, %cst_61 [0] : vector<256x128xf32> to vector<128xf32>
    %66 = vector.shape_cast %65 : vector<128xf32> to vector<1x128xf32>
    %67 = vector.shape_cast %66 : vector<1x128xf32> to vector<1x1x128xf32>
    %c0_62 = arith.constant 0 : index
    %c0_63 = arith.constant 0 : index
    %c0_64 = arith.constant 0 : index
    %68 = vector.load %arg7[%c0_62, %c0_63, %c0_64] : memref<1x1x128xf32, #tpu.memory_space<vmem>>, vector<1x1x128xf32>
    tpu.vector_store %arg7[%c0_62, %c0_63, %c0_64], %67 {strides = array<i32>} : memref<1x1x128xf32, #tpu.memory_space<vmem>>, vector<1x1x128xf32>,
    return
  }
  func.func @transform_0(%arg0: i32) -> (i32, i32, i32, i32) {
    %c0_i32 = arith.constant 0 : i32
    %c0_i32_0 = arith.constant 0 : i32
    %c0_i32_1 = arith.constant 0 : i32
    %c0_i32_2 = arith.constant 0 : i32
    return %arg0, %c0_i32, %c0_i32_0, %c0_i32_1 : i32, i32, i32, i32
  }
  func.func @transform_1(%arg0: i32) -> (i32, i32) {
    %c0_i32 = arith.constant 0 : i32
    %c0_i32_0 = arith.constant 0 : i32
    %c0_i32_1 = arith.constant 0 : i32
    return %c0_i32, %c0_i32_0 : i32, i32
  }
  func.func @transform_2(%arg0: i32) -> (i32, i32) {
    %c0_i32 = arith.constant 0 : i32
    %c0_i32_0 = arith.constant 0 : i32
    %c0_i32_1 = arith.constant 0 : i32
    return %c0_i32, %c0_i32_0 : i32, i32
  }
  func.func @transform_3(%arg0: i32) -> (i32, i32) {
    %c0_i32 = arith.constant 0 : i32
    %c0_i32_0 = arith.constant 0 : i32
    %c0_i32_1 = arith.constant 0 : i32
    return %c0_i32, %c0_i32_0 : i32, i32
  }
  func.func @transform_4(%arg0: i32) -> (i32, i32) {
    %c0_i32 = arith.constant 0 : i32
    %c0_i32_0 = arith.constant 0 : i32
    return %arg0, %c0_i32 : i32, i32
  }
  func.func @transform_5(%arg0: i32) -> (i32, i32, i32) {
    %c0_i32 = arith.constant 0 : i32
    %c0_i32_0 = arith.constant 0 : i32
    %c0_i32_1 = arith.constant 0 : i32
    return %arg0, %c0_i32, %c0_i32_0 : i32, i32, i32
  }
  func.func @transform_6(%arg0: i32) -> (i32, i32, i32) {
    %c0_i32 = arith.constant 0 : i32
    %c0_i32_0 = arith.constant 0 : i32
    %c0_i32_1 = arith.constant 0 : i32
    return %arg0, %c0_i32, %c0_i32_0 : i32, i32, i32
  }
}

module attributes {stable_mosaic.version = 11 : i64} {
  func.func @_bn_leaky_res_kernel(%arg0: i32, %arg1: memref<512x128xbf16, #tpu.memory_space<vmem>>, %arg2: memref<512x128xf32, #tpu.memory_space<vmem>>, %arg3: memref<1x128xf32, #tpu.memory_space<vmem>>, %arg4: memref<1x128xf32, #tpu.memory_space<vmem>>, %arg5: memref<512x128xf32, #tpu.memory_space<vmem>>, %arg6: memref<512x128xbf16, #tpu.memory_space<vmem>>) attributes {dimension_semantics = [#tpu.dimension_semantics<parallel>], iteration_bounds = array<i64: 1>, scalar_prefetch = 0 : i64, scratch_operands = 0 : i64, tpu.core_type = #tpu.core_type<tc>, window_params = [{transform_indices = @transform_0, window_bounds = array<i64: 512, 128>}, {transform_indices = @transform_1, window_bounds = array<i64: 512, 128>}, {pipeline_mode = #tpu.pipeline_mode<synchronous>, transform_indices = @transform_2, window_bounds = array<i64: 1, 128>}, {pipeline_mode = #tpu.pipeline_mode<synchronous>, transform_indices = @transform_3, window_bounds = array<i64: 1, 128>}, {transform_indices = @transform_4, window_bounds = array<i64: 512, 128>}, {transform_indices = @transform_5, window_bounds = array<i64: 512, 128>}]} {
    %c0 = arith.constant 0 : index
    %c0_0 = arith.constant 0 : index
    %0 = vector.load %arg1[%c0, %c0_0] : memref<512x128xbf16, #tpu.memory_space<vmem>>, vector<512x128xbf16>
    %1 = arith.extf %0 : vector<512x128xbf16> to vector<512x128xf32>
    %c0_1 = arith.constant 0 : index
    %c0_2 = arith.constant 0 : index
    %2 = vector.load %arg3[%c0_1, %c0_2] : memref<1x128xf32, #tpu.memory_space<vmem>>, vector<1x128xf32>
    %3 = vector.broadcast %2 : vector<1x128xf32> to vector<512x128xf32>
    %4 = arith.mulf %1, %3 : vector<512x128xf32>
    %c0_3 = arith.constant 0 : index
    %c0_4 = arith.constant 0 : index
    %5 = vector.load %arg4[%c0_3, %c0_4] : memref<1x128xf32, #tpu.memory_space<vmem>>, vector<1x128xf32>
    %6 = vector.broadcast %5 : vector<1x128xf32> to vector<512x128xf32>
    %7 = arith.addf %4, %6 : vector<512x128xf32>
    %cst = arith.constant 0.000000e+00 : f32
    %8 = vector.broadcast %cst : f32 to vector<512x128xf32>
    %9 = arith.cmpf ogt, %7, %8 : vector<512x128xf32>
    %cst_5 = arith.constant 1.000000e-01 : f32
    %10 = vector.broadcast %cst_5 : f32 to vector<512x128xf32>
    %11 = arith.mulf %10, %7 : vector<512x128xf32>
    %12 = arith.select %9, %7, %11 : vector<512x128xi1>, vector<512x128xf32>
    %c0_6 = arith.constant 0 : index
    %c0_7 = arith.constant 0 : index
    %13 = vector.load %arg2[%c0_6, %c0_7] : memref<512x128xf32, #tpu.memory_space<vmem>>, vector<512x128xf32>
    %14 = arith.addf %13, %12 : vector<512x128xf32>
    %c0_8 = arith.constant 0 : index
    %c0_9 = arith.constant 0 : index
    %15 = vector.load %arg5[%c0_8, %c0_9] : memref<512x128xf32, #tpu.memory_space<vmem>>, vector<512x128xf32>
    tpu.vector_store %arg5[%c0_8, %c0_9], %14 {strides = array<i32>} : memref<512x128xf32, #tpu.memory_space<vmem>>, vector<512x128xf32>,
    %16 = arith.truncf %14 : vector<512x128xf32> to vector<512x128xbf16>
    %c0_10 = arith.constant 0 : index
    %c0_11 = arith.constant 0 : index
    %17 = vector.load %arg6[%c0_10, %c0_11] : memref<512x128xbf16, #tpu.memory_space<vmem>>, vector<512x128xbf16>
    tpu.vector_store %arg6[%c0_10, %c0_11], %16 {strides = array<i32>} : memref<512x128xbf16, #tpu.memory_space<vmem>>, vector<512x128xbf16>,
    return
  }
  func.func @transform_0(%arg0: i32) -> (i32, i32) {
    %c0_i32 = arith.constant 0 : i32
    %c0_i32_0 = arith.constant 0 : i32
    return %arg0, %c0_i32 : i32, i32
  }
  func.func @transform_1(%arg0: i32) -> (i32, i32) {
    %c0_i32 = arith.constant 0 : i32
    %c0_i32_0 = arith.constant 0 : i32
    return %arg0, %c0_i32 : i32, i32
  }
  func.func @transform_2(%arg0: i32) -> (i32, i32) {
    %c0_i32 = arith.constant 0 : i32
    %c0_i32_0 = arith.constant 0 : i32
    %c0_i32_1 = arith.constant 0 : i32
    return %c0_i32, %c0_i32_0 : i32, i32
  }
  func.func @transform_3(%arg0: i32) -> (i32, i32) {
    %c0_i32 = arith.constant 0 : i32
    %c0_i32_0 = arith.constant 0 : i32
    %c0_i32_1 = arith.constant 0 : i32
    return %c0_i32, %c0_i32_0 : i32, i32
  }
  func.func @transform_4(%arg0: i32) -> (i32, i32) {
    %c0_i32 = arith.constant 0 : i32
    %c0_i32_0 = arith.constant 0 : i32
    return %arg0, %c0_i32 : i32, i32
  }
  func.func @transform_5(%arg0: i32) -> (i32, i32) {
    %c0_i32 = arith.constant 0 : i32
    %c0_i32_0 = arith.constant 0 : i32
    return %arg0, %c0_i32 : i32, i32
  }
}

module attributes {stable_mosaic.version = 11 : i64} {
  func.func @_bn_leaky_res_kernel(%arg0: i32, %arg1: memref<512x128xbf16, #tpu.memory_space<vmem>>, %arg2: memref<512x128xf32, #tpu.memory_space<vmem>>, %arg3: memref<1x128xf32, #tpu.memory_space<vmem>>, %arg4: memref<1x128xf32, #tpu.memory_space<vmem>>, %arg5: memref<512x128xf32, #tpu.memory_space<vmem>>, %arg6: memref<512x128xbf16, #tpu.memory_space<vmem>>) attributes {dimension_semantics = [#tpu.dimension_semantics<parallel>], iteration_bounds = array<i64: 1>, scalar_prefetch = 0 : i64, scratch_operands = 0 : i64, tpu.core_type = #tpu.core_type<tc>, window_params = [{transform_indices = @transform_0, window_bounds = array<i64: 512, 128>}, {transform_indices = @transform_1, window_bounds = array<i64: 512, 128>}, {pipeline_mode = #tpu.pipeline_mode<synchronous>, transform_indices = @transform_2, window_bounds = array<i64: 1, 128>}, {pipeline_mode = #tpu.pipeline_mode<synchronous>, transform_indices = @transform_3, window_bounds = array<i64: 1, 128>}, {transform_indices = @transform_4, window_bounds = array<i64: 512, 128>}, {transform_indices = @transform_5, window_bounds = array<i64: 512, 128>}]} {
    %c0 = arith.constant 0 : index
    %c0_0 = arith.constant 0 : index
    %0 = vector.load %arg1[%c0, %c0_0] : memref<512x128xbf16, #tpu.memory_space<vmem>>, vector<512x128xbf16>
    %1 = arith.extf %0 : vector<512x128xbf16> to vector<512x128xf32>
    %c0_1 = arith.constant 0 : index
    %c0_2 = arith.constant 0 : index
    %2 = vector.load %arg3[%c0_1, %c0_2] : memref<1x128xf32, #tpu.memory_space<vmem>>, vector<1x128xf32>
    %3 = vector.broadcast %2 : vector<1x128xf32> to vector<512x128xf32>
    %4 = arith.mulf %1, %3 : vector<512x128xf32>
    %c0_3 = arith.constant 0 : index
    %c0_4 = arith.constant 0 : index
    %5 = vector.load %arg4[%c0_3, %c0_4] : memref<1x128xf32, #tpu.memory_space<vmem>>, vector<1x128xf32>
    %6 = vector.broadcast %5 : vector<1x128xf32> to vector<512x128xf32>
    %7 = arith.addf %4, %6 : vector<512x128xf32>
    %cst = arith.constant 0.000000e+00 : f32
    %8 = vector.broadcast %cst : f32 to vector<512x128xf32>
    %9 = arith.cmpf ogt, %7, %8 : vector<512x128xf32>
    %cst_5 = arith.constant 1.000000e-01 : f32
    %10 = vector.broadcast %cst_5 : f32 to vector<512x128xf32>
    %11 = arith.mulf %10, %7 : vector<512x128xf32>
    %12 = arith.select %9, %7, %11 : vector<512x128xi1>, vector<512x128xf32>
    %c0_6 = arith.constant 0 : index
    %c0_7 = arith.constant 0 : index
    %13 = vector.load %arg2[%c0_6, %c0_7] : memref<512x128xf32, #tpu.memory_space<vmem>>, vector<512x128xf32>
    %14 = arith.addf %13, %12 : vector<512x128xf32>
    %c0_8 = arith.constant 0 : index
    %c0_9 = arith.constant 0 : index
    %15 = vector.load %arg5[%c0_8, %c0_9] : memref<512x128xf32, #tpu.memory_space<vmem>>, vector<512x128xf32>
    tpu.vector_store %arg5[%c0_8, %c0_9], %14 {strides = array<i32>} : memref<512x128xf32, #tpu.memory_space<vmem>>, vector<512x128xf32>,
    %16 = arith.truncf %14 : vector<512x128xf32> to vector<512x128xbf16>
    %c0_10 = arith.constant 0 : index
    %c0_11 = arith.constant 0 : index
    %17 = vector.load %arg6[%c0_10, %c0_11] : memref<512x128xbf16, #tpu.memory_space<vmem>>, vector<512x128xbf16>
    tpu.vector_store %arg6[%c0_10, %c0_11], %16 {strides = array<i32>} : memref<512x128xbf16, #tpu.memory_space<vmem>>, vector<512x128xbf16>,
    return
  }
  func.func @transform_0(%arg0: i32) -> (i32, i32) {
    %c0_i32 = arith.constant 0 : i32
    %c0_i32_0 = arith.constant 0 : i32
    return %arg0, %c0_i32 : i32, i32
  }
  func.func @transform_1(%arg0: i32) -> (i32, i32) {
    %c0_i32 = arith.constant 0 : i32
    %c0_i32_0 = arith.constant 0 : i32
    return %arg0, %c0_i32 : i32, i32
  }
  func.func @transform_2(%arg0: i32) -> (i32, i32) {
    %c0_i32 = arith.constant 0 : i32
    %c0_i32_0 = arith.constant 0 : i32
    %c0_i32_1 = arith.constant 0 : i32
    return %c0_i32, %c0_i32_0 : i32, i32
  }
  func.func @transform_3(%arg0: i32) -> (i32, i32) {
    %c0_i32 = arith.constant 0 : i32
    %c0_i32_0 = arith.constant 0 : i32
    %c0_i32_1 = arith.constant 0 : i32
    return %c0_i32, %c0_i32_0 : i32, i32
  }
  func.func @transform_4(%arg0: i32) -> (i32, i32) {
    %c0_i32 = arith.constant 0 : i32
    %c0_i32_0 = arith.constant 0 : i32
    return %arg0, %c0_i32 : i32, i32
  }
  func.func @transform_5(%arg0: i32) -> (i32, i32) {
    %c0_i32 = arith.constant 0 : i32
    %c0_i32_0 = arith.constant 0 : i32
    return %arg0, %c0_i32 : i32, i32
  }
}

</mosaic_0001>

<llo_original>
// kernel: residual_block.8
$region0: #{residual_block.8}
  #allocation0 [shape = 'u32[]', space=smem, size = 0x4, offset = 0x4, fixed_abs, tag = 'smem constant byte address 0x4 - core index']
  #allocation1 [shape = 'u32[72,128]{1,0:T(1,128)}', space=vmem, size = 0x9000, scoped, tag = 'internal scratch']
  %s0 = inlined_call_operand.vmem [shape: bf16[512,128], index: 0, kind: input, shape index: {}]
  %s1 = inlined_call_operand.vmem [shape: f32[512,128], index: 1, kind: input, shape index: {}]
  %s2 = inlined_call_operand.vmem [shape: f32[1,128], index: 2, kind: input, shape index: {}]
  %s3 = inlined_call_operand.vmem [shape: f32[1,128], index: 3, kind: input, shape index: {}]
  %s4 = inlined_call_operand.vmem [shape: f32[512,128], index: 4, kind: output, shape index: {0}]
  %s5 = inlined_call_operand.vmem [shape: bf16[512,128], index: 5, kind: output, shape index: {1}]
  %6 = xla_tuple %s4, %s5
  %s7 = sld [smem:[#allocation0]]
  $region34: #{residual_block.8} parent=0
    _
  %s9 = ssub.s32 1, %s7
  %s10 = scalar_select 0, %s9, %s7
  // Predicated region
  $region2: #{residual_block.8} parent=0 // pred_check
    _
  $region3: #{residual_block.8} parent=0 // pred_check_branch
    %12 = sbr.rel (0) target = $region5
  $region4: #{residual_block.8} parent=0 // pred_region
    _
  $region5: #{residual_block.8} parent=0 // pred_fallthru
    _
  // Predicated region
  $region6: #{residual_block.8} parent=0 // pred_check
    _
  $region7: #{residual_block.8} parent=0 // pred_check_branch
    %14 = sbr.rel (0) target = $region9
  $region8: #{residual_block.8} parent=0 // pred_region
    _
  $region9: #{residual_block.8} parent=0 // pred_fallthru
    _
  // Predicated region
  $region10: #{residual_block.8} parent=0 // pred_check
    _
  $region11: #{residual_block.8} parent=0 // pred_check_branch
    %16 = sbr.rel (0) target = $region13
  $region12: #{residual_block.8} parent=0 // pred_region
    _
  $region13: #{residual_block.8} parent=0 // pred_fallthru
    _
  // Predicated region
  $region14: #{residual_block.8} parent=0 // pred_check
    _
  $region15: #{residual_block.8} parent=0 // pred_check_branch
    %18 = sbr.rel (0) target = $region17
  $region16: #{residual_block.8} parent=0 // pred_region
    _
  $region17: #{residual_block.8} parent=0 // pred_fallthru
    _
  %v19 = vld [vmem:[%s0] sm:$0xf]
  %v20 = vld [vmem:[%s0 + $0x4] sm:$0xf]
  %v21 = vld [vmem:[%s0 + $0x8] sm:$0xf]
  %v22 = vld [vmem:[%s0 + $0xc] sm:$0xf]
  %v23 = vld [vmem:[%s0 + $0x10] sm:$0xf]
  %v24 = vld [vmem:[%s0 + $0x14] sm:$0xf]
  %v25 = vld [vmem:[%s0 + $0x18] sm:$0xf]
  %v26 = vld [vmem:[%s0 + $0x1c] sm:$0xf]
  %v27 = vld [vmem:[%s0 + $0x20] sm:$0xf]
  %v28 = vld [vmem:[%s0 + $0x24] sm:$0xf]
  %v29 = vld [vmem:[%s0 + $0x28] sm:$0xf]
  %v30 = vld [vmem:[%s0 + $0x2c] sm:$0xf]
  %v31 = vld [vmem:[%s0 + $0x30] sm:$0xf]
  %v32 = vld [vmem:[%s0 + $0x34] sm:$0xf]
  %v33 = vld [vmem:[%s0 + $0x38] sm:$0xf]
  %v34 = vld [vmem:[%s0 + $0x3c] sm:$0xf]
  %v35 = vld [vmem:[%s0 + $0x40] sm:$0xf]
  %v36 = vld [vmem:[%s0 + $0x44] sm:$0xf]
  %v37 = vld [vmem:[%s0 + $0x48] sm:$0xf]
  %v38 = vld [vmem:[%s0 + $0x4c] sm:$0xf]
  %v39 = vld [vmem:[%s0 + $0x50] sm:$0xf]
  %v40 = vld [vmem:[%s0 + $0x54] sm:$0xf]
  %v41 = vld [vmem:[%s0 + $0x58] sm:$0xf]
  %v42 = vld [vmem:[%s0 + $0x5c] sm:$0xf]
  %v43 = vld [vmem:[%s0 + $0x60] sm:$0xf]
  %v44 = vld [vmem:[%s0 + $0x64] sm:$0xf]
  %v45 = vld [vmem:[%s0 + $0x68] sm:$0xf]
  %v46 = vld [vmem:[%s0 + $0x6c] sm:$0xf]
  %v47 = vld [vmem:[%s0 + $0x70] sm:$0xf]
  %v48 = vld [vmem:[%s0 + $0x74] sm:$0xf]
  %v49 = vld [vmem:[%s0 + $0x78] sm:$0xf]
  %v50 = vld [vmem:[%s0 + $0x7c] sm:$0xf]
  %v51 = vld [vmem:[%s0 + $0x80] sm:$0xf]
  %v52 = vld [vmem:[%s0 + $0x84] sm:$0xf]
  %v53 = vld [vmem:[%s0 + $0x88] sm:$0xf]
  %v54 = vld [vmem:[%s0 + $0x8c] sm:$0xf]
  %v55 = vld [vmem:[%s0 + $0x90] sm:$0xf]
  %v56 = vld [vmem:[%s0 + $0x94] sm:$0xf]
  %v57 = vld [vmem:[%s0 + $0x98] sm:$0xf]
  %v58 = vld [vmem:[%s0 + $0x9c] sm:$0xf]
  %v59 = vld [vmem:[%s0 + $0xa0] sm:$0xf]
  %v60 = vld [vmem:[%s0 + $0xa4] sm:$0xf]
  %v61 = vld [vmem:[%s0 + $0xa8] sm:$0xf]
  %v62 = vld [vmem:[%s0 + $0xac] sm:$0xf]
  %v63 = vld [vmem:[%s0 + $0xb0] sm:$0xf]
  %v64 = vld [vmem:[%s0 + $0xb4] sm:$0xf]
  %v65 = vld [vmem:[%s0 + $0xb8] sm:$0xf]
  %v66 = vld [vmem:[%s0 + $0xbc] sm:$0xf]
  %v67 = vld [vmem:[%s0 + $0xc0] sm:$0xf]
  %v68 = vld [vmem:[%s0 + $0xc4] sm:$0xf]
  %v69 = vld [vmem:[%s0 + $0xc8] sm:$0xf]
  %v70 = vld [vmem:[%s0 + $0xcc] sm:$0xf]
  %v71 = vld [vmem:[%s0 + $0xd0] sm:$0xf]
  %v72 = vld [vmem:[%s0 + $0xd4] sm:$0xf]
  %v73 = vld [vmem:[%s0 + $0xd8] sm:$0xf]
  %v74 = vld [vmem:[%s0 + $0xdc] sm:$0xf]
  %v75 = vld [vmem:[%s0 + $0xe0] sm:$0xf]
  %v76 = vld [vmem:[%s0 + $0xe4] sm:$0xf]
  %v77 = vld [vmem:[%s0 + $0xe8] sm:$0xf]
  %v78 = vld [vmem:[%s0 + $0xec] sm:$0xf]
  %v79 = vld [vmem:[%s0 + $0xf0] sm:$0xf]
  %v80 = vld [vmem:[%s0 + $0xf4] sm:$0xf]
  %v81 = vld [vmem:[%s0 + $0xf8] sm:$0xf]
  %v82 = vld [vmem:[%s0 + $0xfc] sm:$0xf]
  %v83 = vunpack.c.l.bf16 %v19
  %v84 = vunpack.c.l.bf16 %v20
  %v85 = vunpack.c.l.bf16 %v21
  %v86 = vunpack.c.l.bf16 %v22
  %v87 = vunpack.c.l.bf16 %v23
  %v88 = vunpack.c.l.bf16 %v24
  %v89 = vunpack.c.l.bf16 %v25
  %v90 = vunpack.c.l.bf16 %v26
  %v91 = vunpack.c.l.bf16 %v27
  %v92 = vunpack.c.l.bf16 %v28
  %v93 = vunpack.c.l.bf16 %v29
  %v94 = vunpack.c.l.bf16 %v30
  %v95 = vunpack.c.l.bf16 %v31
  %v96 = vunpack.c.l.bf16 %v32
  %v97 = vunpack.c.l.bf16 %v33
  %v98 = vunpack.c.l.bf16 %v34
  %v99 = vunpack.c.l.bf16 %v35
  %v100 = vunpack.c.l.bf16 %v36
  %v101 = vunpack.c.l.bf16 %v37
  %v102 = vunpack.c.l.bf16 %v38
  %v103 = vunpack.c.l.bf16 %v39
  %v104 = vunpack.c.l.bf16 %v40
  %v105 = vunpack.c.l.bf16 %v41
  %v106 = vunpack.c.l.bf16 %v42
  %v107 = vunpack.c.l.bf16 %v43
  %v108 = vunpack.c.l.bf16 %v44
  %v109 = vunpack.c.l.bf16 %v45
  %v110 = vunpack.c.l.bf16 %v46
  %v111 = vunpack.c.l.bf16 %v47
  %v112 = vunpack.c.l.bf16 %v48
  %v113 = vunpack.c.l.bf16 %v49
  %v114 = vunpack.c.l.bf16 %v50
  %v115 = vunpack.c.l.bf16 %v51
  %v116 = vunpack.c.l.bf16 %v52
  %v117 = vunpack.c.l.bf16 %v53
  %v118 = vunpack.c.l.bf16 %v54
  %v119 = vunpack.c.l.bf16 %v55
  %v120 = vunpack.c.l.bf16 %v56
  %v121 = vunpack.c.l.bf16 %v57
  %v122 = vunpack.c.l.bf16 %v58
  %v123 = vunpack.c.l.bf16 %v59
  %v124 = vunpack.c.l.bf16 %v60
  %v125 = vunpack.c.l.bf16 %v61
  %v126 = vunpack.c.l.bf16 %v62
  %v127 = vunpack.c.l.bf16 %v63
  %v128 = vunpack.c.l.bf16 %v64
  %v129 = vunpack.c.l.bf16 %v65
  %v130 = vunpack.c.l.bf16 %v66
  %v131 = vunpack.c.l.bf16 %v67
  %v132 = vunpack.c.l.bf16 %v68
  %v133 = vunpack.c.l.bf16 %v69
  %v134 = vunpack.c.l.bf16 %v70
  %v135 = vunpack.c.l.bf16 %v71
  %v136 = vunpack.c.l.bf16 %v72
  %v137 = vunpack.c.l.bf16 %v73
  %v138 = vunpack.c.l.bf16 %v74
  %v139 = vunpack.c.l.bf16 %v75
  %v140 = vunpack.c.l.bf16 %v76
  %v141 = vunpack.c.l.bf16 %v77
  %v142 = vunpack.c.l.bf16 %v78
  %v143 = vunpack.c.l.bf16 %v79
  %v144 = vunpack.c.l.bf16 %v80
  %v145 = vunpack.c.l.bf16 %v81
  %v146 = vunpack.c.l.bf16 %v82
  %v147 = vld [vmem:[%s2] sm:$0x1]
  %v149 = vperm.slane %v147, 0
  %v151 = vmul.f32 %v83, %v149
  %v152 = vmul.f32 %v84, %v149
  %v153 = vmul.f32 %v85, %v149
  %v154 = vmul.f32 %v86, %v149
  %v155 = vmul.f32 %v87, %v149
  %v156 = vmul.f32 %v88, %v149
  %v157 = vmul.f32 %v89, %v149
  %v158 = vmul.f32 %v90, %v149
  %v159 = vmul.f32 %v91, %v149
  %v160 = vmul.f32 %v92, %v149
  %v161 = vmul.f32 %v93, %v149
  %v162 = vmul.f32 %v94, %v149
  %v163 = vmul.f32 %v95, %v149
  %v164 = vmul.f32 %v96, %v149
  %v165 = vmul.f32 %v97, %v149
  %v166 = vmul.f32 %v98, %v149
  %v167 = vmul.f32 %v99, %v149
  %v168 = vmul.f32 %v100, %v149
  %v169 = vmul.f32 %v101, %v149
  %v170 = vmul.f32 %v102, %v149
  %v171 = vmul.f32 %v103, %v149
  %v172 = vmul.f32 %v104, %v149
  %v173 = vmul.f32 %v105, %v149
  %v174 = vmul.f32 %v106, %v149
  %v175 = vmul.f32 %v107, %v149
  %v176 = vmul.f32 %v108, %v149
  %v177 = vmul.f32 %v109, %v149
  %v178 = vmul.f32 %v110, %v149
  %v179 = vmul.f32 %v111, %v149
  %v180 = vmul.f32 %v112, %v149
  %v181 = vmul.f32 %v113, %v149
  %v182 = vmul.f32 %v114, %v149
  %v183 = vmul.f32 %v115, %v149
  %v184 = vmul.f32 %v116, %v149
  %v185 = vmul.f32 %v117, %v149
  %v186 = vmul.f32 %v118, %v149
  %v187 = vmul.f32 %v119, %v149
  %v188 = vmul.f32 %v120, %v149
  %v189 = vmul.f32 %v121, %v149
  %v190 = vmul.f32 %v122, %v149
  %v191 = vmul.f32 %v123, %v149
  %v192 = vmul.f32 %v124, %v149
  %v193 = vmul.f32 %v125, %v149
  %v194 = vmul.f32 %v126, %v149
  %v195 = vmul.f32 %v127, %v149
  %v196 = vmul.f32 %v128, %v149
  %v197 = vmul.f32 %v129, %v149
  %v198 = vmul.f32 %v130, %v149
  %v199 = vmul.f32 %v131, %v149
  %v200 = vmul.f32 %v132, %v149
  %v201 = vmul.f32 %v133, %v149
  %v202 = vmul.f32 %v134, %v149
  %v203 = vmul.f32 %v135, %v149
  %v204 = vmul.f32 %v136, %v149
  %v205 = vmul.f32 %v137, %v149
  %v206 = vmul.f32 %v138, %v149
  %v207 = vmul.f32 %v139, %v149
  %v208 = vmul.f32 %v140, %v149
  %v209 = vmul.f32 %v141, %v149
  %v210 = vmul.f32 %v142, %v149
  %v211 = vmul.f32 %v143, %v149
  %v212 = vmul.f32 %v144, %v149
  %v213 = vmul.f32 %v145, %v149
  %v214 = vmul.f32 %v146, %v149
  %v215 = vld [vmem:[%s3] sm:$0x1]
  %v217 = vperm.slane %v215, 0
  %v219 = vadd.f32 %v151, %v217
  %v220 = vadd.f32 %v152, %v217
  %v221 = vadd.f32 %v153, %v217
  %v222 = vadd.f32 %v154, %v217
  %v223 = vadd.f32 %v155, %v217
  %v224 = vadd.f32 %v156, %v217
  %v225 = vadd.f32 %v157, %v217
  %v226 = vadd.f32 %v158, %v217
  %v227 = vadd.f32 %v159, %v217
  %v228 = vadd.f32 %v160, %v217
  %v229 = vadd.f32 %v161, %v217
  %v230 = vadd.f32 %v162, %v217
  %v231 = vadd.f32 %v163, %v217
  %v232 = vadd.f32 %v164, %v217
  %v233 = vadd.f32 %v165, %v217
  %v234 = vadd.f32 %v166, %v217
  %v235 = vadd.f32 %v167, %v217
  %v236 = vadd.f32 %v168, %v217
  %v237 = vadd.f32 %v169, %v217
  %v238 = vadd.f32 %v170, %v217
  %v239 = vadd.f32 %v171, %v217
  %v240 = vadd.f32 %v172, %v217
  %v241 = vadd.f32 %v173, %v217
  %v242 = vadd.f32 %v174, %v217
  %v243 = vadd.f32 %v175, %v217
  %v244 = vadd.f32 %v176, %v217
  %v245 = vadd.f32 %v177, %v217
  %v246 = vadd.f32 %v178, %v217
  %v247 = vadd.f32 %v179, %v217
  %v248 = vadd.f32 %v180, %v217
  %v249 = vadd.f32 %v181, %v217
  %v250 = vadd.f32 %v182, %v217
  %v251 = vadd.f32 %v183, %v217
  %v252 = vadd.f32 %v184, %v217
  %v253 = vadd.f32 %v185, %v217
  %v254 = vadd.f32 %v186, %v217
  %v255 = vadd.f32 %v187, %v217
  %v256 = vadd.f32 %v188, %v217
  %v257 = vadd.f32 %v189, %v217
  %v258 = vadd.f32 %v190, %v217
  %v259 = vadd.f32 %v191, %v217
  %v260 = vadd.f32 %v192, %v217
  %v261 = vadd.f32 %v193, %v217
  %v262 = vadd.f32 %v194, %v217
  %v263 = vadd.f32 %v195, %v217
  %v264 = vadd.f32 %v196, %v217
  %v265 = vadd.f32 %v197, %v217
  %v266 = vadd.f32 %v198, %v217
  %v267 = vadd.f32 %v199, %v217
  %v268 = vadd.f32 %v200, %v217
  %v269 = vadd.f32 %v201, %v217
  %v270 = vadd.f32 %v202, %v217
  %v271 = vadd.f32 %v203, %v217
  %v272 = vadd.f32 %v204, %v217
  %v273 = vadd.f32 %v205, %v217
  %v274 = vadd.f32 %v206, %v217
  %v275 = vadd.f32 %v207, %v217
  %v276 = vadd.f32 %v208, %v217
  %v277 = vadd.f32 %v209, %v217
  %v278 = vadd.f32 %v210, %v217
  %v279 = vadd.f32 %v211, %v217
  %v280 = vadd.f32 %v212, %v217
  %v281 = vadd.f32 %v213, %v217
  %v282 = vadd.f32 %v214, %v217
  %vm283 = vcmp.gt.f32.partialorder %v219, 0.0
  %vm284 = vcmp.gt.f32.partialorder %v220, 0.0
  %vm285 = vcmp.gt.f32.partialorder %v221, 0.0
  %vm286 = vcmp.gt.f32.partialorder %v222, 0.0
  %vm287 = vcmp.gt.f32.partialorder %v223, 0.0
  %vm288 = vcmp.gt.f32.partialorder %v224, 0.0
  %vm289 = vcmp.gt.f32.partialorder %v225, 0.0
  %vm290 = vcmp.gt.f32.partialorder %v226, 0.0
  %vm291 = vcmp.gt.f32.partialorder %v227, 0.0
  %vm292 = vcmp.gt.f32.partialorder %v228, 0.0
  %vm293 = vcmp.gt.f32.partialorder %v229, 0.0
  %vm294 = vcmp.gt.f32.partialorder %v230, 0.0
  %vm295 = vcmp.gt.f32.partialorder %v231, 0.0
  %vm296 = vcmp.gt.f32.partialorder %v232, 0.0
  %vm297 = vcmp.gt.f32.partialorder %v233, 0.0
  %vm298 = vcmp.gt.f32.partialorder %v234, 0.0
  %vm299 = vcmp.gt.f32.partialorder %v235, 0.0
  %vm300 = vcmp.gt.f32.partialorder %v236, 0.0
  %vm301 = vcmp.gt.f32.partialorder %v237, 0.0
  %vm302 = vcmp.gt.f32.partialorder %v238, 0.0
  %vm303 = vcmp.gt.f32.partialorder %v239, 0.0
  %vm304 = vcmp.gt.f32.partialorder %v240, 0.0
  %vm305 = vcmp.gt.f32.partialorder %v241, 0.0
  %vm306 = vcmp.gt.f32.partialorder %v242, 0.0
  %vm307 = vcmp.gt.f32.partialorder %v243, 0.0
  %vm308 = vcmp.gt.f32.partialorder %v244, 0.0
  %vm309 = vcmp.gt.f32.partialorder %v245, 0.0
  %vm310 = vcmp.gt.f32.partialorder %v246, 0.0
  %vm311 = vcmp.gt.f32.partialorder %v247, 0.0
  %vm312 = vcmp.gt.f32.partialorder %v248, 0.0
  %vm313 = vcmp.gt.f32.partialorder %v249, 0.0
  %vm314 = vcmp.gt.f32.partialorder %v250, 0.0
  %vm315 = vcmp.gt.f32.partialorder %v251, 0.0
  %vm316 = vcmp.gt.f32.partialorder %v252, 0.0
  %vm317 = vcmp.gt.f32.partialorder %v253, 0.0
  %vm318 = vcmp.gt.f32.partialorder %v254, 0.0
  %vm319 = vcmp.gt.f32.partialorder %v255, 0.0
  %vm320 = vcmp.gt.f32.partialorder %v256, 0.0
  %vm321 = vcmp.gt.f32.partialorder %v257, 0.0
  %vm322 = vcmp.gt.f32.partialorder %v258, 0.0
  %vm323 = vcmp.gt.f32.partialorder %v259, 0.0
  %vm324 = vcmp.gt.f32.partialorder %v260, 0.0
  %vm325 = vcmp.gt.f32.partialorder %v261, 0.0
  %vm326 = vcmp.gt.f32.partialorder %v262, 0.0
  %vm327 = vcmp.gt.f32.partialorder %v263, 0.0
  %vm328 = vcmp.gt.f32.partialorder %v264, 0.0
  %vm329 = vcmp.gt.f32.partialorder %v265, 0.0
  %vm330 = vcmp.gt.f32.partialorder %v266, 0.0
  %vm331 = vcmp.gt.f32.partialorder %v267, 0.0
  %vm332 = vcmp.gt.f32.partialorder %v268, 0.0
  %vm333 = vcmp.gt.f32.partialorder %v269, 0.0
  %vm334 = vcmp.gt.f32.partialorder %v270, 0.0
  %vm335 = vcmp.gt.f32.partialorder %v271, 0.0
  %vm336 = vcmp.gt.f32.partialorder %v272, 0.0
  %vm337 = vcmp.gt.f32.partialorder %v273, 0.0
  %vm338 = vcmp.gt.f32.partialorder %v274, 0.0
  %vm339 = vcmp.gt.f32.partialorder %v275, 0.0
  %vm340 = vcmp.gt.f32.partialorder %v276, 0.0
  %vm341 = vcmp.gt.f32.partialorder %v277, 0.0
  %vm342 = vcmp.gt.f32.partialorder %v278, 0.0
  %vm343 = vcmp.gt.f32.partialorder %v279, 0.0
  %vm344 = vcmp.gt.f32.partialorder %v280, 0.0
  %vm345 = vcmp.gt.f32.partialorder %v281, 0.0
  %vm346 = vcmp.gt.f32.partialorder %v282, 0.0
  %v347 = vmul.f32 %v219, 0.1
  %v348 = vmul.f32 %v220, 0.1
  %v349 = vmul.f32 %v221, 0.1
  %v350 = vmul.f32 %v222, 0.1
  %v351 = vmul.f32 %v223, 0.1
  %v352 = vmul.f32 %v224, 0.1
  %v353 = vmul.f32 %v225, 0.1
  %v354 = vmul.f32 %v226, 0.1
  %v355 = vmul.f32 %v227, 0.1
  %v356 = vmul.f32 %v228, 0.1
  %v357 = vmul.f32 %v229, 0.1
  %v358 = vmul.f32 %v230, 0.1
  %v359 = vmul.f32 %v231, 0.1
  %v360 = vmul.f32 %v232, 0.1
  %v361 = vmul.f32 %v233, 0.1
  %v362 = vmul.f32 %v234, 0.1
  %v363 = vmul.f32 %v235, 0.1
  %v364 = vmul.f32 %v236, 0.1
  %v365 = vmul.f32 %v237, 0.1
  %v366 = vmul.f32 %v238, 0.1
  %v367 = vmul.f32 %v239, 0.1
  %v368 = vmul.f32 %v240, 0.1
  %v369 = vmul.f32 %v241, 0.1
  %v370 = vmul.f32 %v242, 0.1
  %v371 = vmul.f32 %v243, 0.1
  %v372 = vmul.f32 %v244, 0.1
  %v373 = vmul.f32 %v245, 0.1
  %v374 = vmul.f32 %v246, 0.1
  %v375 = vmul.f32 %v247, 0.1
  %v376 = vmul.f32 %v248, 0.1
  %v377 = vmul.f32 %v249, 0.1
  %v378 = vmul.f32 %v250, 0.1
  %v379 = vmul.f32 %v251, 0.1
  %v380 = vmul.f32 %v252, 0.1
  %v381 = vmul.f32 %v253, 0.1
  %v382 = vmul.f32 %v254, 0.1
  %v383 = vmul.f32 %v255, 0.1
  %v384 = vmul.f32 %v256, 0.1
  %v385 = vmul.f32 %v257, 0.1
  %v386 = vmul.f32 %v258, 0.1
  %v387 = vmul.f32 %v259, 0.1
  %v388 = vmul.f32 %v260, 0.1
  %v389 = vmul.f32 %v261, 0.1
  %v390 = vmul.f32 %v262, 0.1
  %v391 = vmul.f32 %v263, 0.1
  %v392 = vmul.f32 %v264, 0.1
  %v393 = vmul.f32 %v265, 0.1
  %v394 = vmul.f32 %v266, 0.1
  %v395 = vmul.f32 %v267, 0.1
  %v396 = vmul.f32 %v268, 0.1
  %v397 = vmul.f32 %v269, 0.1
  %v398 = vmul.f32 %v270, 0.1
  %v399 = vmul.f32 %v271, 0.1
  %v400 = vmul.f32 %v272, 0.1
  %v401 = vmul.f32 %v273, 0.1
  %v402 = vmul.f32 %v274, 0.1
  %v403 = vmul.f32 %v275, 0.1
  %v404 = vmul.f32 %v276, 0.1
  %v405 = vmul.f32 %v277, 0.1
  %v406 = vmul.f32 %v278, 0.1
  %v407 = vmul.f32 %v279, 0.1
  %v408 = vmul.f32 %v280, 0.1
  %v409 = vmul.f32 %v281, 0.1
  %v410 = vmul.f32 %v282, 0.1
  %v411 = vsel %vm283, %v219, %v347
  %v412 = vsel %vm284, %v220, %v348
  %v413 = vsel %vm285, %v221, %v349
  %v414 = vsel %vm286, %v222, %v350
  %v415 = vsel %vm287, %v223, %v351
  %v416 = vsel %vm288, %v224, %v352
  %v417 = vsel %vm289, %v225, %v353
  %v418 = vsel %vm290, %v226, %v354
  %v419 = vsel %vm291, %v227, %v355
  %v420 = vsel %vm292, %v228, %v356
  %v421 = vsel %vm293, %v229, %v357
  %v422 = vsel %vm294, %v230, %v358
  %v423 = vsel %vm295, %v231, %v359
  %v424 = vsel %vm296, %v232, %v360
  %v425 = vsel %vm297, %v233, %v361
  %v426 = vsel %vm298, %v234, %v362
  %v427 = vsel %vm299, %v235, %v363
  %v428 = vsel %vm300, %v236, %v364
  %v429 = vsel %vm301, %v237, %v365
  %v430 = vsel %vm302, %v238, %v366
  %v431 = vsel %vm303, %v239, %v367
  %v432 = vsel %vm304, %v240, %v368
  %v433 = vsel %vm305, %v241, %v369
  %v434 = vsel %vm306, %v242, %v370
  %v435 = vsel %vm307, %v243, %v371
  %v436 = vsel %vm308, %v244, %v372
  %v437 = vsel %vm309, %v245, %v373
  %v438 = vsel %vm310, %v246, %v374
  %v439 = vsel %vm311, %v247, %v375
  %v440 = vsel %vm312, %v248, %v376
  %v441 = vsel %vm313, %v249, %v377
  %v442 = vsel %vm314, %v250, %v378
  %v443 = vsel %vm315, %v251, %v379
  %v444 = vsel %vm316, %v252, %v380
  %v445 = vsel %vm317, %v253, %v381
  %v446 = vsel %vm318, %v254, %v382
  %v447 = vsel %vm319, %v255, %v383
  %v448 = vsel %vm320, %v256, %v384
  %v449 = vsel %vm321, %v257, %v385
  %v450 = vsel %vm322, %v258, %v386
  %v451 = vsel %vm323, %v259, %v387
  %v452 = vsel %vm324, %v260, %v388
  %v453 = vsel %vm325, %v261, %v389
  %v454 = vsel %vm326, %v262, %v390
  %v455 = vsel %vm327, %v263, %v391
  %v456 = vsel %vm328, %v264, %v392
  %v457 = vsel %vm329, %v265, %v393
  %v458 = vsel %vm330, %v266, %v394
  %v459 = vsel %vm331, %v267, %v395
  %v460 = vsel %vm332, %v268, %v396
  %v461 = vsel %vm333, %v269, %v397
  %v462 = vsel %vm334, %v270, %v398
  %v463 = vsel %vm335, %v271, %v399
  %v464 = vsel %vm336, %v272, %v400
  %v465 = vsel %vm337, %v273, %v401
  %v466 = vsel %vm338, %v274, %v402
  %v467 = vsel %vm339, %v275, %v403
  %v468 = vsel %vm340, %v276, %v404
  %v469 = vsel %vm341, %v277, %v405
  %v470 = vsel %vm342, %v278, %v406
  %v471 = vsel %vm343, %v279, %v407
  %v472 = vsel %vm344, %v280, %v408
  %v473 = vsel %vm345, %v281, %v409
  %v474 = vsel %vm346, %v282, %v410
  %v475 = vld [vmem:[%s1] sm:$0xff]
  %v476 = vld [vmem:[%s1 + $0x8] sm:$0xff]
  %v477 = vld [vmem:[%s1 + $0x10] sm:$0xff]
  %v478 = vld [vmem:[%s1 + $0x18] sm:$0xff]
  %v479 = vld [vmem:[%s1 + $0x20] sm:$0xff]
  %v480 = vld [vmem:[%s1 + $0x28] sm:$0xff]
  %v481 = vld [vmem:[%s1 + $0x30] sm:$0xff]
  %v482 = vld [vmem:[%s1 + $0x38] sm:$0xff]
  %v483 = vld [vmem:[%s1 + $0x40] sm:$0xff]
  %v484 = vld [vmem:[%s1 + $0x48] sm:$0xff]
  %v485 = vld [vmem:[%s1 + $0x50] sm:$0xff]
  %v486 = vld [vmem:[%s1 + $0x58] sm:$0xff]
  %v487 = vld [vmem:[%s1 + $0x60] sm:$0xff]
  %v488 = vld [vmem:[%s1 + $0x68] sm:$0xff]
  %v489 = vld [vmem:[%s1 + $0x70] sm:$0xff]
  %v490 = vld [vmem:[%s1 + $0x78] sm:$0xff]
  %v491 = vld [vmem:[%s1 + $0x80] sm:$0xff]
  %v492 = vld [vmem:[%s1 + $0x88] sm:$0xff]
  %v493 = vld [vmem:[%s1 + $0x90] sm:$0xff]
  %v494 = vld [vmem:[%s1 + $0x98] sm:$0xff]
  %v495 = vld [vmem:[%s1 + $0xa0] sm:$0xff]
  %v496 = vld [vmem:[%s1 + $0xa8] sm:$0xff]
  %v497 = vld [vmem:[%s1 + $0xb0] sm:$0xff]
  %v498 = vld [vmem:[%s1 + $0xb8] sm:$0xff]
  %v499 = vld [vmem:[%s1 + $0xc0] sm:$0xff]
  %v500 = vld [vmem:[%s1 + $0xc8] sm:$0xff]
  %v501 = vld [vmem:[%s1 + $0xd0] sm:$0xff]
  %v502 = vld [vmem:[%s1 + $0xd8] sm:$0xff]
  %v503 = vld [vmem:[%s1 + $0xe0] sm:$0xff]
  %v504 = vld [vmem:[%s1 + $0xe8] sm:$0xff]
  %v505 = vld [vmem:[%s1 + $0xf0] sm:$0xff]
  %v506 = vld [vmem:[%s1 + $0xf8] sm:$0xff]
  %v507 = vld [vmem:[%s1 + $0x100] sm:$0xff]
  %v508 = vld [vmem:[%s1 + $0x108] sm:$0xff]
  %v509 = vld [vmem:[%s1 + $0x110] sm:$0xff]
  %v510 = vld [vmem:[%s1 + $0x118] sm:$0xff]
  %v511 = vld [vmem:[%s1 + $0x120] sm:$0xff]
  %v512 = vld [vmem:[%s1 + $0x128] sm:$0xff]
  %v513 = vld [vmem:[%s1 + $0x130] sm:$0xff]
  %v514 = vld [vmem:[%s1 + $0x138] sm:$0xff]
  %v515 = vld [vmem:[%s1 + $0x140] sm:$0xff]
  %v516 = vld [vmem:[%s1 + $0x148] sm:$0xff]
  %v517 = vld [vmem:[%s1 + $0x150] sm:$0xff]
  %v518 = vld [vmem:[%s1 + $0x158] sm:$0xff]
  %v519 = vld [vmem:[%s1 + $0x160] sm:$0xff]
  %v520 = vld [vmem:[%s1 + $0x168] sm:$0xff]
  %v521 = vld [vmem:[%s1 + $0x170] sm:$0xff]
  %v522 = vld [vmem:[%s1 + $0x178] sm:$0xff]
  %v523 = vld [vmem:[%s1 + $0x180] sm:$0xff]
  %v524 = vld [vmem:[%s1 + $0x188] sm:$0xff]
  %v525 = vld [vmem:[%s1 + $0x190] sm:$0xff]
  %v526 = vld [vmem:[%s1 + $0x198] sm:$0xff]
  %v527 = vld [vmem:[%s1 + $0x1a0] sm:$0xff]
  %v528 = vld [vmem:[%s1 + $0x1a8] sm:$0xff]
  %v529 = vld [vmem:[%s1 + $0x1b0] sm:$0xff]
  %v530 = vld [vmem:[%s1 + $0x1b8] sm:$0xff]
  %v531 = vld [vmem:[%s1 + $0x1c0] sm:$0xff]
  %v532 = vld [vmem:[%s1 + $0x1c8] sm:$0xff]
  %v533 = vld [vmem:[%s1 + $0x1d0] sm:$0xff]
  %v534 = vld [vmem:[%s1 + $0x1d8] sm:$0xff]
  %v535 = vld [vmem:[%s1 + $0x1e0] sm:$0xff]
  %v536 = vld [vmem:[%s1 + $0x1e8] sm:$0xff]
  %v537 = vld [vmem:[%s1 + $0x1f0] sm:$0xff]
  %v538 = vld [vmem:[%s1 + $0x1f8] sm:$0xff]
  %v539 = vadd.f32 %v475, %v411
  %v540 = vadd.f32 %v476, %v412
  %v541 = vadd.f32 %v477, %v413
  %v542 = vadd.f32 %v478, %v414
  %v543 = vadd.f32 %v479, %v415
  %v544 = vadd.f32 %v480, %v416
  %v545 = vadd.f32 %v481, %v417
  %v546 = vadd.f32 %v482, %v418
  %v547 = vadd.f32 %v483, %v419
  %v548 = vadd.f32 %v484, %v420
  %v549 = vadd.f32 %v485, %v421
  %v550 = vadd.f32 %v486, %v422
  %v551 = vadd.f32 %v487, %v423
  %v552 = vadd.f32 %v488, %v424
  %v553 = vadd.f32 %v489, %v425
  %v554 = vadd.f32 %v490, %v426
  %v555 = vadd.f32 %v491, %v427
  %v556 = vadd.f32 %v492, %v428
  %v557 = vadd.f32 %v493, %v429
  %v558 = vadd.f32 %v494, %v430
  %v559 = vadd.f32 %v495, %v431
  %v560 = vadd.f32 %v496, %v432
  %v561 = vadd.f32 %v497, %v433
  %v562 = vadd.f32 %v498, %v434
  %v563 = vadd.f32 %v499, %v435
  %v564 = vadd.f32 %v500, %v436
  %v565 = vadd.f32 %v501, %v437
  %v566 = vadd.f32 %v502, %v438
  %v567 = vadd.f32 %v503, %v439
  %v568 = vadd.f32 %v504, %v440
  %v569 = vadd.f32 %v505, %v441
  %v570 = vadd.f32 %v506, %v442
  %v571 = vadd.f32 %v507, %v443
  %v572 = vadd.f32 %v508, %v444
  %v573 = vadd.f32 %v509, %v445
  %v574 = vadd.f32 %v510, %v446
  %v575 = vadd.f32 %v511, %v447
  %v576 = vadd.f32 %v512, %v448
  %v577 = vadd.f32 %v513, %v449
  %v578 = vadd.f32 %v514, %v450
  %v579 = vadd.f32 %v515, %v451
  %v580 = vadd.f32 %v516, %v452
  %v581 = vadd.f32 %v517, %v453
  %v582 = vadd.f32 %v518, %v454
  %v583 = vadd.f32 %v519, %v455
  %v584 = vadd.f32 %v520, %v456
  %v585 = vadd.f32 %v521, %v457
  %v586 = vadd.f32 %v522, %v458
  %v587 = vadd.f32 %v523, %v459
  %v588 = vadd.f32 %v524, %v460
  %v589 = vadd.f32 %v525, %v461
  %v590 = vadd.f32 %v526, %v462
  %v591 = vadd.f32 %v527, %v463
  %v592 = vadd.f32 %v528, %v464
  %v593 = vadd.f32 %v529, %v465
  %v594 = vadd.f32 %v530, %v466
  %v595 = vadd.f32 %v531, %v467
  %v596 = vadd.f32 %v532, %v468
  %v597 = vadd.f32 %v533, %v469
  %v598 = vadd.f32 %v534, %v470
  %v599 = vadd.f32 %v535, %v471
  %v600 = vadd.f32 %v536, %v472
  %v601 = vadd.f32 %v537, %v473
  %v602 = vadd.f32 %v538, %v474
  %603 = vst [vmem:[%s4] sm:$0xff] %v539
  %604 = vst [vmem:[%s4 + $0x8] sm:$0xff] %v540
  %605 = vst [vmem:[%s4 + $0x10] sm:$0xff] %v541
  %606 = vst [vmem:[%s4 + $0x18] sm:$0xff] %v542
  %607 = vst [vmem:[%s4 + $0x20] sm:$0xff] %v543
  %608 = vst [vmem:[%s4 + $0x28] sm:$0xff] %v544
  %609 = vst [vmem:[%s4 + $0x30] sm:$0xff] %v545
  %610 = vst [vmem:[%s4 + $0x38] sm:$0xff] %v546
  %611 = vst [vmem:[%s4 + $0x40] sm:$0xff] %v547
  %612 = vst [vmem:[%s4 + $0x48] sm:$0xff] %v548
  %613 = vst [vmem:[%s4 + $0x50] sm:$0xff] %v549
  %614 = vst [vmem:[%s4 + $0x58] sm:$0xff] %v550
  %615 = vst [vmem:[%s4 + $0x60] sm:$0xff] %v551
  %616 = vst [vmem:[%s4 + $0x68] sm:$0xff] %v552
  %617 = vst [vmem:[%s4 + $0x70] sm:$0xff] %v553
  %618 = vst [vmem:[%s4 + $0x78] sm:$0xff] %v554
  %619 = vst [vmem:[%s4 + $0x80] sm:$0xff] %v555
  %620 = vst [vmem:[%s4 + $0x88] sm:$0xff] %v556
  %621 = vst [vmem:[%s4 + $0x90] sm:$0xff] %v557
  %622 = vst [vmem:[%s4 + $0x98] sm:$0xff] %v558
  %623 = vst [vmem:[%s4 + $0xa0] sm:$0xff] %v559
  %624 = vst [vmem:[%s4 + $0xa8] sm:$0xff] %v560
  %625 = vst [vmem:[%s4 + $0xb0] sm:$0xff] %v561
  %626 = vst [vmem:[%s4 + $0xb8] sm:$0xff] %v562
  %627 = vst [vmem:[%s4 + $0xc0] sm:$0xff] %v563
  %628 = vst [vmem:[%s4 + $0xc8] sm:$0xff] %v564
  %629 = vst [vmem:[%s4 + $0xd0] sm:$0xff] %v565
  %630 = vst [vmem:[%s4 + $0xd8] sm:$0xff] %v566
  %631 = vst [vmem:[%s4 + $0xe0] sm:$0xff] %v567
  %632 = vst [vmem:[%s4 + $0xe8] sm:$0xff] %v568
  %633 = vst [vmem:[%s4 + $0xf0] sm:$0xff] %v569
  %634 = vst [vmem:[%s4 + $0xf8] sm:$0xff] %v570
  %635 = vst [vmem:[%s4 + $0x100] sm:$0xff] %v571
  %636 = vst [vmem:[%s4 + $0x108] sm:$0xff] %v572
  %637 = vst [vmem:[%s4 + $0x110] sm:$0xff] %v573
  %638 = vst [vmem:[%s4 + $0x118] sm:$0xff] %v574
  %639 = vst [vmem:[%s4 + $0x120] sm:$0xff] %v575
  %640 = vst [vmem:[%s4 + $0x128] sm:$0xff] %v576
  %641 = vst [vmem:[%s4 + $0x130] sm:$0xff] %v577
  %642 = vst [vmem:[%s4 + $0x138] sm:$0xff] %v578
  %643 = vst [vmem:[%s4 + $0x140] sm:$0xff] %v579
  %644 = vst [vmem:[%s4 + $0x148] sm:$0xff] %v580
  %645 = vst [vmem:[%s4 + $0x150] sm:$0xff] %v581
  %646 = vst [vmem:[%s4 + $0x158] sm:$0xff] %v582
  %647 = vst [vmem:[%s4 + $0x160] sm:$0xff] %v583
  %648 = vst [vmem:[%s4 + $0x168] sm:$0xff] %v584
  %649 = vst [vmem:[%s4 + $0x170] sm:$0xff] %v585
  %650 = vst [vmem:[%s4 + $0x178] sm:$0xff] %v586
  %651 = vst [vmem:[%s4 + $0x180] sm:$0xff] %v587
  %652 = vst [vmem:[%s4 + $0x188] sm:$0xff] %v588
  %653 = vst [vmem:[%s4 + $0x190] sm:$0xff] %v589
  %654 = vst [vmem:[%s4 + $0x198] sm:$0xff] %v590
  %655 = vst [vmem:[%s4 + $0x1a0] sm:$0xff] %v591
  %656 = vst [vmem:[%s4 + $0x1a8] sm:$0xff] %v592
  %657 = vst [vmem:[%s4 + $0x1b0] sm:$0xff] %v593
  %658 = vst [vmem:[%s4 + $0x1b8] sm:$0xff] %v594
  %659 = vst [vmem:[%s4 + $0x1c0] sm:$0xff] %v595
  %660 = vst [vmem:[%s4 + $0x1c8] sm:$0xff] %v596
  %661 = vst [vmem:[%s4 + $0x1d0] sm:$0xff] %v597
  %662 = vst [vmem:[%s4 + $0x1d8] sm:$0xff] %v598
  %663 = vst [vmem:[%s4 + $0x1e0] sm:$0xff] %v599
  %664 = vst [vmem:[%s4 + $0x1e8] sm:$0xff] %v600
  %665 = vst [vmem:[%s4 + $0x1f0] sm:$0xff] %v601
  %666 = vst [vmem:[%s4 + $0x1f8] sm:$0xff] %v602
  %v667 = vpack.c.bf16 %v539, %v539
  %v668 = vpack.c.bf16 %v540, %v540
  %v669 = vpack.c.bf16 %v541, %v541
  %v670 = vpack.c.bf16 %v542, %v542
  %v671 = vpack.c.bf16 %v543, %v543
  %v672 = vpack.c.bf16 %v544, %v544
  %v673 = vpack.c.bf16 %v545, %v545
  %v674 = vpack.c.bf16 %v546, %v546
  %v675 = vpack.c.bf16 %v547, %v547
  %v676 = vpack.c.bf16 %v548, %v548
  %v677 = vpack.c.bf16 %v549, %v549
  %v678 = vpack.c.bf16 %v550, %v550
  %v679 = vpack.c.bf16 %v551, %v551
  %v680 = vpack.c.bf16 %v552, %v552
  %v681 = vpack.c.bf16 %v553, %v553
  %v682 = vpack.c.bf16 %v554, %v554
  %v683 = vpack.c.bf16 %v555, %v555
  %v684 = vpack.c.bf16 %v556, %v556
  %v685 = vpack.c.bf16 %v557, %v557
  %v686 = vpack.c.bf16 %v558, %v558
  %v687 = vpack.c.bf16 %v559, %v559
  %v688 = vpack.c.bf16 %v560, %v560
  %v689 = vpack.c.bf16 %v561, %v561
  %v690 = vpack.c.bf16 %v562, %v562
  %v691 = vpack.c.bf16 %v563, %v563
  %v692 = vpack.c.bf16 %v564, %v564
  %v693 = vpack.c.bf16 %v565, %v565
  %v694 = vpack.c.bf16 %v566, %v566
  %v695 = vpack.c.bf16 %v567, %v567
  %v696 = vpack.c.bf16 %v568, %v568
  %v697 = vpack.c.bf16 %v569, %v569
  %v698 = vpack.c.bf16 %v570, %v570
  %v699 = vpack.c.bf16 %v571, %v571
  %v700 = vpack.c.bf16 %v572, %v572
  %v701 = vpack.c.bf16 %v573, %v573
  %v702 = vpack.c.bf16 %v574, %v574
  %v703 = vpack.c.bf16 %v575, %v575
  %v704 = vpack.c.bf16 %v576, %v576
  %v705 = vpack.c.bf16 %v577, %v577
  %v706 = vpack.c.bf16 %v578, %v578
  %v707 = vpack.c.bf16 %v579, %v579
  %v708 = vpack.c.bf16 %v580, %v580
  %v709 = vpack.c.bf16 %v581, %v581
  %v710 = vpack.c.bf16 %v582, %v582
  %v711 = vpack.c.bf16 %v583, %v583
  %v712 = vpack.c.bf16 %v584, %v584
  %v713 = vpack.c.bf16 %v585, %v585
  %v714 = vpack.c.bf16 %v586, %v586
  %v715 = vpack.c.bf16 %v587, %v587
  %v716 = vpack.c.bf16 %v588, %v588
  %v717 = vpack.c.bf16 %v589, %v589
  %v718 = vpack.c.bf16 %v590, %v590
  %v719 = vpack.c.bf16 %v591, %v591
  %v720 = vpack.c.bf16 %v592, %v592
  %v721 = vpack.c.bf16 %v593, %v593
  %v722 = vpack.c.bf16 %v594, %v594
  %v723 = vpack.c.bf16 %v595, %v595
  %v724 = vpack.c.bf16 %v596, %v596
  %v725 = vpack.c.bf16 %v597, %v597
  %v726 = vpack.c.bf16 %v598, %v598
  %v727 = vpack.c.bf16 %v599, %v599
  %v728 = vpack.c.bf16 %v600, %v600
  %v729 = vpack.c.bf16 %v601, %v601
  %v730 = vpack.c.bf16 %v602, %v602
  %731 = vst [vmem:[%s5] sm:$0xf] %v667
  %732 = vst [vmem:[%s5 + $0x4] sm:$0xf] %v668
  %733 = vst [vmem:[%s5 + $0x8] sm:$0xf] %v669
  %734 = vst [vmem:[%s5 + $0xc] sm:$0xf] %v670
  %735 = vst [vmem:[%s5 + $0x10] sm:$0xf] %v671
  %736 = vst [vmem:[%s5 + $0x14] sm:$0xf] %v672
  %737 = vst [vmem:[%s5 + $0x18] sm:$0xf] %v673
  %738 = vst [vmem:[%s5 + $0x1c] sm:$0xf] %v674
  %739 = vst [vmem:[%s5 + $0x20] sm:$0xf] %v675
  %740 = vst [vmem:[%s5 + $0x24] sm:$0xf] %v676
  %741 = vst [vmem:[%s5 + $0x28] sm:$0xf] %v677
  %742 = vst [vmem:[%s5 + $0x2c] sm:$0xf] %v678
  %743 = vst [vmem:[%s5 + $0x30] sm:$0xf] %v679
  %744 = vst [vmem:[%s5 + $0x34] sm:$0xf] %v680
  %745 = vst [vmem:[%s5 + $0x38] sm:$0xf] %v681
  %746 = vst [vmem:[%s5 + $0x3c] sm:$0xf] %v682
  %747 = vst [vmem:[%s5 + $0x40] sm:$0xf] %v683
  %748 = vst [vmem:[%s5 + $0x44] sm:$0xf] %v684
  %749 = vst [vmem:[%s5 + $0x48] sm:$0xf] %v685
  %750 = vst [vmem:[%s5 + $0x4c] sm:$0xf] %v686
  %751 = vst [vmem:[%s5 + $0x50] sm:$0xf] %v687
  %752 = vst [vmem:[%s5 + $0x54] sm:$0xf] %v688
  %753 = vst [vmem:[%s5 + $0x58] sm:$0xf] %v689
  %754 = vst [vmem:[%s5 + $0x5c] sm:$0xf] %v690
  %755 = vst [vmem:[%s5 + $0x60] sm:$0xf] %v691
  %756 = vst [vmem:[%s5 + $0x64] sm:$0xf] %v692
  %757 = vst [vmem:[%s5 + $0x68] sm:$0xf] %v693
  %758 = vst [vmem:[%s5 + $0x6c] sm:$0xf] %v694
  %759 = vst [vmem:[%s5 + $0x70] sm:$0xf] %v695
  %760 = vst [vmem:[%s5 + $0x74] sm:$0xf] %v696
  %761 = vst [vmem:[%s5 + $0x78] sm:$0xf] %v697
  %762 = vst [vmem:[%s5 + $0x7c] sm:$0xf] %v698
  %763 = vst [vmem:[%s5 + $0x80] sm:$0xf] %v699
  %764 = vst [vmem:[%s5 + $0x84] sm:$0xf] %v700
  %765 = vst [vmem:[%s5 + $0x88] sm:$0xf] %v701
  %766 = vst [vmem:[%s5 + $0x8c] sm:$0xf] %v702
  %767 = vst [vmem:[%s5 + $0x90] sm:$0xf] %v703
  %768 = vst [vmem:[%s5 + $0x94] sm:$0xf] %v704
  %769 = vst [vmem:[%s5 + $0x98] sm:$0xf] %v705
  %770 = vst [vmem:[%s5 + $0x9c] sm:$0xf] %v706
  %771 = vst [vmem:[%s5 + $0xa0] sm:$0xf] %v707
  %772 = vst [vmem:[%s5 + $0xa4] sm:$0xf] %v708
  %773 = vst [vmem:[%s5 + $0xa8] sm:$0xf] %v709
  %774 = vst [vmem:[%s5 + $0xac] sm:$0xf] %v710
  %775 = vst [vmem:[%s5 + $0xb0] sm:$0xf] %v711
  %776 = vst [vmem:[%s5 + $0xb4] sm:$0xf] %v712
  %777 = vst [vmem:[%s5 + $0xb8] sm:$0xf] %v713
  %778 = vst [vmem:[%s5 + $0xbc] sm:$0xf] %v714
  %779 = vst [vmem:[%s5 + $0xc0] sm:$0xf] %v715
  %780 = vst [vmem:[%s5 + $0xc4] sm:$0xf] %v716
  %781 = vst [vmem:[%s5 + $0xc8] sm:$0xf] %v717
  %782 = vst [vmem:[%s5 + $0xcc] sm:$0xf] %v718
  %783 = vst [vmem:[%s5 + $0xd0] sm:$0xf] %v719
  %784 = vst [vmem:[%s5 + $0xd4] sm:$0xf] %v720
  %785 = vst [vmem:[%s5 + $0xd8] sm:$0xf] %v721
  %786 = vst [vmem:[%s5 + $0xdc] sm:$0xf] %v722
  %787 = vst [vmem:[%s5 + $0xe0] sm:$0xf] %v723
  %788 = vst [vmem:[%s5 + $0xe4] sm:$0xf] %v724
  %789 = vst [vmem:[%s5 + $0xe8] sm:$0xf] %v725
  %790 = vst [vmem:[%s5 + $0xec] sm:$0xf] %v726
  %791 = vst [vmem:[%s5 + $0xf0] sm:$0xf] %v727
  %792 = vst [vmem:[%s5 + $0xf4] sm:$0xf] %v728
  %793 = vst [vmem:[%s5 + $0xf8] sm:$0xf] %v729
  %794 = vst [vmem:[%s5 + $0xfc] sm:$0xf] %v730
  // Predicated region
  $region18: #{residual_block.8} parent=0 // pred_check
    _
  $region19: #{residual_block.8} parent=0 // pred_check_branch
    %796 = sbr.rel (0) target = $region21
  $region20: #{residual_block.8} parent=0 // pred_region
    _
  $region21: #{residual_block.8} parent=0 // pred_fallthru
    _
  // Predicated region
  $region22: #{residual_block.8} parent=0 // pred_check
    _
  $region23: #{residual_block.8} parent=0 // pred_check_branch
    %798 = sbr.rel (0) target = $region25
  $region24: #{residual_block.8} parent=0 // pred_region
    _
  $region25: #{residual_block.8} parent=0 // pred_fallthru
    _
  // Predicated region
  $region26: #{residual_block.8} parent=0 // pred_check
    _
  $region27: #{residual_block.8} parent=0 // pred_check_branch
    %800 = sbr.rel (0) target = $region29
  $region28: #{residual_block.8} parent=0 // pred_region
    _
  $region29: #{residual_block.8} parent=0 // pred_fallthru
    _
  // Predicated region
  $region30: #{residual_block.8} parent=0 // pred_check
    _
  $region31: #{residual_block.8} parent=0 // pred_check_branch
    %802 = sbr.rel (0) target = $region33
  $region32: #{residual_block.8} parent=0 // pred_region
    _
  $region33: #{residual_block.8} parent=0 // pred_fallthru
    _

// kernel: residual_block.6
$region0: #{residual_block.6}
  #allocation0 [shape = 'u32[]', space=smem, size = 0x4, offset = 0x4, fixed_abs, tag = 'smem constant byte address 0x4 - core index']
  #allocation1 [shape = 'u32[72,128]{1,0:T(1,128)}', space=vmem, size = 0x9000, scoped, tag = 'internal scratch']
  #allocation2 [shape = 'f32[512,128]{1,0:T(8,128)}', space=vmem, size = 0x40000, scoped, tag = 'scratch operand']
  %s0 = inlined_call_operand.vmem [shape: bf16[512,128], index: 0, kind: input, shape index: {}]
  %s1 = inlined_call_operand.vmem [shape: bf16[128,128], index: 1, kind: input, shape index: {}]
  %s2 = inlined_call_operand.vmem [shape: bf16[512,128], index: 2, kind: output, shape index: {0}]
  %s3 = inlined_call_operand.vmem [shape: f32[1,1,128], index: 3, kind: output, shape index: {1}]
  %s4 = inlined_call_operand.vmem [shape: f32[1,1,128], index: 4, kind: output, shape index: {2}]
  %5 = xla_tuple %s2, %s3, %s4
  %s6 = sld [smem:[#allocation0]]
  $region42: #{residual_block.6} parent=0
    _
  %s8 = ssub.s32 1, %s6
  %s9 = scalar_select 0, %s8, %s6
  // Predicated region
  $region2: #{residual_block.6} parent=0 // pred_check
    _
  $region3: #{residual_block.6} parent=0 // pred_check_branch
    %11 = sbr.rel (0) target = $region5
  $region4: #{residual_block.6} parent=0 // pred_region
    _
  $region5: #{residual_block.6} parent=0 // pred_fallthru
    _
  // Predicated region
  $region6: #{residual_block.6} parent=0 // pred_check
    _
  $region7: #{residual_block.6} parent=0 // pred_check_branch
    %13 = sbr.rel (0) target = $region9
  $region8: #{residual_block.6} parent=0 // pred_region
    _
  $region9: #{residual_block.6} parent=0 // pred_fallthru
    _
  %p14 = scmp.eq.s32.totalorder 0, 0
  // Predicated region
  $region10: #{residual_block.6} parent=0 // pred_check
    %p15 = pneg %p14
  $region11: #{residual_block.6} parent=0 // pred_check_branch
    %17 = sbr.rel (%p15) target = $region13
  $region12: #{residual_block.6} parent=0 // pred_region
    %18 = vst [vmem:[#allocation2] sm:$0xff] 0.0
    %19 = vst [vmem:[#allocation2 + $0x8] sm:$0xff] 0.0
    %20 = vst [vmem:[#allocation2 + $0x10] sm:$0xff] 0.0
    %21 = vst [vmem:[#allocation2 + $0x18] sm:$0xff] 0.0
    %22 = vst [vmem:[#allocation2 + $0x20] sm:$0xff] 0.0
    %23 = vst [vmem:[#allocation2 + $0x28] sm:$0xff] 0.0
    %24 = vst [vmem:[#allocation2 + $0x30] sm:$0xff] 0.0
    %25 = vst [vmem:[#allocation2 + $0x38] sm:$0xff] 0.0
    %26 = vst [vmem:[#allocation2 + $0x40] sm:$0xff] 0.0
    %27 = vst [vmem:[#allocation2 + $0x48] sm:$0xff] 0.0
    %28 = vst [vmem:[#allocation2 + $0x50] sm:$0xff] 0.0
    %29 = vst [vmem:[#allocation2 + $0x58] sm:$0xff] 0.0
    %30 = vst [vmem:[#allocation2 + $0x60] sm:$0xff] 0.0
    %31 = vst [vmem:[#allocation2 + $0x68] sm:$0xff] 0.0
    %32 = vst [vmem:[#allocation2 + $0x70] sm:$0xff] 0.0
    %33 = vst [vmem:[#allocation2 + $0x78] sm:$0xff] 0.0
    %34 = vst [vmem:[#allocation2 + $0x80] sm:$0xff] 0.0
    %35 = vst [vmem:[#allocation2 + $0x88] sm:$0xff] 0.0
    %36 = vst [vmem:[#allocation2 + $0x90] sm:$0xff] 0.0
    %37 = vst [vmem:[#allocation2 + $0x98] sm:$0xff] 0.0
    %38 = vst [vmem:[#allocation2 + $0xa0] sm:$0xff] 0.0
    %39 = vst [vmem:[#allocation2 + $0xa8] sm:$0xff] 0.0
    %40 = vst [vmem:[#allocation2 + $0xb0] sm:$0xff] 0.0
    %41 = vst [vmem:[#allocation2 + $0xb8] sm:$0xff] 0.0
    %42 = vst [vmem:[#allocation2 + $0xc0] sm:$0xff] 0.0
    %43 = vst [vmem:[#allocation2 + $0xc8] sm:$0xff] 0.0
    %44 = vst [vmem:[#allocation2 + $0xd0] sm:$0xff] 0.0
    %45 = vst [vmem:[#allocation2 + $0xd8] sm:$0xff] 0.0
    %46 = vst [vmem:[#allocation2 + $0xe0] sm:$0xff] 0.0
    %47 = vst [vmem:[#allocation2 + $0xe8] sm:$0xff] 0.0
    %48 = vst [vmem:[#allocation2 + $0xf0] sm:$0xff] 0.0
    %49 = vst [vmem:[#allocation2 + $0xf8] sm:$0xff] 0.0
    %50 = vst [vmem:[#allocation2 + $0x100] sm:$0xff] 0.0
    %51 = vst [vmem:[#allocation2 + $0x108] sm:$0xff] 0.0
    %52 = vst [vmem:[#allocation2 + $0x110] sm:$0xff] 0.0
    %53 = vst [vmem:[#allocation2 + $0x118] sm:$0xff] 0.0
    %54 = vst [vmem:[#allocation2 + $0x120] sm:$0xff] 0.0
    %55 = vst [vmem:[#allocation2 + $0x128] sm:$0xff] 0.0
    %56 = vst [vmem:[#allocation2 + $0x130] sm:$0xff] 0.0
    %57 = vst [vmem:[#allocation2 + $0x138] sm:$0xff] 0.0
    %58 = vst [vmem:[#allocation2 + $0x140] sm:$0xff] 0.0
    %59 = vst [vmem:[#allocation2 + $0x148] sm:$0xff] 0.0
    %60 = vst [vmem:[#allocation2 + $0x150] sm:$0xff] 0.0
    %61 = vst [vmem:[#allocation2 + $0x158] sm:$0xff] 0.0
    %62 = vst [vmem:[#allocation2 + $0x160] sm:$0xff] 0.0
    %63 = vst [vmem:[#allocation2 + $0x168] sm:$0xff] 0.0
    %64 = vst [vmem:[#allocation2 + $0x170] sm:$0xff] 0.0
    %65 = vst [vmem:[#allocation2 + $0x178] sm:$0xff] 0.0
    %66 = vst [vmem:[#allocation2 + $0x180] sm:$0xff] 0.0
    %67 = vst [vmem:[#allocation2 + $0x188] sm:$0xff] 0.0
    %68 = vst [vmem:[#allocation2 + $0x190] sm:$0xff] 0.0
    %69 = vst [vmem:[#allocation2 + $0x198] sm:$0xff] 0.0
    %70 = vst [vmem:[#allocation2 + $0x1a0] sm:$0xff] 0.0
    %71 = vst [vmem:[#allocation2 + $0x1a8] sm:$0xff] 0.0
    %72 = vst [vmem:[#allocation2 + $0x1b0] sm:$0xff] 0.0
    %73 = vst [vmem:[#allocation2 + $0x1b8] sm:$0xff] 0.0
    %74 = vst [vmem:[#allocation2 + $0x1c0] sm:$0xff] 0.0
    %75 = vst [vmem:[#allocation2 + $0x1c8] sm:$0xff] 0.0
    %76 = vst [vmem:[#allocation2 + $0x1d0] sm:$0xff] 0.0
    %77 = vst [vmem:[#allocation2 + $0x1d8] sm:$0xff] 0.0
    %78 = vst [vmem:[#allocation2 + $0x1e0] sm:$0xff] 0.0
    %79 = vst [vmem:[#allocation2 + $0x1e8] sm:$0xff] 0.0
    %80 = vst [vmem:[#allocation2 + $0x1f0] sm:$0xff] 0.0
    %81 = vst [vmem:[#allocation2 + $0x1f8] sm:$0xff] 0.0
  $region13: #{residual_block.6} parent=0 // pred_fallthru
    _
  %v82 = vld [vmem:[#allocation2] sm:$0xff]
  %v83 = vld [vmem:[#allocation2 + $0x8] sm:$0xff]
  %v84 = vld [vmem:[#allocation2 + $0x10] sm:$0xff]
  %v85 = vld [vmem:[#allocation2 + $0x18] sm:$0xff]
  %v86 = vld [vmem:[#allocation2 + $0x20] sm:$0xff]
  %v87 = vld [vmem:[#allocation2 + $0x28] sm:$0xff]
  %v88 = vld [vmem:[#allocation2 + $0x30] sm:$0xff]
  %v89 = vld [vmem:[#allocation2 + $0x38] sm:$0xff]
  %v90 = vld [vmem:[#allocation2 + $0x40] sm:$0xff]
  %v91 = vld [vmem:[#allocation2 + $0x48] sm:$0xff]
  %v92 = vld [vmem:[#allocation2 + $0x50] sm:$0xff]
  %v93 = vld [vmem:[#allocation2 + $0x58] sm:$0xff]
  %v94 = vld [vmem:[#allocation2 + $0x60] sm:$0xff]
  %v95 = vld [vmem:[#allocation2 + $0x68] sm:$0xff]
  %v96 = vld [vmem:[#allocation2 + $0x70] sm:$0xff]
  %v97 = vld [vmem:[#allocation2 + $0x78] sm:$0xff]
  %v98 = vld [vmem:[#allocation2 + $0x80] sm:$0xff]
  %v99 = vld [vmem:[#allocation2 + $0x88] sm:$0xff]
  %v100 = vld [vmem:[#allocation2 + $0x90] sm:$0xff]
  %v101 = vld [vmem:[#allocation2 + $0x98] sm:$0xff]
  %v102 = vld [vmem:[#allocation2 + $0xa0] sm:$0xff]
  %v103 = vld [vmem:[#allocation2 + $0xa8] sm:$0xff]
  %v104 = vld [vmem:[#allocation2 + $0xb0] sm:$0xff]
  %v105 = vld [vmem:[#allocation2 + $0xb8] sm:$0xff]
  %v106 = vld [vmem:[#allocation2 + $0xc0] sm:$0xff]
  %v107 = vld [vmem:[#allocation2 + $0xc8] sm:$0xff]
  %v108 = vld [vmem:[#allocation2 + $0xd0] sm:$0xff]
  %v109 = vld [vmem:[#allocation2 + $0xd8] sm:$0xff]
  %v110 = vld [vmem:[#allocation2 + $0xe0] sm:$0xff]
  %v111 = vld [vmem:[#allocation2 + $0xe8] sm:$0xff]
  %v112 = vld [vmem:[#allocation2 + $0xf0] sm:$0xff]
  %v113 = vld [vmem:[#allocation2 + $0xf8] sm:$0xff]
  %v114 = vld [vmem:[#allocation2 + $0x100] sm:$0xff]
  %v115 = vld [vmem:[#allocation2 + $0x108] sm:$0xff]
  %v116 = vld [vmem:[#allocation2 + $0x110] sm:$0xff]
  %v117 = vld [vmem:[#allocation2 + $0x118] sm:$0xff]
  %v118 = vld [vmem:[#allocation2 + $0x120] sm:$0xff]
  %v119 = vld [vmem:[#allocation2 + $0x128] sm:$0xff]
  %v120 = vld [vmem:[#allocation2 + $0x130] sm:$0xff]
  %v121 = vld [vmem:[#allocation2 + $0x138] sm:$0xff]
  %v122 = vld [vmem:[#allocation2 + $0x140] sm:$0xff]
  %v123 = vld [vmem:[#allocation2 + $0x148] sm:$0xff]
  %v124 = vld [vmem:[#allocation2 + $0x150] sm:$0xff]
  %v125 = vld [vmem:[#allocation2 + $0x158] sm:$0xff]
  %v126 = vld [vmem:[#allocation2 + $0x160] sm:$0xff]
  %v127 = vld [vmem:[#allocation2 + $0x168] sm:$0xff]
  %v128 = vld [vmem:[#allocation2 + $0x170] sm:$0xff]
  %v129 = vld [vmem:[#allocation2 + $0x178] sm:$0xff]
  %v130 = vld [vmem:[#allocation2 + $0x180] sm:$0xff]
  %v131 = vld [vmem:[#allocation2 + $0x188] sm:$0xff]
  %v132 = vld [vmem:[#allocation2 + $0x190] sm:$0xff]
  %v133 = vld [vmem:[#allocation2 + $0x198] sm:$0xff]
  %v134 = vld [vmem:[#allocation2 + $0x1a0] sm:$0xff]
  %v135 = vld [vmem:[#allocation2 + $0x1a8] sm:$0xff]
  %v136 = vld [vmem:[#allocation2 + $0x1b0] sm:$0xff]
  %v137 = vld [vmem:[#allocation2 + $0x1b8] sm:$0xff]
  %v138 = vld [vmem:[#allocation2 + $0x1c0] sm:$0xff]
  %v139 = vld [vmem:[#allocation2 + $0x1c8] sm:$0xff]
  %v140 = vld [vmem:[#allocation2 + $0x1d0] sm:$0xff]
  %v141 = vld [vmem:[#allocation2 + $0x1d8] sm:$0xff]
  %v142 = vld [vmem:[#allocation2 + $0x1e0] sm:$0xff]
  %v143 = vld [vmem:[#allocation2 + $0x1e8] sm:$0xff]
  %v144 = vld [vmem:[#allocation2 + $0x1f0] sm:$0xff]
  %v145 = vld [vmem:[#allocation2 + $0x1f8] sm:$0xff]
  %v146 = vld [vmem:[%s0] sm:$0xf]
  %v147 = vld [vmem:[%s0 + $0x4] sm:$0xf]
  %v148 = vld [vmem:[%s0 + $0x8] sm:$0xf]
  %v149 = vld [vmem:[%s0 + $0xc] sm:$0xf]
  %v150 = vld [vmem:[%s0 + $0x10] sm:$0xf]
  %v151 = vld [vmem:[%s0 + $0x14] sm:$0xf]
  %v152 = vld [vmem:[%s0 + $0x18] sm:$0xf]
  %v153 = vld [vmem:[%s0 + $0x1c] sm:$0xf]
  %v154 = vld [vmem:[%s0 + $0x20] sm:$0xf]
  %v155 = vld [vmem:[%s0 + $0x24] sm:$0xf]
  %v156 = vld [vmem:[%s0 + $0x28] sm:$0xf]
  %v157 = vld [vmem:[%s0 + $0x2c] sm:$0xf]
  %v158 = vld [vmem:[%s0 + $0x30] sm:$0xf]
  %v159 = vld [vmem:[%s0 + $0x34] sm:$0xf]
  %v160 = vld [vmem:[%s0 + $0x38] sm:$0xf]
  %v161 = vld [vmem:[%s0 + $0x3c] sm:$0xf]
  %v162 = vld [vmem:[%s0 + $0x40] sm:$0xf]
  %v163 = vld [vmem:[%s0 + $0x44] sm:$0xf]
  %v164 = vld [vmem:[%s0 + $0x48] sm:$0xf]
  %v165 = vld [vmem:[%s0 + $0x4c] sm:$0xf]
  %v166 = vld [vmem:[%s0 + $0x50] sm:$0xf]
  %v167 = vld [vmem:[%s0 + $0x54] sm:$0xf]
  %v168 = vld [vmem:[%s0 + $0x58] sm:$0xf]
  %v169 = vld [vmem:[%s0 + $0x5c] sm:$0xf]
  %v170 = vld [vmem:[%s0 + $0x60] sm:$0xf]
  %v171 = vld [vmem:[%s0 + $0x64] sm:$0xf]
  %v172 = vld [vmem:[%s0 + $0x68] sm:$0xf]
  %v173 = vld [vmem:[%s0 + $0x6c] sm:$0xf]
  %v174 = vld [vmem:[%s0 + $0x70] sm:$0xf]
  %v175 = vld [vmem:[%s0 + $0x74] sm:$0xf]
  %v176 = vld [vmem:[%s0 + $0x78] sm:$0xf]
  %v177 = vld [vmem:[%s0 + $0x7c] sm:$0xf]
  %v178 = vld [vmem:[%s0 + $0x80] sm:$0xf]
  %v179 = vld [vmem:[%s0 + $0x84] sm:$0xf]
  %v180 = vld [vmem:[%s0 + $0x88] sm:$0xf]
  %v181 = vld [vmem:[%s0 + $0x8c] sm:$0xf]
  %v182 = vld [vmem:[%s0 + $0x90] sm:$0xf]
  %v183 = vld [vmem:[%s0 + $0x94] sm:$0xf]
  %v184 = vld [vmem:[%s0 + $0x98] sm:$0xf]
  %v185 = vld [vmem:[%s0 + $0x9c] sm:$0xf]
  %v186 = vld [vmem:[%s0 + $0xa0] sm:$0xf]
  %v187 = vld [vmem:[%s0 + $0xa4] sm:$0xf]
  %v188 = vld [vmem:[%s0 + $0xa8] sm:$0xf]
  %v189 = vld [vmem:[%s0 + $0xac] sm:$0xf]
  %v190 = vld [vmem:[%s0 + $0xb0] sm:$0xf]
  %v191 = vld [vmem:[%s0 + $0xb4] sm:$0xf]
  %v192 = vld [vmem:[%s0 + $0xb8] sm:$0xf]
  %v193 = vld [vmem:[%s0 + $0xbc] sm:$0xf]
  %v194 = vld [vmem:[%s0 + $0xc0] sm:$0xf]
  %v195 = vld [vmem:[%s0 + $0xc4] sm:$0xf]
  %v196 = vld [vmem:[%s0 + $0xc8] sm:$0xf]
  %v197 = vld [vmem:[%s0 + $0xcc] sm:$0xf]
  %v198 = vld [vmem:[%s0 + $0xd0] sm:$0xf]
  %v199 = vld [vmem:[%s0 + $0xd4] sm:$0xf]
  %v200 = vld [vmem:[%s0 + $0xd8] sm:$0xf]
  %v201 = vld [vmem:[%s0 + $0xdc] sm:$0xf]
  %v202 = vld [vmem:[%s0 + $0xe0] sm:$0xf]
  %v203 = vld [vmem:[%s0 + $0xe4] sm:$0xf]
  %v204 = vld [vmem:[%s0 + $0xe8] sm:$0xf]
  %v205 = vld [vmem:[%s0 + $0xec] sm:$0xf]
  %v206 = vld [vmem:[%s0 + $0xf0] sm:$0xf]
  %v207 = vld [vmem:[%s0 + $0xf4] sm:$0xf]
  %v208 = vld [vmem:[%s0 + $0xf8] sm:$0xf]
  %v209 = vld [vmem:[%s0 + $0xfc] sm:$0xf]
  %v210 = vld [vmem:[%s1] sm:$0xf]
  %v211 = vld [vmem:[%s1 + $0x4] sm:$0xf]
  %v212 = vld [vmem:[%s1 + $0x8] sm:$0xf]
  %v213 = vld [vmem:[%s1 + $0xc] sm:$0xf]
  %v214 = vld [vmem:[%s1 + $0x10] sm:$0xf]
  %v215 = vld [vmem:[%s1 + $0x14] sm:$0xf]
  %v216 = vld [vmem:[%s1 + $0x18] sm:$0xf]
  %v217 = vld [vmem:[%s1 + $0x1c] sm:$0xf]
  %v218 = vld [vmem:[%s1 + $0x20] sm:$0xf]
  %v219 = vld [vmem:[%s1 + $0x24] sm:$0xf]
  %v220 = vld [vmem:[%s1 + $0x28] sm:$0xf]
  %v221 = vld [vmem:[%s1 + $0x2c] sm:$0xf]
  %v222 = vld [vmem:[%s1 + $0x30] sm:$0xf]
  %v223 = vld [vmem:[%s1 + $0x34] sm:$0xf]
  %v224 = vld [vmem:[%s1 + $0x38] sm:$0xf]
  %v225 = vld [vmem:[%s1 + $0x3c] sm:$0xf]
  %v290 = vunpack.c.l.b16 %v146
  %v291 = vunpack.c.l.b16 %v147
  %v292 = vunpack.c.l.b16 %v148
  %v293 = vunpack.c.l.b16 %v149
  %v294 = vunpack.c.l.b16 %v150
  %v295 = vunpack.c.l.b16 %v151
  %v296 = vunpack.c.l.b16 %v152
  %v297 = vunpack.c.l.b16 %v153
  %v298 = vunpack.c.l.b16 %v154
  %v299 = vunpack.c.l.b16 %v155
  %v300 = vunpack.c.l.b16 %v156
  %v301 = vunpack.c.l.b16 %v157
  %v302 = vunpack.c.l.b16 %v158
  %v303 = vunpack.c.l.b16 %v159
  %v304 = vunpack.c.l.b16 %v160
  %v305 = vunpack.c.l.b16 %v161
  %v306 = vunpack.c.l.b16 %v162
  %v307 = vunpack.c.l.b16 %v163
  %v308 = vunpack.c.l.b16 %v164
  %v309 = vunpack.c.l.b16 %v165
  %v310 = vunpack.c.l.b16 %v166
  %v311 = vunpack.c.l.b16 %v167
  %v312 = vunpack.c.l.b16 %v168
  %v313 = vunpack.c.l.b16 %v169
  %v314 = vunpack.c.l.b16 %v170
  %v315 = vunpack.c.l.b16 %v171
  %v316 = vunpack.c.l.b16 %v172
  %v317 = vunpack.c.l.b16 %v173
  %v318 = vunpack.c.l.b16 %v174
  %v319 = vunpack.c.l.b16 %v175
  %v320 = vunpack.c.l.b16 %v176
  %v321 = vunpack.c.l.b16 %v177
  %v322 = vunpack.c.l.b16 %v178
  %v323 = vunpack.c.l.b16 %v179
  %v324 = vunpack.c.l.b16 %v180
  %v325 = vunpack.c.l.b16 %v181
  %v326 = vunpack.c.l.b16 %v182
  %v327 = vunpack.c.l.b16 %v183
  %v328 = vunpack.c.l.b16 %v184
  %v329 = vunpack.c.l.b16 %v185
  %v330 = vunpack.c.l.b16 %v186
  %v331 = vunpack.c.l.b16 %v187
  %v332 = vunpack.c.l.b16 %v188
  %v333 = vunpack.c.l.b16 %v189
  %v334 = vunpack.c.l.b16 %v190
  %v335 = vunpack.c.l.b16 %v191
  %v336 = vunpack.c.l.b16 %v192
  %v337 = vunpack.c.l.b16 %v193
  %v338 = vunpack.c.l.b16 %v194
  %v339 = vunpack.c.l.b16 %v195
  %v340 = vunpack.c.l.b16 %v196
  %v341 = vunpack.c.l.b16 %v197
  %v342 = vunpack.c.l.b16 %v198
  %v343 = vunpack.c.l.b16 %v199
  %v344 = vunpack.c.l.b16 %v200
  %v345 = vunpack.c.l.b16 %v201
  %v346 = vunpack.c.l.b16 %v202
  %v347 = vunpack.c.l.b16 %v203
  %v348 = vunpack.c.l.b16 %v204
  %v349 = vunpack.c.l.b16 %v205
  %v350 = vunpack.c.l.b16 %v206
  %v351 = vunpack.c.l.b16 %v207
  %v352 = vunpack.c.l.b16 %v208
  %v353 = vunpack.c.l.b16 %v209
  %v354 = vpack.c.b16 %v291, %v290
  %v355 = vpack.c.b16 %v293, %v292
  %v356 = vpack.c.b16 %v295, %v294
  %v357 = vpack.c.b16 %v297, %v296
  %v358 = vpack.c.b16 %v299, %v298
  %v359 = vpack.c.b16 %v301, %v300
  %v360 = vpack.c.b16 %v303, %v302
  %v361 = vpack.c.b16 %v305, %v304
  %v362 = vpack.c.b16 %v307, %v306
  %v363 = vpack.c.b16 %v309, %v308
  %v364 = vpack.c.b16 %v311, %v310
  %v365 = vpack.c.b16 %v313, %v312
  %v366 = vpack.c.b16 %v315, %v314
  %v367 = vpack.c.b16 %v317, %v316
  %v368 = vpack.c.b16 %v319, %v318
  %v369 = vpack.c.b16 %v321, %v320
  %v370 = vpack.c.b16 %v323, %v322
  %v371 = vpack.c.b16 %v325, %v324
  %v372 = vpack.c.b16 %v327, %v326
  %v373 = vpack.c.b16 %v329, %v328
  %v374 = vpack.c.b16 %v331, %v330
  %v375 = vpack.c.b16 %v333, %v332
  %v376 = vpack.c.b16 %v335, %v334
  %v377 = vpack.c.b16 %v337, %v336
  %v378 = vpack.c.b16 %v339, %v338
  %v379 = vpack.c.b16 %v341, %v340
  %v380 = vpack.c.b16 %v343, %v342
  %v381 = vpack.c.b16 %v345, %v344
  %v382 = vpack.c.b16 %v347, %v346
  %v383 = vpack.c.b16 %v349, %v348
  %v384 = vpack.c.b16 %v351, %v350
  %v385 = vpack.c.b16 %v353, %v352
  %v434 = vunpack.c.l.b16 %v210
  %v435 = vunpack.c.l.b16 %v211
  %v436 = vunpack.c.l.b16 %v212
  %v437 = vunpack.c.l.b16 %v213
  %v438 = vunpack.c.l.b16 %v214
  %v439 = vunpack.c.l.b16 %v215
  %v440 = vunpack.c.l.b16 %v216
  %v441 = vunpack.c.l.b16 %v217
  %v442 = vunpack.c.l.b16 %v218
  %v443 = vunpack.c.l.b16 %v219
  %v444 = vunpack.c.l.b16 %v220
  %v445 = vunpack.c.l.b16 %v221
  %v446 = vunpack.c.l.b16 %v222
  %v447 = vunpack.c.l.b16 %v223
  %v448 = vunpack.c.l.b16 %v224
  %v449 = vunpack.c.l.b16 %v225
  %v450 = vpack.c.b16 %v435, %v434
  %v451 = vpack.c.b16 %v437, %v436
  %v452 = vpack.c.b16 %v439, %v438
  %v453 = vpack.c.b16 %v441, %v440
  %v454 = vpack.c.b16 %v443, %v442
  %v455 = vpack.c.b16 %v445, %v444
  %v456 = vpack.c.b16 %v447, %v446
  %v457 = vpack.c.b16 %v449, %v448
  %466 = vmatpush.bf16.msra.mxu0 %v457
  %467 = vmatpush.bf16.msra.mxu0 %v456
  %468 = vmatpush.bf16.msra.mxu0 %v455
  %469 = vmatpush.bf16.msra.mxu0 %v454
  %470 = vmatpush.bf16.msra.mxu0 %v453
  %471 = vmatpush.bf16.msra.mxu0 %v452
  %472 = vmatpush.bf16.msra.mxu0 %v451
  %473 = vmatpush.bf16.msra.mxu0 %v450
  %474 = vmatmul.bf16.gmra.mxu0 %v354
  %v475 = vpop.f32.mrf.mxu0
  %v476 = vadd.f32 0.0, %v475
  %v477 = vpop.f32.mrf.mxu0
  %v478 = vadd.f32 0.0, %v477
  %479 = vmatmul.bf16.gmra.mxu0 %v355
  %v480 = vpop.f32.mrf.mxu0
  %v481 = vadd.f32 0.0, %v480
  %v482 = vpop.f32.mrf.mxu0
  %v483 = vadd.f32 0.0, %v482
  %484 = vmatmul.bf16.gmra.mxu0 %v356
  %v485 = vpop.f32.mrf.mxu0
  %v486 = vadd.f32 0.0, %v485
  %v487 = vpop.f32.mrf.mxu0
  %v488 = vadd.f32 0.0, %v487
  %489 = vmatmul.bf16.gmra.mxu0 %v357
  %v490 = vpop.f32.mrf.mxu0
  %v491 = vadd.f32 0.0, %v490
  %v492 = vpop.f32.mrf.mxu0
  %v493 = vadd.f32 0.0, %v492
  %494 = vmatmul.bf16.gmra.mxu0 %v358
  %v495 = vpop.f32.mrf.mxu0
  %v496 = vadd.f32 0.0, %v495
  %v497 = vpop.f32.mrf.mxu0
  %v498 = vadd.f32 0.0, %v497
  %499 = vmatmul.bf16.gmra.mxu0 %v359
  %v500 = vpop.f32.mrf.mxu0
  %v501 = vadd.f32 0.0, %v500
  %v502 = vpop.f32.mrf.mxu0
  %v503 = vadd.f32 0.0, %v502
  %504 = vmatmul.bf16.gmra.mxu0 %v360
  %v505 = vpop.f32.mrf.mxu0
  %v506 = vadd.f32 0.0, %v505
  %v507 = vpop.f32.mrf.mxu0
  %v508 = vadd.f32 0.0, %v507
  %509 = vmatmul.bf16.gmra.mxu0 %v361
  %v510 = vpop.f32.mrf.mxu0
  %v511 = vadd.f32 0.0, %v510
  %v512 = vpop.f32.mrf.mxu0
  %v513 = vadd.f32 0.0, %v512
  %514 = vmatmul.bf16.gmra.mxu0 %v362
  %v515 = vpop.f32.mrf.mxu0
  %v516 = vadd.f32 0.0, %v515
  %v517 = vpop.f32.mrf.mxu0
  %v518 = vadd.f32 0.0, %v517
  %519 = vmatmul.bf16.gmra.mxu0 %v363
  %v520 = vpop.f32.mrf.mxu0
  %v521 = vadd.f32 0.0, %v520
  %v522 = vpop.f32.mrf.mxu0
  %v523 = vadd.f32 0.0, %v522
  %524 = vmatmul.bf16.gmra.mxu0 %v364
  %v525 = vpop.f32.mrf.mxu0
  %v526 = vadd.f32 0.0, %v525
  %v527 = vpop.f32.mrf.mxu0
  %v528 = vadd.f32 0.0, %v527
  %529 = vmatmul.bf16.gmra.mxu0 %v365
  %v530 = vpop.f32.mrf.mxu0
  %v531 = vadd.f32 0.0, %v530
  %v532 = vpop.f32.mrf.mxu0
  %v533 = vadd.f32 0.0, %v532
  %534 = vmatmul.bf16.gmra.mxu0 %v366
  %v535 = vpop.f32.mrf.mxu0
  %v536 = vadd.f32 0.0, %v535
  %v537 = vpop.f32.mrf.mxu0
  %v538 = vadd.f32 0.0, %v537
  %539 = vmatmul.bf16.gmra.mxu0 %v367
  %v540 = vpop.f32.mrf.mxu0
  %v541 = vadd.f32 0.0, %v540
  %v542 = vpop.f32.mrf.mxu0
  %v543 = vadd.f32 0.0, %v542
  %544 = vmatmul.bf16.gmra.mxu0 %v368
  %v545 = vpop.f32.mrf.mxu0
  %v546 = vadd.f32 0.0, %v545
  %v547 = vpop.f32.mrf.mxu0
  %v548 = vadd.f32 0.0, %v547
  %549 = vmatmul.bf16.gmra.mxu0 %v369
  %v550 = vpop.f32.mrf.mxu0
  %v551 = vadd.f32 0.0, %v550
  %v552 = vpop.f32.mrf.mxu0
  %v553 = vadd.f32 0.0, %v552
  %554 = vmatmul.bf16.gmra.mxu0 %v370
  %v555 = vpop.f32.mrf.mxu0
  %v556 = vadd.f32 0.0, %v555
  %v557 = vpop.f32.mrf.mxu0
  %v558 = vadd.f32 0.0, %v557
  %559 = vmatmul.bf16.gmra.mxu0 %v371
  %v560 = vpop.f32.mrf.mxu0
  %v561 = vadd.f32 0.0, %v560
  %v562 = vpop.f32.mrf.mxu0
  %v563 = vadd.f32 0.0, %v562
  %564 = vmatmul.bf16.gmra.mxu0 %v372
  %v565 = vpop.f32.mrf.mxu0
  %v566 = vadd.f32 0.0, %v565
  %v567 = vpop.f32.mrf.mxu0
  %v568 = vadd.f32 0.0, %v567
  %569 = vmatmul.bf16.gmra.mxu0 %v373
  %v570 = vpop.f32.mrf.mxu0
  %v571 = vadd.f32 0.0, %v570
  %v572 = vpop.f32.mrf.mxu0
  %v573 = vadd.f32 0.0, %v572
  %574 = vmatmul.bf16.gmra.mxu0 %v374
  %v575 = vpop.f32.mrf.mxu0
  %v576 = vadd.f32 0.0, %v575
  %v577 = vpop.f32.mrf.mxu0
  %v578 = vadd.f32 0.0, %v577
  %579 = vmatmul.bf16.gmra.mxu0 %v375
  %v580 = vpop.f32.mrf.mxu0
  %v581 = vadd.f32 0.0, %v580
  %v582 = vpop.f32.mrf.mxu0
  %v583 = vadd.f32 0.0, %v582
  %584 = vmatmul.bf16.gmra.mxu0 %v376
  %v585 = vpop.f32.mrf.mxu0
  %v586 = vadd.f32 0.0, %v585
  %v587 = vpop.f32.mrf.mxu0
  %v588 = vadd.f32 0.0, %v587
  %589 = vmatmul.bf16.gmra.mxu0 %v377
  %v590 = vpop.f32.mrf.mxu0
  %v591 = vadd.f32 0.0, %v590
  %v592 = vpop.f32.mrf.mxu0
  %v593 = vadd.f32 0.0, %v592
  %594 = vmatmul.bf16.gmra.mxu0 %v378
  %v595 = vpop.f32.mrf.mxu0
  %v596 = vadd.f32 0.0, %v595
  %v597 = vpop.f32.mrf.mxu0
  %v598 = vadd.f32 0.0, %v597
  %599 = vmatmul.bf16.gmra.mxu0 %v379
  %v600 = vpop.f32.mrf.mxu0
  %v601 = vadd.f32 0.0, %v600
  %v602 = vpop.f32.mrf.mxu0
  %v603 = vadd.f32 0.0, %v602
  %604 = vmatmul.bf16.gmra.mxu0 %v380
  %v605 = vpop.f32.mrf.mxu0
  %v606 = vadd.f32 0.0, %v605
  %v607 = vpop.f32.mrf.mxu0
  %v608 = vadd.f32 0.0, %v607
  %609 = vmatmul.bf16.gmra.mxu0 %v381
  %v610 = vpop.f32.mrf.mxu0
  %v611 = vadd.f32 0.0, %v610
  %v612 = vpop.f32.mrf.mxu0
  %v613 = vadd.f32 0.0, %v612
  %614 = vmatmul.bf16.gmra.mxu0 %v382
  %v615 = vpop.f32.mrf.mxu0
  %v616 = vadd.f32 0.0, %v615
  %v617 = vpop.f32.mrf.mxu0
  %v618 = vadd.f32 0.0, %v617
  %619 = vmatmul.bf16.gmra.mxu0 %v383
  %v620 = vpop.f32.mrf.mxu0
  %v621 = vadd.f32 0.0, %v620
  %v622 = vpop.f32.mrf.mxu0
  %v623 = vadd.f32 0.0, %v622
  %624 = vmatmul.bf16.gmra.mxu0 %v384
  %v625 = vpop.f32.mrf.mxu0
  %v626 = vadd.f32 0.0, %v625
  %v627 = vpop.f32.mrf.mxu0
  %v628 = vadd.f32 0.0, %v627
  %629 = vmatmul.bf16.gmra.mxu0 %v385
  %v630 = vpop.f32.mrf.mxu0
  %v631 = vadd.f32 0.0, %v630
  %v632 = vpop.f32.mrf.mxu0
  %v633 = vadd.f32 0.0, %v632
  %634 = vdwg.mxu0
  %v635 = vadd.f32 %v82, %v476
  %v636 = vadd.f32 %v83, %v478
  %v637 = vadd.f32 %v84, %v481
  %v638 = vadd.f32 %v85, %v483
  %v639 = vadd.f32 %v86, %v486
  %v640 = vadd.f32 %v87, %v488
  %v641 = vadd.f32 %v88, %v491
  %v642 = vadd.f32 %v89, %v493
  %v643 = vadd.f32 %v90, %v496
  %v644 = vadd.f32 %v91, %v498
  %v645 = vadd.f32 %v92, %v501
  %v646 = vadd.f32 %v93, %v503
  %v647 = vadd.f32 %v94, %v506
  %v648 = vadd.f32 %v95, %v508
  %v649 = vadd.f32 %v96, %v511
  %v650 = vadd.f32 %v97, %v513
  %v651 = vadd.f32 %v98, %v516
  %v652 = vadd.f32 %v99, %v518
  %v653 = vadd.f32 %v100, %v521
  %v654 = vadd.f32 %v101, %v523
  %v655 = vadd.f32 %v102, %v526
  %v656 = vadd.f32 %v103, %v528
  %v657 = vadd.f32 %v104, %v531
  %v658 = vadd.f32 %v105, %v533
  %v659 = vadd.f32 %v106, %v536
  %v660 = vadd.f32 %v107, %v538
  %v661 = vadd.f32 %v108, %v541
  %v662 = vadd.f32 %v109, %v543
  %v663 = vadd.f32 %v110, %v546
  %v664 = vadd.f32 %v111, %v548
  %v665 = vadd.f32 %v112, %v551
  %v666 = vadd.f32 %v113, %v553
  %v667 = vadd.f32 %v114, %v556
  %v668 = vadd.f32 %v115, %v558
  %v669 = vadd.f32 %v116, %v561
  %v670 = vadd.f32 %v117, %v563
  %v671 = vadd.f32 %v118, %v566
  %v672 = vadd.f32 %v119, %v568
  %v673 = vadd.f32 %v120, %v571
  %v674 = vadd.f32 %v121, %v573
  %v675 = vadd.f32 %v122, %v576
  %v676 = vadd.f32 %v123, %v578
  %v677 = vadd.f32 %v124, %v581
  %v678 = vadd.f32 %v125, %v583
  %v679 = vadd.f32 %v126, %v586
  %v680 = vadd.f32 %v127, %v588
  %v681 = vadd.f32 %v128, %v591
  %v682 = vadd.f32 %v129, %v593
  %v683 = vadd.f32 %v130, %v596
  %v684 = vadd.f32 %v131, %v598
  %v685 = vadd.f32 %v132, %v601
  %v686 = vadd.f32 %v133, %v603
  %v687 = vadd.f32 %v134, %v606
  %v688 = vadd.f32 %v135, %v608
  %v689 = vadd.f32 %v136, %v611
  %v690 = vadd.f32 %v137, %v613
  %v691 = vadd.f32 %v138, %v616
  %v692 = vadd.f32 %v139, %v618
  %v693 = vadd.f32 %v140, %v621
  %v694 = vadd.f32 %v141, %v623
  %v695 = vadd.f32 %v142, %v626
  %v696 = vadd.f32 %v143, %v628
  %v697 = vadd.f32 %v144, %v631
  %v698 = vadd.f32 %v145, %v633
  %699 = vst [vmem:[#allocation2] sm:$0xff] %v635
  %700 = vst [vmem:[#allocation2 + $0x8] sm:$0xff] %v636
  %701 = vst [vmem:[#allocation2 + $0x10] sm:$0xff] %v637
  %702 = vst [vmem:[#allocation2 + $0x18] sm:$0xff] %v638
  %703 = vst [vmem:[#allocation2 + $0x20] sm:$0xff] %v639
  %704 = vst [vmem:[#allocation2 + $0x28] sm:$0xff] %v640
  %705 = vst [vmem:[#allocation2 + $0x30] sm:$0xff] %v641
  %706 = vst [vmem:[#allocation2 + $0x38] sm:$0xff] %v642
  %707 = vst [vmem:[#allocation2 + $0x40] sm:$0xff] %v643
  %708 = vst [vmem:[#allocation2 + $0x48] sm:$0xff] %v644
  %709 = vst [vmem:[#allocation2 + $0x50] sm:$0xff] %v645
  %710 = vst [vmem:[#allocation2 + $0x58] sm:$0xff] %v646
  %711 = vst [vmem:[#allocation2 + $0x60] sm:$0xff] %v647
  %712 = vst [vmem:[#allocation2 + $0x68] sm:$0xff] %v648
  %713 = vst [vmem:[#allocation2 + $0x70] sm:$0xff] %v649
  %714 = vst [vmem:[#allocation2 + $0x78] sm:$0xff] %v650
  %715 = vst [vmem:[#allocation2 + $0x80] sm:$0xff] %v651
  %716 = vst [vmem:[#allocation2 + $0x88] sm:$0xff] %v652
  %717 = vst [vmem:[#allocation2 + $0x90] sm:$0xff] %v653
  %718 = vst [vmem:[#allocation2 + $0x98] sm:$0xff] %v654
  %719 = vst [vmem:[#allocation2 + $0xa0] sm:$0xff] %v655
  %720 = vst [vmem:[#allocation2 + $0xa8] sm:$0xff] %v656
  %721 = vst [vmem:[#allocation2 + $0xb0] sm:$0xff] %v657
  %722 = vst [vmem:[#allocation2 + $0xb8] sm:$0xff] %v658
  %723 = vst [vmem:[#allocation2 + $0xc0] sm:$0xff] %v659
  %724 = vst [vmem:[#allocation2 + $0xc8] sm:$0xff] %v660
  %725 = vst [vmem:[#allocation2 + $0xd0] sm:$0xff] %v661
  %726 = vst [vmem:[#allocation2 + $0xd8] sm:$0xff] %v662
  %727 = vst [vmem:[#allocation2 + $0xe0] sm:$0xff] %v663
  %728 = vst [vmem:[#allocation2 + $0xe8] sm:$0xff] %v664
  %729 = vst [vmem:[#allocation2 + $0xf0] sm:$0xff] %v665
  %730 = vst [vmem:[#allocation2 + $0xf8] sm:$0xff] %v666
  %731 = vst [vmem:[#allocation2 + $0x100] sm:$0xff] %v667
  %732 = vst [vmem:[#allocation2 + $0x108] sm:$0xff] %v668
  %733 = vst [vmem:[#allocation2 + $0x110] sm:$0xff] %v669
  %734 = vst [vmem:[#allocation2 + $0x118] sm:$0xff] %v670
  %735 = vst [vmem:[#allocation2 + $0x120] sm:$0xff] %v671
  %736 = vst [vmem:[#allocation2 + $0x128] sm:$0xff] %v672
  %737 = vst [vmem:[#allocation2 + $0x130] sm:$0xff] %v673
  %738 = vst [vmem:[#allocation2 + $0x138] sm:$0xff] %v674
  %739 = vst [vmem:[#allocation2 + $0x140] sm:$0xff] %v675
  %740 = vst [vmem:[#allocation2 + $0x148] sm:$0xff] %v676
  %741 = vst [vmem:[#allocation2 + $0x150] sm:$0xff] %v677
  %742 = vst [vmem:[#allocation2 + $0x158] sm:$0xff] %v678
  %743 = vst [vmem:[#allocation2 + $0x160] sm:$0xff] %v679
  %744 = vst [vmem:[#allocation2 + $0x168] sm:$0xff] %v680
  %745 = vst [vmem:[#allocation2 + $0x170] sm:$0xff] %v681
  %746 = vst [vmem:[#allocation2 + $0x178] sm:$0xff] %v682
  %747 = vst [vmem:[#allocation2 + $0x180] sm:$0xff] %v683
  %748 = vst [vmem:[#allocation2 + $0x188] sm:$0xff] %v684
  %749 = vst [vmem:[#allocation2 + $0x190] sm:$0xff] %v685
  %750 = vst [vmem:[#allocation2 + $0x198] sm:$0xff] %v686
  %751 = vst [vmem:[#allocation2 + $0x1a0] sm:$0xff] %v687
  %752 = vst [vmem:[#allocation2 + $0x1a8] sm:$0xff] %v688
  %753 = vst [vmem:[#allocation2 + $0x1b0] sm:$0xff] %v689
  %754 = vst [vmem:[#allocation2 + $0x1b8] sm:$0xff] %v690
  %755 = vst [vmem:[#allocation2 + $0x1c0] sm:$0xff] %v691
  %756 = vst [vmem:[#allocation2 + $0x1c8] sm:$0xff] %v692
  %757 = vst [vmem:[#allocation2 + $0x1d0] sm:$0xff] %v693
  %758 = vst [vmem:[#allocation2 + $0x1d8] sm:$0xff] %v694
  %759 = vst [vmem:[#allocation2 + $0x1e0] sm:$0xff] %v695
  %760 = vst [vmem:[#allocation2 + $0x1e8] sm:$0xff] %v696
  %761 = vst [vmem:[#allocation2 + $0x1f0] sm:$0xff] %v697
  %762 = vst [vmem:[#allocation2 + $0x1f8] sm:$0xff] %v698
  // Predicated region
  $region14: #{residual_block.6} parent=0 // pred_check
    %p763 = pneg %p14
  $region15: #{residual_block.6} parent=0 // pred_check_branch
    %765 = sbr.rel (%p763) target = $region17
  $region16: #{residual_block.6} parent=0 // pred_region
    %v766 = vld [vmem:[#allocation2] sm:$0xff]
    %v767 = vld [vmem:[#allocation2 + $0x8] sm:$0xff]
    %v768 = vld [vmem:[#allocation2 + $0x10] sm:$0xff]
    %v769 = vld [vmem:[#allocation2 + $0x18] sm:$0xff]
    %v770 = vld [vmem:[#allocation2 + $0x20] sm:$0xff]
    %v771 = vld [vmem:[#allocation2 + $0x28] sm:$0xff]
    %v772 = vld [vmem:[#allocation2 + $0x30] sm:$0xff]
    %v773 = vld [vmem:[#allocation2 + $0x38] sm:$0xff]
    %v774 = vld [vmem:[#allocation2 + $0x40] sm:$0xff]
    %v775 = vld [vmem:[#allocation2 + $0x48] sm:$0xff]
    %v776 = vld [vmem:[#allocation2 + $0x50] sm:$0xff]
    %v777 = vld [vmem:[#allocation2 + $0x58] sm:$0xff]
    %v778 = vld [vmem:[#allocation2 + $0x60] sm:$0xff]
    %v779 = vld [vmem:[#allocation2 + $0x68] sm:$0xff]
    %v780 = vld [vmem:[#allocation2 + $0x70] sm:$0xff]
    %v781 = vld [vmem:[#allocation2 + $0x78] sm:$0xff]
    %v782 = vld [vmem:[#allocation2 + $0x80] sm:$0xff]
    %v783 = vld [vmem:[#allocation2 + $0x88] sm:$0xff]
    %v784 = vld [vmem:[#allocation2 + $0x90] sm:$0xff]
    %v785 = vld [vmem:[#allocation2 + $0x98] sm:$0xff]
    %v786 = vld [vmem:[#allocation2 + $0xa0] sm:$0xff]
    %v787 = vld [vmem:[#allocation2 + $0xa8] sm:$0xff]
    %v788 = vld [vmem:[#allocation2 + $0xb0] sm:$0xff]
    %v789 = vld [vmem:[#allocation2 + $0xb8] sm:$0xff]
    %v790 = vld [vmem:[#allocation2 + $0xc0] sm:$0xff]
    %v791 = vld [vmem:[#allocation2 + $0xc8] sm:$0xff]
    %v792 = vld [vmem:[#allocation2 + $0xd0] sm:$0xff]
    %v793 = vld [vmem:[#allocation2 + $0xd8] sm:$0xff]
    %v794 = vld [vmem:[#allocation2 + $0xe0] sm:$0xff]
    %v795 = vld [vmem:[#allocation2 + $0xe8] sm:$0xff]
    %v796 = vld [vmem:[#allocation2 + $0xf0] sm:$0xff]
    %v797 = vld [vmem:[#allocation2 + $0xf8] sm:$0xff]
    %v798 = vld [vmem:[#allocation2 + $0x100] sm:$0xff]
    %v799 = vld [vmem:[#allocation2 + $0x108] sm:$0xff]
    %v800 = vld [vmem:[#allocation2 + $0x110] sm:$0xff]
    %v801 = vld [vmem:[#allocation2 + $0x118] sm:$0xff]
    %v802 = vld [vmem:[#allocation2 + $0x120] sm:$0xff]
    %v803 = vld [vmem:[#allocation2 + $0x128] sm:$0xff]
    %v804 = vld [vmem:[#allocation2 + $0x130] sm:$0xff]
    %v805 = vld [vmem:[#allocation2 + $0x138] sm:$0xff]
    %v806 = vld [vmem:[#allocation2 + $0x140] sm:$0xff]
    %v807 = vld [vmem:[#allocation2 + $0x148] sm:$0xff]
    %v808 = vld [vmem:[#allocation2 + $0x150] sm:$0xff]
    %v809 = vld [vmem:[#allocation2 + $0x158] sm:$0xff]
    %v810 = vld [vmem:[#allocation2 + $0x160] sm:$0xff]
    %v811 = vld [vmem:[#allocation2 + $0x168] sm:$0xff]
    %v812 = vld [vmem:[#allocation2 + $0x170] sm:$0xff]
    %v813 = vld [vmem:[#allocation2 + $0x178] sm:$0xff]
    %v814 = vld [vmem:[#allocation2 + $0x180] sm:$0xff]
    %v815 = vld [vmem:[#allocation2 + $0x188] sm:$0xff]
    %v816 = vld [vmem:[#allocation2 + $0x190] sm:$0xff]
    %v817 = vld [vmem:[#allocation2 + $0x198] sm:$0xff]
    %v818 = vld [vmem:[#allocation2 + $0x1a0] sm:$0xff]
    %v819 = vld [vmem:[#allocation2 + $0x1a8] sm:$0xff]
    %v820 = vld [vmem:[#allocation2 + $0x1b0] sm:$0xff]
    %v821 = vld [vmem:[#allocation2 + $0x1b8] sm:$0xff]
    %v822 = vld [vmem:[#allocation2 + $0x1c0] sm:$0xff]
    %v823 = vld [vmem:[#allocation2 + $0x1c8] sm:$0xff]
    %v824 = vld [vmem:[#allocation2 + $0x1d0] sm:$0xff]
    %v825 = vld [vmem:[#allocation2 + $0x1d8] sm:$0xff]
    %v826 = vld [vmem:[#allocation2 + $0x1e0] sm:$0xff]
    %v827 = vld [vmem:[#allocation2 + $0x1e8] sm:$0xff]
    %v828 = vld [vmem:[#allocation2 + $0x1f0] sm:$0xff]
    %v829 = vld [vmem:[#allocation2 + $0x1f8] sm:$0xff]
    %v830 = vpack.c.bf16 %v766, %v766
    %v831 = vpack.c.bf16 %v767, %v767
    %v832 = vpack.c.bf16 %v768, %v768
    %v833 = vpack.c.bf16 %v769, %v769
    %v834 = vpack.c.bf16 %v770, %v770
    %v835 = vpack.c.bf16 %v771, %v771
    %v836 = vpack.c.bf16 %v772, %v772
    %v837 = vpack.c.bf16 %v773, %v773
    %v838 = vpack.c.bf16 %v774, %v774
    %v839 = vpack.c.bf16 %v775, %v775
    %v840 = vpack.c.bf16 %v776, %v776
    %v841 = vpack.c.bf16 %v777, %v777
    %v842 = vpack.c.bf16 %v778, %v778
    %v843 = vpack.c.bf16 %v779, %v779
    %v844 = vpack.c.bf16 %v780, %v780
    %v845 = vpack.c.bf16 %v781, %v781
    %v846 = vpack.c.bf16 %v782, %v782
    %v847 = vpack.c.bf16 %v783, %v783
    %v848 = vpack.c.bf16 %v784, %v784
    %v849 = vpack.c.bf16 %v785, %v785
    %v850 = vpack.c.bf16 %v786, %v786
    %v851 = vpack.c.bf16 %v787, %v787
    %v852 = vpack.c.bf16 %v788, %v788
    %v853 = vpack.c.bf16 %v789, %v789
    %v854 = vpack.c.bf16 %v790, %v790
    %v855 = vpack.c.bf16 %v791, %v791
    %v856 = vpack.c.bf16 %v792, %v792
    %v857 = vpack.c.bf16 %v793, %v793
    %v858 = vpack.c.bf16 %v794, %v794
    %v859 = vpack.c.bf16 %v795, %v795
    %v860 = vpack.c.bf16 %v796, %v796
    %v861 = vpack.c.bf16 %v797, %v797
    %v862 = vpack.c.bf16 %v798, %v798
    %v863 = vpack.c.bf16 %v799, %v799
    %v864 = vpack.c.bf16 %v800, %v800
    %v865 = vpack.c.bf16 %v801, %v801
    %v866 = vpack.c.bf16 %v802, %v802
    %v867 = vpack.c.bf16 %v803, %v803
    %v868 = vpack.c.bf16 %v804, %v804
    %v869 = vpack.c.bf16 %v805, %v805
    %v870 = vpack.c.bf16 %v806, %v806
    %v871 = vpack.c.bf16 %v807, %v807
    %v872 = vpack.c.bf16 %v808, %v808
    %v873 = vpack.c.bf16 %v809, %v809
    %v874 = vpack.c.bf16 %v810, %v810
    %v875 = vpack.c.bf16 %v811, %v811
    %v876 = vpack.c.bf16 %v812, %v812
    %v877 = vpack.c.bf16 %v813, %v813
    %v878 = vpack.c.bf16 %v814, %v814
    %v879 = vpack.c.bf16 %v815, %v815
    %v880 = vpack.c.bf16 %v816, %v816
    %v881 = vpack.c.bf16 %v817, %v817
    %v882 = vpack.c.bf16 %v818, %v818
    %v883 = vpack.c.bf16 %v819, %v819
    %v884 = vpack.c.bf16 %v820, %v820
    %v885 = vpack.c.bf16 %v821, %v821
    %v886 = vpack.c.bf16 %v822, %v822
    %v887 = vpack.c.bf16 %v823, %v823
    %v888 = vpack.c.bf16 %v824, %v824
    %v889 = vpack.c.bf16 %v825, %v825
    %v890 = vpack.c.bf16 %v826, %v826
    %v891 = vpack.c.bf16 %v827, %v827
    %v892 = vpack.c.bf16 %v828, %v828
    %v893 = vpack.c.bf16 %v829, %v829
    %894 = vst [vmem:[%s2] sm:$0xf] %v830
    %895 = vst [vmem:[%s2 + $0x4] sm:$0xf] %v831
    %896 = vst [vmem:[%s2 + $0x8] sm:$0xf] %v832
    %897 = vst [vmem:[%s2 + $0xc] sm:$0xf] %v833
    %898 = vst [vmem:[%s2 + $0x10] sm:$0xf] %v834
    %899 = vst [vmem:[%s2 + $0x14] sm:$0xf] %v835
    %900 = vst [vmem:[%s2 + $0x18] sm:$0xf] %v836
    %901 = vst [vmem:[%s2 + $0x1c] sm:$0xf] %v837
    %902 = vst [vmem:[%s2 + $0x20] sm:$0xf] %v838
    %903 = vst [vmem:[%s2 + $0x24] sm:$0xf] %v839
    %904 = vst [vmem:[%s2 + $0x28] sm:$0xf] %v840
    %905 = vst [vmem:[%s2 + $0x2c] sm:$0xf] %v841
    %906 = vst [vmem:[%s2 + $0x30] sm:$0xf] %v842
    %907 = vst [vmem:[%s2 + $0x34] sm:$0xf] %v843
    %908 = vst [vmem:[%s2 + $0x38] sm:$0xf] %v844
    %909 = vst [vmem:[%s2 + $0x3c] sm:$0xf] %v845
    %910 = vst [vmem:[%s2 + $0x40] sm:$0xf] %v846
    %911 = vst [vmem:[%s2 + $0x44] sm:$0xf] %v847
    %912 = vst [vmem:[%s2 + $0x48] sm:$0xf] %v848
    %913 = vst [vmem:[%s2 + $0x4c] sm:$0xf] %v849
    %914 = vst [vmem:[%s2 + $0x50] sm:$0xf] %v850
    %915 = vst [vmem:[%s2 + $0x54] sm:$0xf] %v851
    %916 = vst [vmem:[%s2 + $0x58] sm:$0xf] %v852
    %917 = vst [vmem:[%s2 + $0x5c] sm:$0xf] %v853
    %918 = vst [vmem:[%s2 + $0x60] sm:$0xf] %v854
    %919 = vst [vmem:[%s2 + $0x64] sm:$0xf] %v855
    %920 = vst [vmem:[%s2 + $0x68] sm:$0xf] %v856
    %921 = vst [vmem:[%s2 + $0x6c] sm:$0xf] %v857
    %922 = vst [vmem:[%s2 + $0x70] sm:$0xf] %v858
    %923 = vst [vmem:[%s2 + $0x74] sm:$0xf] %v859
    %924 = vst [vmem:[%s2 + $0x78] sm:$0xf] %v860
    %925 = vst [vmem:[%s2 + $0x7c] sm:$0xf] %v861
    %926 = vst [vmem:[%s2 + $0x80] sm:$0xf] %v862
    %927 = vst [vmem:[%s2 + $0x84] sm:$0xf] %v863
    %928 = vst [vmem:[%s2 + $0x88] sm:$0xf] %v864
    %929 = vst [vmem:[%s2 + $0x8c] sm:$0xf] %v865
    %930 = vst [vmem:[%s2 + $0x90] sm:$0xf] %v866
    %931 = vst [vmem:[%s2 + $0x94] sm:$0xf] %v867
    %932 = vst [vmem:[%s2 + $0x98] sm:$0xf] %v868
    %933 = vst [vmem:[%s2 + $0x9c] sm:$0xf] %v869
    %934 = vst [vmem:[%s2 + $0xa0] sm:$0xf] %v870
    %935 = vst [vmem:[%s2 + $0xa4] sm:$0xf] %v871
    %936 = vst [vmem:[%s2 + $0xa8] sm:$0xf] %v872
    %937 = vst [vmem:[%s2 + $0xac] sm:$0xf] %v873
    %938 = vst [vmem:[%s2 + $0xb0] sm:$0xf] %v874
    %939 = vst [vmem:[%s2 + $0xb4] sm:$0xf] %v875
    %940 = vst [vmem:[%s2 + $0xb8] sm:$0xf] %v876
    %941 = vst [vmem:[%s2 + $0xbc] sm:$0xf] %v877
    %942 = vst [vmem:[%s2 + $0xc0] sm:$0xf] %v878
    %943 = vst [vmem:[%s2 + $0xc4] sm:$0xf] %v879
    %944 = vst [vmem:[%s2 + $0xc8] sm:$0xf] %v880
    %945 = vst [vmem:[%s2 + $0xcc] sm:$0xf] %v881
    %946 = vst [vmem:[%s2 + $0xd0] sm:$0xf] %v882
    %947 = vst [vmem:[%s2 + $0xd4] sm:$0xf] %v883
    %948 = vst [vmem:[%s2 + $0xd8] sm:$0xf] %v884
    %949 = vst [vmem:[%s2 + $0xdc] sm:$0xf] %v885
    %950 = vst [vmem:[%s2 + $0xe0] sm:$0xf] %v886
    %951 = vst [vmem:[%s2 + $0xe4] sm:$0xf] %v887
    %952 = vst [vmem:[%s2 + $0xe8] sm:$0xf] %v888
    %953 = vst [vmem:[%s2 + $0xec] sm:$0xf] %v889
    %954 = vst [vmem:[%s2 + $0xf0] sm:$0xf] %v890
    %955 = vst [vmem:[%s2 + $0xf4] sm:$0xf] %v891
    %956 = vst [vmem:[%s2 + $0xf8] sm:$0xf] %v892
    %957 = vst [vmem:[%s2 + $0xfc] sm:$0xf] %v893
    %v958 = vadd.f32 %v766, %v767
    %v959 = vadd.f32 %v958, %v768
    %v960 = vadd.f32 %v959, %v769
    %v961 = vadd.f32 %v960, %v770
    %v962 = vadd.f32 %v961, %v771
    %v963 = vadd.f32 %v962, %v772
    %v964 = vadd.f32 %v963, %v773
    %v965 = vadd.f32 %v964, %v774
    %v966 = vadd.f32 %v965, %v775
    %v967 = vadd.f32 %v966, %v776
    %v968 = vadd.f32 %v967, %v777
    %v969 = vadd.f32 %v968, %v778
    %v970 = vadd.f32 %v969, %v779
    %v971 = vadd.f32 %v970, %v780
    %v972 = vadd.f32 %v971, %v781
    %v973 = vadd.f32 %v972, %v782
    %v974 = vadd.f32 %v973, %v783
    %v975 = vadd.f32 %v974, %v784
    %v976 = vadd.f32 %v975, %v785
    %v977 = vadd.f32 %v976, %v786
    %v978 = vadd.f32 %v977, %v787
    %v979 = vadd.f32 %v978, %v788
    %v980 = vadd.f32 %v979, %v789
    %v981 = vadd.f32 %v980, %v790
    %v982 = vadd.f32 %v981, %v791
    %v983 = vadd.f32 %v982, %v792
    %v984 = vadd.f32 %v983, %v793
    %v985 = vadd.f32 %v984, %v794
    %v986 = vadd.f32 %v985, %v795
    %v987 = vadd.f32 %v986, %v796
    %v988 = vadd.f32 %v987, %v797
    %v989 = vadd.f32 %v988, %v798
    %v990 = vadd.f32 %v989, %v799
    %v991 = vadd.f32 %v990, %v800
    %v992 = vadd.f32 %v991, %v801
    %v993 = vadd.f32 %v992, %v802
    %v994 = vadd.f32 %v993, %v803
    %v995 = vadd.f32 %v994, %v804
    %v996 = vadd.f32 %v995, %v805
    %v997 = vadd.f32 %v996, %v806
    %v998 = vadd.f32 %v997, %v807
    %v999 = vadd.f32 %v998, %v808
    %v1000 = vadd.f32 %v999, %v809
    %v1001 = vadd.f32 %v1000, %v810
    %v1002 = vadd.f32 %v1001, %v811
    %v1003 = vadd.f32 %v1002, %v812
    %v1004 = vadd.f32 %v1003, %v813
    %v1005 = vadd.f32 %v1004, %v814
    %v1006 = vadd.f32 %v1005, %v815
    %v1007 = vadd.f32 %v1006, %v816
    %v1008 = vadd.f32 %v1007, %v817
    %v1009 = vadd.f32 %v1008, %v818
    %v1010 = vadd.f32 %v1009, %v819
    %v1011 = vadd.f32 %v1010, %v820
    %v1012 = vadd.f32 %v1011, %v821
    %v1013 = vadd.f32 %v1012, %v822
    %v1014 = vadd.f32 %v1013, %v823
    %v1015 = vadd.f32 %v1014, %v824
    %v1016 = vadd.f32 %v1015, %v825
    %v1017 = vadd.f32 %v1016, %v826
    %v1018 = vadd.f32 %v1017, %v827
    %v1019 = vadd.f32 %v1018, %v828
    %v1020 = vadd.f32 %v1019, %v829
    %v1021 = vrot.slane %v1020, 4
    %v1022 = vadd.f32 %v1020, %v1021
    %v1023 = vrot.slane %v1022, 2
    %v1024 = vadd.f32 %v1022, %v1023
    %v1025 = vrot.slane %v1024, 1
    %v1026 = vadd.f32 %v1024, %v1025
    %1027 = vst [vmem:[%s3] sm:$0x1] %v1026
    %v1028 = vmul.f32 %v766, %v766
    %v1029 = vmul.f32 %v767, %v767
    %v1030 = vmul.f32 %v768, %v768
    %v1031 = vmul.f32 %v769, %v769
    %v1032 = vmul.f32 %v770, %v770
    %v1033 = vmul.f32 %v771, %v771
    %v1034 = vmul.f32 %v772, %v772
    %v1035 = vmul.f32 %v773, %v773
    %v1036 = vmul.f32 %v774, %v774
    %v1037 = vmul.f32 %v775, %v775
    %v1038 = vmul.f32 %v776, %v776
    %v1039 = vmul.f32 %v777, %v777
    %v1040 = vmul.f32 %v778, %v778
    %v1041 = vmul.f32 %v779, %v779
    %v1042 = vmul.f32 %v780, %v780
    %v1043 = vmul.f32 %v781, %v781
    %v1044 = vmul.f32 %v782, %v782
    %v1045 = vmul.f32 %v783, %v783
    %v1046 = vmul.f32 %v784, %v784
    %v1047 = vmul.f32 %v785, %v785
    %v1048 = vmul.f32 %v786, %v786
    %v1049 = vmul.f32 %v787, %v787
    %v1050 = vmul.f32 %v788, %v788
    %v1051 = vmul.f32 %v789, %v789
    %v1052 = vmul.f32 %v790, %v790
    %v1053 = vmul.f32 %v791, %v791
    %v1054 = vmul.f32 %v792, %v792
    %v1055 = vmul.f32 %v793, %v793
    %v1056 = vmul.f32 %v794, %v794
    %v1057 = vmul.f32 %v795, %v795
    %v1058 = vmul.f32 %v796, %v796
    %v1059 = vmul.f32 %v797, %v797
    %v1060 = vmul.f32 %v798, %v798
    %v1061 = vmul.f32 %v799, %v799
    %v1062 = vmul.f32 %v800, %v800
    %v1063 = vmul.f32 %v801, %v801
    %v1064 = vmul.f32 %v802, %v802
    %v1065 = vmul.f32 %v803, %v803
    %v1066 = vmul.f32 %v804, %v804
    %v1067 = vmul.f32 %v805, %v805
    %v1068 = vmul.f32 %v806, %v806
    %v1069 = vmul.f32 %v807, %v807
    %v1070 = vmul.f32 %v808, %v808
    %v1071 = vmul.f32 %v809, %v809
    %v1072 = vmul.f32 %v810, %v810
    %v1073 = vmul.f32 %v811, %v811
    %v1074 = vmul.f32 %v812, %v812
    %v1075 = vmul.f32 %v813, %v813
    %v1076 = vmul.f32 %v814, %v814
    %v1077 = vmul.f32 %v815, %v815
    %v1078 = vmul.f32 %v816, %v816
    %v1079 = vmul.f32 %v817, %v817
    %v1080 = vmul.f32 %v818, %v818
    %v1081 = vmul.f32 %v819, %v819
    %v1082 = vmul.f32 %v820, %v820
    %v1083 = vmul.f32 %v821, %v821
    %v1084 = vmul.f32 %v822, %v822
    %v1085 = vmul.f32 %v823, %v823
    %v1086 = vmul.f32 %v824, %v824
    %v1087 = vmul.f32 %v825, %v825
    %v1088 = vmul.f32 %v826, %v826
    %v1089 = vmul.f32 %v827, %v827
    %v1090 = vmul.f32 %v828, %v828
    %v1091 = vmul.f32 %v829, %v829
    %v1092 = vadd.f32 %v1028, %v1029
    %v1093 = vadd.f32 %v1092, %v1030
    %v1094 = vadd.f32 %v1093, %v1031
    %v1095 = vadd.f32 %v1094, %v1032
    %v1096 = vadd.f32 %v1095, %v1033
    %v1097 = vadd.f32 %v1096, %v1034
    %v1098 = vadd.f32 %v1097, %v1035
    %v1099 = vadd.f32 %v1098, %v1036
    %v1100 = vadd.f32 %v1099, %v1037
    %v1101 = vadd.f32 %v1100, %v1038
    %v1102 = vadd.f32 %v1101, %v1039
    %v1103 = vadd.f32 %v1102, %v1040
    %v1104 = vadd.f32 %v1103, %v1041
    %v1105 = vadd.f32 %v1104, %v1042
    %v1106 = vadd.f32 %v1105, %v1043
    %v1107 = vadd.f32 %v1106, %v1044
    %v1108 = vadd.f32 %v1107, %v1045
    %v1109 = vadd.f32 %v1108, %v1046
    %v1110 = vadd.f32 %v1109, %v1047
    %v1111 = vadd.f32 %v1110, %v1048
    %v1112 = vadd.f32 %v1111, %v1049
    %v1113 = vadd.f32 %v1112, %v1050
    %v1114 = vadd.f32 %v1113, %v1051
    %v1115 = vadd.f32 %v1114, %v1052
    %v1116 = vadd.f32 %v1115, %v1053
    %v1117 = vadd.f32 %v1116, %v1054
    %v1118 = vadd.f32 %v1117, %v1055
    %v1119 = vadd.f32 %v1118, %v1056
    %v1120 = vadd.f32 %v1119, %v1057
    %v1121 = vadd.f32 %v1120, %v1058
    %v1122 = vadd.f32 %v1121, %v1059
    %v1123 = vadd.f32 %v1122, %v1060
    %v1124 = vadd.f32 %v1123, %v1061
    %v1125 = vadd.f32 %v1124, %v1062
    %v1126 = vadd.f32 %v1125, %v1063
    %v1127 = vadd.f32 %v1126, %v1064
    %v1128 = vadd.f32 %v1127, %v1065
    %v1129 = vadd.f32 %v1128, %v1066
    %v1130 = vadd.f32 %v1129, %v1067
    %v1131 = vadd.f32 %v1130, %v1068
    %v1132 = vadd.f32 %v1131, %v1069
    %v1133 = vadd.f32 %v1132, %v1070
    %v1134 = vadd.f32 %v1133, %v1071
    %v1135 = vadd.f32 %v1134, %v1072
    %v1136 = vadd.f32 %v1135, %v1073
    %v1137 = vadd.f32 %v1136, %v1074
    %v1138 = vadd.f32 %v1137, %v1075
    %v1139 = vadd.f32 %v1138, %v1076
    %v1140 = vadd.f32 %v1139, %v1077
    %v1141 = vadd.f32 %v1140, %v1078
    %v1142 = vadd.f32 %v1141, %v1079
    %v1143 = vadd.f32 %v1142, %v1080
    %v1144 = vadd.f32 %v1143, %v1081
    %v1145 = vadd.f32 %v1144, %v1082
    %v1146 = vadd.f32 %v1145, %v1083
    %v1147 = vadd.f32 %v1146, %v1084
    %v1148 = vadd.f32 %v1147, %v1085
    %v1149 = vadd.f32 %v1148, %v1086
    %v1150 = vadd.f32 %v1149, %v1087
    %v1151 = vadd.f32 %v1150, %v1088
    %v1152 = vadd.f32 %v1151, %v1089
    %v1153 = vadd.f32 %v1152, %v1090
    %v1154 = vadd.f32 %v1153, %v1091
    %v1155 = vrot.slane %v1154, 4
    %v1156 = vadd.f32 %v1154, %v1155
    %v1157 = vrot.slane %v1156, 2
    %v1158 = vadd.f32 %v1156, %v1157
    %v1159 = vrot.slane %v1158, 1
    %v1160 = vadd.f32 %v1158, %v1159
    %1161 = vst [vmem:[%s4] sm:$0x1] %v1160
  $region17: #{residual_block.6} parent=0 // pred_fallthru
    _
  // Predicated region
  $region18: #{residual_block.6} parent=0 // pred_check
    _
  $region19: #{residual_block.6} parent=0 // pred_check_branch
    %1163 = sbr.rel (0) target = $region21
  $region20: #{residual_block.6} parent=0 // pred_region
    _
  $region21: #{residual_block.6} parent=0 // pred_fallthru
    _
  // Predicated region
  $region22: #{residual_block.6} parent=0 // pred_check
    _
  $region23: #{residual_block.6} parent=0 // pred_check_branch
    %1165 = sbr.rel (0) target = $region25
  $region24: #{residual_block.6} parent=0 // pred_region
    _
  $region25: #{residual_block.6} parent=0 // pred_fallthru
    _
  // Predicated region
  $region26: #{residual_block.6} parent=0 // pred_check
    _
  $region27: #{residual_block.6} parent=0 // pred_check_branch
    %1167 = sbr.rel (0) target = $region29
  $region28: #{residual_block.6} parent=0 // pred_region
    _
  $region29: #{residual_block.6} parent=0 // pred_fallthru
    _
  // Predicated region
  $region30: #{residual_block.6} parent=0 // pred_check
    _
  $region31: #{residual_block.6} parent=0 // pred_check_branch
    %1169 = sbr.rel (0) target = $region33
  $region32: #{residual_block.6} parent=0 // pred_region
    _
  $region33: #{residual_block.6} parent=0 // pred_fallthru
    _
  // Predicated region
  $region34: #{residual_block.6} parent=0 // pred_check
    _
  $region35: #{residual_block.6} parent=0 // pred_check_branch
    %1171 = sbr.rel (0) target = $region37
  $region36: #{residual_block.6} parent=0 // pred_region
    _
  $region37: #{residual_block.6} parent=0 // pred_fallthru
    _
  // Predicated region
  $region38: #{residual_block.6} parent=0 // pred_check
    _
  $region39: #{residual_block.6} parent=0 // pred_check_branch
    %1173 = sbr.rel (0) target = $region41
  $region40: #{residual_block.6} parent=0 // pred_region
    _
  $region41: #{residual_block.6} parent=0 // pred_fallthru
    _

// kernel: residual_block.11
$region0: #{residual_block.11}
  #allocation0 [shape = 'u32[]', space=smem, size = 0x4, offset = 0x4, fixed_abs, tag = 'smem constant byte address 0x4 - core index']
  #allocation1 [shape = 'u32[72,128]{1,0:T(1,128)}', space=vmem, size = 0x9000, scoped, tag = 'internal scratch']
  %s0 = inlined_call_operand.vmem [shape: bf16[512,128], index: 0, kind: input, shape index: {}]
  %s1 = inlined_call_operand.vmem [shape: f32[512,128], index: 1, kind: input, shape index: {}]
  %s2 = inlined_call_operand.vmem [shape: f32[1,128], index: 2, kind: input, shape index: {}]
  %s3 = inlined_call_operand.vmem [shape: f32[1,128], index: 3, kind: input, shape index: {}]
  %s4 = inlined_call_operand.vmem [shape: f32[512,128], index: 4, kind: output, shape index: {0}]
  %s5 = inlined_call_operand.hbm [shape: bf16[512,128], index: 5, kind: output, shape index: {1}]
  %6 = xla_tuple %s4, %s5
  %s7 = sld [smem:[#allocation0]]
  $region34: #{residual_block.11} parent=0
    _
  %s9 = ssub.s32 1, %s7
  %s10 = scalar_select 0, %s9, %s7
  $region1: #{residual_block.11} parent=0
    #allocation2 [shape = 'u8[131072]{0}', space=vmem, size = 0x20000, scoped, tag = 'output window, operand 1, single buffered']
    #allocation3 [shape = 's32[1]{0}', space=sflag, size = 0x4, scoped, tag = 'scoped memory for residual_block.11']
    %11 = vsyncpa [#allocation3], 0
    // Predicated region
    $region2: #{residual_block.11} parent=1 // pred_check
      _
    $region3: #{residual_block.11} parent=1 // pred_check_branch
      %13 = sbr.rel (0) target = $region5
    $region4: #{residual_block.11} parent=1 // pred_region
      _
    $region5: #{residual_block.11} parent=1 // pred_fallthru
      _
    // Predicated region
    $region6: #{residual_block.11} parent=1 // pred_check
      _
    $region7: #{residual_block.11} parent=1 // pred_check_branch
      %15 = sbr.rel (0) target = $region9
    $region8: #{residual_block.11} parent=1 // pred_region
      _
    $region9: #{residual_block.11} parent=1 // pred_fallthru
      _
    // Predicated region
    $region10: #{residual_block.11} parent=1 // pred_check
      _
    $region11: #{residual_block.11} parent=1 // pred_check_branch
      %17 = sbr.rel (0) target = $region13
    $region12: #{residual_block.11} parent=1 // pred_region
      _
    $region13: #{residual_block.11} parent=1 // pred_fallthru
      _
    // Predicated region
    $region14: #{residual_block.11} parent=1 // pred_check
      _
    $region15: #{residual_block.11} parent=1 // pred_check_branch
      %19 = sbr.rel (0) target = $region17
    $region16: #{residual_block.11} parent=1 // pred_region
      _
    $region17: #{residual_block.11} parent=1 // pred_fallthru
      _
    %v20 = vld [vmem:[%s0] sm:$0xf]
    %v21 = vld [vmem:[%s0 + $0x4] sm:$0xf]
    %v22 = vld [vmem:[%s0 + $0x8] sm:$0xf]
    %v23 = vld [vmem:[%s0 + $0xc] sm:$0xf]
    %v24 = vld [vmem:[%s0 + $0x10] sm:$0xf]
    %v25 = vld [vmem:[%s0 + $0x14] sm:$0xf]
    %v26 = vld [vmem:[%s0 + $0x18] sm:$0xf]
    %v27 = vld [vmem:[%s0 + $0x1c] sm:$0xf]
    %v28 = vld [vmem:[%s0 + $0x20] sm:$0xf]
    %v29 = vld [vmem:[%s0 + $0x24] sm:$0xf]
    %v30 = vld [vmem:[%s0 + $0x28] sm:$0xf]
    %v31 = vld [vmem:[%s0 + $0x2c] sm:$0xf]
    %v32 = vld [vmem:[%s0 + $0x30] sm:$0xf]
    %v33 = vld [vmem:[%s0 + $0x34] sm:$0xf]
    %v34 = vld [vmem:[%s0 + $0x38] sm:$0xf]
    %v35 = vld [vmem:[%s0 + $0x3c] sm:$0xf]
    %v36 = vld [vmem:[%s0 + $0x40] sm:$0xf]
    %v37 = vld [vmem:[%s0 + $0x44] sm:$0xf]
    %v38 = vld [vmem:[%s0 + $0x48] sm:$0xf]
    %v39 = vld [vmem:[%s0 + $0x4c] sm:$0xf]
    %v40 = vld [vmem:[%s0 + $0x50] sm:$0xf]
    %v41 = vld [vmem:[%s0 + $0x54] sm:$0xf]
    %v42 = vld [vmem:[%s0 + $0x58] sm:$0xf]
    %v43 = vld [vmem:[%s0 + $0x5c] sm:$0xf]
    %v44 = vld [vmem:[%s0 + $0x60] sm:$0xf]
    %v45 = vld [vmem:[%s0 + $0x64] sm:$0xf]
    %v46 = vld [vmem:[%s0 + $0x68] sm:$0xf]
    %v47 = vld [vmem:[%s0 + $0x6c] sm:$0xf]
    %v48 = vld [vmem:[%s0 + $0x70] sm:$0xf]
    %v49 = vld [vmem:[%s0 + $0x74] sm:$0xf]
    %v50 = vld [vmem:[%s0 + $0x78] sm:$0xf]
    %v51 = vld [vmem:[%s0 + $0x7c] sm:$0xf]
    %v52 = vld [vmem:[%s0 + $0x80] sm:$0xf]
    %v53 = vld [vmem:[%s0 + $0x84] sm:$0xf]
    %v54 = vld [vmem:[%s0 + $0x88] sm:$0xf]
    %v55 = vld [vmem:[%s0 + $0x8c] sm:$0xf]
    %v56 = vld [vmem:[%s0 + $0x90] sm:$0xf]
    %v57 = vld [vmem:[%s0 + $0x94] sm:$0xf]
    %v58 = vld [vmem:[%s0 + $0x98] sm:$0xf]
    %v59 = vld [vmem:[%s0 + $0x9c] sm:$0xf]
    %v60 = vld [vmem:[%s0 + $0xa0] sm:$0xf]
    %v61 = vld [vmem:[%s0 + $0xa4] sm:$0xf]
    %v62 = vld [vmem:[%s0 + $0xa8] sm:$0xf]
    %v63 = vld [vmem:[%s0 + $0xac] sm:$0xf]
    %v64 = vld [vmem:[%s0 + $0xb0] sm:$0xf]
    %v65 = vld [vmem:[%s0 + $0xb4] sm:$0xf]
    %v66 = vld [vmem:[%s0 + $0xb8] sm:$0xf]
    %v67 = vld [vmem:[%s0 + $0xbc] sm:$0xf]
    %v68 = vld [vmem:[%s0 + $0xc0] sm:$0xf]
    %v69 = vld [vmem:[%s0 + $0xc4] sm:$0xf]
    %v70 = vld [vmem:[%s0 + $0xc8] sm:$0xf]
    %v71 = vld [vmem:[%s0 + $0xcc] sm:$0xf]
    %v72 = vld [vmem:[%s0 + $0xd0] sm:$0xf]
    %v73 = vld [vmem:[%s0 + $0xd4] sm:$0xf]
    %v74 = vld [vmem:[%s0 + $0xd8] sm:$0xf]
    %v75 = vld [vmem:[%s0 + $0xdc] sm:$0xf]
    %v76 = vld [vmem:[%s0 + $0xe0] sm:$0xf]
    %v77 = vld [vmem:[%s0 + $0xe4] sm:$0xf]
    %v78 = vld [vmem:[%s0 + $0xe8] sm:$0xf]
    %v79 = vld [vmem:[%s0 + $0xec] sm:$0xf]
    %v80 = vld [vmem:[%s0 + $0xf0] sm:$0xf]
    %v81 = vld [vmem:[%s0 + $0xf4] sm:$0xf]
    %v82 = vld [vmem:[%s0 + $0xf8] sm:$0xf]
    %v83 = vld [vmem:[%s0 + $0xfc] sm:$0xf]
    %v84 = vunpack.c.l.bf16 %v20
    %v85 = vunpack.c.l.bf16 %v21
    %v86 = vunpack.c.l.bf16 %v22
    %v87 = vunpack.c.l.bf16 %v23
    %v88 = vunpack.c.l.bf16 %v24
    %v89 = vunpack.c.l.bf16 %v25
    %v90 = vunpack.c.l.bf16 %v26
    %v91 = vunpack.c.l.bf16 %v27
    %v92 = vunpack.c.l.bf16 %v28
    %v93 = vunpack.c.l.bf16 %v29
    %v94 = vunpack.c.l.bf16 %v30
    %v95 = vunpack.c.l.bf16 %v31
    %v96 = vunpack.c.l.bf16 %v32
    %v97 = vunpack.c.l.bf16 %v33
    %v98 = vunpack.c.l.bf16 %v34
    %v99 = vunpack.c.l.bf16 %v35
    %v100 = vunpack.c.l.bf16 %v36
    %v101 = vunpack.c.l.bf16 %v37
    %v102 = vunpack.c.l.bf16 %v38
    %v103 = vunpack.c.l.bf16 %v39
    %v104 = vunpack.c.l.bf16 %v40
    %v105 = vunpack.c.l.bf16 %v41
    %v106 = vunpack.c.l.bf16 %v42
    %v107 = vunpack.c.l.bf16 %v43
    %v108 = vunpack.c.l.bf16 %v44
    %v109 = vunpack.c.l.bf16 %v45
    %v110 = vunpack.c.l.bf16 %v46
    %v111 = vunpack.c.l.bf16 %v47
    %v112 = vunpack.c.l.bf16 %v48
    %v113 = vunpack.c.l.bf16 %v49
    %v114 = vunpack.c.l.bf16 %v50
    %v115 = vunpack.c.l.bf16 %v51
    %v116 = vunpack.c.l.bf16 %v52
    %v117 = vunpack.c.l.bf16 %v53
    %v118 = vunpack.c.l.bf16 %v54
    %v119 = vunpack.c.l.bf16 %v55
    %v120 = vunpack.c.l.bf16 %v56
    %v121 = vunpack.c.l.bf16 %v57
    %v122 = vunpack.c.l.bf16 %v58
    %v123 = vunpack.c.l.bf16 %v59
    %v124 = vunpack.c.l.bf16 %v60
    %v125 = vunpack.c.l.bf16 %v61
    %v126 = vunpack.c.l.bf16 %v62
    %v127 = vunpack.c.l.bf16 %v63
    %v128 = vunpack.c.l.bf16 %v64
    %v129 = vunpack.c.l.bf16 %v65
    %v130 = vunpack.c.l.bf16 %v66
    %v131 = vunpack.c.l.bf16 %v67
    %v132 = vunpack.c.l.bf16 %v68
    %v133 = vunpack.c.l.bf16 %v69
    %v134 = vunpack.c.l.bf16 %v70
    %v135 = vunpack.c.l.bf16 %v71
    %v136 = vunpack.c.l.bf16 %v72
    %v137 = vunpack.c.l.bf16 %v73
    %v138 = vunpack.c.l.bf16 %v74
    %v139 = vunpack.c.l.bf16 %v75
    %v140 = vunpack.c.l.bf16 %v76
    %v141 = vunpack.c.l.bf16 %v77
    %v142 = vunpack.c.l.bf16 %v78
    %v143 = vunpack.c.l.bf16 %v79
    %v144 = vunpack.c.l.bf16 %v80
    %v145 = vunpack.c.l.bf16 %v81
    %v146 = vunpack.c.l.bf16 %v82
    %v147 = vunpack.c.l.bf16 %v83
    %v148 = vld [vmem:[%s2] sm:$0x1]
    %v150 = vperm.slane %v148, 0
    %v152 = vmul.f32 %v84, %v150
    %v153 = vmul.f32 %v85, %v150
    %v154 = vmul.f32 %v86, %v150
    %v155 = vmul.f32 %v87, %v150
    %v156 = vmul.f32 %v88, %v150
    %v157 = vmul.f32 %v89, %v150
    %v158 = vmul.f32 %v90, %v150
    %v159 = vmul.f32 %v91, %v150
    %v160 = vmul.f32 %v92, %v150
    %v161 = vmul.f32 %v93, %v150
    %v162 = vmul.f32 %v94, %v150
    %v163 = vmul.f32 %v95, %v150
    %v164 = vmul.f32 %v96, %v150
    %v165 = vmul.f32 %v97, %v150
    %v166 = vmul.f32 %v98, %v150
    %v167 = vmul.f32 %v99, %v150
    %v168 = vmul.f32 %v100, %v150
    %v169 = vmul.f32 %v101, %v150
    %v170 = vmul.f32 %v102, %v150
    %v171 = vmul.f32 %v103, %v150
    %v172 = vmul.f32 %v104, %v150
    %v173 = vmul.f32 %v105, %v150
    %v174 = vmul.f32 %v106, %v150
    %v175 = vmul.f32 %v107, %v150
    %v176 = vmul.f32 %v108, %v150
    %v177 = vmul.f32 %v109, %v150
    %v178 = vmul.f32 %v110, %v150
    %v179 = vmul.f32 %v111, %v150
    %v180 = vmul.f32 %v112, %v150
    %v181 = vmul.f32 %v113, %v150
    %v182 = vmul.f32 %v114, %v150
    %v183 = vmul.f32 %v115, %v150
    %v184 = vmul.f32 %v116, %v150
    %v185 = vmul.f32 %v117, %v150
    %v186 = vmul.f32 %v118, %v150
    %v187 = vmul.f32 %v119, %v150
    %v188 = vmul.f32 %v120, %v150
    %v189 = vmul.f32 %v121, %v150
    %v190 = vmul.f32 %v122, %v150
    %v191 = vmul.f32 %v123, %v150
    %v192 = vmul.f32 %v124, %v150
    %v193 = vmul.f32 %v125, %v150
    %v194 = vmul.f32 %v126, %v150
    %v195 = vmul.f32 %v127, %v150
    %v196 = vmul.f32 %v128, %v150
    %v197 = vmul.f32 %v129, %v150
    %v198 = vmul.f32 %v130, %v150
    %v199 = vmul.f32 %v131, %v150
    %v200 = vmul.f32 %v132, %v150
    %v201 = vmul.f32 %v133, %v150
    %v202 = vmul.f32 %v134, %v150
    %v203 = vmul.f32 %v135, %v150
    %v204 = vmul.f32 %v136, %v150
    %v205 = vmul.f32 %v137, %v150
    %v206 = vmul.f32 %v138, %v150
    %v207 = vmul.f32 %v139, %v150
    %v208 = vmul.f32 %v140, %v150
    %v209 = vmul.f32 %v141, %v150
    %v210 = vmul.f32 %v142, %v150
    %v211 = vmul.f32 %v143, %v150
    %v212 = vmul.f32 %v144, %v150
    %v213 = vmul.f32 %v145, %v150
    %v214 = vmul.f32 %v146, %v150
    %v215 = vmul.f32 %v147, %v150
    %v216 = vld [vmem:[%s3] sm:$0x1]
    %v218 = vperm.slane %v216, 0
    %v220 = vadd.f32 %v152, %v218
    %v221 = vadd.f32 %v153, %v218
    %v222 = vadd.f32 %v154, %v218
    %v223 = vadd.f32 %v155, %v218
    %v224 = vadd.f32 %v156, %v218
    %v225 = vadd.f32 %v157, %v218
    %v226 = vadd.f32 %v158, %v218
    %v227 = vadd.f32 %v159, %v218
    %v228 = vadd.f32 %v160, %v218
    %v229 = vadd.f32 %v161, %v218
    %v230 = vadd.f32 %v162, %v218
    %v231 = vadd.f32 %v163, %v218
    %v232 = vadd.f32 %v164, %v218
    %v233 = vadd.f32 %v165, %v218
    %v234 = vadd.f32 %v166, %v218
    %v235 = vadd.f32 %v167, %v218
    %v236 = vadd.f32 %v168, %v218
    %v237 = vadd.f32 %v169, %v218
    %v238 = vadd.f32 %v170, %v218
    %v239 = vadd.f32 %v171, %v218
    %v240 = vadd.f32 %v172, %v218
    %v241 = vadd.f32 %v173, %v218
    %v242 = vadd.f32 %v174, %v218
    %v243 = vadd.f32 %v175, %v218
    %v244 = vadd.f32 %v176, %v218
    %v245 = vadd.f32 %v177, %v218
    %v246 = vadd.f32 %v178, %v218
    %v247 = vadd.f32 %v179, %v218
    %v248 = vadd.f32 %v180, %v218
    %v249 = vadd.f32 %v181, %v218
    %v250 = vadd.f32 %v182, %v218
    %v251 = vadd.f32 %v183, %v218
    %v252 = vadd.f32 %v184, %v218
    %v253 = vadd.f32 %v185, %v218
    %v254 = vadd.f32 %v186, %v218
    %v255 = vadd.f32 %v187, %v218
    %v256 = vadd.f32 %v188, %v218
    %v257 = vadd.f32 %v189, %v218
    %v258 = vadd.f32 %v190, %v218
    %v259 = vadd.f32 %v191, %v218
    %v260 = vadd.f32 %v192, %v218
    %v261 = vadd.f32 %v193, %v218
    %v262 = vadd.f32 %v194, %v218
    %v263 = vadd.f32 %v195, %v218
    %v264 = vadd.f32 %v196, %v218
    %v265 = vadd.f32 %v197, %v218
    %v266 = vadd.f32 %v198, %v218
    %v267 = vadd.f32 %v199, %v218
    %v268 = vadd.f32 %v200, %v218
    %v269 = vadd.f32 %v201, %v218
    %v270 = vadd.f32 %v202, %v218
    %v271 = vadd.f32 %v203, %v218
    %v272 = vadd.f32 %v204, %v218
    %v273 = vadd.f32 %v205, %v218
    %v274 = vadd.f32 %v206, %v218
    %v275 = vadd.f32 %v207, %v218
    %v276 = vadd.f32 %v208, %v218
    %v277 = vadd.f32 %v209, %v218
    %v278 = vadd.f32 %v210, %v218
    %v279 = vadd.f32 %v211, %v218
    %v280 = vadd.f32 %v212, %v218
    %v281 = vadd.f32 %v213, %v218
    %v282 = vadd.f32 %v214, %v218
    %v283 = vadd.f32 %v215, %v218
    %vm284 = vcmp.gt.f32.partialorder %v220, 0.0
    %vm285 = vcmp.gt.f32.partialorder %v221, 0.0
    %vm286 = vcmp.gt.f32.partialorder %v222, 0.0
    %vm287 = vcmp.gt.f32.partialorder %v223, 0.0
    %vm288 = vcmp.gt.f32.partialorder %v224, 0.0
    %vm289 = vcmp.gt.f32.partialorder %v225, 0.0
    %vm290 = vcmp.gt.f32.partialorder %v226, 0.0
    %vm291 = vcmp.gt.f32.partialorder %v227, 0.0
    %vm292 = vcmp.gt.f32.partialorder %v228, 0.0
    %vm293 = vcmp.gt.f32.partialorder %v229, 0.0
    %vm294 = vcmp.gt.f32.partialorder %v230, 0.0
    %vm295 = vcmp.gt.f32.partialorder %v231, 0.0
    %vm296 = vcmp.gt.f32.partialorder %v232, 0.0
    %vm297 = vcmp.gt.f32.partialorder %v233, 0.0
    %vm298 = vcmp.gt.f32.partialorder %v234, 0.0
    %vm299 = vcmp.gt.f32.partialorder %v235, 0.0
    %vm300 = vcmp.gt.f32.partialorder %v236, 0.0
    %vm301 = vcmp.gt.f32.partialorder %v237, 0.0
    %vm302 = vcmp.gt.f32.partialorder %v238, 0.0
    %vm303 = vcmp.gt.f32.partialorder %v239, 0.0
    %vm304 = vcmp.gt.f32.partialorder %v240, 0.0
    %vm305 = vcmp.gt.f32.partialorder %v241, 0.0
    %vm306 = vcmp.gt.f32.partialorder %v242, 0.0
    %vm307 = vcmp.gt.f32.partialorder %v243, 0.0
    %vm308 = vcmp.gt.f32.partialorder %v244, 0.0
    %vm309 = vcmp.gt.f32.partialorder %v245, 0.0
    %vm310 = vcmp.gt.f32.partialorder %v246, 0.0
    %vm311 = vcmp.gt.f32.partialorder %v247, 0.0
    %vm312 = vcmp.gt.f32.partialorder %v248, 0.0
    %vm313 = vcmp.gt.f32.partialorder %v249, 0.0
    %vm314 = vcmp.gt.f32.partialorder %v250, 0.0
    %vm315 = vcmp.gt.f32.partialorder %v251, 0.0
    %vm316 = vcmp.gt.f32.partialorder %v252, 0.0
    %vm317 = vcmp.gt.f32.partialorder %v253, 0.0
    %vm318 = vcmp.gt.f32.partialorder %v254, 0.0
    %vm319 = vcmp.gt.f32.partialorder %v255, 0.0
    %vm320 = vcmp.gt.f32.partialorder %v256, 0.0
    %vm321 = vcmp.gt.f32.partialorder %v257, 0.0
    %vm322 = vcmp.gt.f32.partialorder %v258, 0.0
    %vm323 = vcmp.gt.f32.partialorder %v259, 0.0
    %vm324 = vcmp.gt.f32.partialorder %v260, 0.0
    %vm325 = vcmp.gt.f32.partialorder %v261, 0.0
    %vm326 = vcmp.gt.f32.partialorder %v262, 0.0
    %vm327 = vcmp.gt.f32.partialorder %v263, 0.0
    %vm328 = vcmp.gt.f32.partialorder %v264, 0.0
    %vm329 = vcmp.gt.f32.partialorder %v265, 0.0
    %vm330 = vcmp.gt.f32.partialorder %v266, 0.0
    %vm331 = vcmp.gt.f32.partialorder %v267, 0.0
    %vm332 = vcmp.gt.f32.partialorder %v268, 0.0
    %vm333 = vcmp.gt.f32.partialorder %v269, 0.0
    %vm334 = vcmp.gt.f32.partialorder %v270, 0.0
    %vm335 = vcmp.gt.f32.partialorder %v271, 0.0
    %vm336 = vcmp.gt.f32.partialorder %v272, 0.0
    %vm337 = vcmp.gt.f32.partialorder %v273, 0.0
    %vm338 = vcmp.gt.f32.partialorder %v274, 0.0
    %vm339 = vcmp.gt.f32.partialorder %v275, 0.0
    %vm340 = vcmp.gt.f32.partialorder %v276, 0.0
    %vm341 = vcmp.gt.f32.partialorder %v277, 0.0
    %vm342 = vcmp.gt.f32.partialorder %v278, 0.0
    %vm343 = vcmp.gt.f32.partialorder %v279, 0.0
    %vm344 = vcmp.gt.f32.partialorder %v280, 0.0
    %vm345 = vcmp.gt.f32.partialorder %v281, 0.0
    %vm346 = vcmp.gt.f32.partialorder %v282, 0.0
    %vm347 = vcmp.gt.f32.partialorder %v283, 0.0
    %v348 = vmul.f32 %v220, 0.1
    %v349 = vmul.f32 %v221, 0.1
    %v350 = vmul.f32 %v222, 0.1
    %v351 = vmul.f32 %v223, 0.1
    %v352 = vmul.f32 %v224, 0.1
    %v353 = vmul.f32 %v225, 0.1
    %v354 = vmul.f32 %v226, 0.1
    %v355 = vmul.f32 %v227, 0.1
    %v356 = vmul.f32 %v228, 0.1
    %v357 = vmul.f32 %v229, 0.1
    %v358 = vmul.f32 %v230, 0.1
    %v359 = vmul.f32 %v231, 0.1
    %v360 = vmul.f32 %v232, 0.1
    %v361 = vmul.f32 %v233, 0.1
    %v362 = vmul.f32 %v234, 0.1
    %v363 = vmul.f32 %v235, 0.1
    %v364 = vmul.f32 %v236, 0.1
    %v365 = vmul.f32 %v237, 0.1
    %v366 = vmul.f32 %v238, 0.1
    %v367 = vmul.f32 %v239, 0.1
    %v368 = vmul.f32 %v240, 0.1
    %v369 = vmul.f32 %v241, 0.1
    %v370 = vmul.f32 %v242, 0.1
    %v371 = vmul.f32 %v243, 0.1
    %v372 = vmul.f32 %v244, 0.1
    %v373 = vmul.f32 %v245, 0.1
    %v374 = vmul.f32 %v246, 0.1
    %v375 = vmul.f32 %v247, 0.1
    %v376 = vmul.f32 %v248, 0.1
    %v377 = vmul.f32 %v249, 0.1
    %v378 = vmul.f32 %v250, 0.1
    %v379 = vmul.f32 %v251, 0.1
    %v380 = vmul.f32 %v252, 0.1
    %v381 = vmul.f32 %v253, 0.1
    %v382 = vmul.f32 %v254, 0.1
    %v383 = vmul.f32 %v255, 0.1
    %v384 = vmul.f32 %v256, 0.1
    %v385 = vmul.f32 %v257, 0.1
    %v386 = vmul.f32 %v258, 0.1
    %v387 = vmul.f32 %v259, 0.1
    %v388 = vmul.f32 %v260, 0.1
    %v389 = vmul.f32 %v261, 0.1
    %v390 = vmul.f32 %v262, 0.1
    %v391 = vmul.f32 %v263, 0.1
    %v392 = vmul.f32 %v264, 0.1
    %v393 = vmul.f32 %v265, 0.1
    %v394 = vmul.f32 %v266, 0.1
    %v395 = vmul.f32 %v267, 0.1
    %v396 = vmul.f32 %v268, 0.1
    %v397 = vmul.f32 %v269, 0.1
    %v398 = vmul.f32 %v270, 0.1
    %v399 = vmul.f32 %v271, 0.1
    %v400 = vmul.f32 %v272, 0.1
    %v401 = vmul.f32 %v273, 0.1
    %v402 = vmul.f32 %v274, 0.1
    %v403 = vmul.f32 %v275, 0.1
    %v404 = vmul.f32 %v276, 0.1
    %v405 = vmul.f32 %v277, 0.1
    %v406 = vmul.f32 %v278, 0.1
    %v407 = vmul.f32 %v279, 0.1
    %v408 = vmul.f32 %v280, 0.1
    %v409 = vmul.f32 %v281, 0.1
    %v410 = vmul.f32 %v282, 0.1
    %v411 = vmul.f32 %v283, 0.1
    %v412 = vsel %vm284, %v220, %v348
    %v413 = vsel %vm285, %v221, %v349
    %v414 = vsel %vm286, %v222, %v350
    %v415 = vsel %vm287, %v223, %v351
    %v416 = vsel %vm288, %v224, %v352
    %v417 = vsel %vm289, %v225, %v353
    %v418 = vsel %vm290, %v226, %v354
    %v419 = vsel %vm291, %v227, %v355
    %v420 = vsel %vm292, %v228, %v356
    %v421 = vsel %vm293, %v229, %v357
    %v422 = vsel %vm294, %v230, %v358
    %v423 = vsel %vm295, %v231, %v359
    %v424 = vsel %vm296, %v232, %v360
    %v425 = vsel %vm297, %v233, %v361
    %v426 = vsel %vm298, %v234, %v362
    %v427 = vsel %vm299, %v235, %v363
    %v428 = vsel %vm300, %v236, %v364
    %v429 = vsel %vm301, %v237, %v365
    %v430 = vsel %vm302, %v238, %v366
    %v431 = vsel %vm303, %v239, %v367
    %v432 = vsel %vm304, %v240, %v368
    %v433 = vsel %vm305, %v241, %v369
    %v434 = vsel %vm306, %v242, %v370
    %v435 = vsel %vm307, %v243, %v371
    %v436 = vsel %vm308, %v244, %v372
    %v437 = vsel %vm309, %v245, %v373
    %v438 = vsel %vm310, %v246, %v374
    %v439 = vsel %vm311, %v247, %v375
    %v440 = vsel %vm312, %v248, %v376
    %v441 = vsel %vm313, %v249, %v377
    %v442 = vsel %vm314, %v250, %v378
    %v443 = vsel %vm315, %v251, %v379
    %v444 = vsel %vm316, %v252, %v380
    %v445 = vsel %vm317, %v253, %v381
    %v446 = vsel %vm318, %v254, %v382
    %v447 = vsel %vm319, %v255, %v383
    %v448 = vsel %vm320, %v256, %v384
    %v449 = vsel %vm321, %v257, %v385
    %v450 = vsel %vm322, %v258, %v386
    %v451 = vsel %vm323, %v259, %v387
    %v452 = vsel %vm324, %v260, %v388
    %v453 = vsel %vm325, %v261, %v389
    %v454 = vsel %vm326, %v262, %v390
    %v455 = vsel %vm327, %v263, %v391
    %v456 = vsel %vm328, %v264, %v392
    %v457 = vsel %vm329, %v265, %v393
    %v458 = vsel %vm330, %v266, %v394
    %v459 = vsel %vm331, %v267, %v395
    %v460 = vsel %vm332, %v268, %v396
    %v461 = vsel %vm333, %v269, %v397
    %v462 = vsel %vm334, %v270, %v398
    %v463 = vsel %vm335, %v271, %v399
    %v464 = vsel %vm336, %v272, %v400
    %v465 = vsel %vm337, %v273, %v401
    %v466 = vsel %vm338, %v274, %v402
    %v467 = vsel %vm339, %v275, %v403
    %v468 = vsel %vm340, %v276, %v404
    %v469 = vsel %vm341, %v277, %v405
    %v470 = vsel %vm342, %v278, %v406
    %v471 = vsel %vm343, %v279, %v407
    %v472 = vsel %vm344, %v280, %v408
    %v473 = vsel %vm345, %v281, %v409
    %v474 = vsel %vm346, %v282, %v410
    %v475 = vsel %vm347, %v283, %v411
    %v476 = vld [vmem:[%s1] sm:$0xff]
    %v477 = vld [vmem:[%s1 + $0x8] sm:$0xff]
    %v478 = vld [vmem:[%s1 + $0x10] sm:$0xff]
    %v479 = vld [vmem:[%s1 + $0x18] sm:$0xff]
    %v480 = vld [vmem:[%s1 + $0x20] sm:$0xff]
    %v481 = vld [vmem:[%s1 + $0x28] sm:$0xff]
    %v482 = vld [vmem:[%s1 + $0x30] sm:$0xff]
    %v483 = vld [vmem:[%s1 + $0x38] sm:$0xff]
    %v484 = vld [vmem:[%s1 + $0x40] sm:$0xff]
    %v485 = vld [vmem:[%s1 + $0x48] sm:$0xff]
    %v486 = vld [vmem:[%s1 + $0x50] sm:$0xff]
    %v487 = vld [vmem:[%s1 + $0x58] sm:$0xff]
    %v488 = vld [vmem:[%s1 + $0x60] sm:$0xff]
    %v489 = vld [vmem:[%s1 + $0x68] sm:$0xff]
    %v490 = vld [vmem:[%s1 + $0x70] sm:$0xff]
    %v491 = vld [vmem:[%s1 + $0x78] sm:$0xff]
    %v492 = vld [vmem:[%s1 + $0x80] sm:$0xff]
    %v493 = vld [vmem:[%s1 + $0x88] sm:$0xff]
    %v494 = vld [vmem:[%s1 + $0x90] sm:$0xff]
    %v495 = vld [vmem:[%s1 + $0x98] sm:$0xff]
    %v496 = vld [vmem:[%s1 + $0xa0] sm:$0xff]
    %v497 = vld [vmem:[%s1 + $0xa8] sm:$0xff]
    %v498 = vld [vmem:[%s1 + $0xb0] sm:$0xff]
    %v499 = vld [vmem:[%s1 + $0xb8] sm:$0xff]
    %v500 = vld [vmem:[%s1 + $0xc0] sm:$0xff]
    %v501 = vld [vmem:[%s1 + $0xc8] sm:$0xff]
    %v502 = vld [vmem:[%s1 + $0xd0] sm:$0xff]
    %v503 = vld [vmem:[%s1 + $0xd8] sm:$0xff]
    %v504 = vld [vmem:[%s1 + $0xe0] sm:$0xff]
    %v505 = vld [vmem:[%s1 + $0xe8] sm:$0xff]
    %v506 = vld [vmem:[%s1 + $0xf0] sm:$0xff]
    %v507 = vld [vmem:[%s1 + $0xf8] sm:$0xff]
    %v508 = vld [vmem:[%s1 + $0x100] sm:$0xff]
    %v509 = vld [vmem:[%s1 + $0x108] sm:$0xff]
    %v510 = vld [vmem:[%s1 + $0x110] sm:$0xff]
    %v511 = vld [vmem:[%s1 + $0x118] sm:$0xff]
    %v512 = vld [vmem:[%s1 + $0x120] sm:$0xff]
    %v513 = vld [vmem:[%s1 + $0x128] sm:$0xff]
    %v514 = vld [vmem:[%s1 + $0x130] sm:$0xff]
    %v515 = vld [vmem:[%s1 + $0x138] sm:$0xff]
    %v516 = vld [vmem:[%s1 + $0x140] sm:$0xff]
    %v517 = vld [vmem:[%s1 + $0x148] sm:$0xff]
    %v518 = vld [vmem:[%s1 + $0x150] sm:$0xff]
    %v519 = vld [vmem:[%s1 + $0x158] sm:$0xff]
    %v520 = vld [vmem:[%s1 + $0x160] sm:$0xff]
    %v521 = vld [vmem:[%s1 + $0x168] sm:$0xff]
    %v522 = vld [vmem:[%s1 + $0x170] sm:$0xff]
    %v523 = vld [vmem:[%s1 + $0x178] sm:$0xff]
    %v524 = vld [vmem:[%s1 + $0x180] sm:$0xff]
    %v525 = vld [vmem:[%s1 + $0x188] sm:$0xff]
    %v526 = vld [vmem:[%s1 + $0x190] sm:$0xff]
    %v527 = vld [vmem:[%s1 + $0x198] sm:$0xff]
    %v528 = vld [vmem:[%s1 + $0x1a0] sm:$0xff]
    %v529 = vld [vmem:[%s1 + $0x1a8] sm:$0xff]
    %v530 = vld [vmem:[%s1 + $0x1b0] sm:$0xff]
    %v531 = vld [vmem:[%s1 + $0x1b8] sm:$0xff]
    %v532 = vld [vmem:[%s1 + $0x1c0] sm:$0xff]
    %v533 = vld [vmem:[%s1 + $0x1c8] sm:$0xff]
    %v534 = vld [vmem:[%s1 + $0x1d0] sm:$0xff]
    %v535 = vld [vmem:[%s1 + $0x1d8] sm:$0xff]
    %v536 = vld [vmem:[%s1 + $0x1e0] sm:$0xff]
    %v537 = vld [vmem:[%s1 + $0x1e8] sm:$0xff]
    %v538 = vld [vmem:[%s1 + $0x1f0] sm:$0xff]
    %v539 = vld [vmem:[%s1 + $0x1f8] sm:$0xff]
    %v540 = vadd.f32 %v476, %v412
    %v541 = vadd.f32 %v477, %v413
    %v542 = vadd.f32 %v478, %v414
    %v543 = vadd.f32 %v479, %v415
    %v544 = vadd.f32 %v480, %v416
    %v545 = vadd.f32 %v481, %v417
    %v546 = vadd.f32 %v482, %v418
    %v547 = vadd.f32 %v483, %v419
    %v548 = vadd.f32 %v484, %v420
    %v549 = vadd.f32 %v485, %v421
    %v550 = vadd.f32 %v486, %v422
    %v551 = vadd.f32 %v487, %v423
    %v552 = vadd.f32 %v488, %v424
    %v553 = vadd.f32 %v489, %v425
    %v554 = vadd.f32 %v490, %v426
    %v555 = vadd.f32 %v491, %v427
    %v556 = vadd.f32 %v492, %v428
    %v557 = vadd.f32 %v493, %v429
    %v558 = vadd.f32 %v494, %v430
    %v559 = vadd.f32 %v495, %v431
    %v560 = vadd.f32 %v496, %v432
    %v561 = vadd.f32 %v497, %v433
    %v562 = vadd.f32 %v498, %v434
    %v563 = vadd.f32 %v499, %v435
    %v564 = vadd.f32 %v500, %v436
    %v565 = vadd.f32 %v501, %v437
    %v566 = vadd.f32 %v502, %v438
    %v567 = vadd.f32 %v503, %v439
    %v568 = vadd.f32 %v504, %v440
    %v569 = vadd.f32 %v505, %v441
    %v570 = vadd.f32 %v506, %v442
    %v571 = vadd.f32 %v507, %v443
    %v572 = vadd.f32 %v508, %v444
    %v573 = vadd.f32 %v509, %v445
    %v574 = vadd.f32 %v510, %v446
    %v575 = vadd.f32 %v511, %v447
    %v576 = vadd.f32 %v512, %v448
    %v577 = vadd.f32 %v513, %v449
    %v578 = vadd.f32 %v514, %v450
    %v579 = vadd.f32 %v515, %v451
    %v580 = vadd.f32 %v516, %v452
    %v581 = vadd.f32 %v517, %v453
    %v582 = vadd.f32 %v518, %v454
    %v583 = vadd.f32 %v519, %v455
    %v584 = vadd.f32 %v520, %v456
    %v585 = vadd.f32 %v521, %v457
    %v586 = vadd.f32 %v522, %v458
    %v587 = vadd.f32 %v523, %v459
    %v588 = vadd.f32 %v524, %v460
    %v589 = vadd.f32 %v525, %v461
    %v590 = vadd.f32 %v526, %v462
    %v591 = vadd.f32 %v527, %v463
    %v592 = vadd.f32 %v528, %v464
    %v593 = vadd.f32 %v529, %v465
    %v594 = vadd.f32 %v530, %v466
    %v595 = vadd.f32 %v531, %v467
    %v596 = vadd.f32 %v532, %v468
    %v597 = vadd.f32 %v533, %v469
    %v598 = vadd.f32 %v534, %v470
    %v599 = vadd.f32 %v535, %v471
    %v600 = vadd.f32 %v536, %v472
    %v601 = vadd.f32 %v537, %v473
    %v602 = vadd.f32 %v538, %v474
    %v603 = vadd.f32 %v539, %v475
    %604 = vst [vmem:[%s4] sm:$0xff] %v540
    %605 = vst [vmem:[%s4 + $0x8] sm:$0xff] %v541
    %606 = vst [vmem:[%s4 + $0x10] sm:$0xff] %v542
    %607 = vst [vmem:[%s4 + $0x18] sm:$0xff] %v543
    %608 = vst [vmem:[%s4 + $0x20] sm:$0xff] %v544
    %609 = vst [vmem:[%s4 + $0x28] sm:$0xff] %v545
    %610 = vst [vmem:[%s4 + $0x30] sm:$0xff] %v546
    %611 = vst [vmem:[%s4 + $0x38] sm:$0xff] %v547
    %612 = vst [vmem:[%s4 + $0x40] sm:$0xff] %v548
    %613 = vst [vmem:[%s4 + $0x48] sm:$0xff] %v549
    %614 = vst [vmem:[%s4 + $0x50] sm:$0xff] %v550
    %615 = vst [vmem:[%s4 + $0x58] sm:$0xff] %v551
    %616 = vst [vmem:[%s4 + $0x60] sm:$0xff] %v552
    %617 = vst [vmem:[%s4 + $0x68] sm:$0xff] %v553
    %618 = vst [vmem:[%s4 + $0x70] sm:$0xff] %v554
    %619 = vst [vmem:[%s4 + $0x78] sm:$0xff] %v555
    %620 = vst [vmem:[%s4 + $0x80] sm:$0xff] %v556
    %621 = vst [vmem:[%s4 + $0x88] sm:$0xff] %v557
    %622 = vst [vmem:[%s4 + $0x90] sm:$0xff] %v558
    %623 = vst [vmem:[%s4 + $0x98] sm:$0xff] %v559
    %624 = vst [vmem:[%s4 + $0xa0] sm:$0xff] %v560
    %625 = vst [vmem:[%s4 + $0xa8] sm:$0xff] %v561
    %626 = vst [vmem:[%s4 + $0xb0] sm:$0xff] %v562
    %627 = vst [vmem:[%s4 + $0xb8] sm:$0xff] %v563
    %628 = vst [vmem:[%s4 + $0xc0] sm:$0xff] %v564
    %629 = vst [vmem:[%s4 + $0xc8] sm:$0xff] %v565
    %630 = vst [vmem:[%s4 + $0xd0] sm:$0xff] %v566
    %631 = vst [vmem:[%s4 + $0xd8] sm:$0xff] %v567
    %632 = vst [vmem:[%s4 + $0xe0] sm:$0xff] %v568
    %633 = vst [vmem:[%s4 + $0xe8] sm:$0xff] %v569
    %634 = vst [vmem:[%s4 + $0xf0] sm:$0xff] %v570
    %635 = vst [vmem:[%s4 + $0xf8] sm:$0xff] %v571
    %636 = vst [vmem:[%s4 + $0x100] sm:$0xff] %v572
    %637 = vst [vmem:[%s4 + $0x108] sm:$0xff] %v573
    %638 = vst [vmem:[%s4 + $0x110] sm:$0xff] %v574
    %639 = vst [vmem:[%s4 + $0x118] sm:$0xff] %v575
    %640 = vst [vmem:[%s4 + $0x120] sm:$0xff] %v576
    %641 = vst [vmem:[%s4 + $0x128] sm:$0xff] %v577
    %642 = vst [vmem:[%s4 + $0x130] sm:$0xff] %v578
    %643 = vst [vmem:[%s4 + $0x138] sm:$0xff] %v579
    %644 = vst [vmem:[%s4 + $0x140] sm:$0xff] %v580
    %645 = vst [vmem:[%s4 + $0x148] sm:$0xff] %v581
    %646 = vst [vmem:[%s4 + $0x150] sm:$0xff] %v582
    %647 = vst [vmem:[%s4 + $0x158] sm:$0xff] %v583
    %648 = vst [vmem:[%s4 + $0x160] sm:$0xff] %v584
    %649 = vst [vmem:[%s4 + $0x168] sm:$0xff] %v585
    %650 = vst [vmem:[%s4 + $0x170] sm:$0xff] %v586
    %651 = vst [vmem:[%s4 + $0x178] sm:$0xff] %v587
    %652 = vst [vmem:[%s4 + $0x180] sm:$0xff] %v588
    %653 = vst [vmem:[%s4 + $0x188] sm:$0xff] %v589
    %654 = vst [vmem:[%s4 + $0x190] sm:$0xff] %v590
    %655 = vst [vmem:[%s4 + $0x198] sm:$0xff] %v591
    %656 = vst [vmem:[%s4 + $0x1a0] sm:$0xff] %v592
    %657 = vst [vmem:[%s4 + $0x1a8] sm:$0xff] %v593
    %658 = vst [vmem:[%s4 + $0x1b0] sm:$0xff] %v594
    %659 = vst [vmem:[%s4 + $0x1b8] sm:$0xff] %v595
    %660 = vst [vmem:[%s4 + $0x1c0] sm:$0xff] %v596
    %661 = vst [vmem:[%s4 + $0x1c8] sm:$0xff] %v597
    %662 = vst [vmem:[%s4 + $0x1d0] sm:$0xff] %v598
    %663 = vst [vmem:[%s4 + $0x1d8] sm:$0xff] %v599
    %664 = vst [vmem:[%s4 + $0x1e0] sm:$0xff] %v600
    %665 = vst [vmem:[%s4 + $0x1e8] sm:$0xff] %v601
    %666 = vst [vmem:[%s4 + $0x1f0] sm:$0xff] %v602
    %667 = vst [vmem:[%s4 + $0x1f8] sm:$0xff] %v603
    %v668 = vpack.c.bf16 %v540, %v540
    %v669 = vpack.c.bf16 %v541, %v541
    %v670 = vpack.c.bf16 %v542, %v542
    %v671 = vpack.c.bf16 %v543, %v543
    %v672 = vpack.c.bf16 %v544, %v544
    %v673 = vpack.c.bf16 %v545, %v545
    %v674 = vpack.c.bf16 %v546, %v546
    %v675 = vpack.c.bf16 %v547, %v547
    %v676 = vpack.c.bf16 %v548, %v548
    %v677 = vpack.c.bf16 %v549, %v549
    %v678 = vpack.c.bf16 %v550, %v550
    %v679 = vpack.c.bf16 %v551, %v551
    %v680 = vpack.c.bf16 %v552, %v552
    %v681 = vpack.c.bf16 %v553, %v553
    %v682 = vpack.c.bf16 %v554, %v554
    %v683 = vpack.c.bf16 %v555, %v555
    %v684 = vpack.c.bf16 %v556, %v556
    %v685 = vpack.c.bf16 %v557, %v557
    %v686 = vpack.c.bf16 %v558, %v558
    %v687 = vpack.c.bf16 %v559, %v559
    %v688 = vpack.c.bf16 %v560, %v560
    %v689 = vpack.c.bf16 %v561, %v561
    %v690 = vpack.c.bf16 %v562, %v562
    %v691 = vpack.c.bf16 %v563, %v563
    %v692 = vpack.c.bf16 %v564, %v564
    %v693 = vpack.c.bf16 %v565, %v565
    %v694 = vpack.c.bf16 %v566, %v566
    %v695 = vpack.c.bf16 %v567, %v567
    %v696 = vpack.c.bf16 %v568, %v568
    %v697 = vpack.c.bf16 %v569, %v569
    %v698 = vpack.c.bf16 %v570, %v570
    %v699 = vpack.c.bf16 %v571, %v571
    %v700 = vpack.c.bf16 %v572, %v572
    %v701 = vpack.c.bf16 %v573, %v573
    %v702 = vpack.c.bf16 %v574, %v574
    %v703 = vpack.c.bf16 %v575, %v575
    %v704 = vpack.c.bf16 %v576, %v576
    %v705 = vpack.c.bf16 %v577, %v577
    %v706 = vpack.c.bf16 %v578, %v578
    %v707 = vpack.c.bf16 %v579, %v579
    %v708 = vpack.c.bf16 %v580, %v580
    %v709 = vpack.c.bf16 %v581, %v581
    %v710 = vpack.c.bf16 %v582, %v582
    %v711 = vpack.c.bf16 %v583, %v583
    %v712 = vpack.c.bf16 %v584, %v584
    %v713 = vpack.c.bf16 %v585, %v585
    %v714 = vpack.c.bf16 %v586, %v586
    %v715 = vpack.c.bf16 %v587, %v587
    %v716 = vpack.c.bf16 %v588, %v588
    %v717 = vpack.c.bf16 %v589, %v589
    %v718 = vpack.c.bf16 %v590, %v590
    %v719 = vpack.c.bf16 %v591, %v591
    %v720 = vpack.c.bf16 %v592, %v592
    %v721 = vpack.c.bf16 %v593, %v593
    %v722 = vpack.c.bf16 %v594, %v594
    %v723 = vpack.c.bf16 %v595, %v595
    %v724 = vpack.c.bf16 %v596, %v596
    %v725 = vpack.c.bf16 %v597, %v597
    %v726 = vpack.c.bf16 %v598, %v598
    %v727 = vpack.c.bf16 %v599, %v599
    %v728 = vpack.c.bf16 %v600, %v600
    %v729 = vpack.c.bf16 %v601, %v601
    %v730 = vpack.c.bf16 %v602, %v602
    %v731 = vpack.c.bf16 %v603, %v603
    %732 = vst [vmem:[#allocation2] sm:$0xf] %v668
    %733 = vst [vmem:[#allocation2 + $0x4] sm:$0xf] %v669
    %734 = vst [vmem:[#allocation2 + $0x8] sm:$0xf] %v670
    %735 = vst [vmem:[#allocation2 + $0xc] sm:$0xf] %v671
    %736 = vst [vmem:[#allocation2 + $0x10] sm:$0xf] %v672
    %737 = vst [vmem:[#allocation2 + $0x14] sm:$0xf] %v673
    %738 = vst [vmem:[#allocation2 + $0x18] sm:$0xf] %v674
    %739 = vst [vmem:[#allocation2 + $0x1c] sm:$0xf] %v675
    %740 = vst [vmem:[#allocation2 + $0x20] sm:$0xf] %v676
    %741 = vst [vmem:[#allocation2 + $0x24] sm:$0xf] %v677
    %742 = vst [vmem:[#allocation2 + $0x28] sm:$0xf] %v678
    %743 = vst [vmem:[#allocation2 + $0x2c] sm:$0xf] %v679
    %744 = vst [vmem:[#allocation2 + $0x30] sm:$0xf] %v680
    %745 = vst [vmem:[#allocation2 + $0x34] sm:$0xf] %v681
    %746 = vst [vmem:[#allocation2 + $0x38] sm:$0xf] %v682
    %747 = vst [vmem:[#allocation2 + $0x3c] sm:$0xf] %v683
    %748 = vst [vmem:[#allocation2 + $0x40] sm:$0xf] %v684
    %749 = vst [vmem:[#allocation2 + $0x44] sm:$0xf] %v685
    %750 = vst [vmem:[#allocation2 + $0x48] sm:$0xf] %v686
    %751 = vst [vmem:[#allocation2 + $0x4c] sm:$0xf] %v687
    %752 = vst [vmem:[#allocation2 + $0x50] sm:$0xf] %v688
    %753 = vst [vmem:[#allocation2 + $0x54] sm:$0xf] %v689
    %754 = vst [vmem:[#allocation2 + $0x58] sm:$0xf] %v690
    %755 = vst [vmem:[#allocation2 + $0x5c] sm:$0xf] %v691
    %756 = vst [vmem:[#allocation2 + $0x60] sm:$0xf] %v692
    %757 = vst [vmem:[#allocation2 + $0x64] sm:$0xf] %v693
    %758 = vst [vmem:[#allocation2 + $0x68] sm:$0xf] %v694
    %759 = vst [vmem:[#allocation2 + $0x6c] sm:$0xf] %v695
    %760 = vst [vmem:[#allocation2 + $0x70] sm:$0xf] %v696
    %761 = vst [vmem:[#allocation2 + $0x74] sm:$0xf] %v697
    %762 = vst [vmem:[#allocation2 + $0x78] sm:$0xf] %v698
    %763 = vst [vmem:[#allocation2 + $0x7c] sm:$0xf] %v699
    %764 = vst [vmem:[#allocation2 + $0x80] sm:$0xf] %v700
    %765 = vst [vmem:[#allocation2 + $0x84] sm:$0xf] %v701
    %766 = vst [vmem:[#allocation2 + $0x88] sm:$0xf] %v702
    %767 = vst [vmem:[#allocation2 + $0x8c] sm:$0xf] %v703
    %768 = vst [vmem:[#allocation2 + $0x90] sm:$0xf] %v704
    %769 = vst [vmem:[#allocation2 + $0x94] sm:$0xf] %v705
    %770 = vst [vmem:[#allocation2 + $0x98] sm:$0xf] %v706
    %771 = vst [vmem:[#allocation2 + $0x9c] sm:$0xf] %v707
    %772 = vst [vmem:[#allocation2 + $0xa0] sm:$0xf] %v708
    %773 = vst [vmem:[#allocation2 + $0xa4] sm:$0xf] %v709
    %774 = vst [vmem:[#allocation2 + $0xa8] sm:$0xf] %v710
    %775 = vst [vmem:[#allocation2 + $0xac] sm:$0xf] %v711
    %776 = vst [vmem:[#allocation2 + $0xb0] sm:$0xf] %v712
    %777 = vst [vmem:[#allocation2 + $0xb4] sm:$0xf] %v713
    %778 = vst [vmem:[#allocation2 + $0xb8] sm:$0xf] %v714
    %779 = vst [vmem:[#allocation2 + $0xbc] sm:$0xf] %v715
    %780 = vst [vmem:[#allocation2 + $0xc0] sm:$0xf] %v716
    %781 = vst [vmem:[#allocation2 + $0xc4] sm:$0xf] %v717
    %782 = vst [vmem:[#allocation2 + $0xc8] sm:$0xf] %v718
    %783 = vst [vmem:[#allocation2 + $0xcc] sm:$0xf] %v719
    %784 = vst [vmem:[#allocation2 + $0xd0] sm:$0xf] %v720
    %785 = vst [vmem:[#allocation2 + $0xd4] sm:$0xf] %v721
    %786 = vst [vmem:[#allocation2 + $0xd8] sm:$0xf] %v722
    %787 = vst [vmem:[#allocation2 + $0xdc] sm:$0xf] %v723
    %788 = vst [vmem:[#allocation2 + $0xe0] sm:$0xf] %v724
    %789 = vst [vmem:[#allocation2 + $0xe4] sm:$0xf] %v725
    %790 = vst [vmem:[#allocation2 + $0xe8] sm:$0xf] %v726
    %791 = vst [vmem:[#allocation2 + $0xec] sm:$0xf] %v727
    %792 = vst [vmem:[#allocation2 + $0xf0] sm:$0xf] %v728
    %793 = vst [vmem:[#allocation2 + $0xf4] sm:$0xf] %v729
    %794 = vst [vmem:[#allocation2 + $0xf8] sm:$0xf] %v730
    %795 = vst [vmem:[#allocation2 + $0xfc] sm:$0xf] %v731
    // Predicated region
    $region18: #{residual_block.11} parent=1 // pred_check
      _
    $region19: #{residual_block.11} parent=1 // pred_check_branch
      %797 = sbr.rel (0) target = $region21
    $region20: #{residual_block.11} parent=1 // pred_region
      _
    $region21: #{residual_block.11} parent=1 // pred_fallthru
      _
    // Predicated region
    $region22: #{residual_block.11} parent=1 // pred_check
      _
    $region23: #{residual_block.11} parent=1 // pred_check_branch
      %799 = sbr.rel (0) target = $region25
    $region24: #{residual_block.11} parent=1 // pred_region
      %801 = vsyncadd [#allocation3], 0
      %s802 = sshll.u32 [#allocation2], 4
      %s803 = int_to_ptr.vmem [resolvable:$true] %s802
      %s804 = sshll.u32 %s5, 4
      %s805 = int_to_ptr.hbm [resolvable:$true] %s804
      %810 = dma.vmem_to_hbm [thread:$0]  %s803, 4096, %s805, [#allocation3], 64, 64, 4
    $region25: #{residual_block.11} parent=1 // pred_fallthru
      _
    // Predicated region
    $region26: #{residual_block.11} parent=1 // pred_check
      _
    $region27: #{residual_block.11} parent=1 // pred_check_branch
      %812 = sbr.rel (0) target = $region29
    $region28: #{residual_block.11} parent=1 // pred_region
      _
    $region29: #{residual_block.11} parent=1 // pred_fallthru
      _
    // Predicated region
    $region30: #{residual_block.11} parent=1 // pred_check
      _
    $region31: #{residual_block.11} parent=1 // pred_check_branch
      %814 = sbr.rel (0) target = $region33
    $region32: #{residual_block.11} parent=1 // pred_region
      %816 = dma.done [#allocation3], 4096
    $region33: #{residual_block.11} parent=1 // pred_fallthru
      _
    %817 = vsyncpa [#allocation3], 1

// kernel: residual_block.7
$region0: #{residual_block.7}
  #allocation0 [shape = 'u32[]', space=smem, size = 0x4, offset = 0x4, fixed_abs, tag = 'smem constant byte address 0x4 - core index']
  #allocation1 [shape = 'u32[72,128]{1,0:T(1,128)}', space=vmem, size = 0x9000, scoped, tag = 'internal scratch']
  #allocation2 [shape = 'f32[18,18,128]{2,1,0:T(8,128)}', space=vmem, size = 0x36000, scoped, tag = 'scratch operand']
  #allocation3 [shape = 'bf16[256,1152]{1,0:T(8,128)(2,1)}', space=vmem, size = 0x90000, scoped, tag = 'scratch operand']
  %s0 = inlined_call_operand.vmem [shape: bf16[2,16,16,128], index: 0, kind: input, shape index: {}]
  %s1 = inlined_call_operand.vmem [shape: f32[1,128], index: 1, kind: input, shape index: {}]
  %s2 = inlined_call_operand.vmem [shape: f32[1,128], index: 2, kind: input, shape index: {}]
  %s3 = inlined_call_operand.vmem [shape: bf16[1152,128], index: 3, kind: input, shape index: {}]
  %s4 = inlined_call_operand.vmem [shape: bf16[512,128], index: 4, kind: output, shape index: {0}]
  %s5 = inlined_call_operand.vmem [shape: f32[2,1,128], index: 5, kind: output, shape index: {1}]
  %s6 = inlined_call_operand.vmem [shape: f32[2,1,128], index: 6, kind: output, shape index: {2}]
  %7 = xla_tuple %s4, %s5, %s6
  %s8 = sld [smem:[#allocation0]]
  $region65: #{residual_block.7} parent=0
    _
  %s10 = ssub.s32 1, %s8
  %s11 = scalar_select 0, %s10, %s8
  loop: start=0, step=1, limit=4
  $region2: #{residual_block.7} parent=0 // loop_pre_header
    _
  $region3: #{residual_block.7} parent=0 // loop_header
    %s13 = sphi 0, %s17
    %p14 = scmp.ge.s32.totalorder %s13, 4
    %s23 = sphi 0, %s25
    %s26 = sphi 0, %s23
    %s27 = sphi 0, %s26
    %s43 = sphi 0, %s27
    %s47 = sphi 0, %s47
    %s49 = sphi 0, %s47
    %s50 = sphi 0, %s49
    %s64 = sphi 0, %s50
    %s68 = sphi 0, %s68
    %s70 = sphi 0, %s68
    %s71 = sphi 0, %s70
    %s85 = sphi 0, %s71
    %s89 = sphi 0, %s89
    %s91 = sphi 0, %s89
    %s92 = sphi 0, %s91
    %s106 = sphi 0, %s92
    %s112 = sphi 0, %s114
    %s115 = sphi 0, %s112
    %s116 = sphi 0, %s115
    %s132 = sphi 0, %s116
    %s138 = sphi 0, %s140
    %s141 = sphi 0, %s138
    %s142 = sphi 0, %s141
    %s158 = sphi 0, %s142
    %s164 = sphi 0, %s166
    %s167 = sphi 0, %s164
    %s168 = sphi 0, %s167
    %s184 = sphi 0, %s168
  $region4: #{residual_block.7} parent=0 // loop_header_branch
    %16 = sbr.rel (%p14) target = $region8
  $region5: #{residual_block.7} parent=0 // loop_body
    %s18 = ssub.s32 %s13, 1
    %s19 = ssub.s32 %s13, 2
    %s20 = sadd.s32 %s13, 1
    %s21 = ssub.s32 %s13, %s20
    %p22 = scmp.eq.s32.totalorder %s21, 0
    %s24 = sadd.s32 %s23, 1
    %s25 = scalar_select %p22, %s23, %s24
    %p28 = pneg %p22
    %p29 = scmp.eq.s32.totalorder %s13, 1
    %p30 = por %p28, %p29
    %p31 = scmp.ne.s32.totalorder %s23, %s26
    %p32 = scmp.eq.s32.totalorder %s13, 0
    %p33 = por %p31, %p32
    %p34 = scmp.ne.s32.totalorder %s23, %s26
    %p35 = scmp.eq.s32.totalorder %s18, 1
    %p36 = por %p34, %p35
    %p37 = scmp.ne.s32.totalorder %s26, %s27
    %p38 = scmp.eq.s32.totalorder %s18, 0
    %p39 = por %p37, %p38
    %p40 = scmp.ne.s32.totalorder %s26, %s27
    %p41 = scmp.eq.s32.totalorder %s19, 1
    %p42 = por %p40, %p41
    %p44 = scmp.ne.s32.totalorder %s27, %s43
    %p45 = scmp.eq.s32.totalorder %s19, 0
    %p46 = por %p44, %p45
    %s48 = sadd.s32 %s47, 1
    %p51 = scmp.eq.s32.totalorder %s13, 1
    %p52 = scmp.ne.s32.totalorder %s47, %s49
    %p53 = scmp.eq.s32.totalorder %s13, 0
    %p54 = por %p52, %p53
    %p55 = scmp.ne.s32.totalorder %s47, %s49
    %p56 = scmp.eq.s32.totalorder %s18, 1
    %p57 = por %p55, %p56
    %p58 = scmp.ne.s32.totalorder %s49, %s50
    %p59 = scmp.eq.s32.totalorder %s18, 0
    %p60 = por %p58, %p59
    %p61 = scmp.ne.s32.totalorder %s49, %s50
    %p62 = scmp.eq.s32.totalorder %s19, 1
    %p63 = por %p61, %p62
    %p65 = scmp.ne.s32.totalorder %s50, %s64
    %p66 = scmp.eq.s32.totalorder %s19, 0
    %p67 = por %p65, %p66
    %s69 = sadd.s32 %s68, 1
    %p72 = scmp.eq.s32.totalorder %s13, 1
    %p73 = scmp.ne.s32.totalorder %s68, %s70
    %p74 = scmp.eq.s32.totalorder %s13, 0
    %p75 = por %p73, %p74
    %p76 = scmp.ne.s32.totalorder %s68, %s70
    %p77 = scmp.eq.s32.totalorder %s18, 1
    %p78 = por %p76, %p77
    %p79 = scmp.ne.s32.totalorder %s70, %s71
    %p80 = scmp.eq.s32.totalorder %s18, 0
    %p81 = por %p79, %p80
    %p82 = scmp.ne.s32.totalorder %s70, %s71
    %p83 = scmp.eq.s32.totalorder %s19, 1
    %p84 = por %p82, %p83
    %p86 = scmp.ne.s32.totalorder %s71, %s85
    %p87 = scmp.eq.s32.totalorder %s19, 0
    %p88 = por %p86, %p87
    %s90 = sadd.s32 %s89, 1
    %p93 = scmp.eq.s32.totalorder %s13, 1
    %p94 = scmp.ne.s32.totalorder %s89, %s91
    %p95 = scmp.eq.s32.totalorder %s13, 0
    %p96 = por %p94, %p95
    %p97 = scmp.ne.s32.totalorder %s89, %s91
    %p98 = scmp.eq.s32.totalorder %s18, 1
    %p99 = por %p97, %p98
    %p100 = scmp.ne.s32.totalorder %s91, %s92
    %p101 = scmp.eq.s32.totalorder %s18, 0
    %p102 = por %p100, %p101
    %p103 = scmp.ne.s32.totalorder %s91, %s92
    %p104 = scmp.eq.s32.totalorder %s19, 1
    %p105 = por %p103, %p104
    %p107 = scmp.ne.s32.totalorder %s92, %s106
    %p108 = scmp.eq.s32.totalorder %s19, 0
    %p109 = por %p107, %p108
    %s110 = ssub.s32 %s13, %s20
    %p111 = scmp.eq.s32.totalorder %s110, 0
    %s113 = sadd.s32 %s112, 1
    %s114 = scalar_select %p111, %s112, %s113
    %p117 = pneg %p111
    %p118 = scmp.eq.s32.totalorder %s13, 1
    %p119 = por %p117, %p118
    %p120 = scmp.ne.s32.totalorder %s112, %s115
    %p121 = scmp.eq.s32.totalorder %s13, 0
    %p122 = por %p120, %p121
    %p123 = scmp.ne.s32.totalorder %s112, %s115
    %p124 = scmp.eq.s32.totalorder %s18, 1
    %p125 = por %p123, %p124
    %p126 = scmp.ne.s32.totalorder %s115, %s116
    %p127 = scmp.eq.s32.totalorder %s18, 0
    %p128 = por %p126, %p127
    %p129 = scmp.ne.s32.totalorder %s115, %s116
    %p130 = scmp.eq.s32.totalorder %s19, 1
    %p131 = por %p129, %p130
    %p133 = scmp.ne.s32.totalorder %s116, %s132
    %p134 = scmp.eq.s32.totalorder %s19, 0
    %p135 = por %p133, %p134
    %s136 = ssub.s32 %s13, %s20
    %p137 = scmp.eq.s32.totalorder %s136, 0
    %s139 = sadd.s32 %s138, 1
    %s140 = scalar_select %p137, %s138, %s139
    %p143 = pneg %p137
    %p144 = scmp.eq.s32.totalorder %s13, 1
    %p145 = por %p143, %p144
    %p146 = scmp.ne.s32.totalorder %s138, %s141
    %p147 = scmp.eq.s32.totalorder %s13, 0
    %p148 = por %p146, %p147
    %p149 = scmp.ne.s32.totalorder %s138, %s141
    %p150 = scmp.eq.s32.totalorder %s18, 1
    %p151 = por %p149, %p150
    %p152 = scmp.ne.s32.totalorder %s141, %s142
    %p153 = scmp.eq.s32.totalorder %s18, 0
    %p154 = por %p152, %p153
    %p155 = scmp.ne.s32.totalorder %s141, %s142
    %p156 = scmp.eq.s32.totalorder %s19, 1
    %p157 = por %p155, %p156
    %p159 = scmp.ne.s32.totalorder %s142, %s158
    %p160 = scmp.eq.s32.totalorder %s19, 0
    %p161 = por %p159, %p160
    %s162 = ssub.s32 %s13, %s20
    %p163 = scmp.eq.s32.totalorder %s162, 0
    %s165 = sadd.s32 %s164, 1
    %s166 = scalar_select %p163, %s164, %s165
    %p169 = pneg %p163
    %p170 = scmp.eq.s32.totalorder %s13, 1
    %p171 = por %p169, %p170
    %p172 = scmp.ne.s32.totalorder %s164, %s167
    %p173 = scmp.eq.s32.totalorder %s13, 0
    %p174 = por %p172, %p173
    %p175 = scmp.ne.s32.totalorder %s164, %s167
    %p176 = scmp.eq.s32.totalorder %s18, 1
    %p177 = por %p175, %p176
    %p178 = scmp.ne.s32.totalorder %s167, %s168
    %p179 = scmp.eq.s32.totalorder %s18, 0
    %p180 = por %p178, %p179
    %p181 = scmp.ne.s32.totalorder %s167, %s168
    %p182 = scmp.eq.s32.totalorder %s19, 1
    %p183 = por %p181, %p182
    %p185 = scmp.ne.s32.totalorder %s168, %s184
    %p186 = scmp.eq.s32.totalorder %s19, 0
    %p187 = por %p185, %p186
    %p188 = scmp.le.s32.totalorder 1, %s13
    %p189 = scmp.lt.s32.totalorder %s13, 3
    %p190 = pnand %p188, %p189
    %p191 = pneg %p190
    // Predicated region
    $region9: #{residual_block.7} parent=5 // pred_check
      _
    $region10: #{residual_block.7} parent=5 // pred_check_branch
      %193 = sbr.rel (%p190) target = $region12
    $region11: #{residual_block.7} parent=5 // pred_region
      %s194 = ssub.s32 %s13, 1
      // Predicated region
      $region13: #{residual_block.7} parent=11 // pred_check
        %p195 = pneg %p60
      $region14: #{residual_block.7} parent=11 // pred_check_branch
        %197 = sbr.rel (%p195) target = $region16
      $region15: #{residual_block.7} parent=11 // pred_region
        _
      $region16: #{residual_block.7} parent=11 // pred_fallthru
        _
      // Predicated region
      $region17: #{residual_block.7} parent=11 // pred_check
        %p198 = pneg %p81
      $region18: #{residual_block.7} parent=11 // pred_check_branch
        %200 = sbr.rel (%p198) target = $region20
      $region19: #{residual_block.7} parent=11 // pred_region
        _
      $region20: #{residual_block.7} parent=11 // pred_fallthru
        _
      // Predicated region
      $region21: #{residual_block.7} parent=11 // pred_check
        %p201 = pneg %p102
      $region22: #{residual_block.7} parent=11 // pred_check_branch
        %203 = sbr.rel (%p201) target = $region24
      $region23: #{residual_block.7} parent=11 // pred_region
        _
      $region24: #{residual_block.7} parent=11 // pred_fallthru
        _
    $region12: #{residual_block.7} parent=5 // pred_fallthru
      _
    %p204 = scmp.lt.s32.totalorder %s13, 2
    // Predicated region
    $region25: #{residual_block.7} parent=5 // pred_check
      %p205 = pneg %p204
    $region26: #{residual_block.7} parent=5 // pred_check_branch
      %207 = sbr.rel (%p205) target = $region28
    $region27: #{residual_block.7} parent=5 // pred_region
      // Predicated region
      $region29: #{residual_block.7} parent=27 // pred_check
        %p208 = pneg %p33
      $region30: #{residual_block.7} parent=27 // pred_check_branch
        %210 = sbr.rel (%p208) target = $region32
      $region31: #{residual_block.7} parent=27 // pred_region
        %p211 = scmp.lt.s32.totalorder %s13, 1
        %s212 = scalar_select %p211, %s13, 1
        %s213 = smul.addr %s212, 32
        %s214 = smul.addr %s213, 4
        %s215 = scalar_lea.vmem %s0, %s214
      $region32: #{residual_block.7} parent=27 // pred_fallthru
        _
    $region28: #{residual_block.7} parent=5 // pred_fallthru
      _
    %p216 = scmp.le.s32.totalorder 1, %s13
    %p217 = scmp.lt.s32.totalorder %s13, 3
    %p218 = pnand %p216, %p217
    %p219 = pneg %p218
    // Predicated region
    $region33: #{residual_block.7} parent=5 // pred_check
      _
    $region34: #{residual_block.7} parent=5 // pred_check_branch
      %221 = sbr.rel (%p218) target = $region36
    $region35: #{residual_block.7} parent=5 // pred_region
      %s222 = ssub.s32 %s13, 1
      %p223 = scmp.lt.s32.totalorder %s18, 1
      %s224 = scalar_select %p223, %s18, 1
      %s225 = smul.addr %s224, 32
      %s226 = smul.addr %s225, 4
      %s227 = scalar_lea.vmem %s0, %s226
      %p228 = pneg %p39
      %p229 = pneg %p36
      %p230 = pneg %p60
      %p231 = pneg %p57
      %p232 = pneg %p81
      %p233 = pneg %p78
      %p234 = pneg %p102
      %p235 = pneg %p99
      %p236 = pneg %p128
      %p237 = pneg %p125
      %s238 = smul.u32 32, %s18
      %p239 = scmp.lt.s32.totalorder %s238, 63
      %s240 = scalar_select %p239, %s238, 63
      %s241 = smul.addr %s240, 4
      %s242 = scalar_lea.vmem %s4, %s241
      %p243 = pneg %p154
      %p244 = pneg %p151
      %p245 = scmp.lt.s32.totalorder %s18, 1
      %s246 = scalar_select %p245, %s18, 1
      %s247 = scalar_lea.vmem %s5, %s246
      %p248 = pneg %p180
      %p249 = pneg %p177
      %p250 = scmp.lt.s32.totalorder %s18, 1
      %s251 = scalar_select %p250, %s18, 1
      %s252 = scalar_lea.vmem %s6, %s251
      %p253 = scmp.lt.s32.totalorder %s18, 1
      %s254 = scalar_select %p253, %s18, 1
      %s255 = smul.addr %s254, 32
      %s256 = smul.addr %s255, 4
      %s257 = scalar_lea.vmem %s0, %s256
      %s258 = smul.u32 32, %s18
      %p259 = scmp.lt.s32.totalorder %s258, 63
      %s260 = scalar_select %p259, %s258, 63
      %s261 = smul.addr %s260, 4
      %s262 = scalar_lea.vmem %s4, %s261
      %s263 = smul.u32 32, %s18
      %p264 = scmp.lt.s32.totalorder %s18, 1
      %s265 = scalar_select %p264, %s18, 1
      %s266 = scalar_lea.vmem %s5, %s265
      %p267 = scmp.lt.s32.totalorder %s18, 1
      %s268 = scalar_select %p267, %s18, 1
      %s269 = scalar_lea.vmem %s6, %s268
      %v270 = vld [vmem:[%s1] sm:$0x1]
      %v271 = vld [vmem:[%s2] sm:$0x1]
      %v272 = vld [vmem:[%s257] sm:$0xf]
      %v273 = vld [vmem:[%s257 + $0x4] sm:$0xf]
      %v274 = vld [vmem:[%s257 + $0x8] sm:$0xf]
      %v275 = vld [vmem:[%s257 + $0xc] sm:$0xf]
      %v276 = vld [vmem:[%s257 + $0x10] sm:$0xf]
      %v277 = vld [vmem:[%s257 + $0x14] sm:$0xf]
      %v278 = vld [vmem:[%s257 + $0x18] sm:$0xf]
      %v279 = vld [vmem:[%s257 + $0x1c] sm:$0xf]
      %v280 = vld [vmem:[%s257 + $0x20] sm:$0xf]
      %v281 = vld [vmem:[%s257 + $0x24] sm:$0xf]
      %v282 = vld [vmem:[%s257 + $0x28] sm:$0xf]
      %v283 = vld [vmem:[%s257 + $0x2c] sm:$0xf]
      %v284 = vld [vmem:[%s257 + $0x30] sm:$0xf]
      %v285 = vld [vmem:[%s257 + $0x34] sm:$0xf]
      %v286 = vld [vmem:[%s257 + $0x38] sm:$0xf]
      %v287 = vld [vmem:[%s257 + $0x3c] sm:$0xf]
      %v288 = vld [vmem:[%s257 + $0x40] sm:$0xf]
      %v289 = vld [vmem:[%s257 + $0x44] sm:$0xf]
      %v290 = vld [vmem:[%s257 + $0x48] sm:$0xf]
      %v291 = vld [vmem:[%s257 + $0x4c] sm:$0xf]
      %v292 = vld [vmem:[%s257 + $0x50] sm:$0xf]
      %v293 = vld [vmem:[%s257 + $0x54] sm:$0xf]
      %v294 = vld [vmem:[%s257 + $0x58] sm:$0xf]
      %v295 = vld [vmem:[%s257 + $0x5c] sm:$0xf]
      %v296 = vld [vmem:[%s257 + $0x60] sm:$0xf]
      %v297 = vld [vmem:[%s257 + $0x64] sm:$0xf]
      %v298 = vld [vmem:[%s257 + $0x68] sm:$0xf]
      %v299 = vld [vmem:[%s257 + $0x6c] sm:$0xf]
      %v300 = vld [vmem:[%s257 + $0x70] sm:$0xf]
      %v301 = vld [vmem:[%s257 + $0x74] sm:$0xf]
      %v302 = vld [vmem:[%s257 + $0x78] sm:$0xf]
      %v303 = vld [vmem:[%s257 + $0x7c] sm:$0xf]
      %v304 = vunpack.c.l.bf16 %v272
      %v305 = vunpack.c.l.bf16 %v273
      %v306 = vunpack.c.l.bf16 %v274
      %v307 = vunpack.c.l.bf16 %v275
      %v308 = vunpack.c.l.bf16 %v276
      %v309 = vunpack.c.l.bf16 %v277
      %v310 = vunpack.c.l.bf16 %v278
      %v311 = vunpack.c.l.bf16 %v279
      %v312 = vunpack.c.l.bf16 %v280
      %v313 = vunpack.c.l.bf16 %v281
      %v314 = vunpack.c.l.bf16 %v282
      %v315 = vunpack.c.l.bf16 %v283
      %v316 = vunpack.c.l.bf16 %v284
      %v317 = vunpack.c.l.bf16 %v285
      %v318 = vunpack.c.l.bf16 %v286
      %v319 = vunpack.c.l.bf16 %v287
      %v320 = vunpack.c.l.bf16 %v288
      %v321 = vunpack.c.l.bf16 %v289
      %v322 = vunpack.c.l.bf16 %v290
      %v323 = vunpack.c.l.bf16 %v291
      %v324 = vunpack.c.l.bf16 %v292
      %v325 = vunpack.c.l.bf16 %v293
      %v326 = vunpack.c.l.bf16 %v294
      %v327 = vunpack.c.l.bf16 %v295
      %v328 = vunpack.c.l.bf16 %v296
      %v329 = vunpack.c.l.bf16 %v297
      %v330 = vunpack.c.l.bf16 %v298
      %v331 = vunpack.c.l.bf16 %v299
      %v332 = vunpack.c.l.bf16 %v300
      %v333 = vunpack.c.l.bf16 %v301
      %v334 = vunpack.c.l.bf16 %v302
      %v335 = vunpack.c.l.bf16 %v303
      %v337 = vperm.slane %v270, 0
      %v339 = vmul.f32 %v304, %v337
      %v340 = vmul.f32 %v305, %v337
      %v341 = vmul.f32 %v306, %v337
      %v342 = vmul.f32 %v307, %v337
      %v343 = vmul.f32 %v308, %v337
      %v344 = vmul.f32 %v309, %v337
      %v345 = vmul.f32 %v310, %v337
      %v346 = vmul.f32 %v311, %v337
      %v347 = vmul.f32 %v312, %v337
      %v348 = vmul.f32 %v313, %v337
      %v349 = vmul.f32 %v314, %v337
      %v350 = vmul.f32 %v315, %v337
      %v351 = vmul.f32 %v316, %v337
      %v352 = vmul.f32 %v317, %v337
      %v353 = vmul.f32 %v318, %v337
      %v354 = vmul.f32 %v319, %v337
      %v355 = vmul.f32 %v320, %v337
      %v356 = vmul.f32 %v321, %v337
      %v357 = vmul.f32 %v322, %v337
      %v358 = vmul.f32 %v323, %v337
      %v359 = vmul.f32 %v324, %v337
      %v360 = vmul.f32 %v325, %v337
      %v361 = vmul.f32 %v326, %v337
      %v362 = vmul.f32 %v327, %v337
      %v363 = vmul.f32 %v328, %v337
      %v364 = vmul.f32 %v329, %v337
      %v365 = vmul.f32 %v330, %v337
      %v366 = vmul.f32 %v331, %v337
      %v367 = vmul.f32 %v332, %v337
      %v368 = vmul.f32 %v333, %v337
      %v369 = vmul.f32 %v334, %v337
      %v370 = vmul.f32 %v335, %v337
      %v372 = vperm.slane %v271, 0
      %v374 = vadd.f32 %v339, %v372
      %v375 = vadd.f32 %v340, %v372
      %v376 = vadd.f32 %v341, %v372
      %v377 = vadd.f32 %v342, %v372
      %v378 = vadd.f32 %v343, %v372
      %v379 = vadd.f32 %v344, %v372
      %v380 = vadd.f32 %v345, %v372
      %v381 = vadd.f32 %v346, %v372
      %v382 = vadd.f32 %v347, %v372
      %v383 = vadd.f32 %v348, %v372
      %v384 = vadd.f32 %v349, %v372
      %v385 = vadd.f32 %v350, %v372
      %v386 = vadd.f32 %v351, %v372
      %v387 = vadd.f32 %v352, %v372
      %v388 = vadd.f32 %v353, %v372
      %v389 = vadd.f32 %v354, %v372
      %v390 = vadd.f32 %v355, %v372
      %v391 = vadd.f32 %v356, %v372
      %v392 = vadd.f32 %v357, %v372
      %v393 = vadd.f32 %v358, %v372
      %v394 = vadd.f32 %v359, %v372
      %v395 = vadd.f32 %v360, %v372
      %v396 = vadd.f32 %v361, %v372
      %v397 = vadd.f32 %v362, %v372
      %v398 = vadd.f32 %v363, %v372
      %v399 = vadd.f32 %v364, %v372
      %v400 = vadd.f32 %v365, %v372
      %v401 = vadd.f32 %v366, %v372
      %v402 = vadd.f32 %v367, %v372
      %v403 = vadd.f32 %v368, %v372
      %v404 = vadd.f32 %v369, %v372
      %v405 = vadd.f32 %v370, %v372
      %vm406 = vcmp.gt.f32.partialorder %v374, 0.0
      %vm407 = vcmp.gt.f32.partialorder %v375, 0.0
      %vm408 = vcmp.gt.f32.partialorder %v376, 0.0
      %vm409 = vcmp.gt.f32.partialorder %v377, 0.0
      %vm410 = vcmp.gt.f32.partialorder %v378, 0.0
      %vm411 = vcmp.gt.f32.partialorder %v379, 0.0
      %vm412 = vcmp.gt.f32.partialorder %v380, 0.0
      %vm413 = vcmp.gt.f32.partialorder %v381, 0.0
      %vm414 = vcmp.gt.f32.partialorder %v382, 0.0
      %vm415 = vcmp.gt.f32.partialorder %v383, 0.0
      %vm416 = vcmp.gt.f32.partialorder %v384, 0.0
      %vm417 = vcmp.gt.f32.partialorder %v385, 0.0
      %vm418 = vcmp.gt.f32.partialorder %v386, 0.0
      %vm419 = vcmp.gt.f32.partialorder %v387, 0.0
      %vm420 = vcmp.gt.f32.partialorder %v388, 0.0
      %vm421 = vcmp.gt.f32.partialorder %v389, 0.0
      %vm422 = vcmp.gt.f32.partialorder %v390, 0.0
      %vm423 = vcmp.gt.f32.partialorder %v391, 0.0
      %vm424 = vcmp.gt.f32.partialorder %v392, 0.0
      %vm425 = vcmp.gt.f32.partialorder %v393, 0.0
      %vm426 = vcmp.gt.f32.partialorder %v394, 0.0
      %vm427 = vcmp.gt.f32.partialorder %v395, 0.0
      %vm428 = vcmp.gt.f32.partialorder %v396, 0.0
      %vm429 = vcmp.gt.f32.partialorder %v397, 0.0
      %vm430 = vcmp.gt.f32.partialorder %v398, 0.0
      %vm431 = vcmp.gt.f32.partialorder %v399, 0.0
      %vm432 = vcmp.gt.f32.partialorder %v400, 0.0
      %vm433 = vcmp.gt.f32.partialorder %v401, 0.0
      %vm434 = vcmp.gt.f32.partialorder %v402, 0.0
      %vm435 = vcmp.gt.f32.partialorder %v403, 0.0
      %vm436 = vcmp.gt.f32.partialorder %v404, 0.0
      %vm437 = vcmp.gt.f32.partialorder %v405, 0.0
      %v438 = vmul.f32 %v374, 0.1
      %v439 = vmul.f32 %v375, 0.1
      %v440 = vmul.f32 %v376, 0.1
      %v441 = vmul.f32 %v377, 0.1
      %v442 = vmul.f32 %v378, 0.1
      %v443 = vmul.f32 %v379, 0.1
      %v444 = vmul.f32 %v380, 0.1
      %v445 = vmul.f32 %v381, 0.1
      %v446 = vmul.f32 %v382, 0.1
      %v447 = vmul.f32 %v383, 0.1
      %v448 = vmul.f32 %v384, 0.1
      %v449 = vmul.f32 %v385, 0.1
      %v450 = vmul.f32 %v386, 0.1
      %v451 = vmul.f32 %v387, 0.1
      %v452 = vmul.f32 %v388, 0.1
      %v453 = vmul.f32 %v389, 0.1
      %v454 = vmul.f32 %v390, 0.1
      %v455 = vmul.f32 %v391, 0.1
      %v456 = vmul.f32 %v392, 0.1
      %v457 = vmul.f32 %v393, 0.1
      %v458 = vmul.f32 %v394, 0.1
      %v459 = vmul.f32 %v395, 0.1
      %v460 = vmul.f32 %v396, 0.1
      %v461 = vmul.f32 %v397, 0.1
      %v462 = vmul.f32 %v398, 0.1
      %v463 = vmul.f32 %v399, 0.1
      %v464 = vmul.f32 %v400, 0.1
      %v465 = vmul.f32 %v401, 0.1
      %v466 = vmul.f32 %v402, 0.1
      %v467 = vmul.f32 %v403, 0.1
      %v468 = vmul.f32 %v404, 0.1
      %v469 = vmul.f32 %v405, 0.1
      %v470 = vsel %vm406, %v374, %v438
      %v471 = vsel %vm407, %v375, %v439
      %v472 = vsel %vm408, %v376, %v440
      %v473 = vsel %vm409, %v377, %v441
      %v474 = vsel %vm410, %v378, %v442
      %v475 = vsel %vm411, %v379, %v443
      %v476 = vsel %vm412, %v380, %v444
      %v477 = vsel %vm413, %v381, %v445
      %v478 = vsel %vm414, %v382, %v446
      %v479 = vsel %vm415, %v383, %v447
      %v480 = vsel %vm416, %v384, %v448
      %v481 = vsel %vm417, %v385, %v449
      %v482 = vsel %vm418, %v386, %v450
      %v483 = vsel %vm419, %v387, %v451
      %v484 = vsel %vm420, %v388, %v452
      %v485 = vsel %vm421, %v389, %v453
      %v486 = vsel %vm422, %v390, %v454
      %v487 = vsel %vm423, %v391, %v455
      %v488 = vsel %vm424, %v392, %v456
      %v489 = vsel %vm425, %v393, %v457
      %v490 = vsel %vm426, %v394, %v458
      %v491 = vsel %vm427, %v395, %v459
      %v492 = vsel %vm428, %v396, %v460
      %v493 = vsel %vm429, %v397, %v461
      %v494 = vsel %vm430, %v398, %v462
      %v495 = vsel %vm431, %v399, %v463
      %v496 = vsel %vm432, %v400, %v464
      %v497 = vsel %vm433, %v401, %v465
      %v498 = vsel %vm434, %v402, %v466
      %v499 = vsel %vm435, %v403, %v467
      %v500 = vsel %vm436, %v404, %v468
      %v501 = vsel %vm437, %v405, %v469
      %502 = vst [vmem:[#allocation2] sm:$0xff] 0.0
      %503 = vst [vmem:[#allocation2 + $0x8] sm:$0xff] 0.0
      %504 = vst [vmem:[#allocation2 + $0x10] sm:$0x3] 0.0
      %505 = vst [vmem:[#allocation2 + $0x18] sm:$0xff] 0.0
      %506 = vst [vmem:[#allocation2 + $0x20] sm:$0xff] 0.0
      %507 = vst [vmem:[#allocation2 + $0x28] sm:$0x3] 0.0
      %508 = vst [vmem:[#allocation2 + $0x30] sm:$0xff] 0.0
      %509 = vst [vmem:[#allocation2 + $0x38] sm:$0xff] 0.0
      %510 = vst [vmem:[#allocation2 + $0x40] sm:$0x3] 0.0
      %511 = vst [vmem:[#allocation2 + $0x48] sm:$0xff] 0.0
      %512 = vst [vmem:[#allocation2 + $0x50] sm:$0xff] 0.0
      %513 = vst [vmem:[#allocation2 + $0x58] sm:$0x3] 0.0
      %514 = vst [vmem:[#allocation2 + $0x60] sm:$0xff] 0.0
      %515 = vst [vmem:[#allocation2 + $0x68] sm:$0xff] 0.0
      %516 = vst [vmem:[#allocation2 + $0x70] sm:$0x3] 0.0
      %517 = vst [vmem:[#allocation2 + $0x78] sm:$0xff] 0.0
      %518 = vst [vmem:[#allocation2 + $0x80] sm:$0xff] 0.0
      %519 = vst [vmem:[#allocation2 + $0x88] sm:$0x3] 0.0
      %520 = vst [vmem:[#allocation2 + $0x90] sm:$0xff] 0.0
      %521 = vst [vmem:[#allocation2 + $0x98] sm:$0xff] 0.0
      %522 = vst [vmem:[#allocation2 + $0xa0] sm:$0x3] 0.0
      %523 = vst [vmem:[#allocation2 + $0xa8] sm:$0xff] 0.0
      %524 = vst [vmem:[#allocation2 + $0xb0] sm:$0xff] 0.0
      %525 = vst [vmem:[#allocation2 + $0xb8] sm:$0x3] 0.0
      %526 = vst [vmem:[#allocation2 + $0xc0] sm:$0xff] 0.0
      %527 = vst [vmem:[#allocation2 + $0xc8] sm:$0xff] 0.0
      %528 = vst [vmem:[#allocation2 + $0xd0] sm:$0x3] 0.0
      %529 = vst [vmem:[#allocation2 + $0xd8] sm:$0xff] 0.0
      %530 = vst [vmem:[#allocation2 + $0xe0] sm:$0xff] 0.0
      %531 = vst [vmem:[#allocation2 + $0xe8] sm:$0x3] 0.0
      %532 = vst [vmem:[#allocation2 + $0xf0] sm:$0xff] 0.0
      %533 = vst [vmem:[#allocation2 + $0xf8] sm:$0xff] 0.0
      %534 = vst [vmem:[#allocation2 + $0x100] sm:$0x3] 0.0
      %535 = vst [vmem:[#allocation2 + $0x108] sm:$0xff] 0.0
      %536 = vst [vmem:[#allocation2 + $0x110] sm:$0xff] 0.0
      %537 = vst [vmem:[#allocation2 + $0x118] sm:$0x3] 0.0
      %538 = vst [vmem:[#allocation2 + $0x120] sm:$0xff] 0.0
      %539 = vst [vmem:[#allocation2 + $0x128] sm:$0xff] 0.0
      %540 = vst [vmem:[#allocation2 + $0x130] sm:$0x3] 0.0
      %541 = vst [vmem:[#allocation2 + $0x138] sm:$0xff] 0.0
      %542 = vst [vmem:[#allocation2 + $0x140] sm:$0xff] 0.0
      %543 = vst [vmem:[#allocation2 + $0x148] sm:$0x3] 0.0
      %544 = vst [vmem:[#allocation2 + $0x150] sm:$0xff] 0.0
      %545 = vst [vmem:[#allocation2 + $0x158] sm:$0xff] 0.0
      %546 = vst [vmem:[#allocation2 + $0x160] sm:$0x3] 0.0
      %547 = vst [vmem:[#allocation2 + $0x168] sm:$0xff] 0.0
      %548 = vst [vmem:[#allocation2 + $0x170] sm:$0xff] 0.0
      %549 = vst [vmem:[#allocation2 + $0x178] sm:$0x3] 0.0
      %550 = vst [vmem:[#allocation2 + $0x180] sm:$0xff] 0.0
      %551 = vst [vmem:[#allocation2 + $0x188] sm:$0xff] 0.0
      %552 = vst [vmem:[#allocation2 + $0x190] sm:$0x3] 0.0
      %553 = vst [vmem:[#allocation2 + $0x198] sm:$0xff] 0.0
      %554 = vst [vmem:[#allocation2 + $0x1a0] sm:$0xff] 0.0
      %555 = vst [vmem:[#allocation2 + $0x1a8] sm:$0x3] 0.0
      %s556 = scalar_lea.vmem [#allocation2], 24
      %557 = vst [vmem:[%s556 + $0x1] sm:$0xff] %v470
      %558 = vst [vmem:[%s556 + $0x9] sm:$0xff] %v471
      %559 = vst [vmem:[%s556 + $0x19] sm:$0xff] %v472
      %560 = vst [vmem:[%s556 + $0x21] sm:$0xff] %v473
      %561 = vst [vmem:[%s556 + $0x31] sm:$0xff] %v474
      %562 = vst [vmem:[%s556 + $0x39] sm:$0xff] %v475
      %563 = vst [vmem:[%s556 + $0x49] sm:$0xff] %v476
      %564 = vst [vmem:[%s556 + $0x51] sm:$0xff] %v477
      %565 = vst [vmem:[%s556 + $0x61] sm:$0xff] %v478
      %566 = vst [vmem:[%s556 + $0x69] sm:$0xff] %v479
      %567 = vst [vmem:[%s556 + $0x79] sm:$0xff] %v480
      %568 = vst [vmem:[%s556 + $0x81] sm:$0xff] %v481
      %569 = vst [vmem:[%s556 + $0x91] sm:$0xff] %v482
      %570 = vst [vmem:[%s556 + $0x99] sm:$0xff] %v483
      %571 = vst [vmem:[%s556 + $0xa9] sm:$0xff] %v484
      %572 = vst [vmem:[%s556 + $0xb1] sm:$0xff] %v485
      %573 = vst [vmem:[%s556 + $0xc1] sm:$0xff] %v486
      %574 = vst [vmem:[%s556 + $0xc9] sm:$0xff] %v487
      %575 = vst [vmem:[%s556 + $0xd9] sm:$0xff] %v488
      %576 = vst [vmem:[%s556 + $0xe1] sm:$0xff] %v489
      %577 = vst [vmem:[%s556 + $0xf1] sm:$0xff] %v490
      %578 = vst [vmem:[%s556 + $0xf9] sm:$0xff] %v491
      %579 = vst [vmem:[%s556 + $0x109] sm:$0xff] %v492
      %580 = vst [vmem:[%s556 + $0x111] sm:$0xff] %v493
      %581 = vst [vmem:[%s556 + $0x121] sm:$0xff] %v494
      %582 = vst [vmem:[%s556 + $0x129] sm:$0xff] %v495
      %583 = vst [vmem:[%s556 + $0x139] sm:$0xff] %v496
      %584 = vst [vmem:[%s556 + $0x141] sm:$0xff] %v497
      %585 = vst [vmem:[%s556 + $0x151] sm:$0xff] %v498
      %586 = vst [vmem:[%s556 + $0x159] sm:$0xff] %v499
      %587 = vst [vmem:[%s556 + $0x169] sm:$0xff] %v500
      %588 = vst [vmem:[%s556 + $0x171] sm:$0xff] %v501
      %v589 = vld [vmem:[#allocation2] sm:$0xff]
      %v590 = vld [vmem:[#allocation2 + $0x8] sm:$0xff]
      %v591 = vld [vmem:[#allocation2 + $0x18] sm:$0xff]
      %v592 = vld [vmem:[#allocation2 + $0x20] sm:$0xff]
      %v593 = vld [vmem:[#allocation2 + $0x30] sm:$0xff]
      %v594 = vld [vmem:[#allocation2 + $0x38] sm:$0xff]
      %v595 = vld [vmem:[#allocation2 + $0x48] sm:$0xff]
      %v596 = vld [vmem:[#allocation2 + $0x50] sm:$0xff]
      %v597 = vld [vmem:[#allocation2 + $0x60] sm:$0xff]
      %v598 = vld [vmem:[#allocation2 + $0x68] sm:$0xff]
      %v599 = vld [vmem:[#allocation2 + $0x78] sm:$0xff]
      %v600 = vld [vmem:[#allocation2 + $0x80] sm:$0xff]
      %v601 = vld [vmem:[#allocation2 + $0x90] sm:$0xff]
      %v602 = vld [vmem:[#allocation2 + $0x98] sm:$0xff]
      %v603 = vld [vmem:[#allocation2 + $0xa8] sm:$0xff]
      %v604 = vld [vmem:[#allocation2 + $0xb0] sm:$0xff]
      %v605 = vld [vmem:[#allocation2 + $0xc0] sm:$0xff]
      %v606 = vld [vmem:[#allocation2 + $0xc8] sm:$0xff]
      %v607 = vld [vmem:[#allocation2 + $0xd8] sm:$0xff]
      %v608 = vld [vmem:[#allocation2 + $0xe0] sm:$0xff]
      %v609 = vld [vmem:[#allocation2 + $0xf0] sm:$0xff]
      %v610 = vld [vmem:[#allocation2 + $0xf8] sm:$0xff]
      %v611 = vld [vmem:[#allocation2 + $0x108] sm:$0xff]
      %v612 = vld [vmem:[#allocation2 + $0x110] sm:$0xff]
      %v613 = vld [vmem:[#allocation2 + $0x120] sm:$0xff]
      %v614 = vld [vmem:[#allocation2 + $0x128] sm:$0xff]
      %v615 = vld [vmem:[#allocation2 + $0x138] sm:$0xff]
      %v616 = vld [vmem:[#allocation2 + $0x140] sm:$0xff]
      %v617 = vld [vmem:[#allocation2 + $0x150] sm:$0xff]
      %v618 = vld [vmem:[#allocation2 + $0x158] sm:$0xff]
      %v619 = vld [vmem:[#allocation2 + $0x168] sm:$0xff]
      %v620 = vld [vmem:[#allocation2 + $0x170] sm:$0xff]
      %v621 = vpack.c.bf16 %v589, %v589
      %v622 = vpack.c.bf16 %v590, %v590
      %v623 = vpack.c.bf16 %v591, %v591
      %v624 = vpack.c.bf16 %v592, %v592
      %v625 = vpack.c.bf16 %v593, %v593
      %v626 = vpack.c.bf16 %v594, %v594
      %v627 = vpack.c.bf16 %v595, %v595
      %v628 = vpack.c.bf16 %v596, %v596
      %v629 = vpack.c.bf16 %v597, %v597
      %v630 = vpack.c.bf16 %v598, %v598
      %v631 = vpack.c.bf16 %v599, %v599
      %v632 = vpack.c.bf16 %v600, %v600
      %v633 = vpack.c.bf16 %v601, %v601
      %v634 = vpack.c.bf16 %v602, %v602
      %v635 = vpack.c.bf16 %v603, %v603
      %v636 = vpack.c.bf16 %v604, %v604
      %v637 = vpack.c.bf16 %v605, %v605
      %v638 = vpack.c.bf16 %v606, %v606
      %v639 = vpack.c.bf16 %v607, %v607
      %v640 = vpack.c.bf16 %v608, %v608
      %v641 = vpack.c.bf16 %v609, %v609
      %v642 = vpack.c.bf16 %v610, %v610
      %v643 = vpack.c.bf16 %v611, %v611
      %v644 = vpack.c.bf16 %v612, %v612
      %v645 = vpack.c.bf16 %v613, %v613
      %v646 = vpack.c.bf16 %v614, %v614
      %v647 = vpack.c.bf16 %v615, %v615
      %v648 = vpack.c.bf16 %v616, %v616
      %v649 = vpack.c.bf16 %v617, %v617
      %v650 = vpack.c.bf16 %v618, %v618
      %v651 = vpack.c.bf16 %v619, %v619
      %v652 = vpack.c.bf16 %v620, %v620
      %653 = vst [vmem:[#allocation3] sm:$0xf] %v621
      %654 = vst [vmem:[#allocation3 + $0x24] sm:$0xf] %v622
      %655 = vst [vmem:[#allocation3 + $0x48] sm:$0xf] %v623
      %656 = vst [vmem:[#allocation3 + $0x6c] sm:$0xf] %v624
      %657 = vst [vmem:[#allocation3 + $0x90] sm:$0xf] %v625
      %658 = vst [vmem:[#allocation3 + $0xb4] sm:$0xf] %v626
      %659 = vst [vmem:[#allocation3 + $0xd8] sm:$0xf] %v627
      %660 = vst [vmem:[#allocation3 + $0xfc] sm:$0xf] %v628
      %661 = vst [vmem:[#allocation3 + $0x120] sm:$0xf] %v629
      %662 = vst [vmem:[#allocation3 + $0x144] sm:$0xf] %v630
      %663 = vst [vmem:[#allocation3 + $0x168] sm:$0xf] %v631
      %664 = vst [vmem:[#allocation3 + $0x18c] sm:$0xf] %v632
      %665 = vst [vmem:[#allocation3 + $0x1b0] sm:$0xf] %v633
      %666 = vst [vmem:[#allocation3 + $0x1d4] sm:$0xf] %v634
      %667 = vst [vmem:[#allocation3 + $0x1f8] sm:$0xf] %v635
      %668 = vst [vmem:[#allocation3 + $0x21c] sm:$0xf] %v636
      %669 = vst [vmem:[#allocation3 + $0x240] sm:$0xf] %v637
      %670 = vst [vmem:[#allocation3 + $0x264] sm:$0xf] %v638
      %671 = vst [vmem:[#allocation3 + $0x288] sm:$0xf] %v639
      %672 = vst [vmem:[#allocation3 + $0x2ac] sm:$0xf] %v640
      %673 = vst [vmem:[#allocation3 + $0x2d0] sm:$0xf] %v641
      %674 = vst [vmem:[#allocation3 + $0x2f4] sm:$0xf] %v642
      %675 = vst [vmem:[#allocation3 + $0x318] sm:$0xf] %v643
      %676 = vst [vmem:[#allocation3 + $0x33c] sm:$0xf] %v644
      %677 = vst [vmem:[#allocation3 + $0x360] sm:$0xf] %v645
      %678 = vst [vmem:[#allocation3 + $0x384] sm:$0xf] %v646
      %679 = vst [vmem:[#allocation3 + $0x3a8] sm:$0xf] %v647
      %680 = vst [vmem:[#allocation3 + $0x3cc] sm:$0xf] %v648
      %681 = vst [vmem:[#allocation3 + $0x3f0] sm:$0xf] %v649
      %682 = vst [vmem:[#allocation3 + $0x414] sm:$0xf] %v650
      %683 = vst [vmem:[#allocation3 + $0x438] sm:$0xf] %v651
      %684 = vst [vmem:[#allocation3 + $0x45c] sm:$0xf] %v652
      %v685 = vld [vmem:[#allocation2 + $0x1] sm:$0xff]
      %v686 = vld [vmem:[#allocation2 + $0x9] sm:$0xff]
      %v687 = vld [vmem:[#allocation2 + $0x19] sm:$0xff]
      %v688 = vld [vmem:[#allocation2 + $0x21] sm:$0xff]
      %v689 = vld [vmem:[#allocation2 + $0x31] sm:$0xff]
      %v690 = vld [vmem:[#allocation2 + $0x39] sm:$0xff]
      %v691 = vld [vmem:[#allocation2 + $0x49] sm:$0xff]
      %v692 = vld [vmem:[#allocation2 + $0x51] sm:$0xff]
      %v693 = vld [vmem:[#allocation2 + $0x61] sm:$0xff]
      %v694 = vld [vmem:[#allocation2 + $0x69] sm:$0xff]
      %v695 = vld [vmem:[#allocation2 + $0x79] sm:$0xff]
      %v696 = vld [vmem:[#allocation2 + $0x81] sm:$0xff]
      %v697 = vld [vmem:[#allocation2 + $0x91] sm:$0xff]
      %v698 = vld [vmem:[#allocation2 + $0x99] sm:$0xff]
      %v699 = vld [vmem:[#allocation2 + $0xa9] sm:$0xff]
      %v700 = vld [vmem:[#allocation2 + $0xb1] sm:$0xff]
      %v701 = vld [vmem:[#allocation2 + $0xc1] sm:$0xff]
      %v702 = vld [vmem:[#allocation2 + $0xc9] sm:$0xff]
      %v703 = vld [vmem:[#allocation2 + $0xd9] sm:$0xff]
      %v704 = vld [vmem:[#allocation2 + $0xe1] sm:$0xff]
      %v705 = vld [vmem:[#allocation2 + $0xf1] sm:$0xff]
      %v706 = vld [vmem:[#allocation2 + $0xf9] sm:$0xff]
      %v707 = vld [vmem:[#allocation2 + $0x109] sm:$0xff]
      %v708 = vld [vmem:[#allocation2 + $0x111] sm:$0xff]
      %v709 = vld [vmem:[#allocation2 + $0x121] sm:$0xff]
      %v710 = vld [vmem:[#allocation2 + $0x129] sm:$0xff]
      %v711 = vld [vmem:[#allocation2 + $0x139] sm:$0xff]
      %v712 = vld [vmem:[#allocation2 + $0x141] sm:$0xff]
      %v713 = vld [vmem:[#allocation2 + $0x151] sm:$0xff]
      %v714 = vld [vmem:[#allocation2 + $0x159] sm:$0xff]
      %v715 = vld [vmem:[#allocation2 + $0x169] sm:$0xff]
      %v716 = vld [vmem:[#allocation2 + $0x171] sm:$0xff]
      %v717 = vpack.c.bf16 %v685, %v685
      %v718 = vpack.c.bf16 %v686, %v686
      %v719 = vpack.c.bf16 %v687, %v687
      %v720 = vpack.c.bf16 %v688, %v688
      %v721 = vpack.c.bf16 %v689, %v689
      %v722 = vpack.c.bf16 %v690, %v690
      %v723 = vpack.c.bf16 %v691, %v691
      %v724 = vpack.c.bf16 %v692, %v692
      %v725 = vpack.c.bf16 %v693, %v693
      %v726 = vpack.c.bf16 %v694, %v694
      %v727 = vpack.c.bf16 %v695, %v695
      %v728 = vpack.c.bf16 %v696, %v696
      %v729 = vpack.c.bf16 %v697, %v697
      %v730 = vpack.c.bf16 %v698, %v698
      %v731 = vpack.c.bf16 %v699, %v699
      %v732 = vpack.c.bf16 %v700, %v700
      %v733 = vpack.c.bf16 %v701, %v701
      %v734 = vpack.c.bf16 %v702, %v702
      %v735 = vpack.c.bf16 %v703, %v703
      %v736 = vpack.c.bf16 %v704, %v704
      %v737 = vpack.c.bf16 %v705, %v705
      %v738 = vpack.c.bf16 %v706, %v706
      %v739 = vpack.c.bf16 %v707, %v707
      %v740 = vpack.c.bf16 %v708, %v708
      %v741 = vpack.c.bf16 %v709, %v709
      %v742 = vpack.c.bf16 %v710, %v710
      %v743 = vpack.c.bf16 %v711, %v711
      %v744 = vpack.c.bf16 %v712, %v712
      %v745 = vpack.c.bf16 %v713, %v713
      %v746 = vpack.c.bf16 %v714, %v714
      %v747 = vpack.c.bf16 %v715, %v715
      %v748 = vpack.c.bf16 %v716, %v716
      %749 = vst [vmem:[#allocation3 + $0x4] sm:$0xf] %v717
      %750 = vst [vmem:[#allocation3 + $0x28] sm:$0xf] %v718
      %751 = vst [vmem:[#allocation3 + $0x4c] sm:$0xf] %v719
      %752 = vst [vmem:[#allocation3 + $0x70] sm:$0xf] %v720
      %753 = vst [vmem:[#allocation3 + $0x94] sm:$0xf] %v721
      %754 = vst [vmem:[#allocation3 + $0xb8] sm:$0xf] %v722
      %755 = vst [vmem:[#allocation3 + $0xdc] sm:$0xf] %v723
      %756 = vst [vmem:[#allocation3 + $0x100] sm:$0xf] %v724
      %757 = vst [vmem:[#allocation3 + $0x124] sm:$0xf] %v725
      %758 = vst [vmem:[#allocation3 + $0x148] sm:$0xf] %v726
      %759 = vst [vmem:[#allocation3 + $0x16c] sm:$0xf] %v727
      %760 = vst [vmem:[#allocation3 + $0x190] sm:$0xf] %v728
      %761 = vst [vmem:[#allocation3 + $0x1b4] sm:$0xf] %v729
      %762 = vst [vmem:[#allocation3 + $0x1d8] sm:$0xf] %v730
      %763 = vst [vmem:[#allocation3 + $0x1fc] sm:$0xf] %v731
      %764 = vst [vmem:[#allocation3 + $0x220] sm:$0xf] %v732
      %765 = vst [vmem:[#allocation3 + $0x244] sm:$0xf] %v733
      %766 = vst [vmem:[#allocation3 + $0x268] sm:$0xf] %v734
      %767 = vst [vmem:[#allocation3 + $0x28c] sm:$0xf] %v735
      %768 = vst [vmem:[#allocation3 + $0x2b0] sm:$0xf] %v736
      %769 = vst [vmem:[#allocation3 + $0x2d4] sm:$0xf] %v737
      %770 = vst [vmem:[#allocation3 + $0x2f8] sm:$0xf] %v738
      %771 = vst [vmem:[#allocation3 + $0x31c] sm:$0xf] %v739
      %772 = vst [vmem:[#allocation3 + $0x340] sm:$0xf] %v740
      %773 = vst [vmem:[#allocation3 + $0x364] sm:$0xf] %v741
      %774 = vst [vmem:[#allocation3 + $0x388] sm:$0xf] %v742
      %775 = vst [vmem:[#allocation3 + $0x3ac] sm:$0xf] %v743
      %776 = vst [vmem:[#allocation3 + $0x3d0] sm:$0xf] %v744
      %777 = vst [vmem:[#allocation3 + $0x3f4] sm:$0xf] %v745
      %778 = vst [vmem:[#allocation3 + $0x418] sm:$0xf] %v746
      %779 = vst [vmem:[#allocation3 + $0x43c] sm:$0xf] %v747
      %780 = vst [vmem:[#allocation3 + $0x460] sm:$0xf] %v748
      %v781 = vld [vmem:[#allocation2 + $0x2] sm:$0xff]
      %v782 = vld [vmem:[#allocation2 + $0xa] sm:$0xff]
      %v783 = vld [vmem:[#allocation2 + $0x1a] sm:$0xff]
      %v784 = vld [vmem:[#allocation2 + $0x22] sm:$0xff]
      %v785 = vld [vmem:[#allocation2 + $0x32] sm:$0xff]
      %v786 = vld [vmem:[#allocation2 + $0x3a] sm:$0xff]
      %v787 = vld [vmem:[#allocation2 + $0x4a] sm:$0xff]
      %v788 = vld [vmem:[#allocation2 + $0x52] sm:$0xff]
      %v789 = vld [vmem:[#allocation2 + $0x62] sm:$0xff]
      %v790 = vld [vmem:[#allocation2 + $0x6a] sm:$0xff]
      %v791 = vld [vmem:[#allocation2 + $0x7a] sm:$0xff]
      %v792 = vld [vmem:[#allocation2 + $0x82] sm:$0xff]
      %v793 = vld [vmem:[#allocation2 + $0x92] sm:$0xff]
      %v794 = vld [vmem:[#allocation2 + $0x9a] sm:$0xff]
      %v795 = vld [vmem:[#allocation2 + $0xaa] sm:$0xff]
      %v796 = vld [vmem:[#allocation2 + $0xb2] sm:$0xff]
      %v797 = vld [vmem:[#allocation2 + $0xc2] sm:$0xff]
      %v798 = vld [vmem:[#allocation2 + $0xca] sm:$0xff]
      %v799 = vld [vmem:[#allocation2 + $0xda] sm:$0xff]
      %v800 = vld [vmem:[#allocation2 + $0xe2] sm:$0xff]
      %v801 = vld [vmem:[#allocation2 + $0xf2] sm:$0xff]
      %v802 = vld [vmem:[#allocation2 + $0xfa] sm:$0xff]
      %v803 = vld [vmem:[#allocation2 + $0x10a] sm:$0xff]
      %v804 = vld [vmem:[#allocation2 + $0x112] sm:$0xff]
      %v805 = vld [vmem:[#allocation2 + $0x122] sm:$0xff]
      %v806 = vld [vmem:[#allocation2 + $0x12a] sm:$0xff]
      %v807 = vld [vmem:[#allocation2 + $0x13a] sm:$0xff]
      %v808 = vld [vmem:[#allocation2 + $0x142] sm:$0xff]
      %v809 = vld [vmem:[#allocation2 + $0x152] sm:$0xff]
      %v810 = vld [vmem:[#allocation2 + $0x15a] sm:$0xff]
      %v811 = vld [vmem:[#allocation2 + $0x16a] sm:$0xff]
      %v812 = vld [vmem:[#allocation2 + $0x172] sm:$0xff]
      %v813 = vpack.c.bf16 %v781, %v781
      %v814 = vpack.c.bf16 %v782, %v782
      %v815 = vpack.c.bf16 %v783, %v783
      %v816 = vpack.c.bf16 %v784, %v784
      %v817 = vpack.c.bf16 %v785, %v785
      %v818 = vpack.c.bf16 %v786, %v786
      %v819 = vpack.c.bf16 %v787, %v787
      %v820 = vpack.c.bf16 %v788, %v788
      %v821 = vpack.c.bf16 %v789, %v789
      %v822 = vpack.c.bf16 %v790, %v790
      %v823 = vpack.c.bf16 %v791, %v791
      %v824 = vpack.c.bf16 %v792, %v792
      %v825 = vpack.c.bf16 %v793, %v793
      %v826 = vpack.c.bf16 %v794, %v794
      %v827 = vpack.c.bf16 %v795, %v795
      %v828 = vpack.c.bf16 %v796, %v796
      %v829 = vpack.c.bf16 %v797, %v797
      %v830 = vpack.c.bf16 %v798, %v798
      %v831 = vpack.c.bf16 %v799, %v799
      %v832 = vpack.c.bf16 %v800, %v800
      %v833 = vpack.c.bf16 %v801, %v801
      %v834 = vpack.c.bf16 %v802, %v802
      %v835 = vpack.c.bf16 %v803, %v803
      %v836 = vpack.c.bf16 %v804, %v804
      %v837 = vpack.c.bf16 %v805, %v805
      %v838 = vpack.c.bf16 %v806, %v806
      %v839 = vpack.c.bf16 %v807, %v807
      %v840 = vpack.c.bf16 %v808, %v808
      %v841 = vpack.c.bf16 %v809, %v809
      %v842 = vpack.c.bf16 %v810, %v810
      %v843 = vpack.c.bf16 %v811, %v811
      %v844 = vpack.c.bf16 %v812, %v812
      %845 = vst [vmem:[#allocation3 + $0x8] sm:$0xf] %v813
      %846 = vst [vmem:[#allocation3 + $0x2c] sm:$0xf] %v814
      %847 = vst [vmem:[#allocation3 + $0x50] sm:$0xf] %v815
      %848 = vst [vmem:[#allocation3 + $0x74] sm:$0xf] %v816
      %849 = vst [vmem:[#allocation3 + $0x98] sm:$0xf] %v817
      %850 = vst [vmem:[#allocation3 + $0xbc] sm:$0xf] %v818
      %851 = vst [vmem:[#allocation3 + $0xe0] sm:$0xf] %v819
      %852 = vst [vmem:[#allocation3 + $0x104] sm:$0xf] %v820
      %853 = vst [vmem:[#allocation3 + $0x128] sm:$0xf] %v821
      %854 = vst [vmem:[#allocation3 + $0x14c] sm:$0xf] %v822
      %855 = vst [vmem:[#allocation3 + $0x170] sm:$0xf] %v823
      %856 = vst [vmem:[#allocation3 + $0x194] sm:$0xf] %v824
      %857 = vst [vmem:[#allocation3 + $0x1b8] sm:$0xf] %v825
      %858 = vst [vmem:[#allocation3 + $0x1dc] sm:$0xf] %v826
      %859 = vst [vmem:[#allocation3 + $0x200] sm:$0xf] %v827
      %860 = vst [vmem:[#allocation3 + $0x224] sm:$0xf] %v828
      %861 = vst [vmem:[#allocation3 + $0x248] sm:$0xf] %v829
      %862 = vst [vmem:[#allocation3 + $0x26c] sm:$0xf] %v830
      %863 = vst [vmem:[#allocation3 + $0x290] sm:$0xf] %v831
      %864 = vst [vmem:[#allocation3 + $0x2b4] sm:$0xf] %v832
      %865 = vst [vmem:[#allocation3 + $0x2d8] sm:$0xf] %v833
      %866 = vst [vmem:[#allocation3 + $0x2fc] sm:$0xf] %v834
      %867 = vst [vmem:[#allocation3 + $0x320] sm:$0xf] %v835
      %868 = vst [vmem:[#allocation3 + $0x344] sm:$0xf] %v836
      %869 = vst [vmem:[#allocation3 + $0x368] sm:$0xf] %v837
      %870 = vst [vmem:[#allocation3 + $0x38c] sm:$0xf] %v838
      %871 = vst [vmem:[#allocation3 + $0x3b0] sm:$0xf] %v839
      %872 = vst [vmem:[#allocation3 + $0x3d4] sm:$0xf] %v840
      %873 = vst [vmem:[#allocation3 + $0x3f8] sm:$0xf] %v841
      %874 = vst [vmem:[#allocation3 + $0x41c] sm:$0xf] %v842
      %875 = vst [vmem:[#allocation3 + $0x440] sm:$0xf] %v843
      %876 = vst [vmem:[#allocation3 + $0x464] sm:$0xf] %v844
      %v877 = vld [vmem:[%s556] sm:$0xff]
      %v878 = vld [vmem:[%s556 + $0x8] sm:$0xff]
      %v879 = vld [vmem:[%s556 + $0x18] sm:$0xff]
      %v880 = vld [vmem:[%s556 + $0x20] sm:$0xff]
      %v881 = vld [vmem:[%s556 + $0x30] sm:$0xff]
      %v882 = vld [vmem:[%s556 + $0x38] sm:$0xff]
      %v883 = vld [vmem:[%s556 + $0x48] sm:$0xff]
      %v884 = vld [vmem:[%s556 + $0x50] sm:$0xff]
      %v885 = vld [vmem:[%s556 + $0x60] sm:$0xff]
      %v886 = vld [vmem:[%s556 + $0x68] sm:$0xff]
      %v887 = vld [vmem:[%s556 + $0x78] sm:$0xff]
      %v888 = vld [vmem:[%s556 + $0x80] sm:$0xff]
      %v889 = vld [vmem:[%s556 + $0x90] sm:$0xff]
      %v890 = vld [vmem:[%s556 + $0x98] sm:$0xff]
      %v891 = vld [vmem:[%s556 + $0xa8] sm:$0xff]
      %v892 = vld [vmem:[%s556 + $0xb0] sm:$0xff]
      %v893 = vld [vmem:[%s556 + $0xc0] sm:$0xff]
      %v894 = vld [vmem:[%s556 + $0xc8] sm:$0xff]
      %v895 = vld [vmem:[%s556 + $0xd8] sm:$0xff]
      %v896 = vld [vmem:[%s556 + $0xe0] sm:$0xff]
      %v897 = vld [vmem:[%s556 + $0xf0] sm:$0xff]
      %v898 = vld [vmem:[%s556 + $0xf8] sm:$0xff]
      %v899 = vld [vmem:[%s556 + $0x108] sm:$0xff]
      %v900 = vld [vmem:[%s556 + $0x110] sm:$0xff]
      %v901 = vld [vmem:[%s556 + $0x120] sm:$0xff]
      %v902 = vld [vmem:[%s556 + $0x128] sm:$0xff]
      %v903 = vld [vmem:[%s556 + $0x138] sm:$0xff]
      %v904 = vld [vmem:[%s556 + $0x140] sm:$0xff]
      %v905 = vld [vmem:[%s556 + $0x150] sm:$0xff]
      %v906 = vld [vmem:[%s556 + $0x158] sm:$0xff]
      %v907 = vld [vmem:[%s556 + $0x168] sm:$0xff]
      %v908 = vld [vmem:[%s556 + $0x170] sm:$0xff]
      %v909 = vpack.c.bf16 %v877, %v877
      %v910 = vpack.c.bf16 %v878, %v878
      %v911 = vpack.c.bf16 %v879, %v879
      %v912 = vpack.c.bf16 %v880, %v880
      %v913 = vpack.c.bf16 %v881, %v881
      %v914 = vpack.c.bf16 %v882, %v882
      %v915 = vpack.c.bf16 %v883, %v883
      %v916 = vpack.c.bf16 %v884, %v884
      %v917 = vpack.c.bf16 %v885, %v885
      %v918 = vpack.c.bf16 %v886, %v886
      %v919 = vpack.c.bf16 %v887, %v887
      %v920 = vpack.c.bf16 %v888, %v888
      %v921 = vpack.c.bf16 %v889, %v889
      %v922 = vpack.c.bf16 %v890, %v890
      %v923 = vpack.c.bf16 %v891, %v891
      %v924 = vpack.c.bf16 %v892, %v892
      %v925 = vpack.c.bf16 %v893, %v893
      %v926 = vpack.c.bf16 %v894, %v894
      %v927 = vpack.c.bf16 %v895, %v895
      %v928 = vpack.c.bf16 %v896, %v896
      %v929 = vpack.c.bf16 %v897, %v897
      %v930 = vpack.c.bf16 %v898, %v898
      %v931 = vpack.c.bf16 %v899, %v899
      %v932 = vpack.c.bf16 %v900, %v900
      %v933 = vpack.c.bf16 %v901, %v901
      %v934 = vpack.c.bf16 %v902, %v902
      %v935 = vpack.c.bf16 %v903, %v903
      %v936 = vpack.c.bf16 %v904, %v904
      %v937 = vpack.c.bf16 %v905, %v905
      %v938 = vpack.c.bf16 %v906, %v906
      %v939 = vpack.c.bf16 %v907, %v907
      %v940 = vpack.c.bf16 %v908, %v908
      %941 = vst [vmem:[#allocation3 + $0xc] sm:$0xf] %v909
      %942 = vst [vmem:[#allocation3 + $0x30] sm:$0xf] %v910
      %943 = vst [vmem:[#allocation3 + $0x54] sm:$0xf] %v911
      %944 = vst [vmem:[#allocation3 + $0x78] sm:$0xf] %v912
      %945 = vst [vmem:[#allocation3 + $0x9c] sm:$0xf] %v913
      %946 = vst [vmem:[#allocation3 + $0xc0] sm:$0xf] %v914
      %947 = vst [vmem:[#allocation3 + $0xe4] sm:$0xf] %v915
      %948 = vst [vmem:[#allocation3 + $0x108] sm:$0xf] %v916
      %949 = vst [vmem:[#allocation3 + $0x12c] sm:$0xf] %v917
      %950 = vst [vmem:[#allocation3 + $0x150] sm:$0xf] %v918
      %951 = vst [vmem:[#allocation3 + $0x174] sm:$0xf] %v919
      %952 = vst [vmem:[#allocation3 + $0x198] sm:$0xf] %v920
      %953 = vst [vmem:[#allocation3 + $0x1bc] sm:$0xf] %v921
      %954 = vst [vmem:[#allocation3 + $0x1e0] sm:$0xf] %v922
      %955 = vst [vmem:[#allocation3 + $0x204] sm:$0xf] %v923
      %956 = vst [vmem:[#allocation3 + $0x228] sm:$0xf] %v924
      %957 = vst [vmem:[#allocation3 + $0x24c] sm:$0xf] %v925
      %958 = vst [vmem:[#allocation3 + $0x270] sm:$0xf] %v926
      %959 = vst [vmem:[#allocation3 + $0x294] sm:$0xf] %v927
      %960 = vst [vmem:[#allocation3 + $0x2b8] sm:$0xf] %v928
      %961 = vst [vmem:[#allocation3 + $0x2dc] sm:$0xf] %v929
      %962 = vst [vmem:[#allocation3 + $0x300] sm:$0xf] %v930
      %963 = vst [vmem:[#allocation3 + $0x324] sm:$0xf] %v931
      %964 = vst [vmem:[#allocation3 + $0x348] sm:$0xf] %v932
      %965 = vst [vmem:[#allocation3 + $0x36c] sm:$0xf] %v933
      %966 = vst [vmem:[#allocation3 + $0x390] sm:$0xf] %v934
      %967 = vst [vmem:[#allocation3 + $0x3b4] sm:$0xf] %v935
      %968 = vst [vmem:[#allocation3 + $0x3d8] sm:$0xf] %v936
      %969 = vst [vmem:[#allocation3 + $0x3fc] sm:$0xf] %v937
      %970 = vst [vmem:[#allocation3 + $0x420] sm:$0xf] %v938
      %971 = vst [vmem:[#allocation3 + $0x444] sm:$0xf] %v939
      %972 = vst [vmem:[#allocation3 + $0x468] sm:$0xf] %v940
      %v973 = vld [vmem:[%s556 + $0x1] sm:$0xff]
      %v974 = vld [vmem:[%s556 + $0x9] sm:$0xff]
      %v975 = vld [vmem:[%s556 + $0x19] sm:$0xff]
      %v976 = vld [vmem:[%s556 + $0x21] sm:$0xff]
      %v977 = vld [vmem:[%s556 + $0x31] sm:$0xff]
      %v978 = vld [vmem:[%s556 + $0x39] sm:$0xff]
      %v979 = vld [vmem:[%s556 + $0x49] sm:$0xff]
      %v980 = vld [vmem:[%s556 + $0x51] sm:$0xff]
      %v981 = vld [vmem:[%s556 + $0x61] sm:$0xff]
      %v982 = vld [vmem:[%s556 + $0x69] sm:$0xff]
      %v983 = vld [vmem:[%s556 + $0x79] sm:$0xff]
      %v984 = vld [vmem:[%s556 + $0x81] sm:$0xff]
      %v985 = vld [vmem:[%s556 + $0x91] sm:$0xff]
      %v986 = vld [vmem:[%s556 + $0x99] sm:$0xff]
      %v987 = vld [vmem:[%s556 + $0xa9] sm:$0xff]
      %v988 = vld [vmem:[%s556 + $0xb1] sm:$0xff]
      %v989 = vld [vmem:[%s556 + $0xc1] sm:$0xff]
      %v990 = vld [vmem:[%s556 + $0xc9] sm:$0xff]
      %v991 = vld [vmem:[%s556 + $0xd9] sm:$0xff]
      %v992 = vld [vmem:[%s556 + $0xe1] sm:$0xff]
      %v993 = vld [vmem:[%s556 + $0xf1] sm:$0xff]
      %v994 = vld [vmem:[%s556 + $0xf9] sm:$0xff]
      %v995 = vld [vmem:[%s556 + $0x109] sm:$0xff]
      %v996 = vld [vmem:[%s556 + $0x111] sm:$0xff]
      %v997 = vld [vmem:[%s556 + $0x121] sm:$0xff]
      %v998 = vld [vmem:[%s556 + $0x129] sm:$0xff]
      %v999 = vld [vmem:[%s556 + $0x139] sm:$0xff]
      %v1000 = vld [vmem:[%s556 + $0x141] sm:$0xff]
      %v1001 = vld [vmem:[%s556 + $0x151] sm:$0xff]
      %v1002 = vld [vmem:[%s556 + $0x159] sm:$0xff]
      %v1003 = vld [vmem:[%s556 + $0x169] sm:$0xff]
      %v1004 = vld [vmem:[%s556 + $0x171] sm:$0xff]
      %v1005 = vpack.c.bf16 %v973, %v973
      %v1006 = vpack.c.bf16 %v974, %v974
      %v1007 = vpack.c.bf16 %v975, %v975
      %v1008 = vpack.c.bf16 %v976, %v976
      %v1009 = vpack.c.bf16 %v977, %v977
      %v1010 = vpack.c.bf16 %v978, %v978
      %v1011 = vpack.c.bf16 %v979, %v979
      %v1012 = vpack.c.bf16 %v980, %v980
      %v1013 = vpack.c.bf16 %v981, %v981
      %v1014 = vpack.c.bf16 %v982, %v982
      %v1015 = vpack.c.bf16 %v983, %v983
      %v1016 = vpack.c.bf16 %v984, %v984
      %v1017 = vpack.c.bf16 %v985, %v985
      %v1018 = vpack.c.bf16 %v986, %v986
      %v1019 = vpack.c.bf16 %v987, %v987
      %v1020 = vpack.c.bf16 %v988, %v988
      %v1021 = vpack.c.bf16 %v989, %v989
      %v1022 = vpack.c.bf16 %v990, %v990
      %v1023 = vpack.c.bf16 %v991, %v991
      %v1024 = vpack.c.bf16 %v992, %v992
      %v1025 = vpack.c.bf16 %v993, %v993
      %v1026 = vpack.c.bf16 %v994, %v994
      %v1027 = vpack.c.bf16 %v995, %v995
      %v1028 = vpack.c.bf16 %v996, %v996
      %v1029 = vpack.c.bf16 %v997, %v997
      %v1030 = vpack.c.bf16 %v998, %v998
      %v1031 = vpack.c.bf16 %v999, %v999
      %v1032 = vpack.c.bf16 %v1000, %v1000
      %v1033 = vpack.c.bf16 %v1001, %v1001
      %v1034 = vpack.c.bf16 %v1002, %v1002
      %v1035 = vpack.c.bf16 %v1003, %v1003
      %v1036 = vpack.c.bf16 %v1004, %v1004
      %1037 = vst [vmem:[#allocation3 + $0x10] sm:$0xf] %v1005
      %1038 = vst [vmem:[#allocation3 + $0x34] sm:$0xf] %v1006
      %1039 = vst [vmem:[#allocation3 + $0x58] sm:$0xf] %v1007
      %1040 = vst [vmem:[#allocation3 + $0x7c] sm:$0xf] %v1008
      %1041 = vst [vmem:[#allocation3 + $0xa0] sm:$0xf] %v1009
      %1042 = vst [vmem:[#allocation3 + $0xc4] sm:$0xf] %v1010
      %1043 = vst [vmem:[#allocation3 + $0xe8] sm:$0xf] %v1011
      %1044 = vst [vmem:[#allocation3 + $0x10c] sm:$0xf] %v1012
      %1045 = vst [vmem:[#allocation3 + $0x130] sm:$0xf] %v1013
      %1046 = vst [vmem:[#allocation3 + $0x154] sm:$0xf] %v1014
      %1047 = vst [vmem:[#allocation3 + $0x178] sm:$0xf] %v1015
      %1048 = vst [vmem:[#allocation3 + $0x19c] sm:$0xf] %v1016
      %1049 = vst [vmem:[#allocation3 + $0x1c0] sm:$0xf] %v1017
      %1050 = vst [vmem:[#allocation3 + $0x1e4] sm:$0xf] %v1018
      %1051 = vst [vmem:[#allocation3 + $0x208] sm:$0xf] %v1019
      %1052 = vst [vmem:[#allocation3 + $0x22c] sm:$0xf] %v1020
      %1053 = vst [vmem:[#allocation3 + $0x250] sm:$0xf] %v1021
      %1054 = vst [vmem:[#allocation3 + $0x274] sm:$0xf] %v1022
      %1055 = vst [vmem:[#allocation3 + $0x298] sm:$0xf] %v1023
      %1056 = vst [vmem:[#allocation3 + $0x2bc] sm:$0xf] %v1024
      %1057 = vst [vmem:[#allocation3 + $0x2e0] sm:$0xf] %v1025
      %1058 = vst [vmem:[#allocation3 + $0x304] sm:$0xf] %v1026
      %1059 = vst [vmem:[#allocation3 + $0x328] sm:$0xf] %v1027
      %1060 = vst [vmem:[#allocation3 + $0x34c] sm:$0xf] %v1028
      %1061 = vst [vmem:[#allocation3 + $0x370] sm:$0xf] %v1029
      %1062 = vst [vmem:[#allocation3 + $0x394] sm:$0xf] %v1030
      %1063 = vst [vmem:[#allocation3 + $0x3b8] sm:$0xf] %v1031
      %1064 = vst [vmem:[#allocation3 + $0x3dc] sm:$0xf] %v1032
      %1065 = vst [vmem:[#allocation3 + $0x400] sm:$0xf] %v1033
      %1066 = vst [vmem:[#allocation3 + $0x424] sm:$0xf] %v1034
      %1067 = vst [vmem:[#allocation3 + $0x448] sm:$0xf] %v1035
      %1068 = vst [vmem:[#allocation3 + $0x46c] sm:$0xf] %v1036
      %v1069 = vld [vmem:[%s556 + $0x2] sm:$0xff]
      %v1070 = vld [vmem:[%s556 + $0xa] sm:$0xff]
      %v1071 = vld [vmem:[%s556 + $0x1a] sm:$0xff]
      %v1072 = vld [vmem:[%s556 + $0x22] sm:$0xff]
      %v1073 = vld [vmem:[%s556 + $0x32] sm:$0xff]
      %v1074 = vld [vmem:[%s556 + $0x3a] sm:$0xff]
      %v1075 = vld [vmem:[%s556 + $0x4a] sm:$0xff]
      %v1076 = vld [vmem:[%s556 + $0x52] sm:$0xff]
      %v1077 = vld [vmem:[%s556 + $0x62] sm:$0xff]
      %v1078 = vld [vmem:[%s556 + $0x6a] sm:$0xff]
      %v1079 = vld [vmem:[%s556 + $0x7a] sm:$0xff]
      %v1080 = vld [vmem:[%s556 + $0x82] sm:$0xff]
      %v1081 = vld [vmem:[%s556 + $0x92] sm:$0xff]
      %v1082 = vld [vmem:[%s556 + $0x9a] sm:$0xff]
      %v1083 = vld [vmem:[%s556 + $0xaa] sm:$0xff]
      %v1084 = vld [vmem:[%s556 + $0xb2] sm:$0xff]
      %v1085 = vld [vmem:[%s556 + $0xc2] sm:$0xff]
      %v1086 = vld [vmem:[%s556 + $0xca] sm:$0xff]
      %v1087 = vld [vmem:[%s556 + $0xda] sm:$0xff]
      %v1088 = vld [vmem:[%s556 + $0xe2] sm:$0xff]
      %v1089 = vld [vmem:[%s556 + $0xf2] sm:$0xff]
      %v1090 = vld [vmem:[%s556 + $0xfa] sm:$0xff]
      %v1091 = vld [vmem:[%s556 + $0x10a] sm:$0xff]
      %v1092 = vld [vmem:[%s556 + $0x112] sm:$0xff]
      %v1093 = vld [vmem:[%s556 + $0x122] sm:$0xff]
      %v1094 = vld [vmem:[%s556 + $0x12a] sm:$0xff]
      %v1095 = vld [vmem:[%s556 + $0x13a] sm:$0xff]
      %v1096 = vld [vmem:[%s556 + $0x142] sm:$0xff]
      %v1097 = vld [vmem:[%s556 + $0x152] sm:$0xff]
      %v1098 = vld [vmem:[%s556 + $0x15a] sm:$0xff]
      %v1099 = vld [vmem:[%s556 + $0x16a] sm:$0xff]
      %v1100 = vld [vmem:[%s556 + $0x172] sm:$0xff]
      %v1101 = vpack.c.bf16 %v1069, %v1069
      %v1102 = vpack.c.bf16 %v1070, %v1070
      %v1103 = vpack.c.bf16 %v1071, %v1071
      %v1104 = vpack.c.bf16 %v1072, %v1072
      %v1105 = vpack.c.bf16 %v1073, %v1073
      %v1106 = vpack.c.bf16 %v1074, %v1074
      %v1107 = vpack.c.bf16 %v1075, %v1075
      %v1108 = vpack.c.bf16 %v1076, %v1076
      %v1109 = vpack.c.bf16 %v1077, %v1077
      %v1110 = vpack.c.bf16 %v1078, %v1078
      %v1111 = vpack.c.bf16 %v1079, %v1079
      %v1112 = vpack.c.bf16 %v1080, %v1080
      %v1113 = vpack.c.bf16 %v1081, %v1081
      %v1114 = vpack.c.bf16 %v1082, %v1082
      %v1115 = vpack.c.bf16 %v1083, %v1083
      %v1116 = vpack.c.bf16 %v1084, %v1084
      %v1117 = vpack.c.bf16 %v1085, %v1085
      %v1118 = vpack.c.bf16 %v1086, %v1086
      %v1119 = vpack.c.bf16 %v1087, %v1087
      %v1120 = vpack.c.bf16 %v1088, %v1088
      %v1121 = vpack.c.bf16 %v1089, %v1089
      %v1122 = vpack.c.bf16 %v1090, %v1090
      %v1123 = vpack.c.bf16 %v1091, %v1091
      %v1124 = vpack.c.bf16 %v1092, %v1092
      %v1125 = vpack.c.bf16 %v1093, %v1093
      %v1126 = vpack.c.bf16 %v1094, %v1094
      %v1127 = vpack.c.bf16 %v1095, %v1095
      %v1128 = vpack.c.bf16 %v1096, %v1096
      %v1129 = vpack.c.bf16 %v1097, %v1097
      %v1130 = vpack.c.bf16 %v1098, %v1098
      %v1131 = vpack.c.bf16 %v1099, %v1099
      %v1132 = vpack.c.bf16 %v1100, %v1100
      %1133 = vst [vmem:[#allocation3 + $0x14] sm:$0xf] %v1101
      %1134 = vst [vmem:[#allocation3 + $0x38] sm:$0xf] %v1102
      %1135 = vst [vmem:[#allocation3 + $0x5c] sm:$0xf] %v1103
      %1136 = vst [vmem:[#allocation3 + $0x80] sm:$0xf] %v1104
      %1137 = vst [vmem:[#allocation3 + $0xa4] sm:$0xf] %v1105
      %1138 = vst [vmem:[#allocation3 + $0xc8] sm:$0xf] %v1106
      %1139 = vst [vmem:[#allocation3 + $0xec] sm:$0xf] %v1107
      %1140 = vst [vmem:[#allocation3 + $0x110] sm:$0xf] %v1108
      %1141 = vst [vmem:[#allocation3 + $0x134] sm:$0xf] %v1109
      %1142 = vst [vmem:[#allocation3 + $0x158] sm:$0xf] %v1110
      %1143 = vst [vmem:[#allocation3 + $0x17c] sm:$0xf] %v1111
      %1144 = vst [vmem:[#allocation3 + $0x1a0] sm:$0xf] %v1112
      %1145 = vst [vmem:[#allocation3 + $0x1c4] sm:$0xf] %v1113
      %1146 = vst [vmem:[#allocation3 + $0x1e8] sm:$0xf] %v1114
      %1147 = vst [vmem:[#allocation3 + $0x20c] sm:$0xf] %v1115
      %1148 = vst [vmem:[#allocation3 + $0x230] sm:$0xf] %v1116
      %1149 = vst [vmem:[#allocation3 + $0x254] sm:$0xf] %v1117
      %1150 = vst [vmem:[#allocation3 + $0x278] sm:$0xf] %v1118
      %1151 = vst [vmem:[#allocation3 + $0x29c] sm:$0xf] %v1119
      %1152 = vst [vmem:[#allocation3 + $0x2c0] sm:$0xf] %v1120
      %1153 = vst [vmem:[#allocation3 + $0x2e4] sm:$0xf] %v1121
      %1154 = vst [vmem:[#allocation3 + $0x308] sm:$0xf] %v1122
      %1155 = vst [vmem:[#allocation3 + $0x32c] sm:$0xf] %v1123
      %1156 = vst [vmem:[#allocation3 + $0x350] sm:$0xf] %v1124
      %1157 = vst [vmem:[#allocation3 + $0x374] sm:$0xf] %v1125
      %1158 = vst [vmem:[#allocation3 + $0x398] sm:$0xf] %v1126
      %1159 = vst [vmem:[#allocation3 + $0x3bc] sm:$0xf] %v1127
      %1160 = vst [vmem:[#allocation3 + $0x3e0] sm:$0xf] %v1128
      %1161 = vst [vmem:[#allocation3 + $0x404] sm:$0xf] %v1129
      %1162 = vst [vmem:[#allocation3 + $0x428] sm:$0xf] %v1130
      %1163 = vst [vmem:[#allocation3 + $0x44c] sm:$0xf] %v1131
      %1164 = vst [vmem:[#allocation3 + $0x470] sm:$0xf] %v1132
      %s1165 = scalar_lea.vmem [#allocation2], 48
      %v1166 = vld [vmem:[%s1165] sm:$0xff]
      %v1167 = vld [vmem:[%s1165 + $0x8] sm:$0xff]
      %v1168 = vld [vmem:[%s1165 + $0x18] sm:$0xff]
      %v1169 = vld [vmem:[%s1165 + $0x20] sm:$0xff]
      %v1170 = vld [vmem:[%s1165 + $0x30] sm:$0xff]
      %v1171 = vld [vmem:[%s1165 + $0x38] sm:$0xff]
      %v1172 = vld [vmem:[%s1165 + $0x48] sm:$0xff]
      %v1173 = vld [vmem:[%s1165 + $0x50] sm:$0xff]
      %v1174 = vld [vmem:[%s1165 + $0x60] sm:$0xff]
      %v1175 = vld [vmem:[%s1165 + $0x68] sm:$0xff]
      %v1176 = vld [vmem:[%s1165 + $0x78] sm:$0xff]
      %v1177 = vld [vmem:[%s1165 + $0x80] sm:$0xff]
      %v1178 = vld [vmem:[%s1165 + $0x90] sm:$0xff]
      %v1179 = vld [vmem:[%s1165 + $0x98] sm:$0xff]
      %v1180 = vld [vmem:[%s1165 + $0xa8] sm:$0xff]
      %v1181 = vld [vmem:[%s1165 + $0xb0] sm:$0xff]
      %v1182 = vld [vmem:[%s1165 + $0xc0] sm:$0xff]
      %v1183 = vld [vmem:[%s1165 + $0xc8] sm:$0xff]
      %v1184 = vld [vmem:[%s1165 + $0xd8] sm:$0xff]
      %v1185 = vld [vmem:[%s1165 + $0xe0] sm:$0xff]
      %v1186 = vld [vmem:[%s1165 + $0xf0] sm:$0xff]
      %v1187 = vld [vmem:[%s1165 + $0xf8] sm:$0xff]
      %v1188 = vld [vmem:[%s1165 + $0x108] sm:$0xff]
      %v1189 = vld [vmem:[%s1165 + $0x110] sm:$0xff]
      %v1190 = vld [vmem:[%s1165 + $0x120] sm:$0xff]
      %v1191 = vld [vmem:[%s1165 + $0x128] sm:$0xff]
      %v1192 = vld [vmem:[%s1165 + $0x138] sm:$0xff]
      %v1193 = vld [vmem:[%s1165 + $0x140] sm:$0xff]
      %v1194 = vld [vmem:[%s1165 + $0x150] sm:$0xff]
      %v1195 = vld [vmem:[%s1165 + $0x158] sm:$0xff]
      %v1196 = vld [vmem:[%s1165 + $0x168] sm:$0xff]
      %v1197 = vld [vmem:[%s1165 + $0x170] sm:$0xff]
      %v1198 = vpack.c.bf16 %v1166, %v1166
      %v1199 = vpack.c.bf16 %v1167, %v1167
      %v1200 = vpack.c.bf16 %v1168, %v1168
      %v1201 = vpack.c.bf16 %v1169, %v1169
      %v1202 = vpack.c.bf16 %v1170, %v1170
      %v1203 = vpack.c.bf16 %v1171, %v1171
      %v1204 = vpack.c.bf16 %v1172, %v1172
      %v1205 = vpack.c.bf16 %v1173, %v1173
      %v1206 = vpack.c.bf16 %v1174, %v1174
      %v1207 = vpack.c.bf16 %v1175, %v1175
      %v1208 = vpack.c.bf16 %v1176, %v1176
      %v1209 = vpack.c.bf16 %v1177, %v1177
      %v1210 = vpack.c.bf16 %v1178, %v1178
      %v1211 = vpack.c.bf16 %v1179, %v1179
      %v1212 = vpack.c.bf16 %v1180, %v1180
      %v1213 = vpack.c.bf16 %v1181, %v1181
      %v1214 = vpack.c.bf16 %v1182, %v1182
      %v1215 = vpack.c.bf16 %v1183, %v1183
      %v1216 = vpack.c.bf16 %v1184, %v1184
      %v1217 = vpack.c.bf16 %v1185, %v1185
      %v1218 = vpack.c.bf16 %v1186, %v1186
      %v1219 = vpack.c.bf16 %v1187, %v1187
      %v1220 = vpack.c.bf16 %v1188, %v1188
      %v1221 = vpack.c.bf16 %v1189, %v1189
      %v1222 = vpack.c.bf16 %v1190, %v1190
      %v1223 = vpack.c.bf16 %v1191, %v1191
      %v1224 = vpack.c.bf16 %v1192, %v1192
      %v1225 = vpack.c.bf16 %v1193, %v1193
      %v1226 = vpack.c.bf16 %v1194, %v1194
      %v1227 = vpack.c.bf16 %v1195, %v1195
      %v1228 = vpack.c.bf16 %v1196, %v1196
      %v1229 = vpack.c.bf16 %v1197, %v1197
      %1230 = vst [vmem:[#allocation3 + $0x18] sm:$0xf] %v1198
      %1231 = vst [vmem:[#allocation3 + $0x3c] sm:$0xf] %v1199
      %1232 = vst [vmem:[#allocation3 + $0x60] sm:$0xf] %v1200
      %1233 = vst [vmem:[#allocation3 + $0x84] sm:$0xf] %v1201
      %1234 = vst [vmem:[#allocation3 + $0xa8] sm:$0xf] %v1202
      %1235 = vst [vmem:[#allocation3 + $0xcc] sm:$0xf] %v1203
      %1236 = vst [vmem:[#allocation3 + $0xf0] sm:$0xf] %v1204
      %1237 = vst [vmem:[#allocation3 + $0x114] sm:$0xf] %v1205
      %1238 = vst [vmem:[#allocation3 + $0x138] sm:$0xf] %v1206
      %1239 = vst [vmem:[#allocation3 + $0x15c] sm:$0xf] %v1207
      %1240 = vst [vmem:[#allocation3 + $0x180] sm:$0xf] %v1208
      %1241 = vst [vmem:[#allocation3 + $0x1a4] sm:$0xf] %v1209
      %1242 = vst [vmem:[#allocation3 + $0x1c8] sm:$0xf] %v1210
      %1243 = vst [vmem:[#allocation3 + $0x1ec] sm:$0xf] %v1211
      %1244 = vst [vmem:[#allocation3 + $0x210] sm:$0xf] %v1212
      %1245 = vst [vmem:[#allocation3 + $0x234] sm:$0xf] %v1213
      %1246 = vst [vmem:[#allocation3 + $0x258] sm:$0xf] %v1214
      %1247 = vst [vmem:[#allocation3 + $0x27c] sm:$0xf] %v1215
      %1248 = vst [vmem:[#allocation3 + $0x2a0] sm:$0xf] %v1216
      %1249 = vst [vmem:[#allocation3 + $0x2c4] sm:$0xf] %v1217
      %1250 = vst [vmem:[#allocation3 + $0x2e8] sm:$0xf] %v1218
      %1251 = vst [vmem:[#allocation3 + $0x30c] sm:$0xf] %v1219
      %1252 = vst [vmem:[#allocation3 + $0x330] sm:$0xf] %v1220
      %1253 = vst [vmem:[#allocation3 + $0x354] sm:$0xf] %v1221
      %1254 = vst [vmem:[#allocation3 + $0x378] sm:$0xf] %v1222
      %1255 = vst [vmem:[#allocation3 + $0x39c] sm:$0xf] %v1223
      %1256 = vst [vmem:[#allocation3 + $0x3c0] sm:$0xf] %v1224
      %1257 = vst [vmem:[#allocation3 + $0x3e4] sm:$0xf] %v1225
      %1258 = vst [vmem:[#allocation3 + $0x408] sm:$0xf] %v1226
      %1259 = vst [vmem:[#allocation3 + $0x42c] sm:$0xf] %v1227
      %1260 = vst [vmem:[#allocation3 + $0x450] sm:$0xf] %v1228
      %1261 = vst [vmem:[#allocation3 + $0x474] sm:$0xf] %v1229
      %v1262 = vld [vmem:[%s1165 + $0x1] sm:$0xff]
      %v1263 = vld [vmem:[%s1165 + $0x9] sm:$0xff]
      %v1264 = vld [vmem:[%s1165 + $0x19] sm:$0xff]
      %v1265 = vld [vmem:[%s1165 + $0x21] sm:$0xff]
      %v1266 = vld [vmem:[%s1165 + $0x31] sm:$0xff]
      %v1267 = vld [vmem:[%s1165 + $0x39] sm:$0xff]
      %v1268 = vld [vmem:[%s1165 + $0x49] sm:$0xff]
      %v1269 = vld [vmem:[%s1165 + $0x51] sm:$0xff]
      %v1270 = vld [vmem:[%s1165 + $0x61] sm:$0xff]
      %v1271 = vld [vmem:[%s1165 + $0x69] sm:$0xff]
      %v1272 = vld [vmem:[%s1165 + $0x79] sm:$0xff]
      %v1273 = vld [vmem:[%s1165 + $0x81] sm:$0xff]
      %v1274 = vld [vmem:[%s1165 + $0x91] sm:$0xff]
      %v1275 = vld [vmem:[%s1165 + $0x99] sm:$0xff]
      %v1276 = vld [vmem:[%s1165 + $0xa9] sm:$0xff]
      %v1277 = vld [vmem:[%s1165 + $0xb1] sm:$0xff]
      %v1278 = vld [vmem:[%s1165 + $0xc1] sm:$0xff]
      %v1279 = vld [vmem:[%s1165 + $0xc9] sm:$0xff]
      %v1280 = vld [vmem:[%s1165 + $0xd9] sm:$0xff]
      %v1281 = vld [vmem:[%s1165 + $0xe1] sm:$0xff]
      %v1282 = vld [vmem:[%s1165 + $0xf1] sm:$0xff]
      %v1283 = vld [vmem:[%s1165 + $0xf9] sm:$0xff]
      %v1284 = vld [vmem:[%s1165 + $0x109] sm:$0xff]
      %v1285 = vld [vmem:[%s1165 + $0x111] sm:$0xff]
      %v1286 = vld [vmem:[%s1165 + $0x121] sm:$0xff]
      %v1287 = vld [vmem:[%s1165 + $0x129] sm:$0xff]
      %v1288 = vld [vmem:[%s1165 + $0x139] sm:$0xff]
      %v1289 = vld [vmem:[%s1165 + $0x141] sm:$0xff]
      %v1290 = vld [vmem:[%s1165 + $0x151] sm:$0xff]
      %v1291 = vld [vmem:[%s1165 + $0x159] sm:$0xff]
      %v1292 = vld [vmem:[%s1165 + $0x169] sm:$0xff]
      %v1293 = vld [vmem:[%s1165 + $0x171] sm:$0xff]
      %v1294 = vpack.c.bf16 %v1262, %v1262
      %v1295 = vpack.c.bf16 %v1263, %v1263
      %v1296 = vpack.c.bf16 %v1264, %v1264
      %v1297 = vpack.c.bf16 %v1265, %v1265
      %v1298 = vpack.c.bf16 %v1266, %v1266
      %v1299 = vpack.c.bf16 %v1267, %v1267
      %v1300 = vpack.c.bf16 %v1268, %v1268
      %v1301 = vpack.c.bf16 %v1269, %v1269
      %v1302 = vpack.c.bf16 %v1270, %v1270
      %v1303 = vpack.c.bf16 %v1271, %v1271
      %v1304 = vpack.c.bf16 %v1272, %v1272
      %v1305 = vpack.c.bf16 %v1273, %v1273
      %v1306 = vpack.c.bf16 %v1274, %v1274
      %v1307 = vpack.c.bf16 %v1275, %v1275
      %v1308 = vpack.c.bf16 %v1276, %v1276
      %v1309 = vpack.c.bf16 %v1277, %v1277
      %v1310 = vpack.c.bf16 %v1278, %v1278
      %v1311 = vpack.c.bf16 %v1279, %v1279
      %v1312 = vpack.c.bf16 %v1280, %v1280
      %v1313 = vpack.c.bf16 %v1281, %v1281
      %v1314 = vpack.c.bf16 %v1282, %v1282
      %v1315 = vpack.c.bf16 %v1283, %v1283
      %v1316 = vpack.c.bf16 %v1284, %v1284
      %v1317 = vpack.c.bf16 %v1285, %v1285
      %v1318 = vpack.c.bf16 %v1286, %v1286
      %v1319 = vpack.c.bf16 %v1287, %v1287
      %v1320 = vpack.c.bf16 %v1288, %v1288
      %v1321 = vpack.c.bf16 %v1289, %v1289
      %v1322 = vpack.c.bf16 %v1290, %v1290
      %v1323 = vpack.c.bf16 %v1291, %v1291
      %v1324 = vpack.c.bf16 %v1292, %v1292
      %v1325 = vpack.c.bf16 %v1293, %v1293
      %1326 = vst [vmem:[#allocation3 + $0x1c] sm:$0xf] %v1294
      %1327 = vst [vmem:[#allocation3 + $0x40] sm:$0xf] %v1295
      %1328 = vst [vmem:[#allocation3 + $0x64] sm:$0xf] %v1296
      %1329 = vst [vmem:[#allocation3 + $0x88] sm:$0xf] %v1297
      %1330 = vst [vmem:[#allocation3 + $0xac] sm:$0xf] %v1298
      %1331 = vst [vmem:[#allocation3 + $0xd0] sm:$0xf] %v1299
      %1332 = vst [vmem:[#allocation3 + $0xf4] sm:$0xf] %v1300
      %1333 = vst [vmem:[#allocation3 + $0x118] sm:$0xf] %v1301
      %1334 = vst [vmem:[#allocation3 + $0x13c] sm:$0xf] %v1302
      %1335 = vst [vmem:[#allocation3 + $0x160] sm:$0xf] %v1303
      %1336 = vst [vmem:[#allocation3 + $0x184] sm:$0xf] %v1304
      %1337 = vst [vmem:[#allocation3 + $0x1a8] sm:$0xf] %v1305
      %1338 = vst [vmem:[#allocation3 + $0x1cc] sm:$0xf] %v1306
      %1339 = vst [vmem:[#allocation3 + $0x1f0] sm:$0xf] %v1307
      %1340 = vst [vmem:[#allocation3 + $0x214] sm:$0xf] %v1308
      %1341 = vst [vmem:[#allocation3 + $0x238] sm:$0xf] %v1309
      %1342 = vst [vmem:[#allocation3 + $0x25c] sm:$0xf] %v1310
      %1343 = vst [vmem:[#allocation3 + $0x280] sm:$0xf] %v1311
      %1344 = vst [vmem:[#allocation3 + $0x2a4] sm:$0xf] %v1312
      %1345 = vst [vmem:[#allocation3 + $0x2c8] sm:$0xf] %v1313
      %1346 = vst [vmem:[#allocation3 + $0x2ec] sm:$0xf] %v1314
      %1347 = vst [vmem:[#allocation3 + $0x310] sm:$0xf] %v1315
      %1348 = vst [vmem:[#allocation3 + $0x334] sm:$0xf] %v1316
      %1349 = vst [vmem:[#allocation3 + $0x358] sm:$0xf] %v1317
      %1350 = vst [vmem:[#allocation3 + $0x37c] sm:$0xf] %v1318
      %1351 = vst [vmem:[#allocation3 + $0x3a0] sm:$0xf] %v1319
      %1352 = vst [vmem:[#allocation3 + $0x3c4] sm:$0xf] %v1320
      %1353 = vst [vmem:[#allocation3 + $0x3e8] sm:$0xf] %v1321
      %1354 = vst [vmem:[#allocation3 + $0x40c] sm:$0xf] %v1322
      %1355 = vst [vmem:[#allocation3 + $0x430] sm:$0xf] %v1323
      %1356 = vst [vmem:[#allocation3 + $0x454] sm:$0xf] %v1324
      %1357 = vst [vmem:[#allocation3 + $0x478] sm:$0xf] %v1325
      %v1358 = vld [vmem:[%s1165 + $0x2] sm:$0xff]
      %v1359 = vld [vmem:[%s1165 + $0xa] sm:$0xff]
      %v1360 = vld [vmem:[%s1165 + $0x1a] sm:$0xff]
      %v1361 = vld [vmem:[%s1165 + $0x22] sm:$0xff]
      %v1362 = vld [vmem:[%s1165 + $0x32] sm:$0xff]
      %v1363 = vld [vmem:[%s1165 + $0x3a] sm:$0xff]
      %v1364 = vld [vmem:[%s1165 + $0x4a] sm:$0xff]
      %v1365 = vld [vmem:[%s1165 + $0x52] sm:$0xff]
      %v1366 = vld [vmem:[%s1165 + $0x62] sm:$0xff]
      %v1367 = vld [vmem:[%s1165 + $0x6a] sm:$0xff]
      %v1368 = vld [vmem:[%s1165 + $0x7a] sm:$0xff]
      %v1369 = vld [vmem:[%s1165 + $0x82] sm:$0xff]
      %v1370 = vld [vmem:[%s1165 + $0x92] sm:$0xff]
      %v1371 = vld [vmem:[%s1165 + $0x9a] sm:$0xff]
      %v1372 = vld [vmem:[%s1165 + $0xaa] sm:$0xff]
      %v1373 = vld [vmem:[%s1165 + $0xb2] sm:$0xff]
      %v1374 = vld [vmem:[%s1165 + $0xc2] sm:$0xff]
      %v1375 = vld [vmem:[%s1165 + $0xca] sm:$0xff]
      %v1376 = vld [vmem:[%s1165 + $0xda] sm:$0xff]
      %v1377 = vld [vmem:[%s1165 + $0xe2] sm:$0xff]
      %v1378 = vld [vmem:[%s1165 + $0xf2] sm:$0xff]
      %v1379 = vld [vmem:[%s1165 + $0xfa] sm:$0xff]
      %v1380 = vld [vmem:[%s1165 + $0x10a] sm:$0xff]
      %v1381 = vld [vmem:[%s1165 + $0x112] sm:$0xff]
      %v1382 = vld [vmem:[%s1165 + $0x122] sm:$0xff]
      %v1383 = vld [vmem:[%s1165 + $0x12a] sm:$0xff]
      %v1384 = vld [vmem:[%s1165 + $0x13a] sm:$0xff]
      %v1385 = vld [vmem:[%s1165 + $0x142] sm:$0xff]
      %v1386 = vld [vmem:[%s1165 + $0x152] sm:$0xff]
      %v1387 = vld [vmem:[%s1165 + $0x15a] sm:$0xff]
      %v1388 = vld [vmem:[%s1165 + $0x16a] sm:$0xff]
      %v1389 = vld [vmem:[%s1165 + $0x172] sm:$0xff]
      %v1390 = vpack.c.bf16 %v1358, %v1358
      %v1391 = vpack.c.bf16 %v1359, %v1359
      %v1392 = vpack.c.bf16 %v1360, %v1360
      %v1393 = vpack.c.bf16 %v1361, %v1361
      %v1394 = vpack.c.bf16 %v1362, %v1362
      %v1395 = vpack.c.bf16 %v1363, %v1363
      %v1396 = vpack.c.bf16 %v1364, %v1364
      %v1397 = vpack.c.bf16 %v1365, %v1365
      %v1398 = vpack.c.bf16 %v1366, %v1366
      %v1399 = vpack.c.bf16 %v1367, %v1367
      %v1400 = vpack.c.bf16 %v1368, %v1368
      %v1401 = vpack.c.bf16 %v1369, %v1369
      %v1402 = vpack.c.bf16 %v1370, %v1370
      %v1403 = vpack.c.bf16 %v1371, %v1371
      %v1404 = vpack.c.bf16 %v1372, %v1372
      %v1405 = vpack.c.bf16 %v1373, %v1373
      %v1406 = vpack.c.bf16 %v1374, %v1374
      %v1407 = vpack.c.bf16 %v1375, %v1375
      %v1408 = vpack.c.bf16 %v1376, %v1376
      %v1409 = vpack.c.bf16 %v1377, %v1377
      %v1410 = vpack.c.bf16 %v1378, %v1378
      %v1411 = vpack.c.bf16 %v1379, %v1379
      %v1412 = vpack.c.bf16 %v1380, %v1380
      %v1413 = vpack.c.bf16 %v1381, %v1381
      %v1414 = vpack.c.bf16 %v1382, %v1382
      %v1415 = vpack.c.bf16 %v1383, %v1383
      %v1416 = vpack.c.bf16 %v1384, %v1384
      %v1417 = vpack.c.bf16 %v1385, %v1385
      %v1418 = vpack.c.bf16 %v1386, %v1386
      %v1419 = vpack.c.bf16 %v1387, %v1387
      %v1420 = vpack.c.bf16 %v1388, %v1388
      %v1421 = vpack.c.bf16 %v1389, %v1389
      %1422 = vst [vmem:[#allocation3 + $0x20] sm:$0xf] %v1390
      %1423 = vst [vmem:[#allocation3 + $0x44] sm:$0xf] %v1391
      %1424 = vst [vmem:[#allocation3 + $0x68] sm:$0xf] %v1392
      %1425 = vst [vmem:[#allocation3 + $0x8c] sm:$0xf] %v1393
      %1426 = vst [vmem:[#allocation3 + $0xb0] sm:$0xf] %v1394
      %1427 = vst [vmem:[#allocation3 + $0xd4] sm:$0xf] %v1395
      %1428 = vst [vmem:[#allocation3 + $0xf8] sm:$0xf] %v1396
      %1429 = vst [vmem:[#allocation3 + $0x11c] sm:$0xf] %v1397
      %1430 = vst [vmem:[#allocation3 + $0x140] sm:$0xf] %v1398
      %1431 = vst [vmem:[#allocation3 + $0x164] sm:$0xf] %v1399
      %1432 = vst [vmem:[#allocation3 + $0x188] sm:$0xf] %v1400
      %1433 = vst [vmem:[#allocation3 + $0x1ac] sm:$0xf] %v1401
      %1434 = vst [vmem:[#allocation3 + $0x1d0] sm:$0xf] %v1402
      %1435 = vst [vmem:[#allocation3 + $0x1f4] sm:$0xf] %v1403
      %1436 = vst [vmem:[#allocation3 + $0x218] sm:$0xf] %v1404
      %1437 = vst [vmem:[#allocation3 + $0x23c] sm:$0xf] %v1405
      %1438 = vst [vmem:[#allocation3 + $0x260] sm:$0xf] %v1406
      %1439 = vst [vmem:[#allocation3 + $0x284] sm:$0xf] %v1407
      %1440 = vst [vmem:[#allocation3 + $0x2a8] sm:$0xf] %v1408
      %1441 = vst [vmem:[#allocation3 + $0x2cc] sm:$0xf] %v1409
      %1442 = vst [vmem:[#allocation3 + $0x2f0] sm:$0xf] %v1410
      %1443 = vst [vmem:[#allocation3 + $0x314] sm:$0xf] %v1411
      %1444 = vst [vmem:[#allocation3 + $0x338] sm:$0xf] %v1412
      %1445 = vst [vmem:[#allocation3 + $0x35c] sm:$0xf] %v1413
      %1446 = vst [vmem:[#allocation3 + $0x380] sm:$0xf] %v1414
      %1447 = vst [vmem:[#allocation3 + $0x3a4] sm:$0xf] %v1415
      %1448 = vst [vmem:[#allocation3 + $0x3c8] sm:$0xf] %v1416
      %1449 = vst [vmem:[#allocation3 + $0x3ec] sm:$0xf] %v1417
      %1450 = vst [vmem:[#allocation3 + $0x410] sm:$0xf] %v1418
      %1451 = vst [vmem:[#allocation3 + $0x434] sm:$0xf] %v1419
      %1452 = vst [vmem:[#allocation3 + $0x458] sm:$0xf] %v1420
      %1453 = vst [vmem:[#allocation3 + $0x47c] sm:$0xf] %v1421
      %v1454 = vld [vmem:[#allocation3] sm:$0xff]
      %v1455 = vld [vmem:[#allocation3 + $0x8] sm:$0xff]
      %v1456 = vld [vmem:[#allocation3 + $0x10] sm:$0xff]
      %v1457 = vld [vmem:[#allocation3 + $0x18] sm:$0xff]
      %v1458 = vld [vmem:[#allocation3 + $0x20] sm:$0xf]
      %v1459 = vld [vmem:[#allocation3 + $0x24] sm:$0xff]
      %v1460 = vld [vmem:[#allocation3 + $0x2c] sm:$0xff]
      %v1461 = vld [vmem:[#allocation3 + $0x34] sm:$0xff]
      %v1462 = vld [vmem:[#allocation3 + $0x3c] sm:$0xff]
      %v1463 = vld [vmem:[#allocation3 + $0x44] sm:$0xf]
      %v1464 = vld [vmem:[#allocation3 + $0x48] sm:$0xff]
      %v1465 = vld [vmem:[#allocation3 + $0x50] sm:$0xff]
      %v1466 = vld [vmem:[#allocation3 + $0x58] sm:$0xff]
      %v1467 = vld [vmem:[#allocation3 + $0x60] sm:$0xff]
      %v1468 = vld [vmem:[#allocation3 + $0x68] sm:$0xf]
      %v1469 = vld [vmem:[#allocation3 + $0x6c] sm:$0xff]
      %v1470 = vld [vmem:[#allocation3 + $0x74] sm:$0xff]
      %v1471 = vld [vmem:[#allocation3 + $0x7c] sm:$0xff]
      %v1472 = vld [vmem:[#allocation3 + $0x84] sm:$0xff]
      %v1473 = vld [vmem:[#allocation3 + $0x8c] sm:$0xf]
      %v1474 = vld [vmem:[#allocation3 + $0x90] sm:$0xff]
      %v1475 = vld [vmem:[#allocation3 + $0x98] sm:$0xff]
      %v1476 = vld [vmem:[#allocation3 + $0xa0] sm:$0xff]
      %v1477 = vld [vmem:[#allocation3 + $0xa8] sm:$0xff]
      %v1478 = vld [vmem:[#allocation3 + $0xb0] sm:$0xf]
      %v1479 = vld [vmem:[#allocation3 + $0xb4] sm:$0xff]
      %v1480 = vld [vmem:[#allocation3 + $0xbc] sm:$0xff]
      %v1481 = vld [vmem:[#allocation3 + $0xc4] sm:$0xff]
      %v1482 = vld [vmem:[#allocation3 + $0xcc] sm:$0xff]
      %v1483 = vld [vmem:[#allocation3 + $0xd4] sm:$0xf]
      %v1484 = vld [vmem:[#allocation3 + $0xd8] sm:$0xff]
      %v1485 = vld [vmem:[#allocation3 + $0xe0] sm:$0xff]
      %v1486 = vld [vmem:[#allocation3 + $0xe8] sm:$0xff]
      %v1487 = vld [vmem:[#allocation3 + $0xf0] sm:$0xff]
      %v1488 = vld [vmem:[#allocation3 + $0xf8] sm:$0xf]
      %v1489 = vld [vmem:[#allocation3 + $0xfc] sm:$0xff]
      %v1490 = vld [vmem:[#allocation3 + $0x104] sm:$0xff]
      %v1491 = vld [vmem:[#allocation3 + $0x10c] sm:$0xff]
      %v1492 = vld [vmem:[#allocation3 + $0x114] sm:$0xff]
      %v1493 = vld [vmem:[#allocation3 + $0x11c] sm:$0xf]
      %v1494 = vld [vmem:[#allocation3 + $0x120] sm:$0xff]
      %v1495 = vld [vmem:[#allocation3 + $0x128] sm:$0xff]
      %v1496 = vld [vmem:[#allocation3 + $0x130] sm:$0xff]
      %v1497 = vld [vmem:[#allocation3 + $0x138] sm:$0xff]
      %v1498 = vld [vmem:[#allocation3 + $0x140] sm:$0xf]
      %v1499 = vld [vmem:[#allocation3 + $0x144] sm:$0xff]
      %v1500 = vld [vmem:[#allocation3 + $0x14c] sm:$0xff]
      %v1501 = vld [vmem:[#allocation3 + $0x154] sm:$0xff]
      %v1502 = vld [vmem:[#allocation3 + $0x15c] sm:$0xff]
      %v1503 = vld [vmem:[#allocation3 + $0x164] sm:$0xf]
      %v1504 = vld [vmem:[#allocation3 + $0x168] sm:$0xff]
      %v1505 = vld [vmem:[#allocation3 + $0x170] sm:$0xff]
      %v1506 = vld [vmem:[#allocation3 + $0x178] sm:$0xff]
      %v1507 = vld [vmem:[#allocation3 + $0x180] sm:$0xff]
      %v1508 = vld [vmem:[#allocation3 + $0x188] sm:$0xf]
      %v1509 = vld [vmem:[#allocation3 + $0x18c] sm:$0xff]
      %v1510 = vld [vmem:[#allocation3 + $0x194] sm:$0xff]
      %v1511 = vld [vmem:[#allocation3 + $0x19c] sm:$0xff]
      %v1512 = vld [vmem:[#allocation3 + $0x1a4] sm:$0xff]
      %v1513 = vld [vmem:[#allocation3 + $0x1ac] sm:$0xf]
      %v1514 = vld [vmem:[#allocation3 + $0x1b0] sm:$0xff]
      %v1515 = vld [vmem:[#allocation3 + $0x1b8] sm:$0xff]
      %v1516 = vld [vmem:[#allocation3 + $0x1c0] sm:$0xff]
      %v1517 = vld [vmem:[#allocation3 + $0x1c8] sm:$0xff]
      %v1518 = vld [vmem:[#allocation3 + $0x1d0] sm:$0xf]
      %v1519 = vld [vmem:[#allocation3 + $0x1d4] sm:$0xff]
      %v1520 = vld [vmem:[#allocation3 + $0x1dc] sm:$0xff]
      %v1521 = vld [vmem:[#allocation3 + $0x1e4] sm:$0xff]
      %v1522 = vld [vmem:[#allocation3 + $0x1ec] sm:$0xff]
      %v1523 = vld [vmem:[#allocation3 + $0x1f4] sm:$0xf]
      %v1524 = vld [vmem:[#allocation3 + $0x1f8] sm:$0xff]
      %v1525 = vld [vmem:[#allocation3 + $0x200] sm:$0xff]
      %v1526 = vld [vmem:[#allocation3 + $0x208] sm:$0xff]
      %v1527 = vld [vmem:[#allocation3 + $0x210] sm:$0xff]
      %v1528 = vld [vmem:[#allocation3 + $0x218] sm:$0xf]
      %v1529 = vld [vmem:[#allocation3 + $0x21c] sm:$0xff]
      %v1530 = vld [vmem:[#allocation3 + $0x224] sm:$0xff]
      %v1531 = vld [vmem:[#allocation3 + $0x22c] sm:$0xff]
      %v1532 = vld [vmem:[#allocation3 + $0x234] sm:$0xff]
      %v1533 = vld [vmem:[#allocation3 + $0x23c] sm:$0xf]
      %v1534 = vld [vmem:[#allocation3 + $0x240] sm:$0xff]
      %v1535 = vld [vmem:[#allocation3 + $0x248] sm:$0xff]
      %v1536 = vld [vmem:[#allocation3 + $0x250] sm:$0xff]
      %v1537 = vld [vmem:[#allocation3 + $0x258] sm:$0xff]
      %v1538 = vld [vmem:[#allocation3 + $0x260] sm:$0xf]
      %v1539 = vld [vmem:[#allocation3 + $0x264] sm:$0xff]
      %v1540 = vld [vmem:[#allocation3 + $0x26c] sm:$0xff]
      %v1541 = vld [vmem:[#allocation3 + $0x274] sm:$0xff]
      %v1542 = vld [vmem:[#allocation3 + $0x27c] sm:$0xff]
      %v1543 = vld [vmem:[#allocation3 + $0x284] sm:$0xf]
      %v1544 = vld [vmem:[#allocation3 + $0x288] sm:$0xff]
      %v1545 = vld [vmem:[#allocation3 + $0x290] sm:$0xff]
      %v1546 = vld [vmem:[#allocation3 + $0x298] sm:$0xff]
      %v1547 = vld [vmem:[#allocation3 + $0x2a0] sm:$0xff]
      %v1548 = vld [vmem:[#allocation3 + $0x2a8] sm:$0xf]
      %v1549 = vld [vmem:[#allocation3 + $0x2ac] sm:$0xff]
      %v1550 = vld [vmem:[#allocation3 + $0x2b4] sm:$0xff]
      %v1551 = vld [vmem:[#allocation3 + $0x2bc] sm:$0xff]
      %v1552 = vld [vmem:[#allocation3 + $0x2c4] sm:$0xff]
      %v1553 = vld [vmem:[#allocation3 + $0x2cc] sm:$0xf]
      %v1554 = vld [vmem:[#allocation3 + $0x2d0] sm:$0xff]
      %v1555 = vld [vmem:[#allocation3 + $0x2d8] sm:$0xff]
      %v1556 = vld [vmem:[#allocation3 + $0x2e0] sm:$0xff]
      %v1557 = vld [vmem:[#allocation3 + $0x2e8] sm:$0xff]
      %v1558 = vld [vmem:[#allocation3 + $0x2f0] sm:$0xf]
      %v1559 = vld [vmem:[#allocation3 + $0x2f4] sm:$0xff]
      %v1560 = vld [vmem:[#allocation3 + $0x2fc] sm:$0xff]
      %v1561 = vld [vmem:[#allocation3 + $0x304] sm:$0xff]
      %v1562 = vld [vmem:[#allocation3 + $0x30c] sm:$0xff]
      %v1563 = vld [vmem:[#allocation3 + $0x314] sm:$0xf]
      %v1564 = vld [vmem:[#allocation3 + $0x318] sm:$0xff]
      %v1565 = vld [vmem:[#allocation3 + $0x320] sm:$0xff]
      %v1566 = vld [vmem:[#allocation3 + $0x328] sm:$0xff]
      %v1567 = vld [vmem:[#allocation3 + $0x330] sm:$0xff]
      %v1568 = vld [vmem:[#allocation3 + $0x338] sm:$0xf]
      %v1569 = vld [vmem:[#allocation3 + $0x33c] sm:$0xff]
      %v1570 = vld [vmem:[#allocation3 + $0x344] sm:$0xff]
      %v1571 = vld [vmem:[#allocation3 + $0x34c] sm:$0xff]
      %v1572 = vld [vmem:[#allocation3 + $0x354] sm:$0xff]
      %v1573 = vld [vmem:[#allocation3 + $0x35c] sm:$0xf]
      %v1574 = vld [vmem:[#allocation3 + $0x360] sm:$0xff]
      %v1575 = vld [vmem:[#allocation3 + $0x368] sm:$0xff]
      %v1576 = vld [vmem:[#allocation3 + $0x370] sm:$0xff]
      %v1577 = vld [vmem:[#allocation3 + $0x378] sm:$0xff]
      %v1578 = vld [vmem:[#allocation3 + $0x380] sm:$0xf]
      %v1579 = vld [vmem:[#allocation3 + $0x384] sm:$0xff]
      %v1580 = vld [vmem:[#allocation3 + $0x38c] sm:$0xff]
      %v1581 = vld [vmem:[#allocation3 + $0x394] sm:$0xff]
      %v1582 = vld [vmem:[#allocation3 + $0x39c] sm:$0xff]
      %v1583 = vld [vmem:[#allocation3 + $0x3a4] sm:$0xf]
      %v1584 = vld [vmem:[#allocation3 + $0x3a8] sm:$0xff]
      %v1585 = vld [vmem:[#allocation3 + $0x3b0] sm:$0xff]
      %v1586 = vld [vmem:[#allocation3 + $0x3b8] sm:$0xff]
      %v1587 = vld [vmem:[#allocation3 + $0x3c0] sm:$0xff]
      %v1588 = vld [vmem:[#allocation3 + $0x3c8] sm:$0xf]
      %v1589 = vld [vmem:[#allocation3 + $0x3cc] sm:$0xff]
      %v1590 = vld [vmem:[#allocation3 + $0x3d4] sm:$0xff]
      %v1591 = vld [vmem:[#allocation3 + $0x3dc] sm:$0xff]
      %v1592 = vld [vmem:[#allocation3 + $0x3e4] sm:$0xff]
      %v1593 = vld [vmem:[#allocation3 + $0x3ec] sm:$0xf]
      %v1594 = vld [vmem:[#allocation3 + $0x3f0] sm:$0xff]
      %v1595 = vld [vmem:[#allocation3 + $0x3f8] sm:$0xff]
      %v1596 = vld [vmem:[#allocation3 + $0x400] sm:$0xff]
      %v1597 = vld [vmem:[#allocation3 + $0x408] sm:$0xff]
      %v1598 = vld [vmem:[#allocation3 + $0x410] sm:$0xf]
      %v1599 = vld [vmem:[#allocation3 + $0x414] sm:$0xff]
      %v1600 = vld [vmem:[#allocation3 + $0x41c] sm:$0xff]
      %v1601 = vld [vmem:[#allocation3 + $0x424] sm:$0xff]
      %v1602 = vld [vmem:[#allocation3 + $0x42c] sm:$0xff]
      %v1603 = vld [vmem:[#allocation3 + $0x434] sm:$0xf]
      %v1604 = vld [vmem:[#allocation3 + $0x438] sm:$0xff]
      %v1605 = vld [vmem:[#allocation3 + $0x440] sm:$0xff]
      %v1606 = vld [vmem:[#allocation3 + $0x448] sm:$0xff]
      %v1607 = vld [vmem:[#allocation3 + $0x450] sm:$0xff]
      %v1608 = vld [vmem:[#allocation3 + $0x458] sm:$0xf]
      %v1609 = vld [vmem:[#allocation3 + $0x45c] sm:$0xff]
      %v1610 = vld [vmem:[#allocation3 + $0x464] sm:$0xff]
      %v1611 = vld [vmem:[#allocation3 + $0x46c] sm:$0xff]
      %v1612 = vld [vmem:[#allocation3 + $0x474] sm:$0xff]
      %v1613 = vld [vmem:[#allocation3 + $0x47c] sm:$0xf]
      %v1614 = vld [vmem:[%s3] sm:$0xf]
      %v1615 = vld [vmem:[%s3 + $0x4] sm:$0xf]
      %v1616 = vld [vmem:[%s3 + $0x8] sm:$0xf]
      %v1617 = vld [vmem:[%s3 + $0xc] sm:$0xf]
      %v1618 = vld [vmem:[%s3 + $0x10] sm:$0xf]
      %v1619 = vld [vmem:[%s3 + $0x14] sm:$0xf]
      %v1620 = vld [vmem:[%s3 + $0x18] sm:$0xf]
      %v1621 = vld [vmem:[%s3 + $0x1c] sm:$0xf]
      %v1622 = vld [vmem:[%s3 + $0x20] sm:$0xf]
      %v1623 = vld [vmem:[%s3 + $0x24] sm:$0xf]
      %v1624 = vld [vmem:[%s3 + $0x28] sm:$0xf]
      %v1625 = vld [vmem:[%s3 + $0x2c] sm:$0xf]
      %v1626 = vld [vmem:[%s3 + $0x30] sm:$0xf]
      %v1627 = vld [vmem:[%s3 + $0x34] sm:$0xf]
      %v1628 = vld [vmem:[%s3 + $0x38] sm:$0xf]
      %v1629 = vld [vmem:[%s3 + $0x3c] sm:$0xf]
      %v1630 = vld [vmem:[%s3 + $0x40] sm:$0xf]
      %v1631 = vld [vmem:[%s3 + $0x44] sm:$0xf]
      %v1632 = vld [vmem:[%s3 + $0x48] sm:$0xf]
      %v1633 = vld [vmem:[%s3 + $0x4c] sm:$0xf]
      %v1634 = vld [vmem:[%s3 + $0x50] sm:$0xf]
      %v1635 = vld [vmem:[%s3 + $0x54] sm:$0xf]
      %v1636 = vld [vmem:[%s3 + $0x58] sm:$0xf]
      %v1637 = vld [vmem:[%s3 + $0x5c] sm:$0xf]
      %v1638 = vld [vmem:[%s3 + $0x60] sm:$0xf]
      %v1639 = vld [vmem:[%s3 + $0x64] sm:$0xf]
      %v1640 = vld [vmem:[%s3 + $0x68] sm:$0xf]
      %v1641 = vld [vmem:[%s3 + $0x6c] sm:$0xf]
      %v1642 = vld [vmem:[%s3 + $0x70] sm:$0xf]
      %v1643 = vld [vmem:[%s3 + $0x74] sm:$0xf]
      %v1644 = vld [vmem:[%s3 + $0x78] sm:$0xf]
      %v1645 = vld [vmem:[%s3 + $0x7c] sm:$0xf]
      %v1646 = vld [vmem:[%s3 + $0x80] sm:$0xf]
      %v1647 = vld [vmem:[%s3 + $0x84] sm:$0xf]
      %v1648 = vld [vmem:[%s3 + $0x88] sm:$0xf]
      %v1649 = vld [vmem:[%s3 + $0x8c] sm:$0xf]
      %v1650 = vld [vmem:[%s3 + $0x90] sm:$0xf]
      %v1651 = vld [vmem:[%s3 + $0x94] sm:$0xf]
      %v1652 = vld [vmem:[%s3 + $0x98] sm:$0xf]
      %v1653 = vld [vmem:[%s3 + $0x9c] sm:$0xf]
      %v1654 = vld [vmem:[%s3 + $0xa0] sm:$0xf]
      %v1655 = vld [vmem:[%s3 + $0xa4] sm:$0xf]
      %v1656 = vld [vmem:[%s3 + $0xa8] sm:$0xf]
      %v1657 = vld [vmem:[%s3 + $0xac] sm:$0xf]
      %v1658 = vld [vmem:[%s3 + $0xb0] sm:$0xf]
      %v1659 = vld [vmem:[%s3 + $0xb4] sm:$0xf]
      %v1660 = vld [vmem:[%s3 + $0xb8] sm:$0xf]
      %v1661 = vld [vmem:[%s3 + $0xbc] sm:$0xf]
      %v1662 = vld [vmem:[%s3 + $0xc0] sm:$0xf]
      %v1663 = vld [vmem:[%s3 + $0xc4] sm:$0xf]
      %v1664 = vld [vmem:[%s3 + $0xc8] sm:$0xf]
      %v1665 = vld [vmem:[%s3 + $0xcc] sm:$0xf]
      %v1666 = vld [vmem:[%s3 + $0xd0] sm:$0xf]
      %v1667 = vld [vmem:[%s3 + $0xd4] sm:$0xf]
      %v1668 = vld [vmem:[%s3 + $0xd8] sm:$0xf]
      %v1669 = vld [vmem:[%s3 + $0xdc] sm:$0xf]
      %v1670 = vld [vmem:[%s3 + $0xe0] sm:$0xf]
      %v1671 = vld [vmem:[%s3 + $0xe4] sm:$0xf]
      %v1672 = vld [vmem:[%s3 + $0xe8] sm:$0xf]
      %v1673 = vld [vmem:[%s3 + $0xec] sm:$0xf]
      %v1674 = vld [vmem:[%s3 + $0xf0] sm:$0xf]
      %v1675 = vld [vmem:[%s3 + $0xf4] sm:$0xf]
      %v1676 = vld [vmem:[%s3 + $0xf8] sm:$0xf]
      %v1677 = vld [vmem:[%s3 + $0xfc] sm:$0xf]
      %v1678 = vld [vmem:[%s3 + $0x100] sm:$0xf]
      %v1679 = vld [vmem:[%s3 + $0x104] sm:$0xf]
      %v1680 = vld [vmem:[%s3 + $0x108] sm:$0xf]
      %v1681 = vld [vmem:[%s3 + $0x10c] sm:$0xf]
      %v1682 = vld [vmem:[%s3 + $0x110] sm:$0xf]
      %v1683 = vld [vmem:[%s3 + $0x114] sm:$0xf]
      %v1684 = vld [vmem:[%s3 + $0x118] sm:$0xf]
      %v1685 = vld [vmem:[%s3 + $0x11c] sm:$0xf]
      %v1686 = vld [vmem:[%s3 + $0x120] sm:$0xf]
      %v1687 = vld [vmem:[%s3 + $0x124] sm:$0xf]
      %v1688 = vld [vmem:[%s3 + $0x128] sm:$0xf]
      %v1689 = vld [vmem:[%s3 + $0x12c] sm:$0xf]
      %v1690 = vld [vmem:[%s3 + $0x130] sm:$0xf]
      %v1691 = vld [vmem:[%s3 + $0x134] sm:$0xf]
      %v1692 = vld [vmem:[%s3 + $0x138] sm:$0xf]
      %v1693 = vld [vmem:[%s3 + $0x13c] sm:$0xf]
      %v1694 = vld [vmem:[%s3 + $0x140] sm:$0xf]
      %v1695 = vld [vmem:[%s3 + $0x144] sm:$0xf]
      %v1696 = vld [vmem:[%s3 + $0x148] sm:$0xf]
      %v1697 = vld [vmem:[%s3 + $0x14c] sm:$0xf]
      %v1698 = vld [vmem:[%s3 + $0x150] sm:$0xf]
      %v1699 = vld [vmem:[%s3 + $0x154] sm:$0xf]
      %v1700 = vld [vmem:[%s3 + $0x158] sm:$0xf]
      %v1701 = vld [vmem:[%s3 + $0x15c] sm:$0xf]
      %v1702 = vld [vmem:[%s3 + $0x160] sm:$0xf]
      %v1703 = vld [vmem:[%s3 + $0x164] sm:$0xf]
      %v1704 = vld [vmem:[%s3 + $0x168] sm:$0xf]
      %v1705 = vld [vmem:[%s3 + $0x16c] sm:$0xf]
      %v1706 = vld [vmem:[%s3 + $0x170] sm:$0xf]
      %v1707 = vld [vmem:[%s3 + $0x174] sm:$0xf]
      %v1708 = vld [vmem:[%s3 + $0x178] sm:$0xf]
      %v1709 = vld [vmem:[%s3 + $0x17c] sm:$0xf]
      %v1710 = vld [vmem:[%s3 + $0x180] sm:$0xf]
      %v1711 = vld [vmem:[%s3 + $0x184] sm:$0xf]
      %v1712 = vld [vmem:[%s3 + $0x188] sm:$0xf]
      %v1713 = vld [vmem:[%s3 + $0x18c] sm:$0xf]
      %v1714 = vld [vmem:[%s3 + $0x190] sm:$0xf]
      %v1715 = vld [vmem:[%s3 + $0x194] sm:$0xf]
      %v1716 = vld [vmem:[%s3 + $0x198] sm:$0xf]
      %v1717 = vld [vmem:[%s3 + $0x19c] sm:$0xf]
      %v1718 = vld [vmem:[%s3 + $0x1a0] sm:$0xf]
      %v1719 = vld [vmem:[%s3 + $0x1a4] sm:$0xf]
      %v1720 = vld [vmem:[%s3 + $0x1a8] sm:$0xf]
      %v1721 = vld [vmem:[%s3 + $0x1ac] sm:$0xf]
      %v1722 = vld [vmem:[%s3 + $0x1b0] sm:$0xf]
      %v1723 = vld [vmem:[%s3 + $0x1b4] sm:$0xf]
      %v1724 = vld [vmem:[%s3 + $0x1b8] sm:$0xf]
      %v1725 = vld [vmem:[%s3 + $0x1bc] sm:$0xf]
      %v1726 = vld [vmem:[%s3 + $0x1c0] sm:$0xf]
      %v1727 = vld [vmem:[%s3 + $0x1c4] sm:$0xf]
      %v1728 = vld [vmem:[%s3 + $0x1c8] sm:$0xf]
      %v1729 = vld [vmem:[%s3 + $0x1cc] sm:$0xf]
      %v1730 = vld [vmem:[%s3 + $0x1d0] sm:$0xf]
      %v1731 = vld [vmem:[%s3 + $0x1d4] sm:$0xf]
      %v1732 = vld [vmem:[%s3 + $0x1d8] sm:$0xf]
      %v1733 = vld [vmem:[%s3 + $0x1dc] sm:$0xf]
      %v1734 = vld [vmem:[%s3 + $0x1e0] sm:$0xf]
      %v1735 = vld [vmem:[%s3 + $0x1e4] sm:$0xf]
      %v1736 = vld [vmem:[%s3 + $0x1e8] sm:$0xf]
      %v1737 = vld [vmem:[%s3 + $0x1ec] sm:$0xf]
      %v1738 = vld [vmem:[%s3 + $0x1f0] sm:$0xf]
      %v1739 = vld [vmem:[%s3 + $0x1f4] sm:$0xf]
      %v1740 = vld [vmem:[%s3 + $0x1f8] sm:$0xf]
      %v1741 = vld [vmem:[%s3 + $0x1fc] sm:$0xf]
      %v1742 = vld [vmem:[%s3 + $0x200] sm:$0xf]
      %v1743 = vld [vmem:[%s3 + $0x204] sm:$0xf]
      %v1744 = vld [vmem:[%s3 + $0x208] sm:$0xf]
      %v1745 = vld [vmem:[%s3 + $0x20c] sm:$0xf]
      %v1746 = vld [vmem:[%s3 + $0x210] sm:$0xf]
      %v1747 = vld [vmem:[%s3 + $0x214] sm:$0xf]
      %v1748 = vld [vmem:[%s3 + $0x218] sm:$0xf]
      %v1749 = vld [vmem:[%s3 + $0x21c] sm:$0xf]
      %v1750 = vld [vmem:[%s3 + $0x220] sm:$0xf]
      %v1751 = vld [vmem:[%s3 + $0x224] sm:$0xf]
      %v1752 = vld [vmem:[%s3 + $0x228] sm:$0xf]
      %v1753 = vld [vmem:[%s3 + $0x22c] sm:$0xf]
      %v1754 = vld [vmem:[%s3 + $0x230] sm:$0xf]
      %v1755 = vld [vmem:[%s3 + $0x234] sm:$0xf]
      %v1756 = vld [vmem:[%s3 + $0x238] sm:$0xf]
      %v1757 = vld [vmem:[%s3 + $0x23c] sm:$0xf]
      %v1918 = vunpack.c.l.b16 %v1454
      %v1919 = vunpack.c.h.b16 %v1454
      %v1920 = vunpack.c.l.b16 %v1455
      %v1921 = vunpack.c.h.b16 %v1455
      %v1922 = vunpack.c.l.b16 %v1456
      %v1923 = vunpack.c.h.b16 %v1456
      %v1924 = vunpack.c.l.b16 %v1457
      %v1925 = vunpack.c.h.b16 %v1457
      %v1926 = vunpack.c.l.b16 %v1458
      %v1927 = vunpack.c.l.b16 %v1459
      %v1928 = vunpack.c.h.b16 %v1459
      %v1929 = vunpack.c.l.b16 %v1460
      %v1930 = vunpack.c.h.b16 %v1460
      %v1931 = vunpack.c.l.b16 %v1461
      %v1932 = vunpack.c.h.b16 %v1461
      %v1933 = vunpack.c.l.b16 %v1462
      %v1934 = vunpack.c.h.b16 %v1462
      %v1935 = vunpack.c.l.b16 %v1463
      %v1936 = vunpack.c.l.b16 %v1464
      %v1937 = vunpack.c.h.b16 %v1464
      %v1938 = vunpack.c.l.b16 %v1465
      %v1939 = vunpack.c.h.b16 %v1465
      %v1940 = vunpack.c.l.b16 %v1466
      %v1941 = vunpack.c.h.b16 %v1466
      %v1942 = vunpack.c.l.b16 %v1467
      %v1943 = vunpack.c.h.b16 %v1467
      %v1944 = vunpack.c.l.b16 %v1468
      %v1945 = vunpack.c.l.b16 %v1469
      %v1946 = vunpack.c.h.b16 %v1469
      %v1947 = vunpack.c.l.b16 %v1470
      %v1948 = vunpack.c.h.b16 %v1470
      %v1949 = vunpack.c.l.b16 %v1471
      %v1950 = vunpack.c.h.b16 %v1471
      %v1951 = vunpack.c.l.b16 %v1472
      %v1952 = vunpack.c.h.b16 %v1472
      %v1953 = vunpack.c.l.b16 %v1473
      %v1954 = vunpack.c.l.b16 %v1474
      %v1955 = vunpack.c.h.b16 %v1474
      %v1956 = vunpack.c.l.b16 %v1475
      %v1957 = vunpack.c.h.b16 %v1475
      %v1958 = vunpack.c.l.b16 %v1476
      %v1959 = vunpack.c.h.b16 %v1476
      %v1960 = vunpack.c.l.b16 %v1477
      %v1961 = vunpack.c.h.b16 %v1477
      %v1962 = vunpack.c.l.b16 %v1478
      %v1963 = vunpack.c.l.b16 %v1479
      %v1964 = vunpack.c.h.b16 %v1479
      %v1965 = vunpack.c.l.b16 %v1480
      %v1966 = vunpack.c.h.b16 %v1480
      %v1967 = vunpack.c.l.b16 %v1481
      %v1968 = vunpack.c.h.b16 %v1481
      %v1969 = vunpack.c.l.b16 %v1482
      %v1970 = vunpack.c.h.b16 %v1482
      %v1971 = vunpack.c.l.b16 %v1483
      %v1972 = vunpack.c.l.b16 %v1484
      %v1973 = vunpack.c.h.b16 %v1484
      %v1974 = vunpack.c.l.b16 %v1485
      %v1975 = vunpack.c.h.b16 %v1485
      %v1976 = vunpack.c.l.b16 %v1486
      %v1977 = vunpack.c.h.b16 %v1486
      %v1978 = vunpack.c.l.b16 %v1487
      %v1979 = vunpack.c.h.b16 %v1487
      %v1980 = vunpack.c.l.b16 %v1488
      %v1981 = vunpack.c.l.b16 %v1489
      %v1982 = vunpack.c.h.b16 %v1489
      %v1983 = vunpack.c.l.b16 %v1490
      %v1984 = vunpack.c.h.b16 %v1490
      %v1985 = vunpack.c.l.b16 %v1491
      %v1986 = vunpack.c.h.b16 %v1491
      %v1987 = vunpack.c.l.b16 %v1492
      %v1988 = vunpack.c.h.b16 %v1492
      %v1989 = vunpack.c.l.b16 %v1493
      %v1990 = vunpack.c.l.b16 %v1494
      %v1991 = vunpack.c.h.b16 %v1494
      %v1992 = vunpack.c.l.b16 %v1495
      %v1993 = vunpack.c.h.b16 %v1495
      %v1994 = vunpack.c.l.b16 %v1496
      %v1995 = vunpack.c.h.b16 %v1496
      %v1996 = vunpack.c.l.b16 %v1497
      %v1997 = vunpack.c.h.b16 %v1497
      %v1998 = vunpack.c.l.b16 %v1498
      %v1999 = vunpack.c.l.b16 %v1499
      %v2000 = vunpack.c.h.b16 %v1499
      %v2001 = vunpack.c.l.b16 %v1500
      %v2002 = vunpack.c.h.b16 %v1500
      %v2003 = vunpack.c.l.b16 %v1501
      %v2004 = vunpack.c.h.b16 %v1501
      %v2005 = vunpack.c.l.b16 %v1502
      %v2006 = vunpack.c.h.b16 %v1502
      %v2007 = vunpack.c.l.b16 %v1503
      %v2008 = vunpack.c.l.b16 %v1504
      %v2009 = vunpack.c.h.b16 %v1504
      %v2010 = vunpack.c.l.b16 %v1505
      %v2011 = vunpack.c.h.b16 %v1505
      %v2012 = vunpack.c.l.b16 %v1506
      %v2013 = vunpack.c.h.b16 %v1506
      %v2014 = vunpack.c.l.b16 %v1507
      %v2015 = vunpack.c.h.b16 %v1507
      %v2016 = vunpack.c.l.b16 %v1508
      %v2017 = vunpack.c.l.b16 %v1509
      %v2018 = vunpack.c.h.b16 %v1509
      %v2019 = vunpack.c.l.b16 %v1510
      %v2020 = vunpack.c.h.b16 %v1510
      %v2021 = vunpack.c.l.b16 %v1511
      %v2022 = vunpack.c.h.b16 %v1511
      %v2023 = vunpack.c.l.b16 %v1512
      %v2024 = vunpack.c.h.b16 %v1512
      %v2025 = vunpack.c.l.b16 %v1513
      %v2026 = vunpack.c.l.b16 %v1514
      %v2027 = vunpack.c.h.b16 %v1514
      %v2028 = vunpack.c.l.b16 %v1515
      %v2029 = vunpack.c.h.b16 %v1515
      %v2030 = vunpack.c.l.b16 %v1516
      %v2031 = vunpack.c.h.b16 %v1516
      %v2032 = vunpack.c.l.b16 %v1517
      %v2033 = vunpack.c.h.b16 %v1517
      %v2034 = vunpack.c.l.b16 %v1518
      %v2035 = vunpack.c.l.b16 %v1519
      %v2036 = vunpack.c.h.b16 %v1519
      %v2037 = vunpack.c.l.b16 %v1520
      %v2038 = vunpack.c.h.b16 %v1520
      %v2039 = vunpack.c.l.b16 %v1521
      %v2040 = vunpack.c.h.b16 %v1521
      %v2041 = vunpack.c.l.b16 %v1522
      %v2042 = vunpack.c.h.b16 %v1522
      %v2043 = vunpack.c.l.b16 %v1523
      %v2044 = vunpack.c.l.b16 %v1524
      %v2045 = vunpack.c.h.b16 %v1524
      %v2046 = vunpack.c.l.b16 %v1525
      %v2047 = vunpack.c.h.b16 %v1525
      %v2048 = vunpack.c.l.b16 %v1526
      %v2049 = vunpack.c.h.b16 %v1526
      %v2050 = vunpack.c.l.b16 %v1527
      %v2051 = vunpack.c.h.b16 %v1527
      %v2052 = vunpack.c.l.b16 %v1528
      %v2053 = vunpack.c.l.b16 %v1529
      %v2054 = vunpack.c.h.b16 %v1529
      %v2055 = vunpack.c.l.b16 %v1530
      %v2056 = vunpack.c.h.b16 %v1530
      %v2057 = vunpack.c.l.b16 %v1531
      %v2058 = vunpack.c.h.b16 %v1531
      %v2059 = vunpack.c.l.b16 %v1532
      %v2060 = vunpack.c.h.b16 %v1532
      %v2061 = vunpack.c.l.b16 %v1533
      %v2062 = vunpack.c.l.b16 %v1534
      %v2063 = vunpack.c.h.b16 %v1534
      %v2064 = vunpack.c.l.b16 %v1535
      %v2065 = vunpack.c.h.b16 %v1535
      %v2066 = vunpack.c.l.b16 %v1536
      %v2067 = vunpack.c.h.b16 %v1536
      %v2068 = vunpack.c.l.b16 %v1537
      %v2069 = vunpack.c.h.b16 %v1537
      %v2070 = vunpack.c.l.b16 %v1538
      %v2071 = vunpack.c.l.b16 %v1539
      %v2072 = vunpack.c.h.b16 %v1539
      %v2073 = vunpack.c.l.b16 %v1540
      %v2074 = vunpack.c.h.b16 %v1540
      %v2075 = vunpack.c.l.b16 %v1541
      %v2076 = vunpack.c.h.b16 %v1541
      %v2077 = vunpack.c.l.b16 %v1542
      %v2078 = vunpack.c.h.b16 %v1542
      %v2079 = vunpack.c.l.b16 %v1543
      %v2080 = vunpack.c.l.b16 %v1544
      %v2081 = vunpack.c.h.b16 %v1544
      %v2082 = vunpack.c.l.b16 %v1545
      %v2083 = vunpack.c.h.b16 %v1545
      %v2084 = vunpack.c.l.b16 %v1546
      %v2085 = vunpack.c.h.b16 %v1546
      %v2086 = vunpack.c.l.b16 %v1547
      %v2087 = vunpack.c.h.b16 %v1547
      %v2088 = vunpack.c.l.b16 %v1548
      %v2089 = vunpack.c.l.b16 %v1549
      %v2090 = vunpack.c.h.b16 %v1549
      %v2091 = vunpack.c.l.b16 %v1550
      %v2092 = vunpack.c.h.b16 %v1550
      %v2093 = vunpack.c.l.b16 %v1551
      %v2094 = vunpack.c.h.b16 %v1551
      %v2095 = vunpack.c.l.b16 %v1552
      %v2096 = vunpack.c.h.b16 %v1552
      %v2097 = vunpack.c.l.b16 %v1553
      %v2098 = vunpack.c.l.b16 %v1554
      %v2099 = vunpack.c.h.b16 %v1554
      %v2100 = vunpack.c.l.b16 %v1555
      %v2101 = vunpack.c.h.b16 %v1555
      %v2102 = vunpack.c.l.b16 %v1556
      %v2103 = vunpack.c.h.b16 %v1556
      %v2104 = vunpack.c.l.b16 %v1557
      %v2105 = vunpack.c.h.b16 %v1557
      %v2106 = vunpack.c.l.b16 %v1558
      %v2107 = vunpack.c.l.b16 %v1559
      %v2108 = vunpack.c.h.b16 %v1559
      %v2109 = vunpack.c.l.b16 %v1560
      %v2110 = vunpack.c.h.b16 %v1560
      %v2111 = vunpack.c.l.b16 %v1561
      %v2112 = vunpack.c.h.b16 %v1561
      %v2113 = vunpack.c.l.b16 %v1562
      %v2114 = vunpack.c.h.b16 %v1562
      %v2115 = vunpack.c.l.b16 %v1563
      %v2116 = vunpack.c.l.b16 %v1564
      %v2117 = vunpack.c.h.b16 %v1564
      %v2118 = vunpack.c.l.b16 %v1565
      %v2119 = vunpack.c.h.b16 %v1565
      %v2120 = vunpack.c.l.b16 %v1566
      %v2121 = vunpack.c.h.b16 %v1566
      %v2122 = vunpack.c.l.b16 %v1567
      %v2123 = vunpack.c.h.b16 %v1567
      %v2124 = vunpack.c.l.b16 %v1568
      %v2125 = vunpack.c.l.b16 %v1569
      %v2126 = vunpack.c.h.b16 %v1569
      %v2127 = vunpack.c.l.b16 %v1570
      %v2128 = vunpack.c.h.b16 %v1570
      %v2129 = vunpack.c.l.b16 %v1571
      %v2130 = vunpack.c.h.b16 %v1571
      %v2131 = vunpack.c.l.b16 %v1572
      %v2132 = vunpack.c.h.b16 %v1572
      %v2133 = vunpack.c.l.b16 %v1573
      %v2134 = vunpack.c.l.b16 %v1574
      %v2135 = vunpack.c.h.b16 %v1574
      %v2136 = vunpack.c.l.b16 %v1575
      %v2137 = vunpack.c.h.b16 %v1575
      %v2138 = vunpack.c.l.b16 %v1576
      %v2139 = vunpack.c.h.b16 %v1576
      %v2140 = vunpack.c.l.b16 %v1577
      %v2141 = vunpack.c.h.b16 %v1577
      %v2142 = vunpack.c.l.b16 %v1578
      %v2143 = vunpack.c.l.b16 %v1579
      %v2144 = vunpack.c.h.b16 %v1579
      %v2145 = vunpack.c.l.b16 %v1580
      %v2146 = vunpack.c.h.b16 %v1580
      %v2147 = vunpack.c.l.b16 %v1581
      %v2148 = vunpack.c.h.b16 %v1581
      %v2149 = vunpack.c.l.b16 %v1582
      %v2150 = vunpack.c.h.b16 %v1582
      %v2151 = vunpack.c.l.b16 %v1583
      %v2152 = vunpack.c.l.b16 %v1584
      %v2153 = vunpack.c.h.b16 %v1584
      %v2154 = vunpack.c.l.b16 %v1585
      %v2155 = vunpack.c.h.b16 %v1585
      %v2156 = vunpack.c.l.b16 %v1586
      %v2157 = vunpack.c.h.b16 %v1586
      %v2158 = vunpack.c.l.b16 %v1587
      %v2159 = vunpack.c.h.b16 %v1587
      %v2160 = vunpack.c.l.b16 %v1588
      %v2161 = vunpack.c.l.b16 %v1589
      %v2162 = vunpack.c.h.b16 %v1589
      %v2163 = vunpack.c.l.b16 %v1590
      %v2164 = vunpack.c.h.b16 %v1590
      %v2165 = vunpack.c.l.b16 %v1591
      %v2166 = vunpack.c.h.b16 %v1591
      %v2167 = vunpack.c.l.b16 %v1592
      %v2168 = vunpack.c.h.b16 %v1592
      %v2169 = vunpack.c.l.b16 %v1593
      %v2170 = vunpack.c.l.b16 %v1594
      %v2171 = vunpack.c.h.b16 %v1594
      %v2172 = vunpack.c.l.b16 %v1595
      %v2173 = vunpack.c.h.b16 %v1595
      %v2174 = vunpack.c.l.b16 %v1596
      %v2175 = vunpack.c.h.b16 %v1596
      %v2176 = vunpack.c.l.b16 %v1597
      %v2177 = vunpack.c.h.b16 %v1597
      %v2178 = vunpack.c.l.b16 %v1598
      %v2179 = vunpack.c.l.b16 %v1599
      %v2180 = vunpack.c.h.b16 %v1599
      %v2181 = vunpack.c.l.b16 %v1600
      %v2182 = vunpack.c.h.b16 %v1600
      %v2183 = vunpack.c.l.b16 %v1601
      %v2184 = vunpack.c.h.b16 %v1601
      %v2185 = vunpack.c.l.b16 %v1602
      %v2186 = vunpack.c.h.b16 %v1602
      %v2187 = vunpack.c.l.b16 %v1603
      %v2188 = vunpack.c.l.b16 %v1604
      %v2189 = vunpack.c.h.b16 %v1604
      %v2190 = vunpack.c.l.b16 %v1605
      %v2191 = vunpack.c.h.b16 %v1605
      %v2192 = vunpack.c.l.b16 %v1606
      %v2193 = vunpack.c.h.b16 %v1606
      %v2194 = vunpack.c.l.b16 %v1607
      %v2195 = vunpack.c.h.b16 %v1607
      %v2196 = vunpack.c.l.b16 %v1608
      %v2197 = vunpack.c.l.b16 %v1609
      %v2198 = vunpack.c.h.b16 %v1609
      %v2199 = vunpack.c.l.b16 %v1610
      %v2200 = vunpack.c.h.b16 %v1610
      %v2201 = vunpack.c.l.b16 %v1611
      %v2202 = vunpack.c.h.b16 %v1611
      %v2203 = vunpack.c.l.b16 %v1612
      %v2204 = vunpack.c.h.b16 %v1612
      %v2205 = vunpack.c.l.b16 %v1613
      %v2206 = vpack.c.b16 %v1927, %v1918
      %v2207 = vpack.c.b16 %v1928, %v1919
      %v2208 = vpack.c.b16 %v1929, %v1920
      %v2209 = vpack.c.b16 %v1930, %v1921
      %v2210 = vpack.c.b16 %v1931, %v1922
      %v2211 = vpack.c.b16 %v1932, %v1923
      %v2212 = vpack.c.b16 %v1933, %v1924
      %v2213 = vpack.c.b16 %v1934, %v1925
      %v2214 = vpack.c.b16 %v1935, %v1926
      %v2215 = vpack.c.b16 %v1945, %v1936
      %v2216 = vpack.c.b16 %v1946, %v1937
      %v2217 = vpack.c.b16 %v1947, %v1938
      %v2218 = vpack.c.b16 %v1948, %v1939
      %v2219 = vpack.c.b16 %v1949, %v1940
      %v2220 = vpack.c.b16 %v1950, %v1941
      %v2221 = vpack.c.b16 %v1951, %v1942
      %v2222 = vpack.c.b16 %v1952, %v1943
      %v2223 = vpack.c.b16 %v1953, %v1944
      %v2224 = vpack.c.b16 %v1963, %v1954
      %v2225 = vpack.c.b16 %v1964, %v1955
      %v2226 = vpack.c.b16 %v1965, %v1956
      %v2227 = vpack.c.b16 %v1966, %v1957
      %v2228 = vpack.c.b16 %v1967, %v1958
      %v2229 = vpack.c.b16 %v1968, %v1959
      %v2230 = vpack.c.b16 %v1969, %v1960
      %v2231 = vpack.c.b16 %v1970, %v1961
      %v2232 = vpack.c.b16 %v1971, %v1962
      %v2233 = vpack.c.b16 %v1981, %v1972
      %v2234 = vpack.c.b16 %v1982, %v1973
      %v2235 = vpack.c.b16 %v1983, %v1974
      %v2236 = vpack.c.b16 %v1984, %v1975
      %v2237 = vpack.c.b16 %v1985, %v1976
      %v2238 = vpack.c.b16 %v1986, %v1977
      %v2239 = vpack.c.b16 %v1987, %v1978
      %v2240 = vpack.c.b16 %v1988, %v1979
      %v2241 = vpack.c.b16 %v1989, %v1980
      %v2242 = vpack.c.b16 %v1999, %v1990
      %v2243 = vpack.c.b16 %v2000, %v1991
      %v2244 = vpack.c.b16 %v2001, %v1992
      %v2245 = vpack.c.b16 %v2002, %v1993
      %v2246 = vpack.c.b16 %v2003, %v1994
      %v2247 = vpack.c.b16 %v2004, %v1995
      %v2248 = vpack.c.b16 %v2005, %v1996
      %v2249 = vpack.c.b16 %v2006, %v1997
      %v2250 = vpack.c.b16 %v2007, %v1998
      %v2251 = vpack.c.b16 %v2017, %v2008
      %v2252 = vpack.c.b16 %v2018, %v2009
      %v2253 = vpack.c.b16 %v2019, %v2010
      %v2254 = vpack.c.b16 %v2020, %v2011
      %v2255 = vpack.c.b16 %v2021, %v2012
      %v2256 = vpack.c.b16 %v2022, %v2013
      %v2257 = vpack.c.b16 %v2023, %v2014
      %v2258 = vpack.c.b16 %v2024, %v2015
      %v2259 = vpack.c.b16 %v2025, %v2016
      %v2260 = vpack.c.b16 %v2035, %v2026
      %v2261 = vpack.c.b16 %v2036, %v2027
      %v2262 = vpack.c.b16 %v2037, %v2028
      %v2263 = vpack.c.b16 %v2038, %v2029
      %v2264 = vpack.c.b16 %v2039, %v2030
      %v2265 = vpack.c.b16 %v2040, %v2031
      %v2266 = vpack.c.b16 %v2041, %v2032
      %v2267 = vpack.c.b16 %v2042, %v2033
      %v2268 = vpack.c.b16 %v2043, %v2034
      %v2269 = vpack.c.b16 %v2053, %v2044
      %v2270 = vpack.c.b16 %v2054, %v2045
      %v2271 = vpack.c.b16 %v2055, %v2046
      %v2272 = vpack.c.b16 %v2056, %v2047
      %v2273 = vpack.c.b16 %v2057, %v2048
      %v2274 = vpack.c.b16 %v2058, %v2049
      %v2275 = vpack.c.b16 %v2059, %v2050
      %v2276 = vpack.c.b16 %v2060, %v2051
      %v2277 = vpack.c.b16 %v2061, %v2052
      %v2278 = vpack.c.b16 %v2071, %v2062
      %v2279 = vpack.c.b16 %v2072, %v2063
      %v2280 = vpack.c.b16 %v2073, %v2064
      %v2281 = vpack.c.b16 %v2074, %v2065
      %v2282 = vpack.c.b16 %v2075, %v2066
      %v2283 = vpack.c.b16 %v2076, %v2067
      %v2284 = vpack.c.b16 %v2077, %v2068
      %v2285 = vpack.c.b16 %v2078, %v2069
      %v2286 = vpack.c.b16 %v2079, %v2070
      %v2287 = vpack.c.b16 %v2089, %v2080
      %v2288 = vpack.c.b16 %v2090, %v2081
      %v2289 = vpack.c.b16 %v2091, %v2082
      %v2290 = vpack.c.b16 %v2092, %v2083
      %v2291 = vpack.c.b16 %v2093, %v2084
      %v2292 = vpack.c.b16 %v2094, %v2085
      %v2293 = vpack.c.b16 %v2095, %v2086
      %v2294 = vpack.c.b16 %v2096, %v2087
      %v2295 = vpack.c.b16 %v2097, %v2088
      %v2296 = vpack.c.b16 %v2107, %v2098
      %v2297 = vpack.c.b16 %v2108, %v2099
      %v2298 = vpack.c.b16 %v2109, %v2100
      %v2299 = vpack.c.b16 %v2110, %v2101
      %v2300 = vpack.c.b16 %v2111, %v2102
      %v2301 = vpack.c.b16 %v2112, %v2103
      %v2302 = vpack.c.b16 %v2113, %v2104
      %v2303 = vpack.c.b16 %v2114, %v2105
      %v2304 = vpack.c.b16 %v2115, %v2106
      %v2305 = vpack.c.b16 %v2125, %v2116
      %v2306 = vpack.c.b16 %v2126, %v2117
      %v2307 = vpack.c.b16 %v2127, %v2118
      %v2308 = vpack.c.b16 %v2128, %v2119
      %v2309 = vpack.c.b16 %v2129, %v2120
      %v2310 = vpack.c.b16 %v2130, %v2121
      %v2311 = vpack.c.b16 %v2131, %v2122
      %v2312 = vpack.c.b16 %v2132, %v2123
      %v2313 = vpack.c.b16 %v2133, %v2124
      %v2314 = vpack.c.b16 %v2143, %v2134
      %v2315 = vpack.c.b16 %v2144, %v2135
      %v2316 = vpack.c.b16 %v2145, %v2136
      %v2317 = vpack.c.b16 %v2146, %v2137
      %v2318 = vpack.c.b16 %v2147, %v2138
      %v2319 = vpack.c.b16 %v2148, %v2139
      %v2320 = vpack.c.b16 %v2149, %v2140
      %v2321 = vpack.c.b16 %v2150, %v2141
      %v2322 = vpack.c.b16 %v2151, %v2142
      %v2323 = vpack.c.b16 %v2161, %v2152
      %v2324 = vpack.c.b16 %v2162, %v2153
      %v2325 = vpack.c.b16 %v2163, %v2154
      %v2326 = vpack.c.b16 %v2164, %v2155
      %v2327 = vpack.c.b16 %v2165, %v2156
      %v2328 = vpack.c.b16 %v2166, %v2157
      %v2329 = vpack.c.b16 %v2167, %v2158
      %v2330 = vpack.c.b16 %v2168, %v2159
      %v2331 = vpack.c.b16 %v2169, %v2160
      %v2332 = vpack.c.b16 %v2179, %v2170
      %v2333 = vpack.c.b16 %v2180, %v2171
      %v2334 = vpack.c.b16 %v2181, %v2172
      %v2335 = vpack.c.b16 %v2182, %v2173
      %v2336 = vpack.c.b16 %v2183, %v2174
      %v2337 = vpack.c.b16 %v2184, %v2175
      %v2338 = vpack.c.b16 %v2185, %v2176
      %v2339 = vpack.c.b16 %v2186, %v2177
      %v2340 = vpack.c.b16 %v2187, %v2178
      %v2341 = vpack.c.b16 %v2197, %v2188
      %v2342 = vpack.c.b16 %v2198, %v2189
      %v2343 = vpack.c.b16 %v2199, %v2190
      %v2344 = vpack.c.b16 %v2200, %v2191
      %v2345 = vpack.c.b16 %v2201, %v2192
      %v2346 = vpack.c.b16 %v2202, %v2193
      %v2347 = vpack.c.b16 %v2203, %v2194
      %v2348 = vpack.c.b16 %v2204, %v2195
      %v2349 = vpack.c.b16 %v2205, %v2196
      %v2638 = vunpack.c.l.b16 %v1614
      %v2639 = vunpack.c.l.b16 %v1615
      %v2640 = vunpack.c.l.b16 %v1616
      %v2641 = vunpack.c.l.b16 %v1617
      %v2642 = vunpack.c.l.b16 %v1618
      %v2643 = vunpack.c.l.b16 %v1619
      %v2644 = vunpack.c.l.b16 %v1620
      %v2645 = vunpack.c.l.b16 %v1621
      %v2646 = vunpack.c.l.b16 %v1622
      %v2647 = vunpack.c.l.b16 %v1623
      %v2648 = vunpack.c.l.b16 %v1624
      %v2649 = vunpack.c.l.b16 %v1625
      %v2650 = vunpack.c.l.b16 %v1626
      %v2651 = vunpack.c.l.b16 %v1627
      %v2652 = vunpack.c.l.b16 %v1628
      %v2653 = vunpack.c.l.b16 %v1629
      %v2654 = vunpack.c.l.b16 %v1630
      %v2655 = vunpack.c.l.b16 %v1631
      %v2656 = vunpack.c.l.b16 %v1632
      %v2657 = vunpack.c.l.b16 %v1633
      %v2658 = vunpack.c.l.b16 %v1634
      %v2659 = vunpack.c.l.b16 %v1635
      %v2660 = vunpack.c.l.b16 %v1636
      %v2661 = vunpack.c.l.b16 %v1637
      %v2662 = vunpack.c.l.b16 %v1638
      %v2663 = vunpack.c.l.b16 %v1639
      %v2664 = vunpack.c.l.b16 %v1640
      %v2665 = vunpack.c.l.b16 %v1641
      %v2666 = vunpack.c.l.b16 %v1642
      %v2667 = vunpack.c.l.b16 %v1643
      %v2668 = vunpack.c.l.b16 %v1644
      %v2669 = vunpack.c.l.b16 %v1645
      %v2670 = vunpack.c.l.b16 %v1646
      %v2671 = vunpack.c.l.b16 %v1647
      %v2672 = vunpack.c.l.b16 %v1648
      %v2673 = vunpack.c.l.b16 %v1649
      %v2674 = vunpack.c.l.b16 %v1650
      %v2675 = vunpack.c.l.b16 %v1651
      %v2676 = vunpack.c.l.b16 %v1652
      %v2677 = vunpack.c.l.b16 %v1653
      %v2678 = vunpack.c.l.b16 %v1654
      %v2679 = vunpack.c.l.b16 %v1655
      %v2680 = vunpack.c.l.b16 %v1656
      %v2681 = vunpack.c.l.b16 %v1657
      %v2682 = vunpack.c.l.b16 %v1658
      %v2683 = vunpack.c.l.b16 %v1659
      %v2684 = vunpack.c.l.b16 %v1660
      %v2685 = vunpack.c.l.b16 %v1661
      %v2686 = vunpack.c.l.b16 %v1662
      %v2687 = vunpack.c.l.b16 %v1663
      %v2688 = vunpack.c.l.b16 %v1664
      %v2689 = vunpack.c.l.b16 %v1665
      %v2690 = vunpack.c.l.b16 %v1666
      %v2691 = vunpack.c.l.b16 %v1667
      %v2692 = vunpack.c.l.b16 %v1668
      %v2693 = vunpack.c.l.b16 %v1669
      %v2694 = vunpack.c.l.b16 %v1670
      %v2695 = vunpack.c.l.b16 %v1671
      %v2696 = vunpack.c.l.b16 %v1672
      %v2697 = vunpack.c.l.b16 %v1673
      %v2698 = vunpack.c.l.b16 %v1674
      %v2699 = vunpack.c.l.b16 %v1675
      %v2700 = vunpack.c.l.b16 %v1676
      %v2701 = vunpack.c.l.b16 %v1677
      %v2702 = vunpack.c.l.b16 %v1678
      %v2703 = vunpack.c.l.b16 %v1679
      %v2704 = vunpack.c.l.b16 %v1680
      %v2705 = vunpack.c.l.b16 %v1681
      %v2706 = vunpack.c.l.b16 %v1682
      %v2707 = vunpack.c.l.b16 %v1683
      %v2708 = vunpack.c.l.b16 %v1684
      %v2709 = vunpack.c.l.b16 %v1685
      %v2710 = vunpack.c.l.b16 %v1686
      %v2711 = vunpack.c.l.b16 %v1687
      %v2712 = vunpack.c.l.b16 %v1688
      %v2713 = vunpack.c.l.b16 %v1689
      %v2714 = vunpack.c.l.b16 %v1690
      %v2715 = vunpack.c.l.b16 %v1691
      %v2716 = vunpack.c.l.b16 %v1692
      %v2717 = vunpack.c.l.b16 %v1693
      %v2718 = vunpack.c.l.b16 %v1694
      %v2719 = vunpack.c.l.b16 %v1695
      %v2720 = vunpack.c.l.b16 %v1696
      %v2721 = vunpack.c.l.b16 %v1697
      %v2722 = vunpack.c.l.b16 %v1698
      %v2723 = vunpack.c.l.b16 %v1699
      %v2724 = vunpack.c.l.b16 %v1700
      %v2725 = vunpack.c.l.b16 %v1701
      %v2726 = vunpack.c.l.b16 %v1702
      %v2727 = vunpack.c.l.b16 %v1703
      %v2728 = vunpack.c.l.b16 %v1704
      %v2729 = vunpack.c.l.b16 %v1705
      %v2730 = vunpack.c.l.b16 %v1706
      %v2731 = vunpack.c.l.b16 %v1707
      %v2732 = vunpack.c.l.b16 %v1708
      %v2733 = vunpack.c.l.b16 %v1709
      %v2734 = vunpack.c.l.b16 %v1710
      %v2735 = vunpack.c.l.b16 %v1711
      %v2736 = vunpack.c.l.b16 %v1712
      %v2737 = vunpack.c.l.b16 %v1713
      %v2738 = vunpack.c.l.b16 %v1714
      %v2739 = vunpack.c.l.b16 %v1715
      %v2740 = vunpack.c.l.b16 %v1716
      %v2741 = vunpack.c.l.b16 %v1717
      %v2742 = vunpack.c.l.b16 %v1718
      %v2743 = vunpack.c.l.b16 %v1719
      %v2744 = vunpack.c.l.b16 %v1720
      %v2745 = vunpack.c.l.b16 %v1721
      %v2746 = vunpack.c.l.b16 %v1722
      %v2747 = vunpack.c.l.b16 %v1723
      %v2748 = vunpack.c.l.b16 %v1724
      %v2749 = vunpack.c.l.b16 %v1725
      %v2750 = vunpack.c.l.b16 %v1726
      %v2751 = vunpack.c.l.b16 %v1727
      %v2752 = vunpack.c.l.b16 %v1728
      %v2753 = vunpack.c.l.b16 %v1729
      %v2754 = vunpack.c.l.b16 %v1730
      %v2755 = vunpack.c.l.b16 %v1731
      %v2756 = vunpack.c.l.b16 %v1732
      %v2757 = vunpack.c.l.b16 %v1733
      %v2758 = vunpack.c.l.b16 %v1734
      %v2759 = vunpack.c.l.b16 %v1735
      %v2760 = vunpack.c.l.b16 %v1736
      %v2761 = vunpack.c.l.b16 %v1737
      %v2762 = vunpack.c.l.b16 %v1738
      %v2763 = vunpack.c.l.b16 %v1739
      %v2764 = vunpack.c.l.b16 %v1740
      %v2765 = vunpack.c.l.b16 %v1741
      %v2766 = vunpack.c.l.b16 %v1742
      %v2767 = vunpack.c.l.b16 %v1743
      %v2768 = vunpack.c.l.b16 %v1744
      %v2769 = vunpack.c.l.b16 %v1745
      %v2770 = vunpack.c.l.b16 %v1746
      %v2771 = vunpack.c.l.b16 %v1747
      %v2772 = vunpack.c.l.b16 %v1748
      %v2773 = vunpack.c.l.b16 %v1749
      %v2774 = vunpack.c.l.b16 %v1750
      %v2775 = vunpack.c.l.b16 %v1751
      %v2776 = vunpack.c.l.b16 %v1752
      %v2777 = vunpack.c.l.b16 %v1753
      %v2778 = vunpack.c.l.b16 %v1754
      %v2779 = vunpack.c.l.b16 %v1755
      %v2780 = vunpack.c.l.b16 %v1756
      %v2781 = vunpack.c.l.b16 %v1757
      %v2782 = vpack.c.b16 %v2639, %v2638
      %v2783 = vpack.c.b16 %v2641, %v2640
      %v2784 = vpack.c.b16 %v2643, %v2642
      %v2785 = vpack.c.b16 %v2645, %v2644
      %v2786 = vpack.c.b16 %v2647, %v2646
      %v2787 = vpack.c.b16 %v2649, %v2648
      %v2788 = vpack.c.b16 %v2651, %v2650
      %v2789 = vpack.c.b16 %v2653, %v2652
      %v2790 = vpack.c.b16 %v2655, %v2654
      %v2791 = vpack.c.b16 %v2657, %v2656
      %v2792 = vpack.c.b16 %v2659, %v2658
      %v2793 = vpack.c.b16 %v2661, %v2660
      %v2794 = vpack.c.b16 %v2663, %v2662
      %v2795 = vpack.c.b16 %v2665, %v2664
      %v2796 = vpack.c.b16 %v2667, %v2666
      %v2797 = vpack.c.b16 %v2669, %v2668
      %v2798 = vpack.c.b16 %v2671, %v2670
      %v2799 = vpack.c.b16 %v2673, %v2672
      %v2800 = vpack.c.b16 %v2675, %v2674
      %v2801 = vpack.c.b16 %v2677, %v2676
      %v2802 = vpack.c.b16 %v2679, %v2678
      %v2803 = vpack.c.b16 %v2681, %v2680
      %v2804 = vpack.c.b16 %v2683, %v2682
      %v2805 = vpack.c.b16 %v2685, %v2684
      %v2806 = vpack.c.b16 %v2687, %v2686
      %v2807 = vpack.c.b16 %v2689, %v2688
      %v2808 = vpack.c.b16 %v2691, %v2690
      %v2809 = vpack.c.b16 %v2693, %v2692
      %v2810 = vpack.c.b16 %v2695, %v2694
      %v2811 = vpack.c.b16 %v2697, %v2696
      %v2812 = vpack.c.b16 %v2699, %v2698
      %v2813 = vpack.c.b16 %v2701, %v2700
      %v2814 = vpack.c.b16 %v2703, %v2702
      %v2815 = vpack.c.b16 %v2705, %v2704
      %v2816 = vpack.c.b16 %v2707, %v2706
      %v2817 = vpack.c.b16 %v2709, %v2708
      %v2818 = vpack.c.b16 %v2711, %v2710
      %v2819 = vpack.c.b16 %v2713, %v2712
      %v2820 = vpack.c.b16 %v2715, %v2714
      %v2821 = vpack.c.b16 %v2717, %v2716
      %v2822 = vpack.c.b16 %v2719, %v2718
      %v2823 = vpack.c.b16 %v2721, %v2720
      %v2824 = vpack.c.b16 %v2723, %v2722
      %v2825 = vpack.c.b16 %v2725, %v2724
      %v2826 = vpack.c.b16 %v2727, %v2726
      %v2827 = vpack.c.b16 %v2729, %v2728
      %v2828 = vpack.c.b16 %v2731, %v2730
      %v2829 = vpack.c.b16 %v2733, %v2732
      %v2830 = vpack.c.b16 %v2735, %v2734
      %v2831 = vpack.c.b16 %v2737, %v2736
      %v2832 = vpack.c.b16 %v2739, %v2738
      %v2833 = vpack.c.b16 %v2741, %v2740
      %v2834 = vpack.c.b16 %v2743, %v2742
      %v2835 = vpack.c.b16 %v2745, %v2744
      %v2836 = vpack.c.b16 %v2747, %v2746
      %v2837 = vpack.c.b16 %v2749, %v2748
      %v2838 = vpack.c.b16 %v2751, %v2750
      %v2839 = vpack.c.b16 %v2753, %v2752
      %v2840 = vpack.c.b16 %v2755, %v2754
      %v2841 = vpack.c.b16 %v2757, %v2756
      %v2842 = vpack.c.b16 %v2759, %v2758
      %v2843 = vpack.c.b16 %v2761, %v2760
      %v2844 = vpack.c.b16 %v2763, %v2762
      %v2845 = vpack.c.b16 %v2765, %v2764
      %v2846 = vpack.c.b16 %v2767, %v2766
      %v2847 = vpack.c.b16 %v2769, %v2768
      %v2848 = vpack.c.b16 %v2771, %v2770
      %v2849 = vpack.c.b16 %v2773, %v2772
      %v2850 = vpack.c.b16 %v2775, %v2774
      %v2851 = vpack.c.b16 %v2777, %v2776
      %v2852 = vpack.c.b16 %v2779, %v2778
      %v2853 = vpack.c.b16 %v2781, %v2780
      %2926 = vmatpush.bf16.msra.mxu0 %v2789
      %2927 = vmatpush.bf16.msra.mxu0 %v2788
      %2928 = vmatpush.bf16.msra.mxu0 %v2787
      %2929 = vmatpush.bf16.msra.mxu0 %v2786
      %2930 = vmatpush.bf16.msra.mxu0 %v2785
      %2931 = vmatpush.bf16.msra.mxu0 %v2784
      %2932 = vmatpush.bf16.msra.mxu0 %v2783
      %2933 = vmatpush.bf16.msra.mxu0 %v2782
      %2934 = vmatmul.bf16.gmra.mxu0 %v2206
      %v2935 = vpop.f32.mrf.mxu0
      %v2936 = vadd.f32 0.0, %v2935
      %v2937 = vpop.f32.mrf.mxu0
      %v2938 = vadd.f32 0.0, %v2937
      %2939 = vmatmul.bf16.gmra.mxu0 %v2215
      %v2940 = vpop.f32.mrf.mxu0
      %v2941 = vadd.f32 0.0, %v2940
      %v2942 = vpop.f32.mrf.mxu0
      %v2943 = vadd.f32 0.0, %v2942
      %2944 = vmatmul.bf16.gmra.mxu0 %v2224
      %v2945 = vpop.f32.mrf.mxu0
      %v2946 = vadd.f32 0.0, %v2945
      %v2947 = vpop.f32.mrf.mxu0
      %v2948 = vadd.f32 0.0, %v2947
      %2949 = vmatmul.bf16.gmra.mxu0 %v2233
      %v2950 = vpop.f32.mrf.mxu0
      %v2951 = vadd.f32 0.0, %v2950
      %v2952 = vpop.f32.mrf.mxu0
      %v2953 = vadd.f32 0.0, %v2952
      %2954 = vmatmul.bf16.gmra.mxu0 %v2242
      %v2955 = vpop.f32.mrf.mxu0
      %v2956 = vadd.f32 0.0, %v2955
      %v2957 = vpop.f32.mrf.mxu0
      %v2958 = vadd.f32 0.0, %v2957
      %2959 = vmatmul.bf16.gmra.mxu0 %v2251
      %v2960 = vpop.f32.mrf.mxu0
      %v2961 = vadd.f32 0.0, %v2960
      %v2962 = vpop.f32.mrf.mxu0
      %v2963 = vadd.f32 0.0, %v2962
      %2964 = vmatmul.bf16.gmra.mxu0 %v2260
      %v2965 = vpop.f32.mrf.mxu0
      %v2966 = vadd.f32 0.0, %v2965
      %v2967 = vpop.f32.mrf.mxu0
      %v2968 = vadd.f32 0.0, %v2967
      %2969 = vmatmul.bf16.gmra.mxu0 %v2269
      %v2970 = vpop.f32.mrf.mxu0
      %v2971 = vadd.f32 0.0, %v2970
      %v2972 = vpop.f32.mrf.mxu0
      %v2973 = vadd.f32 0.0, %v2972
      %2974 = vmatmul.bf16.gmra.mxu0 %v2278
      %v2975 = vpop.f32.mrf.mxu0
      %v2976 = vadd.f32 0.0, %v2975
      %v2977 = vpop.f32.mrf.mxu0
      %v2978 = vadd.f32 0.0, %v2977
      %2979 = vmatmul.bf16.gmra.mxu0 %v2287
      %v2980 = vpop.f32.mrf.mxu0
      %v2981 = vadd.f32 0.0, %v2980
      %v2982 = vpop.f32.mrf.mxu0
      %v2983 = vadd.f32 0.0, %v2982
      %2984 = vmatmul.bf16.gmra.mxu0 %v2296
      %v2985 = vpop.f32.mrf.mxu0
      %v2986 = vadd.f32 0.0, %v2985
      %v2987 = vpop.f32.mrf.mxu0
      %v2988 = vadd.f32 0.0, %v2987
      %2989 = vmatmul.bf16.gmra.mxu0 %v2305
      %v2990 = vpop.f32.mrf.mxu0
      %v2991 = vadd.f32 0.0, %v2990
      %v2992 = vpop.f32.mrf.mxu0
      %v2993 = vadd.f32 0.0, %v2992
      %2994 = vmatmul.bf16.gmra.mxu0 %v2314
      %v2995 = vpop.f32.mrf.mxu0
      %v2996 = vadd.f32 0.0, %v2995
      %v2997 = vpop.f32.mrf.mxu0
      %v2998 = vadd.f32 0.0, %v2997
      %2999 = vmatmul.bf16.gmra.mxu0 %v2323
      %v3000 = vpop.f32.mrf.mxu0
      %v3001 = vadd.f32 0.0, %v3000
      %v3002 = vpop.f32.mrf.mxu0
      %v3003 = vadd.f32 0.0, %v3002
      %3004 = vmatmul.bf16.gmra.mxu0 %v2332
      %v3005 = vpop.f32.mrf.mxu0
      %v3006 = vadd.f32 0.0, %v3005
      %v3007 = vpop.f32.mrf.mxu0
      %v3008 = vadd.f32 0.0, %v3007
      %3009 = vmatmul.bf16.gmra.mxu0 %v2341
      %v3010 = vpop.f32.mrf.mxu0
      %v3011 = vadd.f32 0.0, %v3010
      %v3012 = vpop.f32.mrf.mxu0
      %v3013 = vadd.f32 0.0, %v3012
      %3014 = vdwg.mxu0
      %3015 = vmatpush.bf16.msra.mxu0 %v2797
      %3016 = vmatpush.bf16.msra.mxu0 %v2796
      %3017 = vmatpush.bf16.msra.mxu0 %v2795
      %3018 = vmatpush.bf16.msra.mxu0 %v2794
      %3019 = vmatpush.bf16.msra.mxu0 %v2793
      %3020 = vmatpush.bf16.msra.mxu0 %v2792
      %3021 = vmatpush.bf16.msra.mxu0 %v2791
      %3022 = vmatpush.bf16.msra.mxu0 %v2790
      %3023 = vmatmul.bf16.gmra.mxu0 %v2207
      %v3024 = vpop.f32.mrf.mxu0
      %v3025 = vadd.f32 %v2936, %v3024
      %v3026 = vpop.f32.mrf.mxu0
      %v3027 = vadd.f32 %v2938, %v3026
      %3028 = vmatmul.bf16.gmra.mxu0 %v2216
      %v3029 = vpop.f32.mrf.mxu0
      %v3030 = vadd.f32 %v2941, %v3029
      %v3031 = vpop.f32.mrf.mxu0
      %v3032 = vadd.f32 %v2943, %v3031
      %3033 = vmatmul.bf16.gmra.mxu0 %v2225
      %v3034 = vpop.f32.mrf.mxu0
      %v3035 = vadd.f32 %v2946, %v3034
      %v3036 = vpop.f32.mrf.mxu0
      %v3037 = vadd.f32 %v2948, %v3036
      %3038 = vmatmul.bf16.gmra.mxu0 %v2234
      %v3039 = vpop.f32.mrf.mxu0
      %v3040 = vadd.f32 %v2951, %v3039
      %v3041 = vpop.f32.mrf.mxu0
      %v3042 = vadd.f32 %v2953, %v3041
      %3043 = vmatmul.bf16.gmra.mxu0 %v2243
      %v3044 = vpop.f32.mrf.mxu0
      %v3045 = vadd.f32 %v2956, %v3044
      %v3046 = vpop.f32.mrf.mxu0
      %v3047 = vadd.f32 %v2958, %v3046
      %3048 = vmatmul.bf16.gmra.mxu0 %v2252
      %v3049 = vpop.f32.mrf.mxu0
      %v3050 = vadd.f32 %v2961, %v3049
      %v3051 = vpop.f32.mrf.mxu0
      %v3052 = vadd.f32 %v2963, %v3051
      %3053 = vmatmul.bf16.gmra.mxu0 %v2261
      %v3054 = vpop.f32.mrf.mxu0
      %v3055 = vadd.f32 %v2966, %v3054
      %v3056 = vpop.f32.mrf.mxu0
      %v3057 = vadd.f32 %v2968, %v3056
      %3058 = vmatmul.bf16.gmra.mxu0 %v2270
      %v3059 = vpop.f32.mrf.mxu0
      %v3060 = vadd.f32 %v2971, %v3059
      %v3061 = vpop.f32.mrf.mxu0
      %v3062 = vadd.f32 %v2973, %v3061
      %3063 = vmatmul.bf16.gmra.mxu0 %v2279
      %v3064 = vpop.f32.mrf.mxu0
      %v3065 = vadd.f32 %v2976, %v3064
      %v3066 = vpop.f32.mrf.mxu0
      %v3067 = vadd.f32 %v2978, %v3066
      %3068 = vmatmul.bf16.gmra.mxu0 %v2288
      %v3069 = vpop.f32.mrf.mxu0
      %v3070 = vadd.f32 %v2981, %v3069
      %v3071 = vpop.f32.mrf.mxu0
      %v3072 = vadd.f32 %v2983, %v3071
      %3073 = vmatmul.bf16.gmra.mxu0 %v2297
      %v3074 = vpop.f32.mrf.mxu0
      %v3075 = vadd.f32 %v2986, %v3074
      %v3076 = vpop.f32.mrf.mxu0
      %v3077 = vadd.f32 %v2988, %v3076
      %3078 = vmatmul.bf16.gmra.mxu0 %v2306
      %v3079 = vpop.f32.mrf.mxu0
      %v3080 = vadd.f32 %v2991, %v3079
      %v3081 = vpop.f32.mrf.mxu0
      %v3082 = vadd.f32 %v2993, %v3081
      %3083 = vmatmul.bf16.gmra.mxu0 %v2315
      %v3084 = vpop.f32.mrf.mxu0
      %v3085 = vadd.f32 %v2996, %v3084
      %v3086 = vpop.f32.mrf.mxu0
      %v3087 = vadd.f32 %v2998, %v3086
      %3088 = vmatmul.bf16.gmra.mxu0 %v2324
      %v3089 = vpop.f32.mrf.mxu0
      %v3090 = vadd.f32 %v3001, %v3089
      %v3091 = vpop.f32.mrf.mxu0
      %v3092 = vadd.f32 %v3003, %v3091
      %3093 = vmatmul.bf16.gmra.mxu0 %v2333
      %v3094 = vpop.f32.mrf.mxu0
      %v3095 = vadd.f32 %v3006, %v3094
      %v3096 = vpop.f32.mrf.mxu0
      %v3097 = vadd.f32 %v3008, %v3096
      %3098 = vmatmul.bf16.gmra.mxu0 %v2342
      %v3099 = vpop.f32.mrf.mxu0
      %v3100 = vadd.f32 %v3011, %v3099
      %v3101 = vpop.f32.mrf.mxu0
      %v3102 = vadd.f32 %v3013, %v3101
      %3103 = vdwg.mxu0
      %3104 = vmatpush.bf16.msra.mxu0 %v2805
      %3105 = vmatpush.bf16.msra.mxu0 %v2804
      %3106 = vmatpush.bf16.msra.mxu0 %v2803
      %3107 = vmatpush.bf16.msra.mxu0 %v2802
      %3108 = vmatpush.bf16.msra.mxu0 %v2801
      %3109 = vmatpush.bf16.msra.mxu0 %v2800
      %3110 = vmatpush.bf16.msra.mxu0 %v2799
      %3111 = vmatpush.bf16.msra.mxu0 %v2798
      %3112 = vmatmul.bf16.gmra.mxu0 %v2208
      %v3113 = vpop.f32.mrf.mxu0
      %v3114 = vadd.f32 %v3025, %v3113
      %v3115 = vpop.f32.mrf.mxu0
      %v3116 = vadd.f32 %v3027, %v3115
      %3117 = vmatmul.bf16.gmra.mxu0 %v2217
      %v3118 = vpop.f32.mrf.mxu0
      %v3119 = vadd.f32 %v3030, %v3118
      %v3120 = vpop.f32.mrf.mxu0
      %v3121 = vadd.f32 %v3032, %v3120
      %3122 = vmatmul.bf16.gmra.mxu0 %v2226
      %v3123 = vpop.f32.mrf.mxu0
      %v3124 = vadd.f32 %v3035, %v3123
      %v3125 = vpop.f32.mrf.mxu0
      %v3126 = vadd.f32 %v3037, %v3125
      %3127 = vmatmul.bf16.gmra.mxu0 %v2235
      %v3128 = vpop.f32.mrf.mxu0
      %v3129 = vadd.f32 %v3040, %v3128
      %v3130 = vpop.f32.mrf.mxu0
      %v3131 = vadd.f32 %v3042, %v3130
      %3132 = vmatmul.bf16.gmra.mxu0 %v2244
      %v3133 = vpop.f32.mrf.mxu0
      %v3134 = vadd.f32 %v3045, %v3133
      %v3135 = vpop.f32.mrf.mxu0
      %v3136 = vadd.f32 %v3047, %v3135
      %3137 = vmatmul.bf16.gmra.mxu0 %v2253
      %v3138 = vpop.f32.mrf.mxu0
      %v3139 = vadd.f32 %v3050, %v3138
      %v3140 = vpop.f32.mrf.mxu0
      %v3141 = vadd.f32 %v3052, %v3140
      %3142 = vmatmul.bf16.gmra.mxu0 %v2262
      %v3143 = vpop.f32.mrf.mxu0
      %v3144 = vadd.f32 %v3055, %v3143
      %v3145 = vpop.f32.mrf.mxu0
      %v3146 = vadd.f32 %v3057, %v3145
      %3147 = vmatmul.bf16.gmra.mxu0 %v2271
      %v3148 = vpop.f32.mrf.mxu0
      %v3149 = vadd.f32 %v3060, %v3148
      %v3150 = vpop.f32.mrf.mxu0
      %v3151 = vadd.f32 %v3062, %v3150
      %3152 = vmatmul.bf16.gmra.mxu0 %v2280
      %v3153 = vpop.f32.mrf.mxu0
      %v3154 = vadd.f32 %v3065, %v3153
      %v3155 = vpop.f32.mrf.mxu0
      %v3156 = vadd.f32 %v3067, %v3155
      %3157 = vmatmul.bf16.gmra.mxu0 %v2289
      %v3158 = vpop.f32.mrf.mxu0
      %v3159 = vadd.f32 %v3070, %v3158
      %v3160 = vpop.f32.mrf.mxu0
      %v3161 = vadd.f32 %v3072, %v3160
      %3162 = vmatmul.bf16.gmra.mxu0 %v2298
      %v3163 = vpop.f32.mrf.mxu0
      %v3164 = vadd.f32 %v3075, %v3163
      %v3165 = vpop.f32.mrf.mxu0
      %v3166 = vadd.f32 %v3077, %v3165
      %3167 = vmatmul.bf16.gmra.mxu0 %v2307
      %v3168 = vpop.f32.mrf.mxu0
      %v3169 = vadd.f32 %v3080, %v3168
      %v3170 = vpop.f32.mrf.mxu0
      %v3171 = vadd.f32 %v3082, %v3170
      %3172 = vmatmul.bf16.gmra.mxu0 %v2316
      %v3173 = vpop.f32.mrf.mxu0
      %v3174 = vadd.f32 %v3085, %v3173
      %v3175 = vpop.f32.mrf.mxu0
      %v3176 = vadd.f32 %v3087, %v3175
      %3177 = vmatmul.bf16.gmra.mxu0 %v2325
      %v3178 = vpop.f32.mrf.mxu0
      %v3179 = vadd.f32 %v3090, %v3178
      %v3180 = vpop.f32.mrf.mxu0
      %v3181 = vadd.f32 %v3092, %v3180
      %3182 = vmatmul.bf16.gmra.mxu0 %v2334
      %v3183 = vpop.f32.mrf.mxu0
      %v3184 = vadd.f32 %v3095, %v3183
      %v3185 = vpop.f32.mrf.mxu0
      %v3186 = vadd.f32 %v3097, %v3185
      %3187 = vmatmul.bf16.gmra.mxu0 %v2343
      %v3188 = vpop.f32.mrf.mxu0
      %v3189 = vadd.f32 %v3100, %v3188
      %v3190 = vpop.f32.mrf.mxu0
      %v3191 = vadd.f32 %v3102, %v3190
      %3192 = vdwg.mxu0
      %3193 = vmatpush.bf16.msra.mxu0 %v2813
      %3194 = vmatpush.bf16.msra.mxu0 %v2812
      %3195 = vmatpush.bf16.msra.mxu0 %v2811
      %3196 = vmatpush.bf16.msra.mxu0 %v2810
      %3197 = vmatpush.bf16.msra.mxu0 %v2809
      %3198 = vmatpush.bf16.msra.mxu0 %v2808
      %3199 = vmatpush.bf16.msra.mxu0 %v2807
      %3200 = vmatpush.bf16.msra.mxu0 %v2806
      %3201 = vmatmul.bf16.gmra.mxu0 %v2209
      %v3202 = vpop.f32.mrf.mxu0
      %v3203 = vadd.f32 %v3114, %v3202
      %v3204 = vpop.f32.mrf.mxu0
      %v3205 = vadd.f32 %v3116, %v3204
      %3206 = vmatmul.bf16.gmra.mxu0 %v2218
      %v3207 = vpop.f32.mrf.mxu0
      %v3208 = vadd.f32 %v3119, %v3207
      %v3209 = vpop.f32.mrf.mxu0
      %v3210 = vadd.f32 %v3121, %v3209
      %3211 = vmatmul.bf16.gmra.mxu0 %v2227
      %v3212 = vpop.f32.mrf.mxu0
      %v3213 = vadd.f32 %v3124, %v3212
      %v3214 = vpop.f32.mrf.mxu0
      %v3215 = vadd.f32 %v3126, %v3214
      %3216 = vmatmul.bf16.gmra.mxu0 %v2236
      %v3217 = vpop.f32.mrf.mxu0
      %v3218 = vadd.f32 %v3129, %v3217
      %v3219 = vpop.f32.mrf.mxu0
      %v3220 = vadd.f32 %v3131, %v3219
      %3221 = vmatmul.bf16.gmra.mxu0 %v2245
      %v3222 = vpop.f32.mrf.mxu0
      %v3223 = vadd.f32 %v3134, %v3222
      %v3224 = vpop.f32.mrf.mxu0
      %v3225 = vadd.f32 %v3136, %v3224
      %3226 = vmatmul.bf16.gmra.mxu0 %v2254
      %v3227 = vpop.f32.mrf.mxu0
      %v3228 = vadd.f32 %v3139, %v3227
      %v3229 = vpop.f32.mrf.mxu0
      %v3230 = vadd.f32 %v3141, %v3229
      %3231 = vmatmul.bf16.gmra.mxu0 %v2263
      %v3232 = vpop.f32.mrf.mxu0
      %v3233 = vadd.f32 %v3144, %v3232
      %v3234 = vpop.f32.mrf.mxu0
      %v3235 = vadd.f32 %v3146, %v3234
      %3236 = vmatmul.bf16.gmra.mxu0 %v2272
      %v3237 = vpop.f32.mrf.mxu0
      %v3238 = vadd.f32 %v3149, %v3237
      %v3239 = vpop.f32.mrf.mxu0
      %v3240 = vadd.f32 %v3151, %v3239
      %3241 = vmatmul.bf16.gmra.mxu0 %v2281
      %v3242 = vpop.f32.mrf.mxu0
      %v3243 = vadd.f32 %v3154, %v3242
      %v3244 = vpop.f32.mrf.mxu0
      %v3245 = vadd.f32 %v3156, %v3244
      %3246 = vmatmul.bf16.gmra.mxu0 %v2290
      %v3247 = vpop.f32.mrf.mxu0
      %v3248 = vadd.f32 %v3159, %v3247
      %v3249 = vpop.f32.mrf.mxu0
      %v3250 = vadd.f32 %v3161, %v3249
      %3251 = vmatmul.bf16.gmra.mxu0 %v2299
      %v3252 = vpop.f32.mrf.mxu0
      %v3253 = vadd.f32 %v3164, %v3252
      %v3254 = vpop.f32.mrf.mxu0
      %v3255 = vadd.f32 %v3166, %v3254
      %3256 = vmatmul.bf16.gmra.mxu0 %v2308
      %v3257 = vpop.f32.mrf.mxu0
      %v3258 = vadd.f32 %v3169, %v3257
      %v3259 = vpop.f32.mrf.mxu0
      %v3260 = vadd.f32 %v3171, %v3259
      %3261 = vmatmul.bf16.gmra.mxu0 %v2317
      %v3262 = vpop.f32.mrf.mxu0
      %v3263 = vadd.f32 %v3174, %v3262
      %v3264 = vpop.f32.mrf.mxu0
      %v3265 = vadd.f32 %v3176, %v3264
      %3266 = vmatmul.bf16.gmra.mxu0 %v2326
      %v3267 = vpop.f32.mrf.mxu0
      %v3268 = vadd.f32 %v3179, %v3267
      %v3269 = vpop.f32.mrf.mxu0
      %v3270 = vadd.f32 %v3181, %v3269
      %3271 = vmatmul.bf16.gmra.mxu0 %v2335
      %v3272 = vpop.f32.mrf.mxu0
      %v3273 = vadd.f32 %v3184, %v3272
      %v3274 = vpop.f32.mrf.mxu0
      %v3275 = vadd.f32 %v3186, %v3274
      %3276 = vmatmul.bf16.gmra.mxu0 %v2344
      %v3277 = vpop.f32.mrf.mxu0
      %v3278 = vadd.f32 %v3189, %v3277
      %v3279 = vpop.f32.mrf.mxu0
      %v3280 = vadd.f32 %v3191, %v3279
      %3281 = vdwg.mxu0
      %3282 = vmatpush.bf16.msra.mxu0 %v2821
      %3283 = vmatpush.bf16.msra.mxu0 %v2820
      %3284 = vmatpush.bf16.msra.mxu0 %v2819
      %3285 = vmatpush.bf16.msra.mxu0 %v2818
      %3286 = vmatpush.bf16.msra.mxu0 %v2817
      %3287 = vmatpush.bf16.msra.mxu0 %v2816
      %3288 = vmatpush.bf16.msra.mxu0 %v2815
      %3289 = vmatpush.bf16.msra.mxu0 %v2814
      %3290 = vmatmul.bf16.gmra.mxu0 %v2210
      %v3291 = vpop.f32.mrf.mxu0
      %v3292 = vadd.f32 %v3203, %v3291
      %v3293 = vpop.f32.mrf.mxu0
      %v3294 = vadd.f32 %v3205, %v3293
      %3295 = vmatmul.bf16.gmra.mxu0 %v2219
      %v3296 = vpop.f32.mrf.mxu0
      %v3297 = vadd.f32 %v3208, %v3296
      %v3298 = vpop.f32.mrf.mxu0
      %v3299 = vadd.f32 %v3210, %v3298
      %3300 = vmatmul.bf16.gmra.mxu0 %v2228
      %v3301 = vpop.f32.mrf.mxu0
      %v3302 = vadd.f32 %v3213, %v3301
      %v3303 = vpop.f32.mrf.mxu0
      %v3304 = vadd.f32 %v3215, %v3303
      %3305 = vmatmul.bf16.gmra.mxu0 %v2237
      %v3306 = vpop.f32.mrf.mxu0
      %v3307 = vadd.f32 %v3218, %v3306
      %v3308 = vpop.f32.mrf.mxu0
      %v3309 = vadd.f32 %v3220, %v3308
      %3310 = vmatmul.bf16.gmra.mxu0 %v2246
      %v3311 = vpop.f32.mrf.mxu0
      %v3312 = vadd.f32 %v3223, %v3311
      %v3313 = vpop.f32.mrf.mxu0
      %v3314 = vadd.f32 %v3225, %v3313
      %3315 = vmatmul.bf16.gmra.mxu0 %v2255
      %v3316 = vpop.f32.mrf.mxu0
      %v3317 = vadd.f32 %v3228, %v3316
      %v3318 = vpop.f32.mrf.mxu0
      %v3319 = vadd.f32 %v3230, %v3318
      %3320 = vmatmul.bf16.gmra.mxu0 %v2264
      %v3321 = vpop.f32.mrf.mxu0
      %v3322 = vadd.f32 %v3233, %v3321
      %v3323 = vpop.f32.mrf.mxu0
      %v3324 = vadd.f32 %v3235, %v3323
      %3325 = vmatmul.bf16.gmra.mxu0 %v2273
      %v3326 = vpop.f32.mrf.mxu0
      %v3327 = vadd.f32 %v3238, %v3326
      %v3328 = vpop.f32.mrf.mxu0
      %v3329 = vadd.f32 %v3240, %v3328
      %3330 = vmatmul.bf16.gmra.mxu0 %v2282
      %v3331 = vpop.f32.mrf.mxu0
      %v3332 = vadd.f32 %v3243, %v3331
      %v3333 = vpop.f32.mrf.mxu0
      %v3334 = vadd.f32 %v3245, %v3333
      %3335 = vmatmul.bf16.gmra.mxu0 %v2291
      %v3336 = vpop.f32.mrf.mxu0
      %v3337 = vadd.f32 %v3248, %v3336
      %v3338 = vpop.f32.mrf.mxu0
      %v3339 = vadd.f32 %v3250, %v3338
      %3340 = vmatmul.bf16.gmra.mxu0 %v2300
      %v3341 = vpop.f32.mrf.mxu0
      %v3342 = vadd.f32 %v3253, %v3341
      %v3343 = vpop.f32.mrf.mxu0
      %v3344 = vadd.f32 %v3255, %v3343
      %3345 = vmatmul.bf16.gmra.mxu0 %v2309
      %v3346 = vpop.f32.mrf.mxu0
      %v3347 = vadd.f32 %v3258, %v3346
      %v3348 = vpop.f32.mrf.mxu0
      %v3349 = vadd.f32 %v3260, %v3348
      %3350 = vmatmul.bf16.gmra.mxu0 %v2318
      %v3351 = vpop.f32.mrf.mxu0
      %v3352 = vadd.f32 %v3263, %v3351
      %v3353 = vpop.f32.mrf.mxu0
      %v3354 = vadd.f32 %v3265, %v3353
      %3355 = vmatmul.bf16.gmra.mxu0 %v2327
      %v3356 = vpop.f32.mrf.mxu0
      %v3357 = vadd.f32 %v3268, %v3356
      %v3358 = vpop.f32.mrf.mxu0
      %v3359 = vadd.f32 %v3270, %v3358
      %3360 = vmatmul.bf16.gmra.mxu0 %v2336
      %v3361 = vpop.f32.mrf.mxu0
      %v3362 = vadd.f32 %v3273, %v3361
      %v3363 = vpop.f32.mrf.mxu0
      %v3364 = vadd.f32 %v3275, %v3363
      %3365 = vmatmul.bf16.gmra.mxu0 %v2345
      %v3366 = vpop.f32.mrf.mxu0
      %v3367 = vadd.f32 %v3278, %v3366
      %v3368 = vpop.f32.mrf.mxu0
      %v3369 = vadd.f32 %v3280, %v3368
      %3370 = vdwg.mxu0
      %3371 = vmatpush.bf16.msra.mxu0 %v2829
      %3372 = vmatpush.bf16.msra.mxu0 %v2828
      %3373 = vmatpush.bf16.msra.mxu0 %v2827
      %3374 = vmatpush.bf16.msra.mxu0 %v2826
      %3375 = vmatpush.bf16.msra.mxu0 %v2825
      %3376 = vmatpush.bf16.msra.mxu0 %v2824
      %3377 = vmatpush.bf16.msra.mxu0 %v2823
      %3378 = vmatpush.bf16.msra.mxu0 %v2822
      %3379 = vmatmul.bf16.gmra.mxu0 %v2211
      %v3380 = vpop.f32.mrf.mxu0
      %v3381 = vadd.f32 %v3292, %v3380
      %v3382 = vpop.f32.mrf.mxu0
      %v3383 = vadd.f32 %v3294, %v3382
      %3384 = vmatmul.bf16.gmra.mxu0 %v2220
      %v3385 = vpop.f32.mrf.mxu0
      %v3386 = vadd.f32 %v3297, %v3385
      %v3387 = vpop.f32.mrf.mxu0
      %v3388 = vadd.f32 %v3299, %v3387
      %3389 = vmatmul.bf16.gmra.mxu0 %v2229
      %v3390 = vpop.f32.mrf.mxu0
      %v3391 = vadd.f32 %v3302, %v3390
      %v3392 = vpop.f32.mrf.mxu0
      %v3393 = vadd.f32 %v3304, %v3392
      %3394 = vmatmul.bf16.gmra.mxu0 %v2238
      %v3395 = vpop.f32.mrf.mxu0
      %v3396 = vadd.f32 %v3307, %v3395
      %v3397 = vpop.f32.mrf.mxu0
      %v3398 = vadd.f32 %v3309, %v3397
      %3399 = vmatmul.bf16.gmra.mxu0 %v2247
      %v3400 = vpop.f32.mrf.mxu0
      %v3401 = vadd.f32 %v3312, %v3400
      %v3402 = vpop.f32.mrf.mxu0
      %v3403 = vadd.f32 %v3314, %v3402
      %3404 = vmatmul.bf16.gmra.mxu0 %v2256
      %v3405 = vpop.f32.mrf.mxu0
      %v3406 = vadd.f32 %v3317, %v3405
      %v3407 = vpop.f32.mrf.mxu0
      %v3408 = vadd.f32 %v3319, %v3407
      %3409 = vmatmul.bf16.gmra.mxu0 %v2265
      %v3410 = vpop.f32.mrf.mxu0
      %v3411 = vadd.f32 %v3322, %v3410
      %v3412 = vpop.f32.mrf.mxu0
      %v3413 = vadd.f32 %v3324, %v3412
      %3414 = vmatmul.bf16.gmra.mxu0 %v2274
      %v3415 = vpop.f32.mrf.mxu0
      %v3416 = vadd.f32 %v3327, %v3415
      %v3417 = vpop.f32.mrf.mxu0
      %v3418 = vadd.f32 %v3329, %v3417
      %3419 = vmatmul.bf16.gmra.mxu0 %v2283
      %v3420 = vpop.f32.mrf.mxu0
      %v3421 = vadd.f32 %v3332, %v3420
      %v3422 = vpop.f32.mrf.mxu0
      %v3423 = vadd.f32 %v3334, %v3422
      %3424 = vmatmul.bf16.gmra.mxu0 %v2292
      %v3425 = vpop.f32.mrf.mxu0
      %v3426 = vadd.f32 %v3337, %v3425
      %v3427 = vpop.f32.mrf.mxu0
      %v3428 = vadd.f32 %v3339, %v3427
      %3429 = vmatmul.bf16.gmra.mxu0 %v2301
      %v3430 = vpop.f32.mrf.mxu0
      %v3431 = vadd.f32 %v3342, %v3430
      %v3432 = vpop.f32.mrf.mxu0
      %v3433 = vadd.f32 %v3344, %v3432
      %3434 = vmatmul.bf16.gmra.mxu0 %v2310
      %v3435 = vpop.f32.mrf.mxu0
      %v3436 = vadd.f32 %v3347, %v3435
      %v3437 = vpop.f32.mrf.mxu0
      %v3438 = vadd.f32 %v3349, %v3437
      %3439 = vmatmul.bf16.gmra.mxu0 %v2319
      %v3440 = vpop.f32.mrf.mxu0
      %v3441 = vadd.f32 %v3352, %v3440
      %v3442 = vpop.f32.mrf.mxu0
      %v3443 = vadd.f32 %v3354, %v3442
      %3444 = vmatmul.bf16.gmra.mxu0 %v2328
      %v3445 = vpop.f32.mrf.mxu0
      %v3446 = vadd.f32 %v3357, %v3445
      %v3447 = vpop.f32.mrf.mxu0
      %v3448 = vadd.f32 %v3359, %v3447
      %3449 = vmatmul.bf16.gmra.mxu0 %v2337
      %v3450 = vpop.f32.mrf.mxu0
      %v3451 = vadd.f32 %v3362, %v3450
      %v3452 = vpop.f32.mrf.mxu0
      %v3453 = vadd.f32 %v3364, %v3452
      %3454 = vmatmul.bf16.gmra.mxu0 %v2346
      %v3455 = vpop.f32.mrf.mxu0
      %v3456 = vadd.f32 %v3367, %v3455
      %v3457 = vpop.f32.mrf.mxu0
      %v3458 = vadd.f32 %v3369, %v3457
      %3459 = vdwg.mxu0
      %3460 = vmatpush.bf16.msra.mxu0 %v2837
      %3461 = vmatpush.bf16.msra.mxu0 %v2836
      %3462 = vmatpush.bf16.msra.mxu0 %v2835
      %3463 = vmatpush.bf16.msra.mxu0 %v2834
      %3464 = vmatpush.bf16.msra.mxu0 %v2833
      %3465 = vmatpush.bf16.msra.mxu0 %v2832
      %3466 = vmatpush.bf16.msra.mxu0 %v2831
      %3467 = vmatpush.bf16.msra.mxu0 %v2830
      %3468 = vmatmul.bf16.gmra.mxu0 %v2212
      %v3469 = vpop.f32.mrf.mxu0
      %v3470 = vadd.f32 %v3381, %v3469
      %v3471 = vpop.f32.mrf.mxu0
      %v3472 = vadd.f32 %v3383, %v3471
      %3473 = vmatmul.bf16.gmra.mxu0 %v2221
      %v3474 = vpop.f32.mrf.mxu0
      %v3475 = vadd.f32 %v3386, %v3474
      %v3476 = vpop.f32.mrf.mxu0
      %v3477 = vadd.f32 %v3388, %v3476
      %3478 = vmatmul.bf16.gmra.mxu0 %v2230
      %v3479 = vpop.f32.mrf.mxu0
      %v3480 = vadd.f32 %v3391, %v3479
      %v3481 = vpop.f32.mrf.mxu0
      %v3482 = vadd.f32 %v3393, %v3481
      %3483 = vmatmul.bf16.gmra.mxu0 %v2239
      %v3484 = vpop.f32.mrf.mxu0
      %v3485 = vadd.f32 %v3396, %v3484
      %v3486 = vpop.f32.mrf.mxu0
      %v3487 = vadd.f32 %v3398, %v3486
      %3488 = vmatmul.bf16.gmra.mxu0 %v2248
      %v3489 = vpop.f32.mrf.mxu0
      %v3490 = vadd.f32 %v3401, %v3489
      %v3491 = vpop.f32.mrf.mxu0
      %v3492 = vadd.f32 %v3403, %v3491
      %3493 = vmatmul.bf16.gmra.mxu0 %v2257
      %v3494 = vpop.f32.mrf.mxu0
      %v3495 = vadd.f32 %v3406, %v3494
      %v3496 = vpop.f32.mrf.mxu0
      %v3497 = vadd.f32 %v3408, %v3496
      %3498 = vmatmul.bf16.gmra.mxu0 %v2266
      %v3499 = vpop.f32.mrf.mxu0
      %v3500 = vadd.f32 %v3411, %v3499
      %v3501 = vpop.f32.mrf.mxu0
      %v3502 = vadd.f32 %v3413, %v3501
      %3503 = vmatmul.bf16.gmra.mxu0 %v2275
      %v3504 = vpop.f32.mrf.mxu0
      %v3505 = vadd.f32 %v3416, %v3504
      %v3506 = vpop.f32.mrf.mxu0
      %v3507 = vadd.f32 %v3418, %v3506
      %3508 = vmatmul.bf16.gmra.mxu0 %v2284
      %v3509 = vpop.f32.mrf.mxu0
      %v3510 = vadd.f32 %v3421, %v3509
      %v3511 = vpop.f32.mrf.mxu0
      %v3512 = vadd.f32 %v3423, %v3511
      %3513 = vmatmul.bf16.gmra.mxu0 %v2293
      %v3514 = vpop.f32.mrf.mxu0
      %v3515 = vadd.f32 %v3426, %v3514
      %v3516 = vpop.f32.mrf.mxu0
      %v3517 = vadd.f32 %v3428, %v3516
      %3518 = vmatmul.bf16.gmra.mxu0 %v2302
      %v3519 = vpop.f32.mrf.mxu0
      %v3520 = vadd.f32 %v3431, %v3519
      %v3521 = vpop.f32.mrf.mxu0
      %v3522 = vadd.f32 %v3433, %v3521
      %3523 = vmatmul.bf16.gmra.mxu0 %v2311
      %v3524 = vpop.f32.mrf.mxu0
      %v3525 = vadd.f32 %v3436, %v3524
      %v3526 = vpop.f32.mrf.mxu0
      %v3527 = vadd.f32 %v3438, %v3526
      %3528 = vmatmul.bf16.gmra.mxu0 %v2320
      %v3529 = vpop.f32.mrf.mxu0
      %v3530 = vadd.f32 %v3441, %v3529
      %v3531 = vpop.f32.mrf.mxu0
      %v3532 = vadd.f32 %v3443, %v3531
      %3533 = vmatmul.bf16.gmra.mxu0 %v2329
      %v3534 = vpop.f32.mrf.mxu0
      %v3535 = vadd.f32 %v3446, %v3534
      %v3536 = vpop.f32.mrf.mxu0
      %v3537 = vadd.f32 %v3448, %v3536
      %3538 = vmatmul.bf16.gmra.mxu0 %v2338
      %v3539 = vpop.f32.mrf.mxu0
      %v3540 = vadd.f32 %v3451, %v3539
      %v3541 = vpop.f32.mrf.mxu0
      %v3542 = vadd.f32 %v3453, %v3541
      %3543 = vmatmul.bf16.gmra.mxu0 %v2347
      %v3544 = vpop.f32.mrf.mxu0
      %v3545 = vadd.f32 %v3456, %v3544
      %v3546 = vpop.f32.mrf.mxu0
      %v3547 = vadd.f32 %v3458, %v3546
      %3548 = vdwg.mxu0
      %3549 = vmatpush.bf16.msra.mxu0 %v2845
      %3550 = vmatpush.bf16.msra.mxu0 %v2844
      %3551 = vmatpush.bf16.msra.mxu0 %v2843
      %3552 = vmatpush.bf16.msra.mxu0 %v2842
      %3553 = vmatpush.bf16.msra.mxu0 %v2841
      %3554 = vmatpush.bf16.msra.mxu0 %v2840
      %3555 = vmatpush.bf16.msra.mxu0 %v2839
      %3556 = vmatpush.bf16.msra.mxu0 %v2838
      %3557 = vmatmul.bf16.gmra.mxu0 %v2213
      %v3558 = vpop.f32.mrf.mxu0
      %v3559 = vadd.f32 %v3470, %v3558
      %v3560 = vpop.f32.mrf.mxu0
      %v3561 = vadd.f32 %v3472, %v3560
      %3562 = vmatmul.bf16.gmra.mxu0 %v2222
      %v3563 = vpop.f32.mrf.mxu0
      %v3564 = vadd.f32 %v3475, %v3563
      %v3565 = vpop.f32.mrf.mxu0
      %v3566 = vadd.f32 %v3477, %v3565
      %3567 = vmatmul.bf16.gmra.mxu0 %v2231
      %v3568 = vpop.f32.mrf.mxu0
      %v3569 = vadd.f32 %v3480, %v3568
      %v3570 = vpop.f32.mrf.mxu0
      %v3571 = vadd.f32 %v3482, %v3570
      %3572 = vmatmul.bf16.gmra.mxu0 %v2240
      %v3573 = vpop.f32.mrf.mxu0
      %v3574 = vadd.f32 %v3485, %v3573
      %v3575 = vpop.f32.mrf.mxu0
      %v3576 = vadd.f32 %v3487, %v3575
      %3577 = vmatmul.bf16.gmra.mxu0 %v2249
      %v3578 = vpop.f32.mrf.mxu0
      %v3579 = vadd.f32 %v3490, %v3578
      %v3580 = vpop.f32.mrf.mxu0
      %v3581 = vadd.f32 %v3492, %v3580
      %3582 = vmatmul.bf16.gmra.mxu0 %v2258
      %v3583 = vpop.f32.mrf.mxu0
      %v3584 = vadd.f32 %v3495, %v3583
      %v3585 = vpop.f32.mrf.mxu0
      %v3586 = vadd.f32 %v3497, %v3585
      %3587 = vmatmul.bf16.gmra.mxu0 %v2267
      %v3588 = vpop.f32.mrf.mxu0
      %v3589 = vadd.f32 %v3500, %v3588
      %v3590 = vpop.f32.mrf.mxu0
      %v3591 = vadd.f32 %v3502, %v3590
      %3592 = vmatmul.bf16.gmra.mxu0 %v2276
      %v3593 = vpop.f32.mrf.mxu0
      %v3594 = vadd.f32 %v3505, %v3593
      %v3595 = vpop.f32.mrf.mxu0
      %v3596 = vadd.f32 %v3507, %v3595
      %3597 = vmatmul.bf16.gmra.mxu0 %v2285
      %v3598 = vpop.f32.mrf.mxu0
      %v3599 = vadd.f32 %v3510, %v3598
      %v3600 = vpop.f32.mrf.mxu0
      %v3601 = vadd.f32 %v3512, %v3600
      %3602 = vmatmul.bf16.gmra.mxu0 %v2294
      %v3603 = vpop.f32.mrf.mxu0
      %v3604 = vadd.f32 %v3515, %v3603
      %v3605 = vpop.f32.mrf.mxu0
      %v3606 = vadd.f32 %v3517, %v3605
      %3607 = vmatmul.bf16.gmra.mxu0 %v2303
      %v3608 = vpop.f32.mrf.mxu0
      %v3609 = vadd.f32 %v3520, %v3608
      %v3610 = vpop.f32.mrf.mxu0
      %v3611 = vadd.f32 %v3522, %v3610
      %3612 = vmatmul.bf16.gmra.mxu0 %v2312
      %v3613 = vpop.f32.mrf.mxu0
      %v3614 = vadd.f32 %v3525, %v3613
      %v3615 = vpop.f32.mrf.mxu0
      %v3616 = vadd.f32 %v3527, %v3615
      %3617 = vmatmul.bf16.gmra.mxu0 %v2321
      %v3618 = vpop.f32.mrf.mxu0
      %v3619 = vadd.f32 %v3530, %v3618
      %v3620 = vpop.f32.mrf.mxu0
      %v3621 = vadd.f32 %v3532, %v3620
      %3622 = vmatmul.bf16.gmra.mxu0 %v2330
      %v3623 = vpop.f32.mrf.mxu0
      %v3624 = vadd.f32 %v3535, %v3623
      %v3625 = vpop.f32.mrf.mxu0
      %v3626 = vadd.f32 %v3537, %v3625
      %3627 = vmatmul.bf16.gmra.mxu0 %v2339
      %v3628 = vpop.f32.mrf.mxu0
      %v3629 = vadd.f32 %v3540, %v3628
      %v3630 = vpop.f32.mrf.mxu0
      %v3631 = vadd.f32 %v3542, %v3630
      %3632 = vmatmul.bf16.gmra.mxu0 %v2348
      %v3633 = vpop.f32.mrf.mxu0
      %v3634 = vadd.f32 %v3545, %v3633
      %v3635 = vpop.f32.mrf.mxu0
      %v3636 = vadd.f32 %v3547, %v3635
      %3637 = vdwg.mxu0
      %3638 = vmatpush.bf16.msra.mxu0 %v2853
      %3639 = vmatpush.bf16.msra.mxu0 %v2852
      %3640 = vmatpush.bf16.msra.mxu0 %v2851
      %3641 = vmatpush.bf16.msra.mxu0 %v2850
      %3642 = vmatpush.bf16.msra.mxu0 %v2849
      %3643 = vmatpush.bf16.msra.mxu0 %v2848
      %3644 = vmatpush.bf16.msra.mxu0 %v2847
      %3645 = vmatpush.bf16.msra.mxu0 %v2846
      %3646 = vmatmul.bf16.gmra.mxu0 %v2214
      %v3647 = vpop.f32.mrf.mxu0
      %v3648 = vadd.f32 %v3559, %v3647
      %v3649 = vpop.f32.mrf.mxu0
      %v3650 = vadd.f32 %v3561, %v3649
      %3651 = vmatmul.bf16.gmra.mxu0 %v2223
      %v3652 = vpop.f32.mrf.mxu0
      %v3653 = vadd.f32 %v3564, %v3652
      %v3654 = vpop.f32.mrf.mxu0
      %v3655 = vadd.f32 %v3566, %v3654
      %3656 = vmatmul.bf16.gmra.mxu0 %v2232
      %v3657 = vpop.f32.mrf.mxu0
      %v3658 = vadd.f32 %v3569, %v3657
      %v3659 = vpop.f32.mrf.mxu0
      %v3660 = vadd.f32 %v3571, %v3659
      %3661 = vmatmul.bf16.gmra.mxu0 %v2241
      %v3662 = vpop.f32.mrf.mxu0
      %v3663 = vadd.f32 %v3574, %v3662
      %v3664 = vpop.f32.mrf.mxu0
      %v3665 = vadd.f32 %v3576, %v3664
      %3666 = vmatmul.bf16.gmra.mxu0 %v2250
      %v3667 = vpop.f32.mrf.mxu0
      %v3668 = vadd.f32 %v3579, %v3667
      %v3669 = vpop.f32.mrf.mxu0
      %v3670 = vadd.f32 %v3581, %v3669
      %3671 = vmatmul.bf16.gmra.mxu0 %v2259
      %v3672 = vpop.f32.mrf.mxu0
      %v3673 = vadd.f32 %v3584, %v3672
      %v3674 = vpop.f32.mrf.mxu0
      %v3675 = vadd.f32 %v3586, %v3674
      %3676 = vmatmul.bf16.gmra.mxu0 %v2268
      %v3677 = vpop.f32.mrf.mxu0
      %v3678 = vadd.f32 %v3589, %v3677
      %v3679 = vpop.f32.mrf.mxu0
      %v3680 = vadd.f32 %v3591, %v3679
      %3681 = vmatmul.bf16.gmra.mxu0 %v2277
      %v3682 = vpop.f32.mrf.mxu0
      %v3683 = vadd.f32 %v3594, %v3682
      %v3684 = vpop.f32.mrf.mxu0
      %v3685 = vadd.f32 %v3596, %v3684
      %3686 = vmatmul.bf16.gmra.mxu0 %v2286
      %v3687 = vpop.f32.mrf.mxu0
      %v3688 = vadd.f32 %v3599, %v3687
      %v3689 = vpop.f32.mrf.mxu0
      %v3690 = vadd.f32 %v3601, %v3689
      %3691 = vmatmul.bf16.gmra.mxu0 %v2295
      %v3692 = vpop.f32.mrf.mxu0
      %v3693 = vadd.f32 %v3604, %v3692
      %v3694 = vpop.f32.mrf.mxu0
      %v3695 = vadd.f32 %v3606, %v3694
      %3696 = vmatmul.bf16.gmra.mxu0 %v2304
      %v3697 = vpop.f32.mrf.mxu0
      %v3698 = vadd.f32 %v3609, %v3697
      %v3699 = vpop.f32.mrf.mxu0
      %v3700 = vadd.f32 %v3611, %v3699
      %3701 = vmatmul.bf16.gmra.mxu0 %v2313
      %v3702 = vpop.f32.mrf.mxu0
      %v3703 = vadd.f32 %v3614, %v3702
      %v3704 = vpop.f32.mrf.mxu0
      %v3705 = vadd.f32 %v3616, %v3704
      %3706 = vmatmul.bf16.gmra.mxu0 %v2322
      %v3707 = vpop.f32.mrf.mxu0
      %v3708 = vadd.f32 %v3619, %v3707
      %v3709 = vpop.f32.mrf.mxu0
      %v3710 = vadd.f32 %v3621, %v3709
      %3711 = vmatmul.bf16.gmra.mxu0 %v2331
      %v3712 = vpop.f32.mrf.mxu0
      %v3713 = vadd.f32 %v3624, %v3712
      %v3714 = vpop.f32.mrf.mxu0
      %v3715 = vadd.f32 %v3626, %v3714
      %3716 = vmatmul.bf16.gmra.mxu0 %v2340
      %v3717 = vpop.f32.mrf.mxu0
      %v3718 = vadd.f32 %v3629, %v3717
      %v3719 = vpop.f32.mrf.mxu0
      %v3720 = vadd.f32 %v3631, %v3719
      %3721 = vmatmul.bf16.gmra.mxu0 %v2349
      %v3722 = vpop.f32.mrf.mxu0
      %v3723 = vadd.f32 %v3634, %v3722
      %v3724 = vpop.f32.mrf.mxu0
      %v3725 = vadd.f32 %v3636, %v3724
      %3726 = vdwg.mxu0
      %v3727 = vpack.c.bf16 %v3648, %v3648
      %v3728 = vpack.c.bf16 %v3650, %v3650
      %v3729 = vpack.c.bf16 %v3653, %v3653
      %v3730 = vpack.c.bf16 %v3655, %v3655
      %v3731 = vpack.c.bf16 %v3658, %v3658
      %v3732 = vpack.c.bf16 %v3660, %v3660
      %v3733 = vpack.c.bf16 %v3663, %v3663
      %v3734 = vpack.c.bf16 %v3665, %v3665
      %v3735 = vpack.c.bf16 %v3668, %v3668
      %v3736 = vpack.c.bf16 %v3670, %v3670
      %v3737 = vpack.c.bf16 %v3673, %v3673
      %v3738 = vpack.c.bf16 %v3675, %v3675
      %v3739 = vpack.c.bf16 %v3678, %v3678
      %v3740 = vpack.c.bf16 %v3680, %v3680
      %v3741 = vpack.c.bf16 %v3683, %v3683
      %v3742 = vpack.c.bf16 %v3685, %v3685
      %v3743 = vpack.c.bf16 %v3688, %v3688
      %v3744 = vpack.c.bf16 %v3690, %v3690
      %v3745 = vpack.c.bf16 %v3693, %v3693
      %v3746 = vpack.c.bf16 %v3695, %v3695
      %v3747 = vpack.c.bf16 %v3698, %v3698
      %v3748 = vpack.c.bf16 %v3700, %v3700
      %v3749 = vpack.c.bf16 %v3703, %v3703
      %v3750 = vpack.c.bf16 %v3705, %v3705
      %v3751 = vpack.c.bf16 %v3708, %v3708
      %v3752 = vpack.c.bf16 %v3710, %v3710
      %v3753 = vpack.c.bf16 %v3713, %v3713
      %v3754 = vpack.c.bf16 %v3715, %v3715
      %v3755 = vpack.c.bf16 %v3718, %v3718
      %v3756 = vpack.c.bf16 %v3720, %v3720
      %v3757 = vpack.c.bf16 %v3723, %v3723
      %v3758 = vpack.c.bf16 %v3725, %v3725
      %3759 = vst [vmem:[%s262] sm:$0xf] %v3727
      %3760 = vst [vmem:[%s262 + $0x4] sm:$0xf] %v3728
      %3761 = vst [vmem:[%s262 + $0x8] sm:$0xf] %v3729
      %3762 = vst [vmem:[%s262 + $0xc] sm:$0xf] %v3730
      %3763 = vst [vmem:[%s262 + $0x10] sm:$0xf] %v3731
      %3764 = vst [vmem:[%s262 + $0x14] sm:$0xf] %v3732
      %3765 = vst [vmem:[%s262 + $0x18] sm:$0xf] %v3733
      %3766 = vst [vmem:[%s262 + $0x1c] sm:$0xf] %v3734
      %3767 = vst [vmem:[%s262 + $0x20] sm:$0xf] %v3735
      %3768 = vst [vmem:[%s262 + $0x24] sm:$0xf] %v3736
      %3769 = vst [vmem:[%s262 + $0x28] sm:$0xf] %v3737
      %3770 = vst [vmem:[%s262 + $0x2c] sm:$0xf] %v3738
      %3771 = vst [vmem:[%s262 + $0x30] sm:$0xf] %v3739
      %3772 = vst [vmem:[%s262 + $0x34] sm:$0xf] %v3740
      %3773 = vst [vmem:[%s262 + $0x38] sm:$0xf] %v3741
      %3774 = vst [vmem:[%s262 + $0x3c] sm:$0xf] %v3742
      %3775 = vst [vmem:[%s262 + $0x40] sm:$0xf] %v3743
      %3776 = vst [vmem:[%s262 + $0x44] sm:$0xf] %v3744
      %3777 = vst [vmem:[%s262 + $0x48] sm:$0xf] %v3745
      %3778 = vst [vmem:[%s262 + $0x4c] sm:$0xf] %v3746
      %3779 = vst [vmem:[%s262 + $0x50] sm:$0xf] %v3747
      %3780 = vst [vmem:[%s262 + $0x54] sm:$0xf] %v3748
      %3781 = vst [vmem:[%s262 + $0x58] sm:$0xf] %v3749
      %3782 = vst [vmem:[%s262 + $0x5c] sm:$0xf] %v3750
      %3783 = vst [vmem:[%s262 + $0x60] sm:$0xf] %v3751
      %3784 = vst [vmem:[%s262 + $0x64] sm:$0xf] %v3752
      %3785 = vst [vmem:[%s262 + $0x68] sm:$0xf] %v3753
      %3786 = vst [vmem:[%s262 + $0x6c] sm:$0xf] %v3754
      %3787 = vst [vmem:[%s262 + $0x70] sm:$0xf] %v3755
      %3788 = vst [vmem:[%s262 + $0x74] sm:$0xf] %v3756
      %3789 = vst [vmem:[%s262 + $0x78] sm:$0xf] %v3757
      %3790 = vst [vmem:[%s262 + $0x7c] sm:$0xf] %v3758
      %v3791 = vadd.f32 %v3648, %v3650
      %v3792 = vadd.f32 %v3791, %v3653
      %v3793 = vadd.f32 %v3792, %v3655
      %v3794 = vadd.f32 %v3793, %v3658
      %v3795 = vadd.f32 %v3794, %v3660
      %v3796 = vadd.f32 %v3795, %v3663
      %v3797 = vadd.f32 %v3796, %v3665
      %v3798 = vadd.f32 %v3797, %v3668
      %v3799 = vadd.f32 %v3798, %v3670
      %v3800 = vadd.f32 %v3799, %v3673
      %v3801 = vadd.f32 %v3800, %v3675
      %v3802 = vadd.f32 %v3801, %v3678
      %v3803 = vadd.f32 %v3802, %v3680
      %v3804 = vadd.f32 %v3803, %v3683
      %v3805 = vadd.f32 %v3804, %v3685
      %v3806 = vadd.f32 %v3805, %v3688
      %v3807 = vadd.f32 %v3806, %v3690
      %v3808 = vadd.f32 %v3807, %v3693
      %v3809 = vadd.f32 %v3808, %v3695
      %v3810 = vadd.f32 %v3809, %v3698
      %v3811 = vadd.f32 %v3810, %v3700
      %v3812 = vadd.f32 %v3811, %v3703
      %v3813 = vadd.f32 %v3812, %v3705
      %v3814 = vadd.f32 %v3813, %v3708
      %v3815 = vadd.f32 %v3814, %v3710
      %v3816 = vadd.f32 %v3815, %v3713
      %v3817 = vadd.f32 %v3816, %v3715
      %v3818 = vadd.f32 %v3817, %v3718
      %v3819 = vadd.f32 %v3818, %v3720
      %v3820 = vadd.f32 %v3819, %v3723
      %v3821 = vadd.f32 %v3820, %v3725
      %v3822 = vrot.slane %v3821, 4
      %v3823 = vadd.f32 %v3821, %v3822
      %v3824 = vrot.slane %v3823, 2
      %v3825 = vadd.f32 %v3823, %v3824
      %v3826 = vrot.slane %v3825, 1
      %v3827 = vadd.f32 %v3825, %v3826
      %3828 = vst [vmem:[%s266] sm:$0x1] %v3827
      %v3829 = vmul.f32 %v3648, %v3648
      %v3830 = vmul.f32 %v3650, %v3650
      %v3831 = vmul.f32 %v3653, %v3653
      %v3832 = vmul.f32 %v3655, %v3655
      %v3833 = vmul.f32 %v3658, %v3658
      %v3834 = vmul.f32 %v3660, %v3660
      %v3835 = vmul.f32 %v3663, %v3663
      %v3836 = vmul.f32 %v3665, %v3665
      %v3837 = vmul.f32 %v3668, %v3668
      %v3838 = vmul.f32 %v3670, %v3670
      %v3839 = vmul.f32 %v3673, %v3673
      %v3840 = vmul.f32 %v3675, %v3675
      %v3841 = vmul.f32 %v3678, %v3678
      %v3842 = vmul.f32 %v3680, %v3680
      %v3843 = vmul.f32 %v3683, %v3683
      %v3844 = vmul.f32 %v3685, %v3685
      %v3845 = vmul.f32 %v3688, %v3688
      %v3846 = vmul.f32 %v3690, %v3690
      %v3847 = vmul.f32 %v3693, %v3693
      %v3848 = vmul.f32 %v3695, %v3695
      %v3849 = vmul.f32 %v3698, %v3698
      %v3850 = vmul.f32 %v3700, %v3700
      %v3851 = vmul.f32 %v3703, %v3703
      %v3852 = vmul.f32 %v3705, %v3705
      %v3853 = vmul.f32 %v3708, %v3708
      %v3854 = vmul.f32 %v3710, %v3710
      %v3855 = vmul.f32 %v3713, %v3713
      %v3856 = vmul.f32 %v3715, %v3715
      %v3857 = vmul.f32 %v3718, %v3718
      %v3858 = vmul.f32 %v3720, %v3720
      %v3859 = vmul.f32 %v3723, %v3723
      %v3860 = vmul.f32 %v3725, %v3725
      %v3861 = vadd.f32 %v3829, %v3830
      %v3862 = vadd.f32 %v3861, %v3831
      %v3863 = vadd.f32 %v3862, %v3832
      %v3864 = vadd.f32 %v3863, %v3833
      %v3865 = vadd.f32 %v3864, %v3834
      %v3866 = vadd.f32 %v3865, %v3835
      %v3867 = vadd.f32 %v3866, %v3836
      %v3868 = vadd.f32 %v3867, %v3837
      %v3869 = vadd.f32 %v3868, %v3838
      %v3870 = vadd.f32 %v3869, %v3839
      %v3871 = vadd.f32 %v3870, %v3840
      %v3872 = vadd.f32 %v3871, %v3841
      %v3873 = vadd.f32 %v3872, %v3842
      %v3874 = vadd.f32 %v3873, %v3843
      %v3875 = vadd.f32 %v3874, %v3844
      %v3876 = vadd.f32 %v3875, %v3845
      %v3877 = vadd.f32 %v3876, %v3846
      %v3878 = vadd.f32 %v3877, %v3847
      %v3879 = vadd.f32 %v3878, %v3848
      %v3880 = vadd.f32 %v3879, %v3849
      %v3881 = vadd.f32 %v3880, %v3850
      %v3882 = vadd.f32 %v3881, %v3851
      %v3883 = vadd.f32 %v3882, %v3852
      %v3884 = vadd.f32 %v3883, %v3853
      %v3885 = vadd.f32 %v3884, %v3854
      %v3886 = vadd.f32 %v3885, %v3855
      %v3887 = vadd.f32 %v3886, %v3856
      %v3888 = vadd.f32 %v3887, %v3857
      %v3889 = vadd.f32 %v3888, %v3858
      %v3890 = vadd.f32 %v3889, %v3859
      %v3891 = vadd.f32 %v3890, %v3860
      %v3892 = vrot.slane %v3891, 4
      %v3893 = vadd.f32 %v3891, %v3892
      %v3894 = vrot.slane %v3893, 2
      %v3895 = vadd.f32 %v3893, %v3894
      %v3896 = vrot.slane %v3895, 1
      %v3897 = vadd.f32 %v3895, %v3896
      %3898 = vst [vmem:[%s269] sm:$0x1] %v3897
      %s3899 = smul.u32 32, %s18
      %p3900 = scmp.lt.s32.totalorder %s3899, 63
      %s3901 = scalar_select %p3900, %s3899, 63
      %s3902 = smul.addr %s3901, 4
      %s3903 = scalar_lea.vmem %s4, %s3902
      %p3904 = scmp.lt.s32.totalorder %s18, 1
      %s3905 = scalar_select %p3904, %s18, 1
      %s3906 = scalar_lea.vmem %s5, %s3905
      %p3907 = scmp.lt.s32.totalorder %s18, 1
      %s3908 = scalar_select %p3907, %s18, 1
      %s3909 = scalar_lea.vmem %s6, %s3908
      // Predicated region
      $region37: #{residual_block.7} parent=35 // pred_check
        %p3910 = pneg %p125
      $region38: #{residual_block.7} parent=35 // pred_check_branch
        %3912 = sbr.rel (%p3910) target = $region40
      $region39: #{residual_block.7} parent=35 // pred_region
        %s3913 = smul.u32 32, %s18
      $region40: #{residual_block.7} parent=35 // pred_fallthru
        _
      // Predicated region
      $region41: #{residual_block.7} parent=35 // pred_check
        %p3914 = pneg %p151
      $region42: #{residual_block.7} parent=35 // pred_check_branch
        %3916 = sbr.rel (%p3914) target = $region44
      $region43: #{residual_block.7} parent=35 // pred_region
        _
      $region44: #{residual_block.7} parent=35 // pred_fallthru
        _
      // Predicated region
      $region45: #{residual_block.7} parent=35 // pred_check
        %p3917 = pneg %p177
      $region46: #{residual_block.7} parent=35 // pred_check_branch
        %3919 = sbr.rel (%p3917) target = $region48
      $region47: #{residual_block.7} parent=35 // pred_region
        _
      $region48: #{residual_block.7} parent=35 // pred_fallthru
        _
    $region36: #{residual_block.7} parent=5 // pred_fallthru
      _
    %p3920 = scmp.le.s32.totalorder 2, %s13
    // Predicated region
    $region49: #{residual_block.7} parent=5 // pred_check
      %p3921 = pneg %p3920
    $region50: #{residual_block.7} parent=5 // pred_check_branch
      %3923 = sbr.rel (%p3921) target = $region52
    $region51: #{residual_block.7} parent=5 // pred_region
      %s3924 = ssub.s32 %s13, 2
      // Predicated region
      $region53: #{residual_block.7} parent=51 // pred_check
        %p3925 = pneg %p131
      $region54: #{residual_block.7} parent=51 // pred_check_branch
        %3927 = sbr.rel (%p3925) target = $region56
      $region55: #{residual_block.7} parent=51 // pred_region
        %s3928 = smul.u32 32, %s19
        %p3929 = scmp.lt.s32.totalorder %s3928, 63
        %s3930 = scalar_select %p3929, %s3928, 63
        %s3931 = smul.addr %s3930, 4
        %s3932 = scalar_lea.vmem %s4, %s3931
      $region56: #{residual_block.7} parent=51 // pred_fallthru
        _
      // Predicated region
      $region57: #{residual_block.7} parent=51 // pred_check
        %p3933 = pneg %p157
      $region58: #{residual_block.7} parent=51 // pred_check_branch
        %3935 = sbr.rel (%p3933) target = $region60
      $region59: #{residual_block.7} parent=51 // pred_region
        %p3936 = scmp.lt.s32.totalorder %s19, 1
        %s3937 = scalar_select %p3936, %s19, 1
        %s3938 = scalar_lea.vmem %s5, %s3937
      $region60: #{residual_block.7} parent=51 // pred_fallthru
        _
      // Predicated region
      $region61: #{residual_block.7} parent=51 // pred_check
        %p3939 = pneg %p183
      $region62: #{residual_block.7} parent=51 // pred_check_branch
        %3941 = sbr.rel (%p3939) target = $region64
      $region63: #{residual_block.7} parent=51 // pred_region
        %p3942 = scmp.lt.s32.totalorder %s19, 1
        %s3943 = scalar_select %p3942, %s19, 1
        %s3944 = scalar_lea.vmem %s6, %s3943
      $region64: #{residual_block.7} parent=51 // pred_fallthru
        _
    $region52: #{residual_block.7} parent=5 // pred_fallthru
      _
  $region6: #{residual_block.7} parent=0 // loop_footer
    %s17 = sadd.s32 1, %s13
  $region7: #{residual_block.7} parent=0 // loop_footer_branch
    %12 = sbr.rel target = $region3
  $region8: #{residual_block.7} parent=0 // loop_exit
    _

</llo_original>
